<compile_context>
chip_gen: v7x
topology: tpu7x:2x2x1
jax: 0.10.0
libtpu: 0.0.40
codegen_flags: <defaults>
</compile_context>

<pallas_src>
import jax
import jax.numpy as jnp
from jax.experimental import pallas as pl
from jax.experimental.pallas import tpu as pltpu

C_PAD = 128  # all conv channel dims are padded to the 128-lane width


# ---------------------------------------------------------------------------
# Fused whole-network kernel (one image per grid step)
# ---------------------------------------------------------------------------
def _net_kernel(p_ref, c1w_ref, c1b_ref, c2w_ref, c2b_ref, c3w_ref, c3b_ref,
                c4w_ref, c4b_ref, f1w_ref, f1b_ref, f2w_ref, f2b_ref,
                o_ref,
                c1_s, b2_s, c2_s, b3_s, c3_s, b4_s, c4_s):
    """Layouts:
      conv-output scratch : (H*row_stride, 128) f32, flattened spatial rows
                            (row r = h*row_stride + w; w >= W rows are junk).
      padded-input scratch: (>= (H+2)*(W+2)+2, 128) bf16, flattened replicate
                            padded image; the 9 conv tap slabs are contiguous
                            row-slices of this buffer.
    """
    f32 = jnp.float32

    def conv_padded(src_ref, w_ref, rows, wp):
        # 3x3 conv as ONE matmul: lane-concat the 9 contiguous tap slabs into
        # (rows, 9*128) and dot against (1152, 128) (tap accumulation in-MXU).
        slabs = [src_ref[dy * wp + dx: dy * wp + dx + rows, :]
                 for dy in range(3) for dx in range(3)]
        patches = jnp.concatenate(slabs, axis=1)
        return jnp.dot(patches, w_ref[...], preferred_element_type=f32)

    def pool2x2(src_ref, b_ref, H, W, row_stride, emit, relu=True):
        # 2x2 stride-2 max-pool with stride-2 sublane reads from the conv
        # output scratch; bias added after the max (commutes), ReLU last.
        Ho, Wo = H // 2, W // 2
        bias = jnp.broadcast_to(b_ref[...], (Wo, C_PAD))   # hoisted broadcast
        for ho in range(Ho):
            r0 = (2 * ho) * row_stride
            r1 = r0 + row_stride
            m0 = jnp.maximum(src_ref[pl.ds(r0, Wo, stride=2), :],
                             src_ref[pl.ds(r0 + 1, Wo, stride=2), :])
            m1 = jnp.maximum(src_ref[pl.ds(r1, Wo, stride=2), :],
                             src_ref[pl.ds(r1 + 1, Wo, stride=2), :])
            pr = jnp.maximum(m0, m1) + bias
            if relu:
                pr = jnp.maximum(pr, 0.0)
            emit(ho, pr)

    def padded_row_writer(dst_ref, Ho, Wo):
        # Write a pooled row with replicated left/right columns into the next
        # layer's padded input buffer; also replicate the top/bottom rows.
        Wp = Wo + 2

        def emit(ho, pr):
            pr = pr.astype(dst_ref.dtype)
            row = jnp.concatenate([pr[0:1, :], pr, pr[Wo - 1:Wo, :]], axis=0)
            dst_ref[(ho + 1) * Wp:(ho + 2) * Wp, :] = row
            if ho == 0:                                   # top replicate row
                dst_ref[0:Wp, :] = row
            if ho == Ho - 1:                              # bottom replicate row
                dst_ref[(Ho + 1) * Wp:(Ho + 2) * Wp, :] = row
        return emit

    # -------- conv1 (1 -> 32) + ReLU + pool : 28x28 -> 14x14 ----------------
    c1_s[...] = jnp.dot(p_ref[...], c1w_ref[...], preferred_element_type=f32)
    pool2x2(c1_s, c1b_ref, H=28, W=28, row_stride=28,
            emit=padded_row_writer(b2_s, Ho=14, Wo=14))

    # -------- conv2 (32 -> 64) + ReLU + pool : 14x14 -> 7x7 -----------------
    c2_s[...] = conv_padded(b2_s, c2w_ref, rows=14 * 16, wp=16)
    pool2x2(c2_s, c2b_ref, H=14, W=14, row_stride=16,
            emit=padded_row_writer(b3_s, Ho=7, Wo=7))

    # -------- dropout (eval: id) + BatchNorm (folded) + conv3 (64 -> 128) ---
    c3_s[0:63, :] = conv_padded(b3_s, c3w_ref, rows=63, wp=9) + c3b_ref[...]
    # no ReLU between conv3 and conv4; replicate-pad conv3's output for conv4
    for h in range(7):
        v = c3_s[h * 9: h * 9 + 7, :].astype(b4_s.dtype)   # 7 valid columns
        row = jnp.concatenate([v[0:1, :], v, v[6:7, :]], axis=0)
        b4_s[(h + 1) * 9:(h + 2) * 9, :] = row
        if h == 0:
            b4_s[0:9, :] = row
        if h == 6:
            b4_s[72:81, :] = row

    # -------- conv4 (128 -> 128) + ReLU + pool : 7x7 -> 3x3 -----------------
    c4_s[0:63, :] = conv_padded(b4_s, c4w_ref, rows=63, wp=9)
    pooled4 = []
    pool2x2(c4_s, c4b_ref, H=7, W=7, row_stride=9,
            emit=lambda ho, pr: pooled4.append(pr))

    # -------- flatten + fc1 + ReLU + fc2 (torch order handled via f1w) ------
    parts = []
    for pr in pooled4:                        # ho = 0, 1, 2
        prb = pr.astype(jnp.bfloat16)
        for wo in range(3):
            parts.append(prb[wo:wo + 1, :])   # s = ho*3 + wo, channels in lanes
    feat = jnp.concatenate(parts, axis=1)     # (1, 9*128)

    h1 = jnp.dot(feat, f1w_ref[...], preferred_element_type=f32) + f1b_ref[...]
    h1 = jnp.maximum(h1, 0.0).astype(jnp.bfloat16)
    o_ref[...] = jnp.dot(h1, f2w_ref[...],
                         preferred_element_type=f32) + f2b_ref[...]


# ---------------------------------------------------------------------------
# Wrapper
# ---------------------------------------------------------------------------
def forward(x_nchw, pp):
    """x_nchw: (N, 1, 28, 28) float32 -> (N, 10) float32 logits."""
    N = x_nchw.shape[0]
    x = x_nchw.reshape(N, 28, 28)
    # conv1 im2col (one tiny XLA fusion): replicate pad + 9 shifted slices.
    xp = jnp.pad(x, ((0, 0), (1, 1), (1, 1)), mode="edge")            # (N,30,30)
    patches = jnp.stack([xp[:, dy:dy + 28, dx:dx + 28]
                         for dy in range(3) for dx in range(3)], axis=-1)
    patches = patches.reshape(N, 28 * 28, 9).astype(jnp.bfloat16)

    def wspec(shape):
        return pl.BlockSpec(shape, lambda n: (0, 0))

    out = pl.pallas_call(
        _net_kernel,
        out_shape=jax.ShapeDtypeStruct((N, 1, C_PAD), jnp.float32),
        grid=(N,),
        in_specs=[
            pl.BlockSpec((None, 28 * 28, 9), lambda n: (n, 0, 0)),    # patches
            wspec((9, C_PAD)), wspec((1, C_PAD)),                     # conv1
            wspec((9 * C_PAD, C_PAD)), wspec((1, C_PAD)),             # conv2
            wspec((9 * C_PAD, C_PAD)), wspec((1, C_PAD)),             # conv3+BN
            wspec((9 * C_PAD, C_PAD)), wspec((1, C_PAD)),             # conv4
            wspec((9 * C_PAD, 512)), wspec((1, 512)),                 # fc1
            wspec((512, C_PAD)), wspec((1, C_PAD)),                   # fc2
        ],
        out_specs=pl.BlockSpec((None, 1, C_PAD), lambda n: (n, 0, 0)),
        scratch_shapes=[
            pltpu.VMEM((784, C_PAD), jnp.float32),    # conv1 output
            pltpu.VMEM((272, C_PAD), jnp.bfloat16),   # conv2 padded input
            pltpu.VMEM((224, C_PAD), jnp.float32),    # conv2 output
            pltpu.VMEM((88, C_PAD), jnp.bfloat16),    # conv3 padded input
            pltpu.VMEM((64, C_PAD), jnp.float32),     # conv3 output
            pltpu.VMEM((88, C_PAD), jnp.bfloat16),    # conv4 padded input
            pltpu.VMEM((64, C_PAD), jnp.float32),     # conv4 output
        ],
        compiler_params=pltpu.CompilerParams(dimension_semantics=("parallel",)),
    )(patches, pp["c1w"], pp["c1b"], pp["c2w"], pp["c2b"], pp["c3w"], pp["c3b"],
      pp["c4w"], pp["c4b"], pp["f1w"], pp["f1b"], pp["f2w"], pp["f2b"])
    return out.reshape(N, C_PAD)[:, :10]


# ---------------------------------------------------------------------------
# Parameters (torch-style shapes) + trace-time preparation
# ---------------------------------------------------------------------------
def init_params(key):
    ks = jax.random.split(key, 12)

    def conv(kw, kb, cout, cin):
        fan = cin * 9
        w = jax.random.normal(kw, (cout, cin, 3, 3), jnp.float32) / jnp.sqrt(fan)
        b = jax.random.normal(kb, (cout,), jnp.float32) * 0.01
        return w, b

    def linear(kw, kb, cout, cin):
        w = jax.random.normal(kw, (cout, cin), jnp.float32) / jnp.sqrt(cin)
        b = jax.random.normal(kb, (cout,), jnp.float32) * 0.01
        return w, b

    p = {}
    p["conv1_w"], p["conv1_b"] = conv(ks[0], ks[1], 32, 1)
    p["conv2_w"], p["conv2_b"] = conv(ks[2], ks[3], 64, 32)
    p["conv3_w"], p["conv3_b"] = conv(ks[4], ks[5], 128, 64)
    p["conv4_w"], p["conv4_b"] = conv(ks[6], ks[7], 128, 128)
    p["fc1_w"], p["fc1_b"] = linear(ks[8], ks[9], 512, 128 * 3 * 3)
    p["fc2_w"], p["fc2_b"] = linear(ks[10], ks[11], 10, 512)
    # BatchNorm2d(64) fresh-module buffers/params
    p["bn_gamma"] = jnp.ones((64,), jnp.float32)
    p["bn_beta"] = jnp.zeros((64,), jnp.float32)
    p["bn_mean"] = jnp.zeros((64,), jnp.float32)
    p["bn_var"] = jnp.ones((64,), jnp.float32)
    return p


def prepare_params(p, eps=1e-5):
    """Fold BN into conv3, permute/pad weights into the kernel's layouts."""

    def prep_conv(w, b, scale=None, shift=None):
        cout, cin = w.shape[0], w.shape[1]
        wt = jnp.transpose(w, (2, 3, 1, 0)).reshape(9, cin, cout)  # [tap,cin,cout]
        bias = b
        if scale is not None:      # fold eval-mode BatchNorm into the conv
            wt = wt * scale[None, :, None]
            bias = bias + jnp.einsum("ockl,c->o", w, shift)
        wt = jnp.pad(wt, ((0, 0), (0, C_PAD - cin), (0, C_PAD - cout)))
        bias = jnp.pad(bias, (0, C_PAD - cout))
        return (wt.reshape(9 * C_PAD, C_PAD).astype(jnp.bfloat16),
                bias.reshape(1, C_PAD).astype(jnp.float32))

    scale = p["bn_gamma"] / jnp.sqrt(p["bn_var"] + eps)
    shift = p["bn_beta"] - p["bn_mean"] * scale

    pp = {}
    # conv1: Cin = 1 -> weight matrix is (9 taps, 32 out channels), padded.
    w1 = jnp.transpose(p["conv1_w"], (2, 3, 1, 0)).reshape(9, 32)
    pp["c1w"] = jnp.pad(w1, ((0, 0), (0, C_PAD - 32))).astype(jnp.bfloat16)
    pp["c1b"] = jnp.pad(p["conv1_b"], (0, C_PAD - 32)).reshape(1, C_PAD).astype(jnp.float32)

    pp["c2w"], pp["c2b"] = prep_conv(p["conv2_w"], p["conv2_b"])
    pp["c3w"], pp["c3b"] = prep_conv(p["conv3_w"], p["conv3_b"], scale, shift)
    pp["c4w"], pp["c4b"] = prep_conv(p["conv4_w"], p["conv4_b"])

    # fc1: torch feature index = c*9 + s; kernel feature index = s*128 + c.
    f1 = jnp.transpose(p["fc1_w"].reshape(512, C_PAD, 9), (2, 1, 0)).reshape(9 * C_PAD, 512)
    pp["f1w"] = f1.astype(jnp.bfloat16)
    pp["f1b"] = p["fc1_b"].reshape(1, 512).astype(jnp.float32)
    # fc2: pad the 10 logits out to the 128-lane width (sliced in the wrapper).
    pp["f2w"] = jnp.pad(p["fc2_w"].T, ((0, 0), (0, C_PAD - 10))).astype(jnp.bfloat16)
    pp["f2b"] = jnp.pad(p["fc2_b"], (0, C_PAD - 10)).reshape(1, C_PAD).astype(jnp.float32)
    return pp


if __name__ == "__main__":
    key = jax.random.PRNGKey(0)
    pkey, xkey = jax.random.split(key)
    params = init_params(pkey)
    prepared = prepare_params(params)

    # Input shape implied by fc1 (128*3*3): 28x28 single-channel images, batch=2.
    x = jax.random.normal(xkey, (2, 1, 28, 28), jnp.float32)

    out = jax.jit(forward)(x, prepared)
    out = jax.block_until_ready(out)
    assert out.shape == (2, 10), out.shape
    assert bool(jnp.all(jnp.isfinite(out)))
    print("KERNEL_OK")
</pallas_src>

<mosaic_0001>
module attributes {stable_mosaic.version = 11 : i64} {
  func.func @_net_kernel(%arg0: i32, %arg1: memref<1x784x9xbf16, #tpu.memory_space<vmem>>, %arg2: memref<9x128xbf16, #tpu.memory_space<vmem>>, %arg3: memref<1x128xf32, #tpu.memory_space<vmem>>, %arg4: memref<1152x128xbf16, #tpu.memory_space<vmem>>, %arg5: memref<1x128xf32, #tpu.memory_space<vmem>>, %arg6: memref<1152x128xbf16, #tpu.memory_space<vmem>>, %arg7: memref<1x128xf32, #tpu.memory_space<vmem>>, %arg8: memref<1152x128xbf16, #tpu.memory_space<vmem>>, %arg9: memref<1x128xf32, #tpu.memory_space<vmem>>, %arg10: memref<1152x512xbf16, #tpu.memory_space<vmem>>, %arg11: memref<1x512xf32, #tpu.memory_space<vmem>>, %arg12: memref<512x128xbf16, #tpu.memory_space<vmem>>, %arg13: memref<1x128xf32, #tpu.memory_space<vmem>>, %arg14: memref<1x1x128xf32, #tpu.memory_space<vmem>>, %arg15: memref<784x128xf32, #tpu.memory_space<vmem>>, %arg16: memref<272x128xbf16, #tpu.memory_space<vmem>>, %arg17: memref<224x128xf32, #tpu.memory_space<vmem>>, %arg18: memref<88x128xbf16, #tpu.memory_space<vmem>>, %arg19: memref<64x128xf32, #tpu.memory_space<vmem>>, %arg20: memref<88x128xbf16, #tpu.memory_space<vmem>>, %arg21: memref<64x128xf32, #tpu.memory_space<vmem>>) attributes {dimension_semantics = [#tpu.dimension_semantics<parallel>], iteration_bounds = array<i64: 2>, scalar_prefetch = 0 : i64, scratch_operands = 7 : i64, tpu.core_type = #tpu.core_type<tc>, window_params = [{transform_indices = @transform_0, window_bounds = array<i64: 1, 784, 9>}, {pipeline_mode = #tpu.pipeline_mode<synchronous>, transform_indices = @transform_1, window_bounds = array<i64: 9, 128>}, {pipeline_mode = #tpu.pipeline_mode<synchronous>, transform_indices = @transform_2, window_bounds = array<i64: 1, 128>}, {pipeline_mode = #tpu.pipeline_mode<synchronous>, transform_indices = @transform_3, window_bounds = array<i64: 1152, 128>}, {pipeline_mode = #tpu.pipeline_mode<synchronous>, transform_indices = @transform_4, window_bounds = array<i64: 1, 128>}, {pipeline_mode = #tpu.pipeline_mode<synchronous>, transform_indices = @transform_5, window_bounds = array<i64: 1152, 128>}, {pipeline_mode = #tpu.pipeline_mode<synchronous>, transform_indices = @transform_6, window_bounds = array<i64: 1, 128>}, {pipeline_mode = #tpu.pipeline_mode<synchronous>, transform_indices = @transform_7, window_bounds = array<i64: 1152, 128>}, {pipeline_mode = #tpu.pipeline_mode<synchronous>, transform_indices = @transform_8, window_bounds = array<i64: 1, 128>}, {pipeline_mode = #tpu.pipeline_mode<synchronous>, transform_indices = @transform_9, window_bounds = array<i64: 1152, 512>}, {pipeline_mode = #tpu.pipeline_mode<synchronous>, transform_indices = @transform_10, window_bounds = array<i64: 1, 512>}, {pipeline_mode = #tpu.pipeline_mode<synchronous>, transform_indices = @transform_11, window_bounds = array<i64: 512, 128>}, {pipeline_mode = #tpu.pipeline_mode<synchronous>, transform_indices = @transform_12, window_bounds = array<i64: 1, 128>}, {transform_indices = @transform_13, window_bounds = array<i64: 1, 1, 128>}]} {
    %c0 = arith.constant 0 : index
    %c0_0 = arith.constant 0 : index
    %c0_1 = arith.constant 0 : index
    %0 = vector.load %arg1[%c0, %c0_0, %c0_1] : memref<1x784x9xbf16, #tpu.memory_space<vmem>>, vector<1x784x9xbf16>
    %1 = vector.shape_cast %0 : vector<1x784x9xbf16> to vector<784x9xbf16>
    %c0_2 = arith.constant 0 : index
    %c0_3 = arith.constant 0 : index
    %2 = vector.load %arg2[%c0_2, %c0_3] : memref<9x128xbf16, #tpu.memory_space<vmem>>, vector<9x128xbf16>
    %cst = arith.constant dense<0.000000e+00> : vector<784x128xf32>
    %3 = tpu.matmul %1, %2, %cst {dimension_numbers = #tpu.dot_dimension_numbers<[1], [0], [0], [1], [0, 0, 1, 1], [], []>} : vector<784x9xbf16>, vector<9x128xbf16>, vector<784x128xf32> -> vector<784x128xf32>
    %c0_4 = arith.constant 0 : index
    %c0_5 = arith.constant 0 : index
    %4 = vector.load %arg15[%c0_4, %c0_5] : memref<784x128xf32, #tpu.memory_space<vmem>>, vector<784x128xf32>
    tpu.vector_store %arg15[%c0_4, %c0_5], %3 {strides = array<i32>} : memref<784x128xf32, #tpu.memory_space<vmem>>, vector<784x128xf32>,
    %c0_6 = arith.constant 0 : index
    %c0_7 = arith.constant 0 : index
    %5 = vector.load %arg3[%c0_6, %c0_7] : memref<1x128xf32, #tpu.memory_space<vmem>>, vector<1x128xf32>
    %6 = vector.shape_cast %5 : vector<1x128xf32> to vector<1x128xf32>
    %7 = vector.broadcast %6 : vector<1x128xf32> to vector<14x128xf32>
    %c0_8 = arith.constant 0 : index
    %c0_9 = arith.constant 0 : index
    %8 = tpu.strided_load %arg15[%c0_8, %c0_9] {strides = array<i32: 2, 1>} : memref<784x128xf32, #tpu.memory_space<vmem>>, vector<14x128xf32>
    %c1 = arith.constant 1 : index
    %c0_10 = arith.constant 0 : index
    %9 = tpu.strided_load %arg15[%c1, %c0_10] {strides = array<i32: 2, 1>} : memref<784x128xf32, #tpu.memory_space<vmem>>, vector<14x128xf32>
    %10 = arith.maximumf %8, %9 : vector<14x128xf32>
    %c28 = arith.constant 28 : index
    %c0_11 = arith.constant 0 : index
    %11 = tpu.strided_load %arg15[%c28, %c0_11] {strides = array<i32: 2, 1>} : memref<784x128xf32, #tpu.memory_space<vmem>>, vector<14x128xf32>
    %c29 = arith.constant 29 : index
    %c0_12 = arith.constant 0 : index
    %12 = tpu.strided_load %arg15[%c29, %c0_12] {strides = array<i32: 2, 1>} : memref<784x128xf32, #tpu.memory_space<vmem>>, vector<14x128xf32>
    %13 = arith.maximumf %11, %12 : vector<14x128xf32>
    %14 = arith.maximumf %10, %13 : vector<14x128xf32>
    %15 = arith.addf %14, %7 : vector<14x128xf32>
    %cst_13 = arith.constant 0.000000e+00 : f32
    %16 = vector.broadcast %cst_13 : f32 to vector<14x128xf32>
    %17 = arith.maximumf %15, %16 : vector<14x128xf32>
    %18 = arith.truncf %17 : vector<14x128xf32> to vector<14x128xbf16>
    %19 = vector.extract_strided_slice %18 {offsets = [0, 0], sizes = [1, 128], strides = [1, 1]} : vector<14x128xbf16> to vector<1x128xbf16>
    %20 = vector.extract_strided_slice %18 {offsets = [13, 0], sizes = [1, 128], strides = [1, 1]} : vector<14x128xbf16> to vector<1x128xbf16>
    %21 = tpu.concatenate %19, %18, %20 in 0 : vector<1x128xbf16>, vector<14x128xbf16>, vector<1x128xbf16> -> vector<16x128xbf16>
    %c16 = arith.constant 16 : index
    %c0_14 = arith.constant 0 : index
    %22 = vector.load %arg16[%c16, %c0_14] : memref<272x128xbf16, #tpu.memory_space<vmem>>, vector<16x128xbf16>
    tpu.vector_store %arg16[%c16, %c0_14], %21 {strides = array<i32>} : memref<272x128xbf16, #tpu.memory_space<vmem>>, vector<16x128xbf16>,
    %c0_15 = arith.constant 0 : index
    %c0_16 = arith.constant 0 : index
    %23 = vector.load %arg16[%c0_15, %c0_16] : memref<272x128xbf16, #tpu.memory_space<vmem>>, vector<16x128xbf16>
    tpu.vector_store %arg16[%c0_15, %c0_16], %21 {strides = array<i32>} : memref<272x128xbf16, #tpu.memory_space<vmem>>, vector<16x128xbf16>,
    %c56 = arith.constant 56 : index
    %c0_17 = arith.constant 0 : index
    %24 = tpu.strided_load %arg15[%c56, %c0_17] {strides = array<i32: 2, 1>} : memref<784x128xf32, #tpu.memory_space<vmem>>, vector<14x128xf32>
    %c57 = arith.constant 57 : index
    %c0_18 = arith.constant 0 : index
    %25 = tpu.strided_load %arg15[%c57, %c0_18] {strides = array<i32: 2, 1>} : memref<784x128xf32, #tpu.memory_space<vmem>>, vector<14x128xf32>
    %26 = arith.maximumf %24, %25 : vector<14x128xf32>
    %c84 = arith.constant 84 : index
    %c0_19 = arith.constant 0 : index
    %27 = tpu.strided_load %arg15[%c84, %c0_19] {strides = array<i32: 2, 1>} : memref<784x128xf32, #tpu.memory_space<vmem>>, vector<14x128xf32>
    %c85 = arith.constant 85 : index
    %c0_20 = arith.constant 0 : index
    %28 = tpu.strided_load %arg15[%c85, %c0_20] {strides = array<i32: 2, 1>} : memref<784x128xf32, #tpu.memory_space<vmem>>, vector<14x128xf32>
    %29 = arith.maximumf %27, %28 : vector<14x128xf32>
    %30 = arith.maximumf %26, %29 : vector<14x128xf32>
    %31 = arith.addf %30, %7 : vector<14x128xf32>
    %cst_21 = arith.constant 0.000000e+00 : f32
    %32 = vector.broadcast %cst_21 : f32 to vector<14x128xf32>
    %33 = arith.maximumf %31, %32 : vector<14x128xf32>
    %34 = arith.truncf %33 : vector<14x128xf32> to vector<14x128xbf16>
    %35 = vector.extract_strided_slice %34 {offsets = [0, 0], sizes = [1, 128], strides = [1, 1]} : vector<14x128xbf16> to vector<1x128xbf16>
    %36 = vector.extract_strided_slice %34 {offsets = [13, 0], sizes = [1, 128], strides = [1, 1]} : vector<14x128xbf16> to vector<1x128xbf16>
    %37 = tpu.concatenate %35, %34, %36 in 0 : vector<1x128xbf16>, vector<14x128xbf16>, vector<1x128xbf16> -> vector<16x128xbf16>
    %c32 = arith.constant 32 : index
    %c0_22 = arith.constant 0 : index
    %38 = vector.load %arg16[%c32, %c0_22] : memref<272x128xbf16, #tpu.memory_space<vmem>>, vector<16x128xbf16>
    tpu.vector_store %arg16[%c32, %c0_22], %37 {strides = array<i32>} : memref<272x128xbf16, #tpu.memory_space<vmem>>, vector<16x128xbf16>,
    %c112 = arith.constant 112 : index
    %c0_23 = arith.constant 0 : index
    %39 = tpu.strided_load %arg15[%c112, %c0_23] {strides = array<i32: 2, 1>} : memref<784x128xf32, #tpu.memory_space<vmem>>, vector<14x128xf32>
    %c113 = arith.constant 113 : index
    %c0_24 = arith.constant 0 : index
    %40 = tpu.strided_load %arg15[%c113, %c0_24] {strides = array<i32: 2, 1>} : memref<784x128xf32, #tpu.memory_space<vmem>>, vector<14x128xf32>
    %41 = arith.maximumf %39, %40 : vector<14x128xf32>
    %c140 = arith.constant 140 : index
    %c0_25 = arith.constant 0 : index
    %42 = tpu.strided_load %arg15[%c140, %c0_25] {strides = array<i32: 2, 1>} : memref<784x128xf32, #tpu.memory_space<vmem>>, vector<14x128xf32>
    %c141 = arith.constant 141 : index
    %c0_26 = arith.constant 0 : index
    %43 = tpu.strided_load %arg15[%c141, %c0_26] {strides = array<i32: 2, 1>} : memref<784x128xf32, #tpu.memory_space<vmem>>, vector<14x128xf32>
    %44 = arith.maximumf %42, %43 : vector<14x128xf32>
    %45 = arith.maximumf %41, %44 : vector<14x128xf32>
    %46 = arith.addf %45, %7 : vector<14x128xf32>
    %cst_27 = arith.constant 0.000000e+00 : f32
    %47 = vector.broadcast %cst_27 : f32 to vector<14x128xf32>
    %48 = arith.maximumf %46, %47 : vector<14x128xf32>
    %49 = arith.truncf %48 : vector<14x128xf32> to vector<14x128xbf16>
    %50 = vector.extract_strided_slice %49 {offsets = [0, 0], sizes = [1, 128], strides = [1, 1]} : vector<14x128xbf16> to vector<1x128xbf16>
    %51 = vector.extract_strided_slice %49 {offsets = [13, 0], sizes = [1, 128], strides = [1, 1]} : vector<14x128xbf16> to vector<1x128xbf16>
    %52 = tpu.concatenate %50, %49, %51 in 0 : vector<1x128xbf16>, vector<14x128xbf16>, vector<1x128xbf16> -> vector<16x128xbf16>
    %c48 = arith.constant 48 : index
    %c0_28 = arith.constant 0 : index
    %53 = vector.load %arg16[%c48, %c0_28] : memref<272x128xbf16, #tpu.memory_space<vmem>>, vector<16x128xbf16>
    tpu.vector_store %arg16[%c48, %c0_28], %52 {strides = array<i32>} : memref<272x128xbf16, #tpu.memory_space<vmem>>, vector<16x128xbf16>,
    %c168 = arith.constant 168 : index
    %c0_29 = arith.constant 0 : index
    %54 = tpu.strided_load %arg15[%c168, %c0_29] {strides = array<i32: 2, 1>} : memref<784x128xf32, #tpu.memory_space<vmem>>, vector<14x128xf32>
    %c169 = arith.constant 169 : index
    %c0_30 = arith.constant 0 : index
    %55 = tpu.strided_load %arg15[%c169, %c0_30] {strides = array<i32: 2, 1>} : memref<784x128xf32, #tpu.memory_space<vmem>>, vector<14x128xf32>
    %56 = arith.maximumf %54, %55 : vector<14x128xf32>
    %c196 = arith.constant 196 : index
    %c0_31 = arith.constant 0 : index
    %57 = tpu.strided_load %arg15[%c196, %c0_31] {strides = array<i32: 2, 1>} : memref<784x128xf32, #tpu.memory_space<vmem>>, vector<14x128xf32>
    %c197 = arith.constant 197 : index
    %c0_32 = arith.constant 0 : index
    %58 = tpu.strided_load %arg15[%c197, %c0_32] {strides = array<i32: 2, 1>} : memref<784x128xf32, #tpu.memory_space<vmem>>, vector<14x128xf32>
    %59 = arith.maximumf %57, %58 : vector<14x128xf32>
    %60 = arith.maximumf %56, %59 : vector<14x128xf32>
    %61 = arith.addf %60, %7 : vector<14x128xf32>
    %cst_33 = arith.constant 0.000000e+00 : f32
    %62 = vector.broadcast %cst_33 : f32 to vector<14x128xf32>
    %63 = arith.maximumf %61, %62 : vector<14x128xf32>
    %64 = arith.truncf %63 : vector<14x128xf32> to vector<14x128xbf16>
    %65 = vector.extract_strided_slice %64 {offsets = [0, 0], sizes = [1, 128], strides = [1, 1]} : vector<14x128xbf16> to vector<1x128xbf16>
    %66 = vector.extract_strided_slice %64 {offsets = [13, 0], sizes = [1, 128], strides = [1, 1]} : vector<14x128xbf16> to vector<1x128xbf16>
    %67 = tpu.concatenate %65, %64, %66 in 0 : vector<1x128xbf16>, vector<14x128xbf16>, vector<1x128xbf16> -> vector<16x128xbf16>
    %c64 = arith.constant 64 : index
    %c0_34 = arith.constant 0 : index
    %68 = vector.load %arg16[%c64, %c0_34] : memref<272x128xbf16, #tpu.memory_space<vmem>>, vector<16x128xbf16>
    tpu.vector_store %arg16[%c64, %c0_34], %67 {strides = array<i32>} : memref<272x128xbf16, #tpu.memory_space<vmem>>, vector<16x128xbf16>,
    %c224 = arith.constant 224 : index
    %c0_35 = arith.constant 0 : index
    %69 = tpu.strided_load %arg15[%c224, %c0_35] {strides = array<i32: 2, 1>} : memref<784x128xf32, #tpu.memory_space<vmem>>, vector<14x128xf32>
    %c225 = arith.constant 225 : index
    %c0_36 = arith.constant 0 : index
    %70 = tpu.strided_load %arg15[%c225, %c0_36] {strides = array<i32: 2, 1>} : memref<784x128xf32, #tpu.memory_space<vmem>>, vector<14x128xf32>
    %71 = arith.maximumf %69, %70 : vector<14x128xf32>
    %c252 = arith.constant 252 : index
    %c0_37 = arith.constant 0 : index
    %72 = tpu.strided_load %arg15[%c252, %c0_37] {strides = array<i32: 2, 1>} : memref<784x128xf32, #tpu.memory_space<vmem>>, vector<14x128xf32>
    %c253 = arith.constant 253 : index
    %c0_38 = arith.constant 0 : index
    %73 = tpu.strided_load %arg15[%c253, %c0_38] {strides = array<i32: 2, 1>} : memref<784x128xf32, #tpu.memory_space<vmem>>, vector<14x128xf32>
    %74 = arith.maximumf %72, %73 : vector<14x128xf32>
    %75 = arith.maximumf %71, %74 : vector<14x128xf32>
    %76 = arith.addf %75, %7 : vector<14x128xf32>
    %cst_39 = arith.constant 0.000000e+00 : f32
    %77 = vector.broadcast %cst_39 : f32 to vector<14x128xf32>
    %78 = arith.maximumf %76, %77 : vector<14x128xf32>
    %79 = arith.truncf %78 : vector<14x128xf32> to vector<14x128xbf16>
    %80 = vector.extract_strided_slice %79 {offsets = [0, 0], sizes = [1, 128], strides = [1, 1]} : vector<14x128xbf16> to vector<1x128xbf16>
    %81 = vector.extract_strided_slice %79 {offsets = [13, 0], sizes = [1, 128], strides = [1, 1]} : vector<14x128xbf16> to vector<1x128xbf16>
    %82 = tpu.concatenate %80, %79, %81 in 0 : vector<1x128xbf16>, vector<14x128xbf16>, vector<1x128xbf16> -> vector<16x128xbf16>
    %c80 = arith.constant 80 : index
    %c0_40 = arith.constant 0 : index
    %83 = vector.load %arg16[%c80, %c0_40] : memref<272x128xbf16, #tpu.memory_space<vmem>>, vector<16x128xbf16>
    tpu.vector_store %arg16[%c80, %c0_40], %82 {strides = array<i32>} : memref<272x128xbf16, #tpu.memory_space<vmem>>, vector<16x128xbf16>,
    %c280 = arith.constant 280 : index
    %c0_41 = arith.constant 0 : index
    %84 = tpu.strided_load %arg15[%c280, %c0_41] {strides = array<i32: 2, 1>} : memref<784x128xf32, #tpu.memory_space<vmem>>, vector<14x128xf32>
    %c281 = arith.constant 281 : index
    %c0_42 = arith.constant 0 : index
    %85 = tpu.strided_load %arg15[%c281, %c0_42] {strides = array<i32: 2, 1>} : memref<784x128xf32, #tpu.memory_space<vmem>>, vector<14x128xf32>
    %86 = arith.maximumf %84, %85 : vector<14x128xf32>
    %c308 = arith.constant 308 : index
    %c0_43 = arith.constant 0 : index
    %87 = tpu.strided_load %arg15[%c308, %c0_43] {strides = array<i32: 2, 1>} : memref<784x128xf32, #tpu.memory_space<vmem>>, vector<14x128xf32>
    %c309 = arith.constant 309 : index
    %c0_44 = arith.constant 0 : index
    %88 = tpu.strided_load %arg15[%c309, %c0_44] {strides = array<i32: 2, 1>} : memref<784x128xf32, #tpu.memory_space<vmem>>, vector<14x128xf32>
    %89 = arith.maximumf %87, %88 : vector<14x128xf32>
    %90 = arith.maximumf %86, %89 : vector<14x128xf32>
    %91 = arith.addf %90, %7 : vector<14x128xf32>
    %cst_45 = arith.constant 0.000000e+00 : f32
    %92 = vector.broadcast %cst_45 : f32 to vector<14x128xf32>
    %93 = arith.maximumf %91, %92 : vector<14x128xf32>
    %94 = arith.truncf %93 : vector<14x128xf32> to vector<14x128xbf16>
    %95 = vector.extract_strided_slice %94 {offsets = [0, 0], sizes = [1, 128], strides = [1, 1]} : vector<14x128xbf16> to vector<1x128xbf16>
    %96 = vector.extract_strided_slice %94 {offsets = [13, 0], sizes = [1, 128], strides = [1, 1]} : vector<14x128xbf16> to vector<1x128xbf16>
    %97 = tpu.concatenate %95, %94, %96 in 0 : vector<1x128xbf16>, vector<14x128xbf16>, vector<1x128xbf16> -> vector<16x128xbf16>
    %c96 = arith.constant 96 : index
    %c0_46 = arith.constant 0 : index
    %98 = vector.load %arg16[%c96, %c0_46] : memref<272x128xbf16, #tpu.memory_space<vmem>>, vector<16x128xbf16>
    tpu.vector_store %arg16[%c96, %c0_46], %97 {strides = array<i32>} : memref<272x128xbf16, #tpu.memory_space<vmem>>, vector<16x128xbf16>,
    %c336 = arith.constant 336 : index
    %c0_47 = arith.constant 0 : index
    %99 = tpu.strided_load %arg15[%c336, %c0_47] {strides = array<i32: 2, 1>} : memref<784x128xf32, #tpu.memory_space<vmem>>, vector<14x128xf32>
    %c337 = arith.constant 337 : index
    %c0_48 = arith.constant 0 : index
    %100 = tpu.strided_load %arg15[%c337, %c0_48] {strides = array<i32: 2, 1>} : memref<784x128xf32, #tpu.memory_space<vmem>>, vector<14x128xf32>
    %101 = arith.maximumf %99, %100 : vector<14x128xf32>
    %c364 = arith.constant 364 : index
    %c0_49 = arith.constant 0 : index
    %102 = tpu.strided_load %arg15[%c364, %c0_49] {strides = array<i32: 2, 1>} : memref<784x128xf32, #tpu.memory_space<vmem>>, vector<14x128xf32>
    %c365 = arith.constant 365 : index
    %c0_50 = arith.constant 0 : index
    %103 = tpu.strided_load %arg15[%c365, %c0_50] {strides = array<i32: 2, 1>} : memref<784x128xf32, #tpu.memory_space<vmem>>, vector<14x128xf32>
    %104 = arith.maximumf %102, %103 : vector<14x128xf32>
    %105 = arith.maximumf %101, %104 : vector<14x128xf32>
    %106 = arith.addf %105, %7 : vector<14x128xf32>
    %cst_51 = arith.constant 0.000000e+00 : f32
    %107 = vector.broadcast %cst_51 : f32 to vector<14x128xf32>
    %108 = arith.maximumf %106, %107 : vector<14x128xf32>
    %109 = arith.truncf %108 : vector<14x128xf32> to vector<14x128xbf16>
    %110 = vector.extract_strided_slice %109 {offsets = [0, 0], sizes = [1, 128], strides = [1, 1]} : vector<14x128xbf16> to vector<1x128xbf16>
    %111 = vector.extract_strided_slice %109 {offsets = [13, 0], sizes = [1, 128], strides = [1, 1]} : vector<14x128xbf16> to vector<1x128xbf16>
    %112 = tpu.concatenate %110, %109, %111 in 0 : vector<1x128xbf16>, vector<14x128xbf16>, vector<1x128xbf16> -> vector<16x128xbf16>
    %c112_52 = arith.constant 112 : index
    %c0_53 = arith.constant 0 : index
    %113 = vector.load %arg16[%c112_52, %c0_53] : memref<272x128xbf16, #tpu.memory_space<vmem>>, vector<16x128xbf16>
    tpu.vector_store %arg16[%c112_52, %c0_53], %112 {strides = array<i32>} : memref<272x128xbf16, #tpu.memory_space<vmem>>, vector<16x128xbf16>,
    %c392 = arith.constant 392 : index
    %c0_54 = arith.constant 0 : index
    %114 = tpu.strided_load %arg15[%c392, %c0_54] {strides = array<i32: 2, 1>} : memref<784x128xf32, #tpu.memory_space<vmem>>, vector<14x128xf32>
    %c393 = arith.constant 393 : index
    %c0_55 = arith.constant 0 : index
    %115 = tpu.strided_load %arg15[%c393, %c0_55] {strides = array<i32: 2, 1>} : memref<784x128xf32, #tpu.memory_space<vmem>>, vector<14x128xf32>
    %116 = arith.maximumf %114, %115 : vector<14x128xf32>
    %c420 = arith.constant 420 : index
    %c0_56 = arith.constant 0 : index
    %117 = tpu.strided_load %arg15[%c420, %c0_56] {strides = array<i32: 2, 1>} : memref<784x128xf32, #tpu.memory_space<vmem>>, vector<14x128xf32>
    %c421 = arith.constant 421 : index
    %c0_57 = arith.constant 0 : index
    %118 = tpu.strided_load %arg15[%c421, %c0_57] {strides = array<i32: 2, 1>} : memref<784x128xf32, #tpu.memory_space<vmem>>, vector<14x128xf32>
    %119 = arith.maximumf %117, %118 : vector<14x128xf32>
    %120 = arith.maximumf %116, %119 : vector<14x128xf32>
    %121 = arith.addf %120, %7 : vector<14x128xf32>
    %cst_58 = arith.constant 0.000000e+00 : f32
    %122 = vector.broadcast %cst_58 : f32 to vector<14x128xf32>
    %123 = arith.maximumf %121, %122 : vector<14x128xf32>
    %124 = arith.truncf %123 : vector<14x128xf32> to vector<14x128xbf16>
    %125 = vector.extract_strided_slice %124 {offsets = [0, 0], sizes = [1, 128], strides = [1, 1]} : vector<14x128xbf16> to vector<1x128xbf16>
    %126 = vector.extract_strided_slice %124 {offsets = [13, 0], sizes = [1, 128], strides = [1, 1]} : vector<14x128xbf16> to vector<1x128xbf16>
    %127 = tpu.concatenate %125, %124, %126 in 0 : vector<1x128xbf16>, vector<14x128xbf16>, vector<1x128xbf16> -> vector<16x128xbf16>
    %c128 = arith.constant 128 : index
    %c0_59 = arith.constant 0 : index
    %128 = vector.load %arg16[%c128, %c0_59] : memref<272x128xbf16, #tpu.memory_space<vmem>>, vector<16x128xbf16>
    tpu.vector_store %arg16[%c128, %c0_59], %127 {strides = array<i32>} : memref<272x128xbf16, #tpu.memory_space<vmem>>, vector<16x128xbf16>,
    %c448 = arith.constant 448 : index
    %c0_60 = arith.constant 0 : index
    %129 = tpu.strided_load %arg15[%c448, %c0_60] {strides = array<i32: 2, 1>} : memref<784x128xf32, #tpu.memory_space<vmem>>, vector<14x128xf32>
    %c449 = arith.constant 449 : index
    %c0_61 = arith.constant 0 : index
    %130 = tpu.strided_load %arg15[%c449, %c0_61] {strides = array<i32: 2, 1>} : memref<784x128xf32, #tpu.memory_space<vmem>>, vector<14x128xf32>
    %131 = arith.maximumf %129, %130 : vector<14x128xf32>
    %c476 = arith.constant 476 : index
    %c0_62 = arith.constant 0 : index
    %132 = tpu.strided_load %arg15[%c476, %c0_62] {strides = array<i32: 2, 1>} : memref<784x128xf32, #tpu.memory_space<vmem>>, vector<14x128xf32>
    %c477 = arith.constant 477 : index
    %c0_63 = arith.constant 0 : index
    %133 = tpu.strided_load %arg15[%c477, %c0_63] {strides = array<i32: 2, 1>} : memref<784x128xf32, #tpu.memory_space<vmem>>, vector<14x128xf32>
    %134 = arith.maximumf %132, %133 : vector<14x128xf32>
    %135 = arith.maximumf %131, %134 : vector<14x128xf32>
    %136 = arith.addf %135, %7 : vector<14x128xf32>
    %cst_64 = arith.constant 0.000000e+00 : f32
    %137 = vector.broadcast %cst_64 : f32 to vector<14x128xf32>
    %138 = arith.maximumf %136, %137 : vector<14x128xf32>
    %139 = arith.truncf %138 : vector<14x128xf32> to vector<14x128xbf16>
    %140 = vector.extract_strided_slice %139 {offsets = [0, 0], sizes = [1, 128], strides = [1, 1]} : vector<14x128xbf16> to vector<1x128xbf16>
    %141 = vector.extract_strided_slice %139 {offsets = [13, 0], sizes = [1, 128], strides = [1, 1]} : vector<14x128xbf16> to vector<1x128xbf16>
    %142 = tpu.concatenate %140, %139, %141 in 0 : vector<1x128xbf16>, vector<14x128xbf16>, vector<1x128xbf16> -> vector<16x128xbf16>
    %c144 = arith.constant 144 : index
    %c0_65 = arith.constant 0 : index
    %143 = vector.load %arg16[%c144, %c0_65] : memref<272x128xbf16, #tpu.memory_space<vmem>>, vector<16x128xbf16>
    tpu.vector_store %arg16[%c144, %c0_65], %142 {strides = array<i32>} : memref<272x128xbf16, #tpu.memory_space<vmem>>, vector<16x128xbf16>,
    %c504 = arith.constant 504 : index
    %c0_66 = arith.constant 0 : index
    %144 = tpu.strided_load %arg15[%c504, %c0_66] {strides = array<i32: 2, 1>} : memref<784x128xf32, #tpu.memory_space<vmem>>, vector<14x128xf32>
    %c505 = arith.constant 505 : index
    %c0_67 = arith.constant 0 : index
    %145 = tpu.strided_load %arg15[%c505, %c0_67] {strides = array<i32: 2, 1>} : memref<784x128xf32, #tpu.memory_space<vmem>>, vector<14x128xf32>
    %146 = arith.maximumf %144, %145 : vector<14x128xf32>
    %c532 = arith.constant 532 : index
    %c0_68 = arith.constant 0 : index
    %147 = tpu.strided_load %arg15[%c532, %c0_68] {strides = array<i32: 2, 1>} : memref<784x128xf32, #tpu.memory_space<vmem>>, vector<14x128xf32>
    %c533 = arith.constant 533 : index
    %c0_69 = arith.constant 0 : index
    %148 = tpu.strided_load %arg15[%c533, %c0_69] {strides = array<i32: 2, 1>} : memref<784x128xf32, #tpu.memory_space<vmem>>, vector<14x128xf32>
    %149 = arith.maximumf %147, %148 : vector<14x128xf32>
    %150 = arith.maximumf %146, %149 : vector<14x128xf32>
    %151 = arith.addf %150, %7 : vector<14x128xf32>
    %cst_70 = arith.constant 0.000000e+00 : f32
    %152 = vector.broadcast %cst_70 : f32 to vector<14x128xf32>
    %153 = arith.maximumf %151, %152 : vector<14x128xf32>
    %154 = arith.truncf %153 : vector<14x128xf32> to vector<14x128xbf16>
    %155 = vector.extract_strided_slice %154 {offsets = [0, 0], sizes = [1, 128], strides = [1, 1]} : vector<14x128xbf16> to vector<1x128xbf16>
    %156 = vector.extract_strided_slice %154 {offsets = [13, 0], sizes = [1, 128], strides = [1, 1]} : vector<14x128xbf16> to vector<1x128xbf16>
    %157 = tpu.concatenate %155, %154, %156 in 0 : vector<1x128xbf16>, vector<14x128xbf16>, vector<1x128xbf16> -> vector<16x128xbf16>
    %c160 = arith.constant 160 : index
    %c0_71 = arith.constant 0 : index
    %158 = vector.load %arg16[%c160, %c0_71] : memref<272x128xbf16, #tpu.memory_space<vmem>>, vector<16x128xbf16>
    tpu.vector_store %arg16[%c160, %c0_71], %157 {strides = array<i32>} : memref<272x128xbf16, #tpu.memory_space<vmem>>, vector<16x128xbf16>,
    %c560 = arith.constant 560 : index
    %c0_72 = arith.constant 0 : index
    %159 = tpu.strided_load %arg15[%c560, %c0_72] {strides = array<i32: 2, 1>} : memref<784x128xf32, #tpu.memory_space<vmem>>, vector<14x128xf32>
    %c561 = arith.constant 561 : index
    %c0_73 = arith.constant 0 : index
    %160 = tpu.strided_load %arg15[%c561, %c0_73] {strides = array<i32: 2, 1>} : memref<784x128xf32, #tpu.memory_space<vmem>>, vector<14x128xf32>
    %161 = arith.maximumf %159, %160 : vector<14x128xf32>
    %c588 = arith.constant 588 : index
    %c0_74 = arith.constant 0 : index
    %162 = tpu.strided_load %arg15[%c588, %c0_74] {strides = array<i32: 2, 1>} : memref<784x128xf32, #tpu.memory_space<vmem>>, vector<14x128xf32>
    %c589 = arith.constant 589 : index
    %c0_75 = arith.constant 0 : index
    %163 = tpu.strided_load %arg15[%c589, %c0_75] {strides = array<i32: 2, 1>} : memref<784x128xf32, #tpu.memory_space<vmem>>, vector<14x128xf32>
    %164 = arith.maximumf %162, %163 : vector<14x128xf32>
    %165 = arith.maximumf %161, %164 : vector<14x128xf32>
    %166 = arith.addf %165, %7 : vector<14x128xf32>
    %cst_76 = arith.constant 0.000000e+00 : f32
    %167 = vector.broadcast %cst_76 : f32 to vector<14x128xf32>
    %168 = arith.maximumf %166, %167 : vector<14x128xf32>
    %169 = arith.truncf %168 : vector<14x128xf32> to vector<14x128xbf16>
    %170 = vector.extract_strided_slice %169 {offsets = [0, 0], sizes = [1, 128], strides = [1, 1]} : vector<14x128xbf16> to vector<1x128xbf16>
    %171 = vector.extract_strided_slice %169 {offsets = [13, 0], sizes = [1, 128], strides = [1, 1]} : vector<14x128xbf16> to vector<1x128xbf16>
    %172 = tpu.concatenate %170, %169, %171 in 0 : vector<1x128xbf16>, vector<14x128xbf16>, vector<1x128xbf16> -> vector<16x128xbf16>
    %c176 = arith.constant 176 : index
    %c0_77 = arith.constant 0 : index
    %173 = vector.load %arg16[%c176, %c0_77] : memref<272x128xbf16, #tpu.memory_space<vmem>>, vector<16x128xbf16>
    tpu.vector_store %arg16[%c176, %c0_77], %172 {strides = array<i32>} : memref<272x128xbf16, #tpu.memory_space<vmem>>, vector<16x128xbf16>,
    %c616 = arith.constant 616 : index
    %c0_78 = arith.constant 0 : index
    %174 = tpu.strided_load %arg15[%c616, %c0_78] {strides = array<i32: 2, 1>} : memref<784x128xf32, #tpu.memory_space<vmem>>, vector<14x128xf32>
    %c617 = arith.constant 617 : index
    %c0_79 = arith.constant 0 : index
    %175 = tpu.strided_load %arg15[%c617, %c0_79] {strides = array<i32: 2, 1>} : memref<784x128xf32, #tpu.memory_space<vmem>>, vector<14x128xf32>
    %176 = arith.maximumf %174, %175 : vector<14x128xf32>
    %c644 = arith.constant 644 : index
    %c0_80 = arith.constant 0 : index
    %177 = tpu.strided_load %arg15[%c644, %c0_80] {strides = array<i32: 2, 1>} : memref<784x128xf32, #tpu.memory_space<vmem>>, vector<14x128xf32>
    %c645 = arith.constant 645 : index
    %c0_81 = arith.constant 0 : index
    %178 = tpu.strided_load %arg15[%c645, %c0_81] {strides = array<i32: 2, 1>} : memref<784x128xf32, #tpu.memory_space<vmem>>, vector<14x128xf32>
    %179 = arith.maximumf %177, %178 : vector<14x128xf32>
    %180 = arith.maximumf %176, %179 : vector<14x128xf32>
    %181 = arith.addf %180, %7 : vector<14x128xf32>
    %cst_82 = arith.constant 0.000000e+00 : f32
    %182 = vector.broadcast %cst_82 : f32 to vector<14x128xf32>
    %183 = arith.maximumf %181, %182 : vector<14x128xf32>
    %184 = arith.truncf %183 : vector<14x128xf32> to vector<14x128xbf16>
    %185 = vector.extract_strided_slice %184 {offsets = [0, 0], sizes = [1, 128], strides = [1, 1]} : vector<14x128xbf16> to vector<1x128xbf16>
    %186 = vector.extract_strided_slice %184 {offsets = [13, 0], sizes = [1, 128], strides = [1, 1]} : vector<14x128xbf16> to vector<1x128xbf16>
    %187 = tpu.concatenate %185, %184, %186 in 0 : vector<1x128xbf16>, vector<14x128xbf16>, vector<1x128xbf16> -> vector<16x128xbf16>
    %c192 = arith.constant 192 : index
    %c0_83 = arith.constant 0 : index
    %188 = vector.load %arg16[%c192, %c0_83] : memref<272x128xbf16, #tpu.memory_space<vmem>>, vector<16x128xbf16>
    tpu.vector_store %arg16[%c192, %c0_83], %187 {strides = array<i32>} : memref<272x128xbf16, #tpu.memory_space<vmem>>, vector<16x128xbf16>,
    %c672 = arith.constant 672 : index
    %c0_84 = arith.constant 0 : index
    %189 = tpu.strided_load %arg15[%c672, %c0_84] {strides = array<i32: 2, 1>} : memref<784x128xf32, #tpu.memory_space<vmem>>, vector<14x128xf32>
    %c673 = arith.constant 673 : index
    %c0_85 = arith.constant 0 : index
    %190 = tpu.strided_load %arg15[%c673, %c0_85] {strides = array<i32: 2, 1>} : memref<784x128xf32, #tpu.memory_space<vmem>>, vector<14x128xf32>
    %191 = arith.maximumf %189, %190 : vector<14x128xf32>
    %c700 = arith.constant 700 : index
    %c0_86 = arith.constant 0 : index
    %192 = tpu.strided_load %arg15[%c700, %c0_86] {strides = array<i32: 2, 1>} : memref<784x128xf32, #tpu.memory_space<vmem>>, vector<14x128xf32>
    %c701 = arith.constant 701 : index
    %c0_87 = arith.constant 0 : index
    %193 = tpu.strided_load %arg15[%c701, %c0_87] {strides = array<i32: 2, 1>} : memref<784x128xf32, #tpu.memory_space<vmem>>, vector<14x128xf32>
    %194 = arith.maximumf %192, %193 : vector<14x128xf32>
    %195 = arith.maximumf %191, %194 : vector<14x128xf32>
    %196 = arith.addf %195, %7 : vector<14x128xf32>
    %cst_88 = arith.constant 0.000000e+00 : f32
    %197 = vector.broadcast %cst_88 : f32 to vector<14x128xf32>
    %198 = arith.maximumf %196, %197 : vector<14x128xf32>
    %199 = arith.truncf %198 : vector<14x128xf32> to vector<14x128xbf16>
    %200 = vector.extract_strided_slice %199 {offsets = [0, 0], sizes = [1, 128], strides = [1, 1]} : vector<14x128xbf16> to vector<1x128xbf16>
    %201 = vector.extract_strided_slice %199 {offsets = [13, 0], sizes = [1, 128], strides = [1, 1]} : vector<14x128xbf16> to vector<1x128xbf16>
    %202 = tpu.concatenate %200, %199, %201 in 0 : vector<1x128xbf16>, vector<14x128xbf16>, vector<1x128xbf16> -> vector<16x128xbf16>
    %c208 = arith.constant 208 : index
    %c0_89 = arith.constant 0 : index
    %203 = vector.load %arg16[%c208, %c0_89] : memref<272x128xbf16, #tpu.memory_space<vmem>>, vector<16x128xbf16>
    tpu.vector_store %arg16[%c208, %c0_89], %202 {strides = array<i32>} : memref<272x128xbf16, #tpu.memory_space<vmem>>, vector<16x128xbf16>,
    %c728 = arith.constant 728 : index
    %c0_90 = arith.constant 0 : index
    %204 = tpu.strided_load %arg15[%c728, %c0_90] {strides = array<i32: 2, 1>} : memref<784x128xf32, #tpu.memory_space<vmem>>, vector<14x128xf32>
    %c729 = arith.constant 729 : index
    %c0_91 = arith.constant 0 : index
    %205 = tpu.strided_load %arg15[%c729, %c0_91] {strides = array<i32: 2, 1>} : memref<784x128xf32, #tpu.memory_space<vmem>>, vector<14x128xf32>
    %206 = arith.maximumf %204, %205 : vector<14x128xf32>
    %c756 = arith.constant 756 : index
    %c0_92 = arith.constant 0 : index
    %207 = tpu.strided_load %arg15[%c756, %c0_92] {strides = array<i32: 2, 1>} : memref<784x128xf32, #tpu.memory_space<vmem>>, vector<14x128xf32>
    %c757 = arith.constant 757 : index
    %c0_93 = arith.constant 0 : index
    %208 = tpu.strided_load %arg15[%c757, %c0_93] {strides = array<i32: 2, 1>} : memref<784x128xf32, #tpu.memory_space<vmem>>, vector<14x128xf32>
    %209 = arith.maximumf %207, %208 : vector<14x128xf32>
    %210 = arith.maximumf %206, %209 : vector<14x128xf32>
    %211 = arith.addf %210, %7 : vector<14x128xf32>
    %cst_94 = arith.constant 0.000000e+00 : f32
    %212 = vector.broadcast %cst_94 : f32 to vector<14x128xf32>
    %213 = arith.maximumf %211, %212 : vector<14x128xf32>
    %214 = arith.truncf %213 : vector<14x128xf32> to vector<14x128xbf16>
    %215 = vector.extract_strided_slice %214 {offsets = [0, 0], sizes = [1, 128], strides = [1, 1]} : vector<14x128xbf16> to vector<1x128xbf16>
    %216 = vector.extract_strided_slice %214 {offsets = [13, 0], sizes = [1, 128], strides = [1, 1]} : vector<14x128xbf16> to vector<1x128xbf16>
    %217 = tpu.concatenate %215, %214, %216 in 0 : vector<1x128xbf16>, vector<14x128xbf16>, vector<1x128xbf16> -> vector<16x128xbf16>
    %c224_95 = arith.constant 224 : index
    %c0_96 = arith.constant 0 : index
    %218 = vector.load %arg16[%c224_95, %c0_96] : memref<272x128xbf16, #tpu.memory_space<vmem>>, vector<16x128xbf16>
    tpu.vector_store %arg16[%c224_95, %c0_96], %217 {strides = array<i32>} : memref<272x128xbf16, #tpu.memory_space<vmem>>, vector<16x128xbf16>,
    %c240 = arith.constant 240 : index
    %c0_97 = arith.constant 0 : index
    %219 = vector.load %arg16[%c240, %c0_97] : memref<272x128xbf16, #tpu.memory_space<vmem>>, vector<16x128xbf16>
    tpu.vector_store %arg16[%c240, %c0_97], %217 {strides = array<i32>} : memref<272x128xbf16, #tpu.memory_space<vmem>>, vector<16x128xbf16>,
    %c0_98 = arith.constant 0 : index
    %c0_99 = arith.constant 0 : index
    %220 = vector.load %arg16[%c0_98, %c0_99] : memref<272x128xbf16, #tpu.memory_space<vmem>>, vector<224x128xbf16>
    %c1_100 = arith.constant 1 : index
    %c0_101 = arith.constant 0 : index
    %221 = vector.load %arg16[%c1_100, %c0_101] : memref<272x128xbf16, #tpu.memory_space<vmem>>, vector<224x128xbf16>
    %c2 = arith.constant 2 : index
    %c0_102 = arith.constant 0 : index
    %222 = vector.load %arg16[%c2, %c0_102] : memref<272x128xbf16, #tpu.memory_space<vmem>>, vector<224x128xbf16>
    %c16_103 = arith.constant 16 : index
    %c0_104 = arith.constant 0 : index
    %223 = vector.load %arg16[%c16_103, %c0_104] : memref<272x128xbf16, #tpu.memory_space<vmem>>, vector<224x128xbf16>
    %c17 = arith.constant 17 : index
    %c0_105 = arith.constant 0 : index
    %224 = vector.load %arg16[%c17, %c0_105] : memref<272x128xbf16, #tpu.memory_space<vmem>>, vector<224x128xbf16>
    %c18 = arith.constant 18 : index
    %c0_106 = arith.constant 0 : index
    %225 = vector.load %arg16[%c18, %c0_106] : memref<272x128xbf16, #tpu.memory_space<vmem>>, vector<224x128xbf16>
    %c32_107 = arith.constant 32 : index
    %c0_108 = arith.constant 0 : index
    %226 = vector.load %arg16[%c32_107, %c0_108] : memref<272x128xbf16, #tpu.memory_space<vmem>>, vector<224x128xbf16>
    %c33 = arith.constant 33 : index
    %c0_109 = arith.constant 0 : index
    %227 = vector.load %arg16[%c33, %c0_109] : memref<272x128xbf16, #tpu.memory_space<vmem>>, vector<224x128xbf16>
    %c34 = arith.constant 34 : index
    %c0_110 = arith.constant 0 : index
    %228 = vector.load %arg16[%c34, %c0_110] : memref<272x128xbf16, #tpu.memory_space<vmem>>, vector<224x128xbf16>
    %229 = tpu.concatenate %220, %221, %222, %223, %224, %225, %226, %227, %228 in 1 : vector<224x128xbf16>, vector<224x128xbf16>, vector<224x128xbf16>, vector<224x128xbf16>, vector<224x128xbf16>, vector<224x128xbf16>, vector<224x128xbf16>, vector<224x128xbf16>, vector<224x128xbf16> -> vector<224x1152xbf16>
    %c0_111 = arith.constant 0 : index
    %c0_112 = arith.constant 0 : index
    %230 = vector.load %arg4[%c0_111, %c0_112] : memref<1152x128xbf16, #tpu.memory_space<vmem>>, vector<1152x128xbf16>
    %cst_113 = arith.constant dense<0.000000e+00> : vector<224x128xf32>
    %231 = tpu.matmul %229, %230, %cst_113 {dimension_numbers = #tpu.dot_dimension_numbers<[1], [0], [0], [1], [0, 0, 1, 1], [], []>} : vector<224x1152xbf16>, vector<1152x128xbf16>, vector<224x128xf32> -> vector<224x128xf32>
    %c0_114 = arith.constant 0 : index
    %c0_115 = arith.constant 0 : index
    %232 = vector.load %arg17[%c0_114, %c0_115] : memref<224x128xf32, #tpu.memory_space<vmem>>, vector<224x128xf32>
    tpu.vector_store %arg17[%c0_114, %c0_115], %231 {strides = array<i32>} : memref<224x128xf32, #tpu.memory_space<vmem>>, vector<224x128xf32>,
    %c0_116 = arith.constant 0 : index
    %c0_117 = arith.constant 0 : index
    %233 = vector.load %arg5[%c0_116, %c0_117] : memref<1x128xf32, #tpu.memory_space<vmem>>, vector<1x128xf32>
    %234 = vector.shape_cast %233 : vector<1x128xf32> to vector<1x128xf32>
    %235 = vector.broadcast %234 : vector<1x128xf32> to vector<7x128xf32>
    %c0_118 = arith.constant 0 : index
    %c0_119 = arith.constant 0 : index
    %236 = tpu.strided_load %arg17[%c0_118, %c0_119] {strides = array<i32: 2, 1>} : memref<224x128xf32, #tpu.memory_space<vmem>>, vector<7x128xf32>
    %c1_120 = arith.constant 1 : index
    %c0_121 = arith.constant 0 : index
    %237 = tpu.strided_load %arg17[%c1_120, %c0_121] {strides = array<i32: 2, 1>} : memref<224x128xf32, #tpu.memory_space<vmem>>, vector<7x128xf32>
    %238 = arith.maximumf %236, %237 : vector<7x128xf32>
    %c16_122 = arith.constant 16 : index
    %c0_123 = arith.constant 0 : index
    %239 = tpu.strided_load %arg17[%c16_122, %c0_123] {strides = array<i32: 2, 1>} : memref<224x128xf32, #tpu.memory_space<vmem>>, vector<7x128xf32>
    %c17_124 = arith.constant 17 : index
    %c0_125 = arith.constant 0 : index
    %240 = tpu.strided_load %arg17[%c17_124, %c0_125] {strides = array<i32: 2, 1>} : memref<224x128xf32, #tpu.memory_space<vmem>>, vector<7x128xf32>
    %241 = arith.maximumf %239, %240 : vector<7x128xf32>
    %242 = arith.maximumf %238, %241 : vector<7x128xf32>
    %243 = arith.addf %242, %235 : vector<7x128xf32>
    %cst_126 = arith.constant 0.000000e+00 : f32
    %244 = vector.broadcast %cst_126 : f32 to vector<7x128xf32>
    %245 = arith.maximumf %243, %244 : vector<7x128xf32>
    %246 = arith.truncf %245 : vector<7x128xf32> to vector<7x128xbf16>
    %247 = vector.extract_strided_slice %246 {offsets = [0, 0], sizes = [1, 128], strides = [1, 1]} : vector<7x128xbf16> to vector<1x128xbf16>
    %248 = vector.extract_strided_slice %246 {offsets = [6, 0], sizes = [1, 128], strides = [1, 1]} : vector<7x128xbf16> to vector<1x128xbf16>
    %249 = tpu.concatenate %247, %246, %248 in 0 : vector<1x128xbf16>, vector<7x128xbf16>, vector<1x128xbf16> -> vector<9x128xbf16>
    %c9 = arith.constant 9 : index
    %c0_127 = arith.constant 0 : index
    %250 = vector.load %arg18[%c9, %c0_127] : memref<88x128xbf16, #tpu.memory_space<vmem>>, vector<9x128xbf16>
    tpu.vector_store %arg18[%c9, %c0_127], %249 {strides = array<i32>} : memref<88x128xbf16, #tpu.memory_space<vmem>>, vector<9x128xbf16>,
    %c0_128 = arith.constant 0 : index
    %c0_129 = arith.constant 0 : index
    %251 = vector.load %arg18[%c0_128, %c0_129] : memref<88x128xbf16, #tpu.memory_space<vmem>>, vector<9x128xbf16>
    tpu.vector_store %arg18[%c0_128, %c0_129], %249 {strides = array<i32>} : memref<88x128xbf16, #tpu.memory_space<vmem>>, vector<9x128xbf16>,
    %c32_130 = arith.constant 32 : index
    %c0_131 = arith.constant 0 : index
    %252 = tpu.strided_load %arg17[%c32_130, %c0_131] {strides = array<i32: 2, 1>} : memref<224x128xf32, #tpu.memory_space<vmem>>, vector<7x128xf32>
    %c33_132 = arith.constant 33 : index
    %c0_133 = arith.constant 0 : index
    %253 = tpu.strided_load %arg17[%c33_132, %c0_133] {strides = array<i32: 2, 1>} : memref<224x128xf32, #tpu.memory_space<vmem>>, vector<7x128xf32>
    %254 = arith.maximumf %252, %253 : vector<7x128xf32>
    %c48_134 = arith.constant 48 : index
    %c0_135 = arith.constant 0 : index
    %255 = tpu.strided_load %arg17[%c48_134, %c0_135] {strides = array<i32: 2, 1>} : memref<224x128xf32, #tpu.memory_space<vmem>>, vector<7x128xf32>
    %c49 = arith.constant 49 : index
    %c0_136 = arith.constant 0 : index
    %256 = tpu.strided_load %arg17[%c49, %c0_136] {strides = array<i32: 2, 1>} : memref<224x128xf32, #tpu.memory_space<vmem>>, vector<7x128xf32>
    %257 = arith.maximumf %255, %256 : vector<7x128xf32>
    %258 = arith.maximumf %254, %257 : vector<7x128xf32>
    %259 = arith.addf %258, %235 : vector<7x128xf32>
    %cst_137 = arith.constant 0.000000e+00 : f32
    %260 = vector.broadcast %cst_137 : f32 to vector<7x128xf32>
    %261 = arith.maximumf %259, %260 : vector<7x128xf32>
    %262 = arith.truncf %261 : vector<7x128xf32> to vector<7x128xbf16>
    %263 = vector.extract_strided_slice %262 {offsets = [0, 0], sizes = [1, 128], strides = [1, 1]} : vector<7x128xbf16> to vector<1x128xbf16>
    %264 = vector.extract_strided_slice %262 {offsets = [6, 0], sizes = [1, 128], strides = [1, 1]} : vector<7x128xbf16> to vector<1x128xbf16>
    %265 = tpu.concatenate %263, %262, %264 in 0 : vector<1x128xbf16>, vector<7x128xbf16>, vector<1x128xbf16> -> vector<9x128xbf16>
    %c18_138 = arith.constant 18 : index
    %c0_139 = arith.constant 0 : index
    %266 = vector.load %arg18[%c18_138, %c0_139] : memref<88x128xbf16, #tpu.memory_space<vmem>>, vector<9x128xbf16>
    tpu.vector_store %arg18[%c18_138, %c0_139], %265 {strides = array<i32>} : memref<88x128xbf16, #tpu.memory_space<vmem>>, vector<9x128xbf16>,
    %c64_140 = arith.constant 64 : index
    %c0_141 = arith.constant 0 : index
    %267 = tpu.strided_load %arg17[%c64_140, %c0_141] {strides = array<i32: 2, 1>} : memref<224x128xf32, #tpu.memory_space<vmem>>, vector<7x128xf32>
    %c65 = arith.constant 65 : index
    %c0_142 = arith.constant 0 : index
    %268 = tpu.strided_load %arg17[%c65, %c0_142] {strides = array<i32: 2, 1>} : memref<224x128xf32, #tpu.memory_space<vmem>>, vector<7x128xf32>
    %269 = arith.maximumf %267, %268 : vector<7x128xf32>
    %c80_143 = arith.constant 80 : index
    %c0_144 = arith.constant 0 : index
    %270 = tpu.strided_load %arg17[%c80_143, %c0_144] {strides = array<i32: 2, 1>} : memref<224x128xf32, #tpu.memory_space<vmem>>, vector<7x128xf32>
    %c81 = arith.constant 81 : index
    %c0_145 = arith.constant 0 : index
    %271 = tpu.strided_load %arg17[%c81, %c0_145] {strides = array<i32: 2, 1>} : memref<224x128xf32, #tpu.memory_space<vmem>>, vector<7x128xf32>
    %272 = arith.maximumf %270, %271 : vector<7x128xf32>
    %273 = arith.maximumf %269, %272 : vector<7x128xf32>
    %274 = arith.addf %273, %235 : vector<7x128xf32>
    %cst_146 = arith.constant 0.000000e+00 : f32
    %275 = vector.broadcast %cst_146 : f32 to vector<7x128xf32>
    %276 = arith.maximumf %274, %275 : vector<7x128xf32>
    %277 = arith.truncf %276 : vector<7x128xf32> to vector<7x128xbf16>
    %278 = vector.extract_strided_slice %277 {offsets = [0, 0], sizes = [1, 128], strides = [1, 1]} : vector<7x128xbf16> to vector<1x128xbf16>
    %279 = vector.extract_strided_slice %277 {offsets = [6, 0], sizes = [1, 128], strides = [1, 1]} : vector<7x128xbf16> to vector<1x128xbf16>
    %280 = tpu.concatenate %278, %277, %279 in 0 : vector<1x128xbf16>, vector<7x128xbf16>, vector<1x128xbf16> -> vector<9x128xbf16>
    %c27 = arith.constant 27 : index
    %c0_147 = arith.constant 0 : index
    %281 = vector.load %arg18[%c27, %c0_147] : memref<88x128xbf16, #tpu.memory_space<vmem>>, vector<9x128xbf16>
    tpu.vector_store %arg18[%c27, %c0_147], %280 {strides = array<i32>} : memref<88x128xbf16, #tpu.memory_space<vmem>>, vector<9x128xbf16>,
    %c96_148 = arith.constant 96 : index
    %c0_149 = arith.constant 0 : index
    %282 = tpu.strided_load %arg17[%c96_148, %c0_149] {strides = array<i32: 2, 1>} : memref<224x128xf32, #tpu.memory_space<vmem>>, vector<7x128xf32>
    %c97 = arith.constant 97 : index
    %c0_150 = arith.constant 0 : index
    %283 = tpu.strided_load %arg17[%c97, %c0_150] {strides = array<i32: 2, 1>} : memref<224x128xf32, #tpu.memory_space<vmem>>, vector<7x128xf32>
    %284 = arith.maximumf %282, %283 : vector<7x128xf32>
    %c112_151 = arith.constant 112 : index
    %c0_152 = arith.constant 0 : index
    %285 = tpu.strided_load %arg17[%c112_151, %c0_152] {strides = array<i32: 2, 1>} : memref<224x128xf32, #tpu.memory_space<vmem>>, vector<7x128xf32>
    %c113_153 = arith.constant 113 : index
    %c0_154 = arith.constant 0 : index
    %286 = tpu.strided_load %arg17[%c113_153, %c0_154] {strides = array<i32: 2, 1>} : memref<224x128xf32, #tpu.memory_space<vmem>>, vector<7x128xf32>
    %287 = arith.maximumf %285, %286 : vector<7x128xf32>
    %288 = arith.maximumf %284, %287 : vector<7x128xf32>
    %289 = arith.addf %288, %235 : vector<7x128xf32>
    %cst_155 = arith.constant 0.000000e+00 : f32
    %290 = vector.broadcast %cst_155 : f32 to vector<7x128xf32>
    %291 = arith.maximumf %289, %290 : vector<7x128xf32>
    %292 = arith.truncf %291 : vector<7x128xf32> to vector<7x128xbf16>
    %293 = vector.extract_strided_slice %292 {offsets = [0, 0], sizes = [1, 128], strides = [1, 1]} : vector<7x128xbf16> to vector<1x128xbf16>
    %294 = vector.extract_strided_slice %292 {offsets = [6, 0], sizes = [1, 128], strides = [1, 1]} : vector<7x128xbf16> to vector<1x128xbf16>
    %295 = tpu.concatenate %293, %292, %294 in 0 : vector<1x128xbf16>, vector<7x128xbf16>, vector<1x128xbf16> -> vector<9x128xbf16>
    %c36 = arith.constant 36 : index
    %c0_156 = arith.constant 0 : index
    %296 = vector.load %arg18[%c36, %c0_156] : memref<88x128xbf16, #tpu.memory_space<vmem>>, vector<9x128xbf16>
    tpu.vector_store %arg18[%c36, %c0_156], %295 {strides = array<i32>} : memref<88x128xbf16, #tpu.memory_space<vmem>>, vector<9x128xbf16>,
    %c128_157 = arith.constant 128 : index
    %c0_158 = arith.constant 0 : index
    %297 = tpu.strided_load %arg17[%c128_157, %c0_158] {strides = array<i32: 2, 1>} : memref<224x128xf32, #tpu.memory_space<vmem>>, vector<7x128xf32>
    %c129 = arith.constant 129 : index
    %c0_159 = arith.constant 0 : index
    %298 = tpu.strided_load %arg17[%c129, %c0_159] {strides = array<i32: 2, 1>} : memref<224x128xf32, #tpu.memory_space<vmem>>, vector<7x128xf32>
    %299 = arith.maximumf %297, %298 : vector<7x128xf32>
    %c144_160 = arith.constant 144 : index
    %c0_161 = arith.constant 0 : index
    %300 = tpu.strided_load %arg17[%c144_160, %c0_161] {strides = array<i32: 2, 1>} : memref<224x128xf32, #tpu.memory_space<vmem>>, vector<7x128xf32>
    %c145 = arith.constant 145 : index
    %c0_162 = arith.constant 0 : index
    %301 = tpu.strided_load %arg17[%c145, %c0_162] {strides = array<i32: 2, 1>} : memref<224x128xf32, #tpu.memory_space<vmem>>, vector<7x128xf32>
    %302 = arith.maximumf %300, %301 : vector<7x128xf32>
    %303 = arith.maximumf %299, %302 : vector<7x128xf32>
    %304 = arith.addf %303, %235 : vector<7x128xf32>
    %cst_163 = arith.constant 0.000000e+00 : f32
    %305 = vector.broadcast %cst_163 : f32 to vector<7x128xf32>
    %306 = arith.maximumf %304, %305 : vector<7x128xf32>
    %307 = arith.truncf %306 : vector<7x128xf32> to vector<7x128xbf16>
    %308 = vector.extract_strided_slice %307 {offsets = [0, 0], sizes = [1, 128], strides = [1, 1]} : vector<7x128xbf16> to vector<1x128xbf16>
    %309 = vector.extract_strided_slice %307 {offsets = [6, 0], sizes = [1, 128], strides = [1, 1]} : vector<7x128xbf16> to vector<1x128xbf16>
    %310 = tpu.concatenate %308, %307, %309 in 0 : vector<1x128xbf16>, vector<7x128xbf16>, vector<1x128xbf16> -> vector<9x128xbf16>
    %c45 = arith.constant 45 : index
    %c0_164 = arith.constant 0 : index
    %311 = vector.load %arg18[%c45, %c0_164] : memref<88x128xbf16, #tpu.memory_space<vmem>>, vector<9x128xbf16>
    tpu.vector_store %arg18[%c45, %c0_164], %310 {strides = array<i32>} : memref<88x128xbf16, #tpu.memory_space<vmem>>, vector<9x128xbf16>,
    %c160_165 = arith.constant 160 : index
    %c0_166 = arith.constant 0 : index
    %312 = tpu.strided_load %arg17[%c160_165, %c0_166] {strides = array<i32: 2, 1>} : memref<224x128xf32, #tpu.memory_space<vmem>>, vector<7x128xf32>
    %c161 = arith.constant 161 : index
    %c0_167 = arith.constant 0 : index
    %313 = tpu.strided_load %arg17[%c161, %c0_167] {strides = array<i32: 2, 1>} : memref<224x128xf32, #tpu.memory_space<vmem>>, vector<7x128xf32>
    %314 = arith.maximumf %312, %313 : vector<7x128xf32>
    %c176_168 = arith.constant 176 : index
    %c0_169 = arith.constant 0 : index
    %315 = tpu.strided_load %arg17[%c176_168, %c0_169] {strides = array<i32: 2, 1>} : memref<224x128xf32, #tpu.memory_space<vmem>>, vector<7x128xf32>
    %c177 = arith.constant 177 : index
    %c0_170 = arith.constant 0 : index
    %316 = tpu.strided_load %arg17[%c177, %c0_170] {strides = array<i32: 2, 1>} : memref<224x128xf32, #tpu.memory_space<vmem>>, vector<7x128xf32>
    %317 = arith.maximumf %315, %316 : vector<7x128xf32>
    %318 = arith.maximumf %314, %317 : vector<7x128xf32>
    %319 = arith.addf %318, %235 : vector<7x128xf32>
    %cst_171 = arith.constant 0.000000e+00 : f32
    %320 = vector.broadcast %cst_171 : f32 to vector<7x128xf32>
    %321 = arith.maximumf %319, %320 : vector<7x128xf32>
    %322 = arith.truncf %321 : vector<7x128xf32> to vector<7x128xbf16>
    %323 = vector.extract_strided_slice %322 {offsets = [0, 0], sizes = [1, 128], strides = [1, 1]} : vector<7x128xbf16> to vector<1x128xbf16>
    %324 = vector.extract_strided_slice %322 {offsets = [6, 0], sizes = [1, 128], strides = [1, 1]} : vector<7x128xbf16> to vector<1x128xbf16>
    %325 = tpu.concatenate %323, %322, %324 in 0 : vector<1x128xbf16>, vector<7x128xbf16>, vector<1x128xbf16> -> vector<9x128xbf16>
    %c54 = arith.constant 54 : index
    %c0_172 = arith.constant 0 : index
    %326 = vector.load %arg18[%c54, %c0_172] : memref<88x128xbf16, #tpu.memory_space<vmem>>, vector<9x128xbf16>
    tpu.vector_store %arg18[%c54, %c0_172], %325 {strides = array<i32>} : memref<88x128xbf16, #tpu.memory_space<vmem>>, vector<9x128xbf16>,
    %c192_173 = arith.constant 192 : index
    %c0_174 = arith.constant 0 : index
    %327 = tpu.strided_load %arg17[%c192_173, %c0_174] {strides = array<i32: 2, 1>} : memref<224x128xf32, #tpu.memory_space<vmem>>, vector<7x128xf32>
    %c193 = arith.constant 193 : index
    %c0_175 = arith.constant 0 : index
    %328 = tpu.strided_load %arg17[%c193, %c0_175] {strides = array<i32: 2, 1>} : memref<224x128xf32, #tpu.memory_space<vmem>>, vector<7x128xf32>
    %329 = arith.maximumf %327, %328 : vector<7x128xf32>
    %c208_176 = arith.constant 208 : index
    %c0_177 = arith.constant 0 : index
    %330 = tpu.strided_load %arg17[%c208_176, %c0_177] {strides = array<i32: 2, 1>} : memref<224x128xf32, #tpu.memory_space<vmem>>, vector<7x128xf32>
    %c209 = arith.constant 209 : index
    %c0_178 = arith.constant 0 : index
    %331 = tpu.strided_load %arg17[%c209, %c0_178] {strides = array<i32: 2, 1>} : memref<224x128xf32, #tpu.memory_space<vmem>>, vector<7x128xf32>
    %332 = arith.maximumf %330, %331 : vector<7x128xf32>
    %333 = arith.maximumf %329, %332 : vector<7x128xf32>
    %334 = arith.addf %333, %235 : vector<7x128xf32>
    %cst_179 = arith.constant 0.000000e+00 : f32
    %335 = vector.broadcast %cst_179 : f32 to vector<7x128xf32>
    %336 = arith.maximumf %334, %335 : vector<7x128xf32>
    %337 = arith.truncf %336 : vector<7x128xf32> to vector<7x128xbf16>
    %338 = vector.extract_strided_slice %337 {offsets = [0, 0], sizes = [1, 128], strides = [1, 1]} : vector<7x128xbf16> to vector<1x128xbf16>
    %339 = vector.extract_strided_slice %337 {offsets = [6, 0], sizes = [1, 128], strides = [1, 1]} : vector<7x128xbf16> to vector<1x128xbf16>
    %340 = tpu.concatenate %338, %337, %339 in 0 : vector<1x128xbf16>, vector<7x128xbf16>, vector<1x128xbf16> -> vector<9x128xbf16>
    %c63 = arith.constant 63 : index
    %c0_180 = arith.constant 0 : index
    %341 = vector.load %arg18[%c63, %c0_180] : memref<88x128xbf16, #tpu.memory_space<vmem>>, vector<9x128xbf16>
    tpu.vector_store %arg18[%c63, %c0_180], %340 {strides = array<i32>} : memref<88x128xbf16, #tpu.memory_space<vmem>>, vector<9x128xbf16>,
    %c72 = arith.constant 72 : index
    %c0_181 = arith.constant 0 : index
    %342 = vector.load %arg18[%c72, %c0_181] : memref<88x128xbf16, #tpu.memory_space<vmem>>, vector<9x128xbf16>
    tpu.vector_store %arg18[%c72, %c0_181], %340 {strides = array<i32>} : memref<88x128xbf16, #tpu.memory_space<vmem>>, vector<9x128xbf16>,
    %c0_182 = arith.constant 0 : index
    %c0_183 = arith.constant 0 : index
    %343 = vector.load %arg18[%c0_182, %c0_183] : memref<88x128xbf16, #tpu.memory_space<vmem>>, vector<63x128xbf16>
    %c1_184 = arith.constant 1 : index
    %c0_185 = arith.constant 0 : index
    %344 = vector.load %arg18[%c1_184, %c0_185] : memref<88x128xbf16, #tpu.memory_space<vmem>>, vector<63x128xbf16>
    %c2_186 = arith.constant 2 : index
    %c0_187 = arith.constant 0 : index
    %345 = vector.load %arg18[%c2_186, %c0_187] : memref<88x128xbf16, #tpu.memory_space<vmem>>, vector<63x128xbf16>
    %c9_188 = arith.constant 9 : index
    %c0_189 = arith.constant 0 : index
    %346 = vector.load %arg18[%c9_188, %c0_189] : memref<88x128xbf16, #tpu.memory_space<vmem>>, vector<63x128xbf16>
    %c10 = arith.constant 10 : index
    %c0_190 = arith.constant 0 : index
    %347 = vector.load %arg18[%c10, %c0_190] : memref<88x128xbf16, #tpu.memory_space<vmem>>, vector<63x128xbf16>
    %c11 = arith.constant 11 : index
    %c0_191 = arith.constant 0 : index
    %348 = vector.load %arg18[%c11, %c0_191] : memref<88x128xbf16, #tpu.memory_space<vmem>>, vector<63x128xbf16>
    %c18_192 = arith.constant 18 : index
    %c0_193 = arith.constant 0 : index
    %349 = vector.load %arg18[%c18_192, %c0_193] : memref<88x128xbf16, #tpu.memory_space<vmem>>, vector<63x128xbf16>
    %c19 = arith.constant 19 : index
    %c0_194 = arith.constant 0 : index
    %350 = vector.load %arg18[%c19, %c0_194] : memref<88x128xbf16, #tpu.memory_space<vmem>>, vector<63x128xbf16>
    %c20 = arith.constant 20 : index
    %c0_195 = arith.constant 0 : index
    %351 = vector.load %arg18[%c20, %c0_195] : memref<88x128xbf16, #tpu.memory_space<vmem>>, vector<63x128xbf16>
    %352 = tpu.concatenate %343, %344, %345, %346, %347, %348, %349, %350, %351 in 1 : vector<63x128xbf16>, vector<63x128xbf16>, vector<63x128xbf16>, vector<63x128xbf16>, vector<63x128xbf16>, vector<63x128xbf16>, vector<63x128xbf16>, vector<63x128xbf16>, vector<63x128xbf16> -> vector<63x1152xbf16>
    %c0_196 = arith.constant 0 : index
    %c0_197 = arith.constant 0 : index
    %353 = vector.load %arg6[%c0_196, %c0_197] : memref<1152x128xbf16, #tpu.memory_space<vmem>>, vector<1152x128xbf16>
    %cst_198 = arith.constant dense<0.000000e+00> : vector<63x128xf32>
    %354 = tpu.matmul %352, %353, %cst_198 {dimension_numbers = #tpu.dot_dimension_numbers<[1], [0], [0], [1], [0, 0, 1, 1], [], []>} : vector<63x1152xbf16>, vector<1152x128xbf16>, vector<63x128xf32> -> vector<63x128xf32>
    %c0_199 = arith.constant 0 : index
    %c0_200 = arith.constant 0 : index
    %355 = vector.load %arg7[%c0_199, %c0_200] : memref<1x128xf32, #tpu.memory_space<vmem>>, vector<1x128xf32>
    %356 = vector.broadcast %355 : vector<1x128xf32> to vector<63x128xf32>
    %357 = arith.addf %354, %356 : vector<63x128xf32>
    %c0_201 = arith.constant 0 : index
    %c0_202 = arith.constant 0 : index
    %358 = vector.load %arg19[%c0_201, %c0_202] : memref<64x128xf32, #tpu.memory_space<vmem>>, vector<63x128xf32>
    tpu.vector_store %arg19[%c0_201, %c0_202], %357 {strides = array<i32>} : memref<64x128xf32, #tpu.memory_space<vmem>>, vector<63x128xf32>,
    %c0_203 = arith.constant 0 : index
    %c0_204 = arith.constant 0 : index
    %359 = vector.load %arg19[%c0_203, %c0_204] : memref<64x128xf32, #tpu.memory_space<vmem>>, vector<7x128xf32>
    %360 = arith.truncf %359 : vector<7x128xf32> to vector<7x128xbf16>
    %361 = vector.extract_strided_slice %360 {offsets = [0, 0], sizes = [1, 128], strides = [1, 1]} : vector<7x128xbf16> to vector<1x128xbf16>
    %362 = vector.extract_strided_slice %360 {offsets = [6, 0], sizes = [1, 128], strides = [1, 1]} : vector<7x128xbf16> to vector<1x128xbf16>
    %363 = tpu.concatenate %361, %360, %362 in 0 : vector<1x128xbf16>, vector<7x128xbf16>, vector<1x128xbf16> -> vector<9x128xbf16>
    %c9_205 = arith.constant 9 : index
    %c0_206 = arith.constant 0 : index
    %364 = vector.load %arg20[%c9_205, %c0_206] : memref<88x128xbf16, #tpu.memory_space<vmem>>, vector<9x128xbf16>
    tpu.vector_store %arg20[%c9_205, %c0_206], %363 {strides = array<i32>} : memref<88x128xbf16, #tpu.memory_space<vmem>>, vector<9x128xbf16>,
    %c0_207 = arith.constant 0 : index
    %c0_208 = arith.constant 0 : index
    %365 = vector.load %arg20[%c0_207, %c0_208] : memref<88x128xbf16, #tpu.memory_space<vmem>>, vector<9x128xbf16>
    tpu.vector_store %arg20[%c0_207, %c0_208], %363 {strides = array<i32>} : memref<88x128xbf16, #tpu.memory_space<vmem>>, vector<9x128xbf16>,
    %c9_209 = arith.constant 9 : index
    %c0_210 = arith.constant 0 : index
    %366 = vector.load %arg19[%c9_209, %c0_210] : memref<64x128xf32, #tpu.memory_space<vmem>>, vector<7x128xf32>
    %367 = arith.truncf %366 : vector<7x128xf32> to vector<7x128xbf16>
    %368 = vector.extract_strided_slice %367 {offsets = [0, 0], sizes = [1, 128], strides = [1, 1]} : vector<7x128xbf16> to vector<1x128xbf16>
    %369 = vector.extract_strided_slice %367 {offsets = [6, 0], sizes = [1, 128], strides = [1, 1]} : vector<7x128xbf16> to vector<1x128xbf16>
    %370 = tpu.concatenate %368, %367, %369 in 0 : vector<1x128xbf16>, vector<7x128xbf16>, vector<1x128xbf16> -> vector<9x128xbf16>
    %c18_211 = arith.constant 18 : index
    %c0_212 = arith.constant 0 : index
    %371 = vector.load %arg20[%c18_211, %c0_212] : memref<88x128xbf16, #tpu.memory_space<vmem>>, vector<9x128xbf16>
    tpu.vector_store %arg20[%c18_211, %c0_212], %370 {strides = array<i32>} : memref<88x128xbf16, #tpu.memory_space<vmem>>, vector<9x128xbf16>,
    %c18_213 = arith.constant 18 : index
    %c0_214 = arith.constant 0 : index
    %372 = vector.load %arg19[%c18_213, %c0_214] : memref<64x128xf32, #tpu.memory_space<vmem>>, vector<7x128xf32>
    %373 = arith.truncf %372 : vector<7x128xf32> to vector<7x128xbf16>
    %374 = vector.extract_strided_slice %373 {offsets = [0, 0], sizes = [1, 128], strides = [1, 1]} : vector<7x128xbf16> to vector<1x128xbf16>
    %375 = vector.extract_strided_slice %373 {offsets = [6, 0], sizes = [1, 128], strides = [1, 1]} : vector<7x128xbf16> to vector<1x128xbf16>
    %376 = tpu.concatenate %374, %373, %375 in 0 : vector<1x128xbf16>, vector<7x128xbf16>, vector<1x128xbf16> -> vector<9x128xbf16>
    %c27_215 = arith.constant 27 : index
    %c0_216 = arith.constant 0 : index
    %377 = vector.load %arg20[%c27_215, %c0_216] : memref<88x128xbf16, #tpu.memory_space<vmem>>, vector<9x128xbf16>
    tpu.vector_store %arg20[%c27_215, %c0_216], %376 {strides = array<i32>} : memref<88x128xbf16, #tpu.memory_space<vmem>>, vector<9x128xbf16>,
    %c27_217 = arith.constant 27 : index
    %c0_218 = arith.constant 0 : index
    %378 = vector.load %arg19[%c27_217, %c0_218] : memref<64x128xf32, #tpu.memory_space<vmem>>, vector<7x128xf32>
    %379 = arith.truncf %378 : vector<7x128xf32> to vector<7x128xbf16>
    %380 = vector.extract_strided_slice %379 {offsets = [0, 0], sizes = [1, 128], strides = [1, 1]} : vector<7x128xbf16> to vector<1x128xbf16>
    %381 = vector.extract_strided_slice %379 {offsets = [6, 0], sizes = [1, 128], strides = [1, 1]} : vector<7x128xbf16> to vector<1x128xbf16>
    %382 = tpu.concatenate %380, %379, %381 in 0 : vector<1x128xbf16>, vector<7x128xbf16>, vector<1x128xbf16> -> vector<9x128xbf16>
    %c36_219 = arith.constant 36 : index
    %c0_220 = arith.constant 0 : index
    %383 = vector.load %arg20[%c36_219, %c0_220] : memref<88x128xbf16, #tpu.memory_space<vmem>>, vector<9x128xbf16>
    tpu.vector_store %arg20[%c36_219, %c0_220], %382 {strides = array<i32>} : memref<88x128xbf16, #tpu.memory_space<vmem>>, vector<9x128xbf16>,
    %c36_221 = arith.constant 36 : index
    %c0_222 = arith.constant 0 : index
    %384 = vector.load %arg19[%c36_221, %c0_222] : memref<64x128xf32, #tpu.memory_space<vmem>>, vector<7x128xf32>
    %385 = arith.truncf %384 : vector<7x128xf32> to vector<7x128xbf16>
    %386 = vector.extract_strided_slice %385 {offsets = [0, 0], sizes = [1, 128], strides = [1, 1]} : vector<7x128xbf16> to vector<1x128xbf16>
    %387 = vector.extract_strided_slice %385 {offsets = [6, 0], sizes = [1, 128], strides = [1, 1]} : vector<7x128xbf16> to vector<1x128xbf16>
    %388 = tpu.concatenate %386, %385, %387 in 0 : vector<1x128xbf16>, vector<7x128xbf16>, vector<1x128xbf16> -> vector<9x128xbf16>
    %c45_223 = arith.constant 45 : index
    %c0_224 = arith.constant 0 : index
    %389 = vector.load %arg20[%c45_223, %c0_224] : memref<88x128xbf16, #tpu.memory_space<vmem>>, vector<9x128xbf16>
    tpu.vector_store %arg20[%c45_223, %c0_224], %388 {strides = array<i32>} : memref<88x128xbf16, #tpu.memory_space<vmem>>, vector<9x128xbf16>,
    %c45_225 = arith.constant 45 : index
    %c0_226 = arith.constant 0 : index
    %390 = vector.load %arg19[%c45_225, %c0_226] : memref<64x128xf32, #tpu.memory_space<vmem>>, vector<7x128xf32>
    %391 = arith.truncf %390 : vector<7x128xf32> to vector<7x128xbf16>
    %392 = vector.extract_strided_slice %391 {offsets = [0, 0], sizes = [1, 128], strides = [1, 1]} : vector<7x128xbf16> to vector<1x128xbf16>
    %393 = vector.extract_strided_slice %391 {offsets = [6, 0], sizes = [1, 128], strides = [1, 1]} : vector<7x128xbf16> to vector<1x128xbf16>
    %394 = tpu.concatenate %392, %391, %393 in 0 : vector<1x128xbf16>, vector<7x128xbf16>, vector<1x128xbf16> -> vector<9x128xbf16>
    %c54_227 = arith.constant 54 : index
    %c0_228 = arith.constant 0 : index
    %395 = vector.load %arg20[%c54_227, %c0_228] : memref<88x128xbf16, #tpu.memory_space<vmem>>, vector<9x128xbf16>
    tpu.vector_store %arg20[%c54_227, %c0_228], %394 {strides = array<i32>} : memref<88x128xbf16, #tpu.memory_space<vmem>>, vector<9x128xbf16>,
    %c54_229 = arith.constant 54 : index
    %c0_230 = arith.constant 0 : index
    %396 = vector.load %arg19[%c54_229, %c0_230] : memref<64x128xf32, #tpu.memory_space<vmem>>, vector<7x128xf32>
    %397 = arith.truncf %396 : vector<7x128xf32> to vector<7x128xbf16>
    %398 = vector.extract_strided_slice %397 {offsets = [0, 0], sizes = [1, 128], strides = [1, 1]} : vector<7x128xbf16> to vector<1x128xbf16>
    %399 = vector.extract_strided_slice %397 {offsets = [6, 0], sizes = [1, 128], strides = [1, 1]} : vector<7x128xbf16> to vector<1x128xbf16>
    %400 = tpu.concatenate %398, %397, %399 in 0 : vector<1x128xbf16>, vector<7x128xbf16>, vector<1x128xbf16> -> vector<9x128xbf16>
    %c63_231 = arith.constant 63 : index
    %c0_232 = arith.constant 0 : index
    %401 = vector.load %arg20[%c63_231, %c0_232] : memref<88x128xbf16, #tpu.memory_space<vmem>>, vector<9x128xbf16>
    tpu.vector_store %arg20[%c63_231, %c0_232], %400 {strides = array<i32>} : memref<88x128xbf16, #tpu.memory_space<vmem>>, vector<9x128xbf16>,
    %c72_233 = arith.constant 72 : index
    %c0_234 = arith.constant 0 : index
    %402 = vector.load %arg20[%c72_233, %c0_234] : memref<88x128xbf16, #tpu.memory_space<vmem>>, vector<9x128xbf16>
    tpu.vector_store %arg20[%c72_233, %c0_234], %400 {strides = array<i32>} : memref<88x128xbf16, #tpu.memory_space<vmem>>, vector<9x128xbf16>,
    %c0_235 = arith.constant 0 : index
    %c0_236 = arith.constant 0 : index
    %403 = vector.load %arg20[%c0_235, %c0_236] : memref<88x128xbf16, #tpu.memory_space<vmem>>, vector<63x128xbf16>
    %c1_237 = arith.constant 1 : index
    %c0_238 = arith.constant 0 : index
    %404 = vector.load %arg20[%c1_237, %c0_238] : memref<88x128xbf16, #tpu.memory_space<vmem>>, vector<63x128xbf16>
    %c2_239 = arith.constant 2 : index
    %c0_240 = arith.constant 0 : index
    %405 = vector.load %arg20[%c2_239, %c0_240] : memref<88x128xbf16, #tpu.memory_space<vmem>>, vector<63x128xbf16>
    %c9_241 = arith.constant 9 : index
    %c0_242 = arith.constant 0 : index
    %406 = vector.load %arg20[%c9_241, %c0_242] : memref<88x128xbf16, #tpu.memory_space<vmem>>, vector<63x128xbf16>
    %c10_243 = arith.constant 10 : index
    %c0_244 = arith.constant 0 : index
    %407 = vector.load %arg20[%c10_243, %c0_244] : memref<88x128xbf16, #tpu.memory_space<vmem>>, vector<63x128xbf16>
    %c11_245 = arith.constant 11 : index
    %c0_246 = arith.constant 0 : index
    %408 = vector.load %arg20[%c11_245, %c0_246] : memref<88x128xbf16, #tpu.memory_space<vmem>>, vector<63x128xbf16>
    %c18_247 = arith.constant 18 : index
    %c0_248 = arith.constant 0 : index
    %409 = vector.load %arg20[%c18_247, %c0_248] : memref<88x128xbf16, #tpu.memory_space<vmem>>, vector<63x128xbf16>
    %c19_249 = arith.constant 19 : index
    %c0_250 = arith.constant 0 : index
    %410 = vector.load %arg20[%c19_249, %c0_250] : memref<88x128xbf16, #tpu.memory_space<vmem>>, vector<63x128xbf16>
    %c20_251 = arith.constant 20 : index
    %c0_252 = arith.constant 0 : index
    %411 = vector.load %arg20[%c20_251, %c0_252] : memref<88x128xbf16, #tpu.memory_space<vmem>>, vector<63x128xbf16>
    %412 = tpu.concatenate %403, %404, %405, %406, %407, %408, %409, %410, %411 in 1 : vector<63x128xbf16>, vector<63x128xbf16>, vector<63x128xbf16>, vector<63x128xbf16>, vector<63x128xbf16>, vector<63x128xbf16>, vector<63x128xbf16>, vector<63x128xbf16>, vector<63x128xbf16> -> vector<63x1152xbf16>
    %c0_253 = arith.constant 0 : index
    %c0_254 = arith.constant 0 : index
    %413 = vector.load %arg8[%c0_253, %c0_254] : memref<1152x128xbf16, #tpu.memory_space<vmem>>, vector<1152x128xbf16>
    %cst_255 = arith.constant dense<0.000000e+00> : vector<63x128xf32>
    %414 = tpu.matmul %412, %413, %cst_255 {dimension_numbers = #tpu.dot_dimension_numbers<[1], [0], [0], [1], [0, 0, 1, 1], [], []>} : vector<63x1152xbf16>, vector<1152x128xbf16>, vector<63x128xf32> -> vector<63x128xf32>
    %c0_256 = arith.constant 0 : index
    %c0_257 = arith.constant 0 : index
    %415 = vector.load %arg21[%c0_256, %c0_257] : memref<64x128xf32, #tpu.memory_space<vmem>>, vector<63x128xf32>
    tpu.vector_store %arg21[%c0_256, %c0_257], %414 {strides = array<i32>} : memref<64x128xf32, #tpu.memory_space<vmem>>, vector<63x128xf32>,
    %c0_258 = arith.constant 0 : index
    %c0_259 = arith.constant 0 : index
    %416 = vector.load %arg9[%c0_258, %c0_259] : memref<1x128xf32, #tpu.memory_space<vmem>>, vector<1x128xf32>
    %417 = vector.shape_cast %416 : vector<1x128xf32> to vector<1x128xf32>
    %418 = vector.broadcast %417 : vector<1x128xf32> to vector<3x128xf32>
    %c0_260 = arith.constant 0 : index
    %c0_261 = arith.constant 0 : index
    %419 = tpu.strided_load %arg21[%c0_260, %c0_261] {strides = array<i32: 2, 1>} : memref<64x128xf32, #tpu.memory_space<vmem>>, vector<3x128xf32>
    %c1_262 = arith.constant 1 : index
    %c0_263 = arith.constant 0 : index
    %420 = tpu.strided_load %arg21[%c1_262, %c0_263] {strides = array<i32: 2, 1>} : memref<64x128xf32, #tpu.memory_space<vmem>>, vector<3x128xf32>
    %421 = arith.maximumf %419, %420 : vector<3x128xf32>
    %c9_264 = arith.constant 9 : index
    %c0_265 = arith.constant 0 : index
    %422 = tpu.strided_load %arg21[%c9_264, %c0_265] {strides = array<i32: 2, 1>} : memref<64x128xf32, #tpu.memory_space<vmem>>, vector<3x128xf32>
    %c10_266 = arith.constant 10 : index
    %c0_267 = arith.constant 0 : index
    %423 = tpu.strided_load %arg21[%c10_266, %c0_267] {strides = array<i32: 2, 1>} : memref<64x128xf32, #tpu.memory_space<vmem>>, vector<3x128xf32>
    %424 = arith.maximumf %422, %423 : vector<3x128xf32>
    %425 = arith.maximumf %421, %424 : vector<3x128xf32>
    %426 = arith.addf %425, %418 : vector<3x128xf32>
    %cst_268 = arith.constant 0.000000e+00 : f32
    %427 = vector.broadcast %cst_268 : f32 to vector<3x128xf32>
    %428 = arith.maximumf %426, %427 : vector<3x128xf32>
    %c18_269 = arith.constant 18 : index
    %c0_270 = arith.constant 0 : index
    %429 = tpu.strided_load %arg21[%c18_269, %c0_270] {strides = array<i32: 2, 1>} : memref<64x128xf32, #tpu.memory_space<vmem>>, vector<3x128xf32>
    %c19_271 = arith.constant 19 : index
    %c0_272 = arith.constant 0 : index
    %430 = tpu.strided_load %arg21[%c19_271, %c0_272] {strides = array<i32: 2, 1>} : memref<64x128xf32, #tpu.memory_space<vmem>>, vector<3x128xf32>
    %431 = arith.maximumf %429, %430 : vector<3x128xf32>
    %c27_273 = arith.constant 27 : index
    %c0_274 = arith.constant 0 : index
    %432 = tpu.strided_load %arg21[%c27_273, %c0_274] {strides = array<i32: 2, 1>} : memref<64x128xf32, #tpu.memory_space<vmem>>, vector<3x128xf32>
    %c28_275 = arith.constant 28 : index
    %c0_276 = arith.constant 0 : index
    %433 = tpu.strided_load %arg21[%c28_275, %c0_276] {strides = array<i32: 2, 1>} : memref<64x128xf32, #tpu.memory_space<vmem>>, vector<3x128xf32>
    %434 = arith.maximumf %432, %433 : vector<3x128xf32>
    %435 = arith.maximumf %431, %434 : vector<3x128xf32>
    %436 = arith.addf %435, %418 : vector<3x128xf32>
    %cst_277 = arith.constant 0.000000e+00 : f32
    %437 = vector.broadcast %cst_277 : f32 to vector<3x128xf32>
    %438 = arith.maximumf %436, %437 : vector<3x128xf32>
    %c36_278 = arith.constant 36 : index
    %c0_279 = arith.constant 0 : index
    %439 = tpu.strided_load %arg21[%c36_278, %c0_279] {strides = array<i32: 2, 1>} : memref<64x128xf32, #tpu.memory_space<vmem>>, vector<3x128xf32>
    %c37 = arith.constant 37 : index
    %c0_280 = arith.constant 0 : index
    %440 = tpu.strided_load %arg21[%c37, %c0_280] {strides = array<i32: 2, 1>} : memref<64x128xf32, #tpu.memory_space<vmem>>, vector<3x128xf32>
    %441 = arith.maximumf %439, %440 : vector<3x128xf32>
    %c45_281 = arith.constant 45 : index
    %c0_282 = arith.constant 0 : index
    %442 = tpu.strided_load %arg21[%c45_281, %c0_282] {strides = array<i32: 2, 1>} : memref<64x128xf32, #tpu.memory_space<vmem>>, vector<3x128xf32>
    %c46 = arith.constant 46 : index
    %c0_283 = arith.constant 0 : index
    %443 = tpu.strided_load %arg21[%c46, %c0_283] {strides = array<i32: 2, 1>} : memref<64x128xf32, #tpu.memory_space<vmem>>, vector<3x128xf32>
    %444 = arith.maximumf %442, %443 : vector<3x128xf32>
    %445 = arith.maximumf %441, %444 : vector<3x128xf32>
    %446 = arith.addf %445, %418 : vector<3x128xf32>
    %cst_284 = arith.constant 0.000000e+00 : f32
    %447 = vector.broadcast %cst_284 : f32 to vector<3x128xf32>
    %448 = arith.maximumf %446, %447 : vector<3x128xf32>
    %449 = arith.truncf %428 : vector<3x128xf32> to vector<3x128xbf16>
    %450 = vector.extract_strided_slice %449 {offsets = [0, 0], sizes = [1, 128], strides = [1, 1]} : vector<3x128xbf16> to vector<1x128xbf16>
    %451 = vector.extract_strided_slice %449 {offsets = [1, 0], sizes = [1, 128], strides = [1, 1]} : vector<3x128xbf16> to vector<1x128xbf16>
    %452 = vector.extract_strided_slice %449 {offsets = [2, 0], sizes = [1, 128], strides = [1, 1]} : vector<3x128xbf16> to vector<1x128xbf16>
    %453 = arith.truncf %438 : vector<3x128xf32> to vector<3x128xbf16>
    %454 = vector.extract_strided_slice %453 {offsets = [0, 0], sizes = [1, 128], strides = [1, 1]} : vector<3x128xbf16> to vector<1x128xbf16>
    %455 = vector.extract_strided_slice %453 {offsets = [1, 0], sizes = [1, 128], strides = [1, 1]} : vector<3x128xbf16> to vector<1x128xbf16>
    %456 = vector.extract_strided_slice %453 {offsets = [2, 0], sizes = [1, 128], strides = [1, 1]} : vector<3x128xbf16> to vector<1x128xbf16>
    %457 = arith.truncf %448 : vector<3x128xf32> to vector<3x128xbf16>
    %458 = vector.extract_strided_slice %457 {offsets = [0, 0], sizes = [1, 128], strides = [1, 1]} : vector<3x128xbf16> to vector<1x128xbf16>
    %459 = vector.extract_strided_slice %457 {offsets = [1, 0], sizes = [1, 128], strides = [1, 1]} : vector<3x128xbf16> to vector<1x128xbf16>
    %460 = vector.extract_strided_slice %457 {offsets = [2, 0], sizes = [1, 128], strides = [1, 1]} : vector<3x128xbf16> to vector<1x128xbf16>
    %461 = tpu.concatenate %450, %451, %452, %454, %455, %456, %458, %459, %460 in 1 : vector<1x128xbf16>, vector<1x128xbf16>, vector<1x128xbf16>, vector<1x128xbf16>, vector<1x128xbf16>, vector<1x128xbf16>, vector<1x128xbf16>, vector<1x128xbf16>, vector<1x128xbf16> -> vector<1x1152xbf16>
    %c0_285 = arith.constant 0 : index
    %c0_286 = arith.constant 0 : index
    %462 = vector.load %arg10[%c0_285, %c0_286] : memref<1152x512xbf16, #tpu.memory_space<vmem>>, vector<1152x512xbf16>
    %cst_287 = arith.constant dense<0.000000e+00> : vector<1x512xf32>
    %463 = tpu.matmul %461, %462, %cst_287 {dimension_numbers = #tpu.dot_dimension_numbers<[1], [0], [0], [1], [0, 0, 1, 1], [], []>} : vector<1x1152xbf16>, vector<1152x512xbf16>, vector<1x512xf32> -> vector<1x512xf32>
    %c0_288 = arith.constant 0 : index
    %c0_289 = arith.constant 0 : index
    %464 = vector.load %arg11[%c0_288, %c0_289] : memref<1x512xf32, #tpu.memory_space<vmem>>, vector<1x512xf32>
    %465 = arith.addf %463, %464 : vector<1x512xf32>
    %cst_290 = arith.constant 0.000000e+00 : f32
    %466 = vector.broadcast %cst_290 : f32 to vector<1x512xf32>
    %467 = arith.maximumf %465, %466 : vector<1x512xf32>
    %468 = arith.truncf %467 : vector<1x512xf32> to vector<1x512xbf16>
    %c0_291 = arith.constant 0 : index
    %c0_292 = arith.constant 0 : index
    %469 = vector.load %arg12[%c0_291, %c0_292] : memref<512x128xbf16, #tpu.memory_space<vmem>>, vector<512x128xbf16>
    %cst_293 = arith.constant dense<0.000000e+00> : vector<1x128xf32>
    %470 = tpu.matmul %468, %469, %cst_293 {dimension_numbers = #tpu.dot_dimension_numbers<[1], [0], [0], [1], [0, 0, 1, 1], [], []>} : vector<1x512xbf16>, vector<512x128xbf16>, vector<1x128xf32> -> vector<1x128xf32>
    %c0_294 = arith.constant 0 : index
    %c0_295 = arith.constant 0 : index
    %471 = vector.load %arg13[%c0_294, %c0_295] : memref<1x128xf32, #tpu.memory_space<vmem>>, vector<1x128xf32>
    %472 = arith.addf %470, %471 : vector<1x128xf32>
    %c0_296 = arith.constant 0 : index
    %c0_297 = arith.constant 0 : index
    %c0_298 = arith.constant 0 : index
    %473 = vector.load %arg14[%c0_296, %c0_297, %c0_298] : memref<1x1x128xf32, #tpu.memory_space<vmem>>, vector<1x1x128xf32>
    %474 = vector.shape_cast %473 : vector<1x1x128xf32> to vector<1x128xf32>
    %475 = vector.shape_cast %472 : vector<1x128xf32> to vector<1x1x128xf32>
    tpu.vector_store %arg14[%c0_296, %c0_297, %c0_298], %475 {strides = array<i32>} : memref<1x1x128xf32, #tpu.memory_space<vmem>>, vector<1x1x128xf32>,
    return
  }
  func.func @transform_0(%arg0: i32) -> (i32, i32, i32) {
    %c0_i32 = arith.constant 0 : i32
    %c0_i32_0 = arith.constant 0 : i32
    %c0_i32_1 = arith.constant 0 : i32
    return %arg0, %c0_i32, %c0_i32_0 : i32, i32, i32
  }
  func.func @transform_1(%arg0: i32) -> (i32, i32) {
    %c0_i32 = arith.constant 0 : i32
    %c0_i32_0 = arith.constant 0 : i32
    %c0_i32_1 = arith.constant 0 : i32
    return %c0_i32, %c0_i32_0 : i32, i32
  }
  func.func @transform_2(%arg0: i32) -> (i32, i32) {
    %c0_i32 = arith.constant 0 : i32
    %c0_i32_0 = arith.constant 0 : i32
    %c0_i32_1 = arith.constant 0 : i32
    return %c0_i32, %c0_i32_0 : i32, i32
  }
  func.func @transform_3(%arg0: i32) -> (i32, i32) {
    %c0_i32 = arith.constant 0 : i32
    %c0_i32_0 = arith.constant 0 : i32
    %c0_i32_1 = arith.constant 0 : i32
    return %c0_i32, %c0_i32_0 : i32, i32
  }
  func.func @transform_4(%arg0: i32) -> (i32, i32) {
    %c0_i32 = arith.constant 0 : i32
    %c0_i32_0 = arith.constant 0 : i32
    %c0_i32_1 = arith.constant 0 : i32
    return %c0_i32, %c0_i32_0 : i32, i32
  }
  func.func @transform_5(%arg0: i32) -> (i32, i32) {
    %c0_i32 = arith.constant 0 : i32
    %c0_i32_0 = arith.constant 0 : i32
    %c0_i32_1 = arith.constant 0 : i32
    return %c0_i32, %c0_i32_0 : i32, i32
  }
  func.func @transform_6(%arg0: i32) -> (i32, i32) {
    %c0_i32 = arith.constant 0 : i32
    %c0_i32_0 = arith.constant 0 : i32
    %c0_i32_1 = arith.constant 0 : i32
    return %c0_i32, %c0_i32_0 : i32, i32
  }
  func.func @transform_7(%arg0: i32) -> (i32, i32) {
    %c0_i32 = arith.constant 0 : i32
    %c0_i32_0 = arith.constant 0 : i32
    %c0_i32_1 = arith.constant 0 : i32
    return %c0_i32, %c0_i32_0 : i32, i32
  }
  func.func @transform_8(%arg0: i32) -> (i32, i32) {
    %c0_i32 = arith.constant 0 : i32
    %c0_i32_0 = arith.constant 0 : i32
    %c0_i32_1 = arith.constant 0 : i32
    return %c0_i32, %c0_i32_0 : i32, i32
  }
  func.func @transform_9(%arg0: i32) -> (i32, i32) {
    %c0_i32 = arith.constant 0 : i32
    %c0_i32_0 = arith.constant 0 : i32
    %c0_i32_1 = arith.constant 0 : i32
    return %c0_i32, %c0_i32_0 : i32, i32
  }
  func.func @transform_10(%arg0: i32) -> (i32, i32) {
    %c0_i32 = arith.constant 0 : i32
    %c0_i32_0 = arith.constant 0 : i32
    %c0_i32_1 = arith.constant 0 : i32
    return %c0_i32, %c0_i32_0 : i32, i32
  }
  func.func @transform_11(%arg0: i32) -> (i32, i32) {
    %c0_i32 = arith.constant 0 : i32
    %c0_i32_0 = arith.constant 0 : i32
    %c0_i32_1 = arith.constant 0 : i32
    return %c0_i32, %c0_i32_0 : i32, i32
  }
  func.func @transform_12(%arg0: i32) -> (i32, i32) {
    %c0_i32 = arith.constant 0 : i32
    %c0_i32_0 = arith.constant 0 : i32
    %c0_i32_1 = arith.constant 0 : i32
    return %c0_i32, %c0_i32_0 : i32, i32
  }
  func.func @transform_13(%arg0: i32) -> (i32, i32, i32) {
    %c0_i32 = arith.constant 0 : i32
    %c0_i32_0 = arith.constant 0 : i32
    %c0_i32_1 = arith.constant 0 : i32
    return %arg0, %c0_i32, %c0_i32_0 : i32, i32, i32
  }
}

</mosaic_0001>

<llo_original>
// kernel: forward.1
$region0: #{forward.1}
  #allocation0 [shape = 'u32[]', space=smem, size = 0x4, offset = 0x4, fixed_abs, tag = 'smem constant byte address 0x4 - core index']
  #allocation1 [shape = 'u32[144,128]{1,0:T(1,128)}', space=vmem, size = 0x12000, scoped, tag = 'internal scratch']
  #allocation2 [shape = 'f32[784,128]{1,0:T(8,128)}', space=vmem, size = 0x62000, scoped, tag = 'scratch operand']
  #allocation3 [shape = 'bf16[272,128]{1,0:T(16,128)(2,1)}', space=vmem, size = 0x11000, scoped, tag = 'scratch operand']
  #allocation4 [shape = 'f32[224,128]{1,0:T(8,128)}', space=vmem, size = 0x1c000, scoped, tag = 'scratch operand']
  #allocation5 [shape = 'bf16[88,128]{1,0:T(8,128)(2,1)}', space=vmem, size = 0x5800, scoped, tag = 'scratch operand']
  #allocation6 [shape = 'f32[64,128]{1,0:T(8,128)}', space=vmem, size = 0x8000, scoped, tag = 'scratch operand']
  #allocation7 [shape = 'bf16[88,128]{1,0:T(8,128)(2,1)}', space=vmem, size = 0x5800, scoped, tag = 'scratch operand']
  #allocation8 [shape = 'f32[64,128]{1,0:T(8,128)}', space=vmem, size = 0x8000, scoped, tag = 'scratch operand']
  %s0 = inlined_call_operand.vmem [shape: bf16[2,784,9], index: 0, kind: input, shape index: {}]
  %s1 = inlined_call_operand.vmem [shape: bf16[9,128], index: 1, kind: input, shape index: {}]
  %s2 = inlined_call_operand.vmem [shape: f32[1,128], index: 2, kind: input, shape index: {}]
  %s3 = inlined_call_operand.hbm [shape: bf16[1152,128], index: 3, kind: input, shape index: {}]
  %s4 = inlined_call_operand.vmem [shape: f32[1,128], index: 4, kind: input, shape index: {}]
  %s5 = inlined_call_operand.hbm [shape: bf16[1152,128], index: 5, kind: input, shape index: {}]
  %s6 = inlined_call_operand.vmem [shape: f32[1,128], index: 6, kind: input, shape index: {}]
  %s7 = inlined_call_operand.hbm [shape: bf16[1152,128], index: 7, kind: input, shape index: {}]
  %s8 = inlined_call_operand.vmem [shape: f32[1,128], index: 8, kind: input, shape index: {}]
  %s9 = inlined_call_operand.vmem [shape: bf16[1152,512], index: 9, kind: input, shape index: {}]
  %s10 = inlined_call_operand.vmem [shape: f32[1,512], index: 10, kind: input, shape index: {}]
  %s11 = inlined_call_operand.vmem [shape: bf16[512,128], index: 11, kind: input, shape index: {}]
  %s12 = inlined_call_operand.vmem [shape: f32[1,128], index: 12, kind: input, shape index: {}]
  %s13 = inlined_call_operand.hbm [shape: f32[2,1,128], index: 13, kind: output, shape index: {}]
  %s14 = sld [smem:[#allocation0]]
  $region97: #{forward.1} parent=0
    _
  %s16 = ssub.s32 1, %s14
  %s17 = scalar_select 0, %s16, %s14
  $region1: #{forward.1} parent=0
    #allocation9 [shape = 'u8[294912]{0}', space=vmem, size = 0x48000, scoped, tag = 'input window, operand 3, single buffered']
    #allocation10 [shape = 's32[2]{0}', space=sflag, size = 0x8, scoped, tag = 'scoped memory for forward.1']
    #allocation11 [shape = 's32[2]{0}', space=sflag, size = 0x8, scoped, tag = 'scoped memory for forward.1']
    #allocation12 [shape = 'u8[294912]{0}', space=vmem, size = 0x48000, scoped, tag = 'input window, operand 5, single buffered']
    #allocation13 [shape = 's32[1]{0}', space=sflag, size = 0x4, scoped, tag = 'scoped memory for forward.1']
    #allocation14 [shape = 'u8[294912]{0}', space=vmem, size = 0x48000, scoped, tag = 'input window, operand 7, single buffered']
    #allocation15 [shape = 'u8[1024]{0}', space=vmem, size = 0x400, scoped, tag = 'output window, operand 0']
    %18 = vsyncpa [#allocation10], 0
    %19 = vsyncpa [#allocation13], 0
    %20 = vsyncpa [#allocation11], 0
    %s21 = scalar_lea.sflag [#allocation11], 1
    %22 = vsyncpa %s21, 0
    loop: start=0, step=1, limit=4
    $region2: #{forward.1} parent=1 // loop_pre_header
      _
    $region3: #{forward.1} parent=1 // loop_header
      %s24 = sphi 0, %s28
      %p25 = scmp.ge.s32.totalorder %s24, 4
      %s34 = sphi 0, %s36
      %s37 = sphi 0, %s34
      %s38 = sphi 0, %s37
      %s54 = sphi 0, %s38
      %s58 = sphi 0, %s58
      %s60 = sphi 0, %s58
      %s61 = sphi 0, %s60
      %s75 = sphi 0, %s61
      %s79 = sphi 0, %s79
      %s81 = sphi 0, %s79
      %s82 = sphi 0, %s81
      %s96 = sphi 0, %s82
      %s100 = sphi 0, %s100
      %s102 = sphi 0, %s100
      %s103 = sphi 0, %s102
      %s117 = sphi 0, %s103
      %s121 = sphi 0, %s121
      %s123 = sphi 0, %s121
      %s124 = sphi 0, %s123
      %s138 = sphi 0, %s124
      %s142 = sphi 0, %s142
      %s144 = sphi 0, %s142
      %s145 = sphi 0, %s144
      %s159 = sphi 0, %s145
      %s163 = sphi 0, %s163
      %s165 = sphi 0, %s163
      %s166 = sphi 0, %s165
      %s180 = sphi 0, %s166
      %s184 = sphi 0, %s184
      %s186 = sphi 0, %s184
      %s187 = sphi 0, %s186
      %s201 = sphi 0, %s187
      %s205 = sphi 0, %s205
      %s207 = sphi 0, %s205
      %s208 = sphi 0, %s207
      %s222 = sphi 0, %s208
      %s226 = sphi 0, %s226
      %s228 = sphi 0, %s226
      %s229 = sphi 0, %s228
      %s243 = sphi 0, %s229
      %s247 = sphi 0, %s247
      %s249 = sphi 0, %s247
      %s250 = sphi 0, %s249
      %s264 = sphi 0, %s250
      %s268 = sphi 0, %s268
      %s270 = sphi 0, %s268
      %s271 = sphi 0, %s270
      %s285 = sphi 0, %s271
      %s289 = sphi 0, %s289
      %s291 = sphi 0, %s289
      %s292 = sphi 0, %s291
      %s306 = sphi 0, %s292
      %s312 = sphi 0, %s314
      %s315 = sphi 0, %s312
      %s316 = sphi 0, %s315
      %s332 = sphi 0, %s316
    $region4: #{forward.1} parent=1 // loop_header_branch
      %27 = sbr.rel (%p25) target = $region8
    $region5: #{forward.1} parent=1 // loop_body
      %s29 = ssub.s32 %s24, 1
      %s30 = ssub.s32 %s24, 2
      %s31 = sadd.s32 %s24, 1
      %s32 = ssub.s32 %s24, %s31
      %p33 = scmp.eq.s32.totalorder %s32, 0
      %s35 = sadd.s32 %s34, 1
      %s36 = scalar_select %p33, %s34, %s35
      %p39 = pneg %p33
      %p40 = scmp.eq.s32.totalorder %s24, 1
      %p41 = por %p39, %p40
      %p42 = scmp.ne.s32.totalorder %s34, %s37
      %p43 = scmp.eq.s32.totalorder %s24, 0
      %p44 = por %p42, %p43
      %p45 = scmp.ne.s32.totalorder %s34, %s37
      %p46 = scmp.eq.s32.totalorder %s29, 1
      %p47 = por %p45, %p46
      %p48 = scmp.ne.s32.totalorder %s37, %s38
      %p49 = scmp.eq.s32.totalorder %s29, 0
      %p50 = por %p48, %p49
      %p51 = scmp.ne.s32.totalorder %s37, %s38
      %p52 = scmp.eq.s32.totalorder %s30, 1
      %p53 = por %p51, %p52
      %p55 = scmp.ne.s32.totalorder %s38, %s54
      %p56 = scmp.eq.s32.totalorder %s30, 0
      %p57 = por %p55, %p56
      %s59 = sadd.s32 %s58, 1
      %p62 = scmp.eq.s32.totalorder %s24, 1
      %p63 = scmp.ne.s32.totalorder %s58, %s60
      %p64 = scmp.eq.s32.totalorder %s24, 0
      %p65 = por %p63, %p64
      %p66 = scmp.ne.s32.totalorder %s58, %s60
      %p67 = scmp.eq.s32.totalorder %s29, 1
      %p68 = por %p66, %p67
      %p69 = scmp.ne.s32.totalorder %s60, %s61
      %p70 = scmp.eq.s32.totalorder %s29, 0
      %p71 = por %p69, %p70
      %p72 = scmp.ne.s32.totalorder %s60, %s61
      %p73 = scmp.eq.s32.totalorder %s30, 1
      %p74 = por %p72, %p73
      %p76 = scmp.ne.s32.totalorder %s61, %s75
      %p77 = scmp.eq.s32.totalorder %s30, 0
      %p78 = por %p76, %p77
      %s80 = sadd.s32 %s79, 1
      %p83 = scmp.eq.s32.totalorder %s24, 1
      %p84 = scmp.ne.s32.totalorder %s79, %s81
      %p85 = scmp.eq.s32.totalorder %s24, 0
      %p86 = por %p84, %p85
      %p87 = scmp.ne.s32.totalorder %s79, %s81
      %p88 = scmp.eq.s32.totalorder %s29, 1
      %p89 = por %p87, %p88
      %p90 = scmp.ne.s32.totalorder %s81, %s82
      %p91 = scmp.eq.s32.totalorder %s29, 0
      %p92 = por %p90, %p91
      %p93 = scmp.ne.s32.totalorder %s81, %s82
      %p94 = scmp.eq.s32.totalorder %s30, 1
      %p95 = por %p93, %p94
      %p97 = scmp.ne.s32.totalorder %s82, %s96
      %p98 = scmp.eq.s32.totalorder %s30, 0
      %p99 = por %p97, %p98
      %s101 = sadd.s32 %s100, 1
      %p104 = scmp.eq.s32.totalorder %s24, 1
      %p105 = scmp.ne.s32.totalorder %s100, %s102
      %p106 = scmp.eq.s32.totalorder %s24, 0
      %p107 = por %p105, %p106
      %p108 = scmp.ne.s32.totalorder %s100, %s102
      %p109 = scmp.eq.s32.totalorder %s29, 1
      %p110 = por %p108, %p109
      %p111 = scmp.ne.s32.totalorder %s102, %s103
      %p112 = scmp.eq.s32.totalorder %s29, 0
      %p113 = por %p111, %p112
      %p114 = scmp.ne.s32.totalorder %s102, %s103
      %p115 = scmp.eq.s32.totalorder %s30, 1
      %p116 = por %p114, %p115
      %p118 = scmp.ne.s32.totalorder %s103, %s117
      %p119 = scmp.eq.s32.totalorder %s30, 0
      %p120 = por %p118, %p119
      %s122 = sadd.s32 %s121, 1
      %p125 = scmp.eq.s32.totalorder %s24, 1
      %p126 = scmp.ne.s32.totalorder %s121, %s123
      %p127 = scmp.eq.s32.totalorder %s24, 0
      %p128 = por %p126, %p127
      %p129 = scmp.ne.s32.totalorder %s121, %s123
      %p130 = scmp.eq.s32.totalorder %s29, 1
      %p131 = por %p129, %p130
      %p132 = scmp.ne.s32.totalorder %s123, %s124
      %p133 = scmp.eq.s32.totalorder %s29, 0
      %p134 = por %p132, %p133
      %p135 = scmp.ne.s32.totalorder %s123, %s124
      %p136 = scmp.eq.s32.totalorder %s30, 1
      %p137 = por %p135, %p136
      %p139 = scmp.ne.s32.totalorder %s124, %s138
      %p140 = scmp.eq.s32.totalorder %s30, 0
      %p141 = por %p139, %p140
      %s143 = sadd.s32 %s142, 1
      %p146 = scmp.eq.s32.totalorder %s24, 1
      %p147 = scmp.ne.s32.totalorder %s142, %s144
      %p148 = scmp.eq.s32.totalorder %s24, 0
      %p149 = por %p147, %p148
      %p150 = scmp.ne.s32.totalorder %s142, %s144
      %p151 = scmp.eq.s32.totalorder %s29, 1
      %p152 = por %p150, %p151
      %p153 = scmp.ne.s32.totalorder %s144, %s145
      %p154 = scmp.eq.s32.totalorder %s29, 0
      %p155 = por %p153, %p154
      %p156 = scmp.ne.s32.totalorder %s144, %s145
      %p157 = scmp.eq.s32.totalorder %s30, 1
      %p158 = por %p156, %p157
      %p160 = scmp.ne.s32.totalorder %s145, %s159
      %p161 = scmp.eq.s32.totalorder %s30, 0
      %p162 = por %p160, %p161
      %s164 = sadd.s32 %s163, 1
      %p167 = scmp.eq.s32.totalorder %s24, 1
      %p168 = scmp.ne.s32.totalorder %s163, %s165
      %p169 = scmp.eq.s32.totalorder %s24, 0
      %p170 = por %p168, %p169
      %p171 = scmp.ne.s32.totalorder %s163, %s165
      %p172 = scmp.eq.s32.totalorder %s29, 1
      %p173 = por %p171, %p172
      %p174 = scmp.ne.s32.totalorder %s165, %s166
      %p175 = scmp.eq.s32.totalorder %s29, 0
      %p176 = por %p174, %p175
      %p177 = scmp.ne.s32.totalorder %s165, %s166
      %p178 = scmp.eq.s32.totalorder %s30, 1
      %p179 = por %p177, %p178
      %p181 = scmp.ne.s32.totalorder %s166, %s180
      %p182 = scmp.eq.s32.totalorder %s30, 0
      %p183 = por %p181, %p182
      %s185 = sadd.s32 %s184, 1
      %p188 = scmp.eq.s32.totalorder %s24, 1
      %p189 = scmp.ne.s32.totalorder %s184, %s186
      %p190 = scmp.eq.s32.totalorder %s24, 0
      %p191 = por %p189, %p190
      %p192 = scmp.ne.s32.totalorder %s184, %s186
      %p193 = scmp.eq.s32.totalorder %s29, 1
      %p194 = por %p192, %p193
      %p195 = scmp.ne.s32.totalorder %s186, %s187
      %p196 = scmp.eq.s32.totalorder %s29, 0
      %p197 = por %p195, %p196
      %p198 = scmp.ne.s32.totalorder %s186, %s187
      %p199 = scmp.eq.s32.totalorder %s30, 1
      %p200 = por %p198, %p199
      %p202 = scmp.ne.s32.totalorder %s187, %s201
      %p203 = scmp.eq.s32.totalorder %s30, 0
      %p204 = por %p202, %p203
      %s206 = sadd.s32 %s205, 1
      %p209 = scmp.eq.s32.totalorder %s24, 1
      %p210 = scmp.ne.s32.totalorder %s205, %s207
      %p211 = scmp.eq.s32.totalorder %s24, 0
      %p212 = por %p210, %p211
      %p213 = scmp.ne.s32.totalorder %s205, %s207
      %p214 = scmp.eq.s32.totalorder %s29, 1
      %p215 = por %p213, %p214
      %p216 = scmp.ne.s32.totalorder %s207, %s208
      %p217 = scmp.eq.s32.totalorder %s29, 0
      %p218 = por %p216, %p217
      %p219 = scmp.ne.s32.totalorder %s207, %s208
      %p220 = scmp.eq.s32.totalorder %s30, 1
      %p221 = por %p219, %p220
      %p223 = scmp.ne.s32.totalorder %s208, %s222
      %p224 = scmp.eq.s32.totalorder %s30, 0
      %p225 = por %p223, %p224
      %s227 = sadd.s32 %s226, 1
      %p230 = scmp.eq.s32.totalorder %s24, 1
      %p231 = scmp.ne.s32.totalorder %s226, %s228
      %p232 = scmp.eq.s32.totalorder %s24, 0
      %p233 = por %p231, %p232
      %p234 = scmp.ne.s32.totalorder %s226, %s228
      %p235 = scmp.eq.s32.totalorder %s29, 1
      %p236 = por %p234, %p235
      %p237 = scmp.ne.s32.totalorder %s228, %s229
      %p238 = scmp.eq.s32.totalorder %s29, 0
      %p239 = por %p237, %p238
      %p240 = scmp.ne.s32.totalorder %s228, %s229
      %p241 = scmp.eq.s32.totalorder %s30, 1
      %p242 = por %p240, %p241
      %p244 = scmp.ne.s32.totalorder %s229, %s243
      %p245 = scmp.eq.s32.totalorder %s30, 0
      %p246 = por %p244, %p245
      %s248 = sadd.s32 %s247, 1
      %p251 = scmp.eq.s32.totalorder %s24, 1
      %p252 = scmp.ne.s32.totalorder %s247, %s249
      %p253 = scmp.eq.s32.totalorder %s24, 0
      %p254 = por %p252, %p253
      %p255 = scmp.ne.s32.totalorder %s247, %s249
      %p256 = scmp.eq.s32.totalorder %s29, 1
      %p257 = por %p255, %p256
      %p258 = scmp.ne.s32.totalorder %s249, %s250
      %p259 = scmp.eq.s32.totalorder %s29, 0
      %p260 = por %p258, %p259
      %p261 = scmp.ne.s32.totalorder %s249, %s250
      %p262 = scmp.eq.s32.totalorder %s30, 1
      %p263 = por %p261, %p262
      %p265 = scmp.ne.s32.totalorder %s250, %s264
      %p266 = scmp.eq.s32.totalorder %s30, 0
      %p267 = por %p265, %p266
      %s269 = sadd.s32 %s268, 1
      %p272 = scmp.eq.s32.totalorder %s24, 1
      %p273 = scmp.ne.s32.totalorder %s268, %s270
      %p274 = scmp.eq.s32.totalorder %s24, 0
      %p275 = por %p273, %p274
      %p276 = scmp.ne.s32.totalorder %s268, %s270
      %p277 = scmp.eq.s32.totalorder %s29, 1
      %p278 = por %p276, %p277
      %p279 = scmp.ne.s32.totalorder %s270, %s271
      %p280 = scmp.eq.s32.totalorder %s29, 0
      %p281 = por %p279, %p280
      %p282 = scmp.ne.s32.totalorder %s270, %s271
      %p283 = scmp.eq.s32.totalorder %s30, 1
      %p284 = por %p282, %p283
      %p286 = scmp.ne.s32.totalorder %s271, %s285
      %p287 = scmp.eq.s32.totalorder %s30, 0
      %p288 = por %p286, %p287
      %s290 = sadd.s32 %s289, 1
      %p293 = scmp.eq.s32.totalorder %s24, 1
      %p294 = scmp.ne.s32.totalorder %s289, %s291
      %p295 = scmp.eq.s32.totalorder %s24, 0
      %p296 = por %p294, %p295
      %p297 = scmp.ne.s32.totalorder %s289, %s291
      %p298 = scmp.eq.s32.totalorder %s29, 1
      %p299 = por %p297, %p298
      %p300 = scmp.ne.s32.totalorder %s291, %s292
      %p301 = scmp.eq.s32.totalorder %s29, 0
      %p302 = por %p300, %p301
      %p303 = scmp.ne.s32.totalorder %s291, %s292
      %p304 = scmp.eq.s32.totalorder %s30, 1
      %p305 = por %p303, %p304
      %p307 = scmp.ne.s32.totalorder %s292, %s306
      %p308 = scmp.eq.s32.totalorder %s30, 0
      %p309 = por %p307, %p308
      %s310 = ssub.s32 %s24, %s31
      %p311 = scmp.eq.s32.totalorder %s310, 0
      %s313 = sadd.s32 %s312, 1
      %s314 = scalar_select %p311, %s312, %s313
      %p317 = pneg %p311
      %p318 = scmp.eq.s32.totalorder %s24, 1
      %p319 = por %p317, %p318
      %p320 = scmp.ne.s32.totalorder %s312, %s315
      %p321 = scmp.eq.s32.totalorder %s24, 0
      %p322 = por %p320, %p321
      %p323 = scmp.ne.s32.totalorder %s312, %s315
      %p324 = scmp.eq.s32.totalorder %s29, 1
      %p325 = por %p323, %p324
      %p326 = scmp.ne.s32.totalorder %s315, %s316
      %p327 = scmp.eq.s32.totalorder %s29, 0
      %p328 = por %p326, %p327
      %p329 = scmp.ne.s32.totalorder %s315, %s316
      %p330 = scmp.eq.s32.totalorder %s30, 1
      %p331 = por %p329, %p330
      %p333 = scmp.ne.s32.totalorder %s316, %s332
      %p334 = scmp.eq.s32.totalorder %s30, 0
      %p335 = por %p333, %p334
      %p336 = scmp.le.s32.totalorder 1, %s24
      %p337 = scmp.lt.s32.totalorder %s24, 3
      %p338 = pnand %p336, %p337
      %p339 = pneg %p338
      // Predicated region
      $region9: #{forward.1} parent=5 // pred_check
        _
      $region10: #{forward.1} parent=5 // pred_check_branch
        %341 = sbr.rel (%p338) target = $region12
      $region11: #{forward.1} parent=5 // pred_region
        %s342 = ssub.s32 %s24, 1
        // Predicated region
        $region13: #{forward.1} parent=11 // pred_check
          %p343 = pneg %p71
        $region14: #{forward.1} parent=11 // pred_check_branch
          %345 = sbr.rel (%p343) target = $region16
        $region15: #{forward.1} parent=11 // pred_region
          _
        $region16: #{forward.1} parent=11 // pred_fallthru
          _
        // Predicated region
        $region17: #{forward.1} parent=11 // pred_check
          %p346 = pneg %p92
        $region18: #{forward.1} parent=11 // pred_check_branch
          %348 = sbr.rel (%p346) target = $region20
        $region19: #{forward.1} parent=11 // pred_region
          _
        $region20: #{forward.1} parent=11 // pred_fallthru
          _
        // Predicated region
        $region21: #{forward.1} parent=11 // pred_check
          %p349 = pneg %p113
        $region22: #{forward.1} parent=11 // pred_check_branch
          %351 = sbr.rel (%p349) target = $region24
        $region23: #{forward.1} parent=11 // pred_region
          %s353 = ssub.s32 9216, 9216
          %354 = vsyncadd [#allocation10], %s353
          %s355 = sshll.u32 [#allocation9], 4
          %s356 = int_to_ptr.vmem [resolvable:$true] %s355
          %361 = dma.hbm_to_vmem [thread:$0]  %s3, 9216, %s356, [#allocation10], 64, 64, 4
        $region24: #{forward.1} parent=11 // pred_fallthru
          _
        // Predicated region
        $region25: #{forward.1} parent=11 // pred_check
          %p362 = pneg %p134
        $region26: #{forward.1} parent=11 // pred_check_branch
          %364 = sbr.rel (%p362) target = $region28
        $region27: #{forward.1} parent=11 // pred_region
          _
        $region28: #{forward.1} parent=11 // pred_fallthru
          _
        // Predicated region
        $region29: #{forward.1} parent=11 // pred_check
          %p365 = pneg %p155
        $region30: #{forward.1} parent=11 // pred_check_branch
          %367 = sbr.rel (%p365) target = $region32
        $region31: #{forward.1} parent=11 // pred_region
          %s369 = ssub.s32 9216, 9216
          %370 = vsyncadd [#allocation13], %s369
          %s371 = sshll.u32 [#allocation12], 4
          %s372 = int_to_ptr.vmem [resolvable:$true] %s371
          %377 = dma.hbm_to_vmem [thread:$0]  %s5, 9216, %s372, [#allocation13], 64, 64, 4
        $region32: #{forward.1} parent=11 // pred_fallthru
          _
        // Predicated region
        $region33: #{forward.1} parent=11 // pred_check
          %p378 = pneg %p176
        $region34: #{forward.1} parent=11 // pred_check_branch
          %380 = sbr.rel (%p378) target = $region36
        $region35: #{forward.1} parent=11 // pred_region
          _
        $region36: #{forward.1} parent=11 // pred_fallthru
          _
        // Predicated region
        $region37: #{forward.1} parent=11 // pred_check
          %p381 = pneg %p197
        $region38: #{forward.1} parent=11 // pred_check_branch
          %383 = sbr.rel (%p381) target = $region40
        $region39: #{forward.1} parent=11 // pred_region
          %s385 = ssub.s32 9216, 9216
          %386 = vsyncadd [#allocation13], %s385
          %s387 = sshll.u32 [#allocation14], 4
          %s388 = int_to_ptr.vmem [resolvable:$true] %s387
          %393 = dma.hbm_to_vmem [thread:$0]  %s7, 9216, %s388, [#allocation13], 64, 64, 4
        $region40: #{forward.1} parent=11 // pred_fallthru
          _
        // Predicated region
        $region41: #{forward.1} parent=11 // pred_check
          %p394 = pneg %p218
        $region42: #{forward.1} parent=11 // pred_check_branch
          %396 = sbr.rel (%p394) target = $region44
        $region43: #{forward.1} parent=11 // pred_region
          _
        $region44: #{forward.1} parent=11 // pred_fallthru
          _
        // Predicated region
        $region45: #{forward.1} parent=11 // pred_check
          %p397 = pneg %p239
        $region46: #{forward.1} parent=11 // pred_check_branch
          %399 = sbr.rel (%p397) target = $region48
        $region47: #{forward.1} parent=11 // pred_region
          _
        $region48: #{forward.1} parent=11 // pred_fallthru
          _
        // Predicated region
        $region49: #{forward.1} parent=11 // pred_check
          %p400 = pneg %p260
        $region50: #{forward.1} parent=11 // pred_check_branch
          %402 = sbr.rel (%p400) target = $region52
        $region51: #{forward.1} parent=11 // pred_region
          _
        $region52: #{forward.1} parent=11 // pred_fallthru
          _
        // Predicated region
        $region53: #{forward.1} parent=11 // pred_check
          %p403 = pneg %p281
        $region54: #{forward.1} parent=11 // pred_check_branch
          %405 = sbr.rel (%p403) target = $region56
        $region55: #{forward.1} parent=11 // pred_region
          _
        $region56: #{forward.1} parent=11 // pred_fallthru
          _
        // Predicated region
        $region57: #{forward.1} parent=11 // pred_check
          %p406 = pneg %p302
        $region58: #{forward.1} parent=11 // pred_check_branch
          %408 = sbr.rel (%p406) target = $region60
        $region59: #{forward.1} parent=11 // pred_region
          _
        $region60: #{forward.1} parent=11 // pred_fallthru
          _
      $region12: #{forward.1} parent=5 // pred_fallthru
        _
      %p409 = scmp.lt.s32.totalorder %s24, 2
      // Predicated region
      $region61: #{forward.1} parent=5 // pred_check
        %p410 = pneg %p409
      $region62: #{forward.1} parent=5 // pred_check_branch
        %412 = sbr.rel (%p410) target = $region64
      $region63: #{forward.1} parent=5 // pred_region
        // Predicated region
        $region65: #{forward.1} parent=63 // pred_check
          %p413 = pneg %p44
        $region66: #{forward.1} parent=63 // pred_check_branch
          %415 = sbr.rel (%p413) target = $region68
        $region67: #{forward.1} parent=63 // pred_region
          %p416 = scmp.lt.s32.totalorder %s24, 1
          %s417 = scalar_select %p416, %s24, 1
          %s418 = smul.addr %s417, 98
          %s419 = smul.addr %s418, 4
          %s420 = scalar_lea.vmem %s0, %s419
        $region68: #{forward.1} parent=63 // pred_fallthru
          _
      $region64: #{forward.1} parent=5 // pred_fallthru
        _
      %p421 = scmp.le.s32.totalorder 1, %s24
      %p422 = scmp.lt.s32.totalorder %s24, 3
      %p423 = pnand %p421, %p422
      %p424 = pneg %p423
      // Predicated region
      $region69: #{forward.1} parent=5 // pred_check
        _
      $region70: #{forward.1} parent=5 // pred_check_branch
        %426 = sbr.rel (%p423) target = $region72
      $region71: #{forward.1} parent=5 // pred_region
        %s427 = ssub.s32 %s24, 1
        // Predicated region
        $region73: #{forward.1} parent=71 // pred_check
          %p428 = pneg %p113
        $region74: #{forward.1} parent=71 // pred_check_branch
          %430 = sbr.rel (%p428) target = $region76
        $region75: #{forward.1} parent=71 // pred_region
          %431 = dma.done [#allocation10], 9216
        $region76: #{forward.1} parent=71 // pred_fallthru
          _
        // Predicated region
        $region77: #{forward.1} parent=71 // pred_check
          %p432 = pneg %p155
        $region78: #{forward.1} parent=71 // pred_check_branch
          %434 = sbr.rel (%p432) target = $region80
        $region79: #{forward.1} parent=71 // pred_region
          %435 = dma.done [#allocation13], 9216
        $region80: #{forward.1} parent=71 // pred_fallthru
          _
        // Predicated region
        $region81: #{forward.1} parent=71 // pred_check
          %p436 = pneg %p197
        $region82: #{forward.1} parent=71 // pred_check_branch
          %438 = sbr.rel (%p436) target = $region84
        $region83: #{forward.1} parent=71 // pred_region
          %439 = dma.done [#allocation13], 9216
        $region84: #{forward.1} parent=71 // pred_fallthru
          _
        %p440 = scmp.lt.s32.totalorder %s29, 1
        %s441 = scalar_select %p440, %s29, 1
        %s442 = smul.addr %s441, 98
        %s443 = smul.addr %s442, 4
        %s444 = scalar_lea.vmem %s0, %s443
        %p445 = pneg %p50
        %p446 = pneg %p47
        %p447 = pneg %p71
        %p448 = pneg %p68
        %p449 = pneg %p92
        %p450 = pneg %p89
        %p451 = pneg %p113
        %p452 = pneg %p110
        %p453 = pneg %p134
        %p454 = pneg %p131
        %p455 = pneg %p155
        %p456 = pneg %p152
        %p457 = pneg %p176
        %p458 = pneg %p173
        %p459 = pneg %p197
        %p460 = pneg %p194
        %p461 = pneg %p218
        %p462 = pneg %p215
        %p463 = pneg %p239
        %p464 = pneg %p236
        %p465 = pneg %p260
        %p466 = pneg %p257
        %p467 = pneg %p281
        %p468 = pneg %p278
        %p469 = pneg %p302
        %p470 = pneg %p299
        %p471 = pneg %p328
        %p472 = pneg %p325
        %s473 = sand.u32 %s315, 1
        %s474 = scalar_lea.sflag [#allocation11], %s473
        %s475 = sand.u32 %s315, 1
        %s476 = scalar_lea.vmem [#allocation15], %s475
        %p477 = scmp.lt.s32.totalorder %s29, 1
        %s478 = scalar_select %p477, %s29, 1
        %s479 = smul.addr %s478, 98
        %s480 = smul.addr %s479, 4
        %s481 = scalar_lea.vmem %s0, %s480
        %v483 = vld [vmem:[%s481] sm:$0xf]
        %v484 = vld [vmem:[%s481 + $0x4] sm:$0xf]
        %v485 = vld [vmem:[%s481 + $0x8] sm:$0xf]
        %v486 = vld [vmem:[%s481 + $0xc] sm:$0xf]
        %v487 = vld [vmem:[%s481 + $0x10] sm:$0xf]
        %v488 = vld [vmem:[%s481 + $0x14] sm:$0xf]
        %v489 = vld [vmem:[%s481 + $0x18] sm:$0xf]
        %v490 = vld [vmem:[%s481 + $0x1c] sm:$0xf]
        %v491 = vld [vmem:[%s481 + $0x20] sm:$0xf]
        %v492 = vld [vmem:[%s481 + $0x24] sm:$0xf]
        %v493 = vld [vmem:[%s481 + $0x28] sm:$0xf]
        %v494 = vld [vmem:[%s481 + $0x2c] sm:$0xf]
        %v495 = vld [vmem:[%s481 + $0x30] sm:$0xf]
        %v496 = vld [vmem:[%s481 + $0x34] sm:$0xf]
        %v497 = vld [vmem:[%s481 + $0x38] sm:$0xf]
        %v498 = vld [vmem:[%s481 + $0x3c] sm:$0xf]
        %v499 = vld [vmem:[%s481 + $0x40] sm:$0xf]
        %v500 = vld [vmem:[%s481 + $0x44] sm:$0xf]
        %v501 = vld [vmem:[%s481 + $0x48] sm:$0xf]
        %v502 = vld [vmem:[%s481 + $0x4c] sm:$0xf]
        %v503 = vld [vmem:[%s481 + $0x50] sm:$0xf]
        %v504 = vld [vmem:[%s481 + $0x54] sm:$0xf]
        %v505 = vld [vmem:[%s481 + $0x58] sm:$0xf]
        %v506 = vld [vmem:[%s481 + $0x5c] sm:$0xf]
        %v507 = vld [vmem:[%s481 + $0x60] sm:$0xf]
        %v508 = vld [vmem:[%s481 + $0x64] sm:$0xf]
        %v509 = vld [vmem:[%s481 + $0x68] sm:$0xf]
        %v510 = vld [vmem:[%s481 + $0x6c] sm:$0xf]
        %v511 = vld [vmem:[%s481 + $0x70] sm:$0xf]
        %v512 = vld [vmem:[%s481 + $0x74] sm:$0xf]
        %v513 = vld [vmem:[%s481 + $0x78] sm:$0xf]
        %v514 = vld [vmem:[%s481 + $0x7c] sm:$0xf]
        %v515 = vld [vmem:[%s481 + $0x80] sm:$0xf]
        %v516 = vld [vmem:[%s481 + $0x84] sm:$0xf]
        %v517 = vld [vmem:[%s481 + $0x88] sm:$0xf]
        %v518 = vld [vmem:[%s481 + $0x8c] sm:$0xf]
        %v519 = vld [vmem:[%s481 + $0x90] sm:$0xf]
        %v520 = vld [vmem:[%s481 + $0x94] sm:$0xf]
        %v521 = vld [vmem:[%s481 + $0x98] sm:$0xf]
        %v522 = vld [vmem:[%s481 + $0x9c] sm:$0xf]
        %v523 = vld [vmem:[%s481 + $0xa0] sm:$0xf]
        %v524 = vld [vmem:[%s481 + $0xa4] sm:$0xf]
        %v525 = vld [vmem:[%s481 + $0xa8] sm:$0xf]
        %v526 = vld [vmem:[%s481 + $0xac] sm:$0xf]
        %v527 = vld [vmem:[%s481 + $0xb0] sm:$0xf]
        %v528 = vld [vmem:[%s481 + $0xb4] sm:$0xf]
        %v529 = vld [vmem:[%s481 + $0xb8] sm:$0xf]
        %v530 = vld [vmem:[%s481 + $0xbc] sm:$0xf]
        %v531 = vld [vmem:[%s481 + $0xc0] sm:$0xf]
        %v532 = vld [vmem:[%s481 + $0xc4] sm:$0xf]
        %v533 = vld [vmem:[%s481 + $0xc8] sm:$0xf]
        %v534 = vld [vmem:[%s481 + $0xcc] sm:$0xf]
        %v535 = vld [vmem:[%s481 + $0xd0] sm:$0xf]
        %v536 = vld [vmem:[%s481 + $0xd4] sm:$0xf]
        %v537 = vld [vmem:[%s481 + $0xd8] sm:$0xf]
        %v538 = vld [vmem:[%s481 + $0xdc] sm:$0xf]
        %v539 = vld [vmem:[%s481 + $0xe0] sm:$0xf]
        %v540 = vld [vmem:[%s481 + $0xe4] sm:$0xf]
        %v541 = vld [vmem:[%s481 + $0xe8] sm:$0xf]
        %v542 = vld [vmem:[%s481 + $0xec] sm:$0xf]
        %v543 = vld [vmem:[%s481 + $0xf0] sm:$0xf]
        %v544 = vld [vmem:[%s481 + $0xf4] sm:$0xf]
        %v545 = vld [vmem:[%s481 + $0xf8] sm:$0xf]
        %v546 = vld [vmem:[%s481 + $0xfc] sm:$0xf]
        %v547 = vld [vmem:[%s481 + $0x100] sm:$0xf]
        %v548 = vld [vmem:[%s481 + $0x104] sm:$0xf]
        %v549 = vld [vmem:[%s481 + $0x108] sm:$0xf]
        %v550 = vld [vmem:[%s481 + $0x10c] sm:$0xf]
        %v551 = vld [vmem:[%s481 + $0x110] sm:$0xf]
        %v552 = vld [vmem:[%s481 + $0x114] sm:$0xf]
        %v553 = vld [vmem:[%s481 + $0x118] sm:$0xf]
        %v554 = vld [vmem:[%s481 + $0x11c] sm:$0xf]
        %v555 = vld [vmem:[%s481 + $0x120] sm:$0xf]
        %v556 = vld [vmem:[%s481 + $0x124] sm:$0xf]
        %v557 = vld [vmem:[%s481 + $0x128] sm:$0xf]
        %v558 = vld [vmem:[%s481 + $0x12c] sm:$0xf]
        %v559 = vld [vmem:[%s481 + $0x130] sm:$0xf]
        %v560 = vld [vmem:[%s481 + $0x134] sm:$0xf]
        %v561 = vld [vmem:[%s481 + $0x138] sm:$0xf]
        %v562 = vld [vmem:[%s481 + $0x13c] sm:$0xf]
        %v563 = vld [vmem:[%s481 + $0x140] sm:$0xf]
        %v564 = vld [vmem:[%s481 + $0x144] sm:$0xf]
        %v565 = vld [vmem:[%s481 + $0x148] sm:$0xf]
        %v566 = vld [vmem:[%s481 + $0x14c] sm:$0xf]
        %v567 = vld [vmem:[%s481 + $0x150] sm:$0xf]
        %v568 = vld [vmem:[%s481 + $0x154] sm:$0xf]
        %v569 = vld [vmem:[%s481 + $0x158] sm:$0xf]
        %v570 = vld [vmem:[%s481 + $0x15c] sm:$0xf]
        %v571 = vld [vmem:[%s481 + $0x160] sm:$0xf]
        %v572 = vld [vmem:[%s481 + $0x164] sm:$0xf]
        %v573 = vld [vmem:[%s481 + $0x168] sm:$0xf]
        %v574 = vld [vmem:[%s481 + $0x16c] sm:$0xf]
        %v575 = vld [vmem:[%s481 + $0x170] sm:$0xf]
        %v576 = vld [vmem:[%s481 + $0x174] sm:$0xf]
        %v577 = vld [vmem:[%s481 + $0x178] sm:$0xf]
        %v578 = vld [vmem:[%s481 + $0x17c] sm:$0xf]
        %v579 = vld [vmem:[%s481 + $0x180] sm:$0xf]
        %v580 = vld [vmem:[%s481 + $0x184] sm:$0xf]
        %v581 = vld [vmem:[%s1] sm:$0xf]
        %v582 = vld [vmem:[%s1 + $0x4] sm:$0x1]
        %v681 = vunpack.c.l.b16 %v483
        %v682 = vunpack.c.l.b16 %v484
        %v683 = vunpack.c.l.b16 %v485
        %v684 = vunpack.c.l.b16 %v486
        %v685 = vunpack.c.l.b16 %v487
        %v686 = vunpack.c.l.b16 %v488
        %v687 = vunpack.c.l.b16 %v489
        %v688 = vunpack.c.l.b16 %v490
        %v689 = vunpack.c.l.b16 %v491
        %v690 = vunpack.c.l.b16 %v492
        %v691 = vunpack.c.l.b16 %v493
        %v692 = vunpack.c.l.b16 %v494
        %v693 = vunpack.c.l.b16 %v495
        %v694 = vunpack.c.l.b16 %v496
        %v695 = vunpack.c.l.b16 %v497
        %v696 = vunpack.c.l.b16 %v498
        %v697 = vunpack.c.l.b16 %v499
        %v698 = vunpack.c.l.b16 %v500
        %v699 = vunpack.c.l.b16 %v501
        %v700 = vunpack.c.l.b16 %v502
        %v701 = vunpack.c.l.b16 %v503
        %v702 = vunpack.c.l.b16 %v504
        %v703 = vunpack.c.l.b16 %v505
        %v704 = vunpack.c.l.b16 %v506
        %v705 = vunpack.c.l.b16 %v507
        %v706 = vunpack.c.l.b16 %v508
        %v707 = vunpack.c.l.b16 %v509
        %v708 = vunpack.c.l.b16 %v510
        %v709 = vunpack.c.l.b16 %v511
        %v710 = vunpack.c.l.b16 %v512
        %v711 = vunpack.c.l.b16 %v513
        %v712 = vunpack.c.l.b16 %v514
        %v713 = vunpack.c.l.b16 %v515
        %v714 = vunpack.c.l.b16 %v516
        %v715 = vunpack.c.l.b16 %v517
        %v716 = vunpack.c.l.b16 %v518
        %v717 = vunpack.c.l.b16 %v519
        %v718 = vunpack.c.l.b16 %v520
        %v719 = vunpack.c.l.b16 %v521
        %v720 = vunpack.c.l.b16 %v522
        %v721 = vunpack.c.l.b16 %v523
        %v722 = vunpack.c.l.b16 %v524
        %v723 = vunpack.c.l.b16 %v525
        %v724 = vunpack.c.l.b16 %v526
        %v725 = vunpack.c.l.b16 %v527
        %v726 = vunpack.c.l.b16 %v528
        %v727 = vunpack.c.l.b16 %v529
        %v728 = vunpack.c.l.b16 %v530
        %v729 = vunpack.c.l.b16 %v531
        %v730 = vunpack.c.l.b16 %v532
        %v731 = vunpack.c.l.b16 %v533
        %v732 = vunpack.c.l.b16 %v534
        %v733 = vunpack.c.l.b16 %v535
        %v734 = vunpack.c.l.b16 %v536
        %v735 = vunpack.c.l.b16 %v537
        %v736 = vunpack.c.l.b16 %v538
        %v737 = vunpack.c.l.b16 %v539
        %v738 = vunpack.c.l.b16 %v540
        %v739 = vunpack.c.l.b16 %v541
        %v740 = vunpack.c.l.b16 %v542
        %v741 = vunpack.c.l.b16 %v543
        %v742 = vunpack.c.l.b16 %v544
        %v743 = vunpack.c.l.b16 %v545
        %v744 = vunpack.c.l.b16 %v546
        %v745 = vunpack.c.l.b16 %v547
        %v746 = vunpack.c.l.b16 %v548
        %v747 = vunpack.c.l.b16 %v549
        %v748 = vunpack.c.l.b16 %v550
        %v749 = vunpack.c.l.b16 %v551
        %v750 = vunpack.c.l.b16 %v552
        %v751 = vunpack.c.l.b16 %v553
        %v752 = vunpack.c.l.b16 %v554
        %v753 = vunpack.c.l.b16 %v555
        %v754 = vunpack.c.l.b16 %v556
        %v755 = vunpack.c.l.b16 %v557
        %v756 = vunpack.c.l.b16 %v558
        %v757 = vunpack.c.l.b16 %v559
        %v758 = vunpack.c.l.b16 %v560
        %v759 = vunpack.c.l.b16 %v561
        %v760 = vunpack.c.l.b16 %v562
        %v761 = vunpack.c.l.b16 %v563
        %v762 = vunpack.c.l.b16 %v564
        %v763 = vunpack.c.l.b16 %v565
        %v764 = vunpack.c.l.b16 %v566
        %v765 = vunpack.c.l.b16 %v567
        %v766 = vunpack.c.l.b16 %v568
        %v767 = vunpack.c.l.b16 %v569
        %v768 = vunpack.c.l.b16 %v570
        %v769 = vunpack.c.l.b16 %v571
        %v770 = vunpack.c.l.b16 %v572
        %v771 = vunpack.c.l.b16 %v573
        %v772 = vunpack.c.l.b16 %v574
        %v773 = vunpack.c.l.b16 %v575
        %v774 = vunpack.c.l.b16 %v576
        %v775 = vunpack.c.l.b16 %v577
        %v776 = vunpack.c.l.b16 %v578
        %v777 = vunpack.c.l.b16 %v579
        %v778 = vunpack.c.l.b16 %v580
        %v779 = vpack.c.b16 %v682, %v681
        %v780 = vpack.c.b16 %v684, %v683
        %v781 = vpack.c.b16 %v686, %v685
        %v782 = vpack.c.b16 %v688, %v687
        %v783 = vpack.c.b16 %v690, %v689
        %v784 = vpack.c.b16 %v692, %v691
        %v785 = vpack.c.b16 %v694, %v693
        %v786 = vpack.c.b16 %v696, %v695
        %v787 = vpack.c.b16 %v698, %v697
        %v788 = vpack.c.b16 %v700, %v699
        %v789 = vpack.c.b16 %v702, %v701
        %v790 = vpack.c.b16 %v704, %v703
        %v791 = vpack.c.b16 %v706, %v705
        %v792 = vpack.c.b16 %v708, %v707
        %v793 = vpack.c.b16 %v710, %v709
        %v794 = vpack.c.b16 %v712, %v711
        %v795 = vpack.c.b16 %v714, %v713
        %v796 = vpack.c.b16 %v716, %v715
        %v797 = vpack.c.b16 %v718, %v717
        %v798 = vpack.c.b16 %v720, %v719
        %v799 = vpack.c.b16 %v722, %v721
        %v800 = vpack.c.b16 %v724, %v723
        %v801 = vpack.c.b16 %v726, %v725
        %v802 = vpack.c.b16 %v728, %v727
        %v803 = vpack.c.b16 %v730, %v729
        %v804 = vpack.c.b16 %v732, %v731
        %v805 = vpack.c.b16 %v734, %v733
        %v806 = vpack.c.b16 %v736, %v735
        %v807 = vpack.c.b16 %v738, %v737
        %v808 = vpack.c.b16 %v740, %v739
        %v809 = vpack.c.b16 %v742, %v741
        %v810 = vpack.c.b16 %v744, %v743
        %v811 = vpack.c.b16 %v746, %v745
        %v812 = vpack.c.b16 %v748, %v747
        %v813 = vpack.c.b16 %v750, %v749
        %v814 = vpack.c.b16 %v752, %v751
        %v815 = vpack.c.b16 %v754, %v753
        %v816 = vpack.c.b16 %v756, %v755
        %v817 = vpack.c.b16 %v758, %v757
        %v818 = vpack.c.b16 %v760, %v759
        %v819 = vpack.c.b16 %v762, %v761
        %v820 = vpack.c.b16 %v764, %v763
        %v821 = vpack.c.b16 %v766, %v765
        %v822 = vpack.c.b16 %v768, %v767
        %v823 = vpack.c.b16 %v770, %v769
        %v824 = vpack.c.b16 %v772, %v771
        %v825 = vpack.c.b16 %v774, %v773
        %v826 = vpack.c.b16 %v776, %v775
        %v827 = vpack.c.b16 %v778, %v777
        %v830 = vunpack.c.l.b16 %v581
        %v831 = vunpack.c.l.b16 %v582
        %v832 = vpack.c.b16 %v831, %v830
        %vm833 = vcmask 72704
        %v835 = vsel %vm833, %v779, 0
        %v838 = vsel %vm833, %v780, 0
        %v841 = vsel %vm833, %v781, 0
        %v844 = vsel %vm833, %v782, 0
        %v847 = vsel %vm833, %v783, 0
        %v850 = vsel %vm833, %v784, 0
        %v853 = vsel %vm833, %v785, 0
        %v856 = vsel %vm833, %v786, 0
        %v859 = vsel %vm833, %v787, 0
        %v862 = vsel %vm833, %v788, 0
        %v865 = vsel %vm833, %v789, 0
        %v868 = vsel %vm833, %v790, 0
        %v871 = vsel %vm833, %v791, 0
        %v874 = vsel %vm833, %v792, 0
        %v877 = vsel %vm833, %v793, 0
        %v880 = vsel %vm833, %v794, 0
        %v883 = vsel %vm833, %v795, 0
        %v886 = vsel %vm833, %v796, 0
        %v889 = vsel %vm833, %v797, 0
        %v892 = vsel %vm833, %v798, 0
        %v895 = vsel %vm833, %v799, 0
        %v898 = vsel %vm833, %v800, 0
        %v901 = vsel %vm833, %v801, 0
        %v904 = vsel %vm833, %v802, 0
        %v907 = vsel %vm833, %v803, 0
        %v910 = vsel %vm833, %v804, 0
        %v913 = vsel %vm833, %v805, 0
        %v916 = vsel %vm833, %v806, 0
        %v919 = vsel %vm833, %v807, 0
        %v922 = vsel %vm833, %v808, 0
        %v925 = vsel %vm833, %v809, 0
        %v928 = vsel %vm833, %v810, 0
        %v931 = vsel %vm833, %v811, 0
        %v934 = vsel %vm833, %v812, 0
        %v937 = vsel %vm833, %v813, 0
        %v940 = vsel %vm833, %v814, 0
        %v943 = vsel %vm833, %v815, 0
        %v946 = vsel %vm833, %v816, 0
        %v949 = vsel %vm833, %v817, 0
        %v952 = vsel %vm833, %v818, 0
        %v955 = vsel %vm833, %v819, 0
        %v958 = vsel %vm833, %v820, 0
        %v961 = vsel %vm833, %v821, 0
        %v964 = vsel %vm833, %v822, 0
        %v967 = vsel %vm833, %v823, 0
        %v970 = vsel %vm833, %v824, 0
        %v973 = vsel %vm833, %v825, 0
        %v976 = vsel %vm833, %v826, 0
        %v979 = vsel %vm833, %v827, 0
        %vm981 = vcmask 1043456
        %vm982 = vcmask 1044480
        %v983 = vsel %vm981, 4294967295, 65535
        %v984 = vsel %vm982, %v983, 0
        %v986 = vand.u32 %v832, %v984
        %988 = vmatprep.subr.bf16.mxu0 0
        %989 = vmatpush1.bf16.msra.mxu0 %v986
        %990 = vmatprep.subr.bf16.mxu0 0
        %991 = vmatpush1.bf16.msra.mxu0 0
        %992 = vmatprep.subr.bf16.mxu0 0
        %993 = vmatpush1.bf16.msra.mxu0 0
        %994 = vmatprep.subr.bf16.mxu0 0
        %995 = vmatpush1.bf16.msra.mxu0 0
        %996 = vmatprep.subr.bf16.mxu0 0
        %997 = vmatpush1.bf16.msra.mxu0 0
        %998 = vmatprep.subr.bf16.mxu0 0
        %999 = vmatpush1.bf16.msra.mxu0 0
        %1000 = vmatprep.subr.bf16.mxu0 0
        %1001 = vmatpush1.bf16.msra.mxu0 0
        %1002 = vmatprep.subr.bf16.mxu0 0
        %1003 = vmatpush1.bf16.msra.mxu0 0
        %1004 = vmatprep.subr.bf16.mxu0 0
        %1005 = vmatpush1.bf16.msra.mxu0 0
        %1006 = vmatprep.subr.bf16.mxu0 0
        %1007 = vmatpush1.bf16.msra.mxu0 0
        %1008 = vmatprep.subr.bf16.mxu0 0
        %1009 = vmatpush1.bf16.msra.mxu0 0
        %1010 = vmatprep.subr.bf16.mxu0 0
        %1011 = vmatpush1.bf16.msra.mxu0 0
        %1012 = vmatprep.subr.bf16.mxu0 0
        %1013 = vmatpush1.bf16.msra.mxu0 0
        %1014 = vmatprep.subr.bf16.mxu0 0
        %1015 = vmatpush1.bf16.msra.mxu0 0
        %1016 = vmatprep.subr.bf16.mxu0 0
        %1017 = vmatpush1.bf16.msra.mxu0 0
        %1018 = vmatprep.subr.bf16.mxu0 0
        %1019 = vmatpush1.bf16.msra.mxu0 0
        %1020 = vmatprep.mubr.bf16.mxu0 0
        %1021 = vmatmul.mubr.bf16.gmra.mrb[0].mxu0 %v835
        %v1022 = vpop.f32.mrb[0].mxu0
        %v1023 = vadd.f32 0.0, %v1022
        %v1024 = vpop.f32.mrb[0].mxu0
        %v1025 = vpop.f32.mrb[0].mxu0
        %v1026 = vadd.f32 0.0, %v1025
        %v1027 = vpop.f32.mrb[0].mxu0
        %1028 = vmatprep.mubr.bf16.mxu0 0
        %1029 = vmatmul.mubr.bf16.gmra.mrb[0].mxu0 %v838
        %v1030 = vpop.f32.mrb[0].mxu0
        %v1031 = vadd.f32 0.0, %v1030
        %v1032 = vpop.f32.mrb[0].mxu0
        %v1033 = vpop.f32.mrb[0].mxu0
        %v1034 = vadd.f32 0.0, %v1033
        %v1035 = vpop.f32.mrb[0].mxu0
        %1036 = vmatprep.mubr.bf16.mxu0 0
        %1037 = vmatmul.mubr.bf16.gmra.mrb[0].mxu0 %v841
        %v1038 = vpop.f32.mrb[0].mxu0
        %v1039 = vadd.f32 0.0, %v1038
        %v1040 = vpop.f32.mrb[0].mxu0
        %v1041 = vpop.f32.mrb[0].mxu0
        %v1042 = vadd.f32 0.0, %v1041
        %v1043 = vpop.f32.mrb[0].mxu0
        %1044 = vmatprep.mubr.bf16.mxu0 0
        %1045 = vmatmul.mubr.bf16.gmra.mrb[0].mxu0 %v844
        %v1046 = vpop.f32.mrb[0].mxu0
        %v1047 = vadd.f32 0.0, %v1046
        %v1048 = vpop.f32.mrb[0].mxu0
        %v1049 = vpop.f32.mrb[0].mxu0
        %v1050 = vadd.f32 0.0, %v1049
        %v1051 = vpop.f32.mrb[0].mxu0
        %1052 = vmatprep.mubr.bf16.mxu0 0
        %1053 = vmatmul.mubr.bf16.gmra.mrb[0].mxu0 %v847
        %v1054 = vpop.f32.mrb[0].mxu0
        %v1055 = vadd.f32 0.0, %v1054
        %v1056 = vpop.f32.mrb[0].mxu0
        %v1057 = vpop.f32.mrb[0].mxu0
        %v1058 = vadd.f32 0.0, %v1057
        %v1059 = vpop.f32.mrb[0].mxu0
        %1060 = vmatprep.mubr.bf16.mxu0 0
        %1061 = vmatmul.mubr.bf16.gmra.mrb[0].mxu0 %v850
        %v1062 = vpop.f32.mrb[0].mxu0
        %v1063 = vadd.f32 0.0, %v1062
        %v1064 = vpop.f32.mrb[0].mxu0
        %v1065 = vpop.f32.mrb[0].mxu0
        %v1066 = vadd.f32 0.0, %v1065
        %v1067 = vpop.f32.mrb[0].mxu0
        %1068 = vmatprep.mubr.bf16.mxu0 0
        %1069 = vmatmul.mubr.bf16.gmra.mrb[0].mxu0 %v853
        %v1070 = vpop.f32.mrb[0].mxu0
        %v1071 = vadd.f32 0.0, %v1070
        %v1072 = vpop.f32.mrb[0].mxu0
        %v1073 = vpop.f32.mrb[0].mxu0
        %v1074 = vadd.f32 0.0, %v1073
        %v1075 = vpop.f32.mrb[0].mxu0
        %1076 = vmatprep.mubr.bf16.mxu0 0
        %1077 = vmatmul.mubr.bf16.gmra.mrb[0].mxu0 %v856
        %v1078 = vpop.f32.mrb[0].mxu0
        %v1079 = vadd.f32 0.0, %v1078
        %v1080 = vpop.f32.mrb[0].mxu0
        %v1081 = vpop.f32.mrb[0].mxu0
        %v1082 = vadd.f32 0.0, %v1081
        %v1083 = vpop.f32.mrb[0].mxu0
        %1084 = vmatprep.mubr.bf16.mxu0 0
        %1085 = vmatmul.mubr.bf16.gmra.mrb[0].mxu0 %v859
        %v1086 = vpop.f32.mrb[0].mxu0
        %v1087 = vadd.f32 0.0, %v1086
        %v1088 = vpop.f32.mrb[0].mxu0
        %v1089 = vpop.f32.mrb[0].mxu0
        %v1090 = vadd.f32 0.0, %v1089
        %v1091 = vpop.f32.mrb[0].mxu0
        %1092 = vmatprep.mubr.bf16.mxu0 0
        %1093 = vmatmul.mubr.bf16.gmra.mrb[0].mxu0 %v862
        %v1094 = vpop.f32.mrb[0].mxu0
        %v1095 = vadd.f32 0.0, %v1094
        %v1096 = vpop.f32.mrb[0].mxu0
        %v1097 = vpop.f32.mrb[0].mxu0
        %v1098 = vadd.f32 0.0, %v1097
        %v1099 = vpop.f32.mrb[0].mxu0
        %1100 = vmatprep.mubr.bf16.mxu0 0
        %1101 = vmatmul.mubr.bf16.gmra.mrb[0].mxu0 %v865
        %v1102 = vpop.f32.mrb[0].mxu0
        %v1103 = vadd.f32 0.0, %v1102
        %v1104 = vpop.f32.mrb[0].mxu0
        %v1105 = vpop.f32.mrb[0].mxu0
        %v1106 = vadd.f32 0.0, %v1105
        %v1107 = vpop.f32.mrb[0].mxu0
        %1108 = vmatprep.mubr.bf16.mxu0 0
        %1109 = vmatmul.mubr.bf16.gmra.mrb[0].mxu0 %v868
        %v1110 = vpop.f32.mrb[0].mxu0
        %v1111 = vadd.f32 0.0, %v1110
        %v1112 = vpop.f32.mrb[0].mxu0
        %v1113 = vpop.f32.mrb[0].mxu0
        %v1114 = vadd.f32 0.0, %v1113
        %v1115 = vpop.f32.mrb[0].mxu0
        %1116 = vmatprep.mubr.bf16.mxu0 0
        %1117 = vmatmul.mubr.bf16.gmra.mrb[0].mxu0 %v871
        %v1118 = vpop.f32.mrb[0].mxu0
        %v1119 = vadd.f32 0.0, %v1118
        %v1120 = vpop.f32.mrb[0].mxu0
        %v1121 = vpop.f32.mrb[0].mxu0
        %v1122 = vadd.f32 0.0, %v1121
        %v1123 = vpop.f32.mrb[0].mxu0
        %1124 = vmatprep.mubr.bf16.mxu0 0
        %1125 = vmatmul.mubr.bf16.gmra.mrb[0].mxu0 %v874
        %v1126 = vpop.f32.mrb[0].mxu0
        %v1127 = vadd.f32 0.0, %v1126
        %v1128 = vpop.f32.mrb[0].mxu0
        %v1129 = vpop.f32.mrb[0].mxu0
        %v1130 = vadd.f32 0.0, %v1129
        %v1131 = vpop.f32.mrb[0].mxu0
        %1132 = vmatprep.mubr.bf16.mxu0 0
        %1133 = vmatmul.mubr.bf16.gmra.mrb[0].mxu0 %v877
        %v1134 = vpop.f32.mrb[0].mxu0
        %v1135 = vadd.f32 0.0, %v1134
        %v1136 = vpop.f32.mrb[0].mxu0
        %v1137 = vpop.f32.mrb[0].mxu0
        %v1138 = vadd.f32 0.0, %v1137
        %v1139 = vpop.f32.mrb[0].mxu0
        %1140 = vmatprep.mubr.bf16.mxu0 0
        %1141 = vmatmul.mubr.bf16.gmra.mrb[0].mxu0 %v880
        %v1142 = vpop.f32.mrb[0].mxu0
        %v1143 = vadd.f32 0.0, %v1142
        %v1144 = vpop.f32.mrb[0].mxu0
        %v1145 = vpop.f32.mrb[0].mxu0
        %v1146 = vadd.f32 0.0, %v1145
        %v1147 = vpop.f32.mrb[0].mxu0
        %1148 = vmatprep.mubr.bf16.mxu0 0
        %1149 = vmatmul.mubr.bf16.gmra.mrb[0].mxu0 %v883
        %v1150 = vpop.f32.mrb[0].mxu0
        %v1151 = vadd.f32 0.0, %v1150
        %v1152 = vpop.f32.mrb[0].mxu0
        %v1153 = vpop.f32.mrb[0].mxu0
        %v1154 = vadd.f32 0.0, %v1153
        %v1155 = vpop.f32.mrb[0].mxu0
        %1156 = vmatprep.mubr.bf16.mxu0 0
        %1157 = vmatmul.mubr.bf16.gmra.mrb[0].mxu0 %v886
        %v1158 = vpop.f32.mrb[0].mxu0
        %v1159 = vadd.f32 0.0, %v1158
        %v1160 = vpop.f32.mrb[0].mxu0
        %v1161 = vpop.f32.mrb[0].mxu0
        %v1162 = vadd.f32 0.0, %v1161
        %v1163 = vpop.f32.mrb[0].mxu0
        %1164 = vmatprep.mubr.bf16.mxu0 0
        %1165 = vmatmul.mubr.bf16.gmra.mrb[0].mxu0 %v889
        %v1166 = vpop.f32.mrb[0].mxu0
        %v1167 = vadd.f32 0.0, %v1166
        %v1168 = vpop.f32.mrb[0].mxu0
        %v1169 = vpop.f32.mrb[0].mxu0
        %v1170 = vadd.f32 0.0, %v1169
        %v1171 = vpop.f32.mrb[0].mxu0
        %1172 = vmatprep.mubr.bf16.mxu0 0
        %1173 = vmatmul.mubr.bf16.gmra.mrb[0].mxu0 %v892
        %v1174 = vpop.f32.mrb[0].mxu0
        %v1175 = vadd.f32 0.0, %v1174
        %v1176 = vpop.f32.mrb[0].mxu0
        %v1177 = vpop.f32.mrb[0].mxu0
        %v1178 = vadd.f32 0.0, %v1177
        %v1179 = vpop.f32.mrb[0].mxu0
        %1180 = vmatprep.mubr.bf16.mxu0 0
        %1181 = vmatmul.mubr.bf16.gmra.mrb[0].mxu0 %v895
        %v1182 = vpop.f32.mrb[0].mxu0
        %v1183 = vadd.f32 0.0, %v1182
        %v1184 = vpop.f32.mrb[0].mxu0
        %v1185 = vpop.f32.mrb[0].mxu0
        %v1186 = vadd.f32 0.0, %v1185
        %v1187 = vpop.f32.mrb[0].mxu0
        %1188 = vmatprep.mubr.bf16.mxu0 0
        %1189 = vmatmul.mubr.bf16.gmra.mrb[0].mxu0 %v898
        %v1190 = vpop.f32.mrb[0].mxu0
        %v1191 = vadd.f32 0.0, %v1190
        %v1192 = vpop.f32.mrb[0].mxu0
        %v1193 = vpop.f32.mrb[0].mxu0
        %v1194 = vadd.f32 0.0, %v1193
        %v1195 = vpop.f32.mrb[0].mxu0
        %1196 = vmatprep.mubr.bf16.mxu0 0
        %1197 = vmatmul.mubr.bf16.gmra.mrb[0].mxu0 %v901
        %v1198 = vpop.f32.mrb[0].mxu0
        %v1199 = vadd.f32 0.0, %v1198
        %v1200 = vpop.f32.mrb[0].mxu0
        %v1201 = vpop.f32.mrb[0].mxu0
        %v1202 = vadd.f32 0.0, %v1201
        %v1203 = vpop.f32.mrb[0].mxu0
        %1204 = vmatprep.mubr.bf16.mxu0 0
        %1205 = vmatmul.mubr.bf16.gmra.mrb[0].mxu0 %v904
        %v1206 = vpop.f32.mrb[0].mxu0
        %v1207 = vadd.f32 0.0, %v1206
        %v1208 = vpop.f32.mrb[0].mxu0
        %v1209 = vpop.f32.mrb[0].mxu0
        %v1210 = vadd.f32 0.0, %v1209
        %v1211 = vpop.f32.mrb[0].mxu0
        %1212 = vmatprep.mubr.bf16.mxu0 0
        %1213 = vmatmul.mubr.bf16.gmra.mrb[0].mxu0 %v907
        %v1214 = vpop.f32.mrb[0].mxu0
        %v1215 = vadd.f32 0.0, %v1214
        %v1216 = vpop.f32.mrb[0].mxu0
        %v1217 = vpop.f32.mrb[0].mxu0
        %v1218 = vadd.f32 0.0, %v1217
        %v1219 = vpop.f32.mrb[0].mxu0
        %1220 = vmatprep.mubr.bf16.mxu0 0
        %1221 = vmatmul.mubr.bf16.gmra.mrb[0].mxu0 %v910
        %v1222 = vpop.f32.mrb[0].mxu0
        %v1223 = vadd.f32 0.0, %v1222
        %v1224 = vpop.f32.mrb[0].mxu0
        %v1225 = vpop.f32.mrb[0].mxu0
        %v1226 = vadd.f32 0.0, %v1225
        %v1227 = vpop.f32.mrb[0].mxu0
        %1228 = vmatprep.mubr.bf16.mxu0 0
        %1229 = vmatmul.mubr.bf16.gmra.mrb[0].mxu0 %v913
        %v1230 = vpop.f32.mrb[0].mxu0
        %v1231 = vadd.f32 0.0, %v1230
        %v1232 = vpop.f32.mrb[0].mxu0
        %v1233 = vpop.f32.mrb[0].mxu0
        %v1234 = vadd.f32 0.0, %v1233
        %v1235 = vpop.f32.mrb[0].mxu0
        %1236 = vmatprep.mubr.bf16.mxu0 0
        %1237 = vmatmul.mubr.bf16.gmra.mrb[0].mxu0 %v916
        %v1238 = vpop.f32.mrb[0].mxu0
        %v1239 = vadd.f32 0.0, %v1238
        %v1240 = vpop.f32.mrb[0].mxu0
        %v1241 = vpop.f32.mrb[0].mxu0
        %v1242 = vadd.f32 0.0, %v1241
        %v1243 = vpop.f32.mrb[0].mxu0
        %1244 = vmatprep.mubr.bf16.mxu0 0
        %1245 = vmatmul.mubr.bf16.gmra.mrb[0].mxu0 %v919
        %v1246 = vpop.f32.mrb[0].mxu0
        %v1247 = vadd.f32 0.0, %v1246
        %v1248 = vpop.f32.mrb[0].mxu0
        %v1249 = vpop.f32.mrb[0].mxu0
        %v1250 = vadd.f32 0.0, %v1249
        %v1251 = vpop.f32.mrb[0].mxu0
        %1252 = vmatprep.mubr.bf16.mxu0 0
        %1253 = vmatmul.mubr.bf16.gmra.mrb[0].mxu0 %v922
        %v1254 = vpop.f32.mrb[0].mxu0
        %v1255 = vadd.f32 0.0, %v1254
        %v1256 = vpop.f32.mrb[0].mxu0
        %v1257 = vpop.f32.mrb[0].mxu0
        %v1258 = vadd.f32 0.0, %v1257
        %v1259 = vpop.f32.mrb[0].mxu0
        %1260 = vmatprep.mubr.bf16.mxu0 0
        %1261 = vmatmul.mubr.bf16.gmra.mrb[0].mxu0 %v925
        %v1262 = vpop.f32.mrb[0].mxu0
        %v1263 = vadd.f32 0.0, %v1262
        %v1264 = vpop.f32.mrb[0].mxu0
        %v1265 = vpop.f32.mrb[0].mxu0
        %v1266 = vadd.f32 0.0, %v1265
        %v1267 = vpop.f32.mrb[0].mxu0
        %1268 = vmatprep.mubr.bf16.mxu0 0
        %1269 = vmatmul.mubr.bf16.gmra.mrb[0].mxu0 %v928
        %v1270 = vpop.f32.mrb[0].mxu0
        %v1271 = vadd.f32 0.0, %v1270
        %v1272 = vpop.f32.mrb[0].mxu0
        %v1273 = vpop.f32.mrb[0].mxu0
        %v1274 = vadd.f32 0.0, %v1273
        %v1275 = vpop.f32.mrb[0].mxu0
        %1276 = vmatprep.mubr.bf16.mxu0 0
        %1277 = vmatmul.mubr.bf16.gmra.mrb[0].mxu0 %v931
        %v1278 = vpop.f32.mrb[0].mxu0
        %v1279 = vadd.f32 0.0, %v1278
        %v1280 = vpop.f32.mrb[0].mxu0
        %v1281 = vpop.f32.mrb[0].mxu0
        %v1282 = vadd.f32 0.0, %v1281
        %v1283 = vpop.f32.mrb[0].mxu0
        %1284 = vmatprep.mubr.bf16.mxu0 0
        %1285 = vmatmul.mubr.bf16.gmra.mrb[0].mxu0 %v934
        %v1286 = vpop.f32.mrb[0].mxu0
        %v1287 = vadd.f32 0.0, %v1286
        %v1288 = vpop.f32.mrb[0].mxu0
        %v1289 = vpop.f32.mrb[0].mxu0
        %v1290 = vadd.f32 0.0, %v1289
        %v1291 = vpop.f32.mrb[0].mxu0
        %1292 = vmatprep.mubr.bf16.mxu0 0
        %1293 = vmatmul.mubr.bf16.gmra.mrb[0].mxu0 %v937
        %v1294 = vpop.f32.mrb[0].mxu0
        %v1295 = vadd.f32 0.0, %v1294
        %v1296 = vpop.f32.mrb[0].mxu0
        %v1297 = vpop.f32.mrb[0].mxu0
        %v1298 = vadd.f32 0.0, %v1297
        %v1299 = vpop.f32.mrb[0].mxu0
        %1300 = vmatprep.mubr.bf16.mxu0 0
        %1301 = vmatmul.mubr.bf16.gmra.mrb[0].mxu0 %v940
        %v1302 = vpop.f32.mrb[0].mxu0
        %v1303 = vadd.f32 0.0, %v1302
        %v1304 = vpop.f32.mrb[0].mxu0
        %v1305 = vpop.f32.mrb[0].mxu0
        %v1306 = vadd.f32 0.0, %v1305
        %v1307 = vpop.f32.mrb[0].mxu0
        %1308 = vmatprep.mubr.bf16.mxu0 0
        %1309 = vmatmul.mubr.bf16.gmra.mrb[0].mxu0 %v943
        %v1310 = vpop.f32.mrb[0].mxu0
        %v1311 = vadd.f32 0.0, %v1310
        %v1312 = vpop.f32.mrb[0].mxu0
        %v1313 = vpop.f32.mrb[0].mxu0
        %v1314 = vadd.f32 0.0, %v1313
        %v1315 = vpop.f32.mrb[0].mxu0
        %1316 = vmatprep.mubr.bf16.mxu0 0
        %1317 = vmatmul.mubr.bf16.gmra.mrb[0].mxu0 %v946
        %v1318 = vpop.f32.mrb[0].mxu0
        %v1319 = vadd.f32 0.0, %v1318
        %v1320 = vpop.f32.mrb[0].mxu0
        %v1321 = vpop.f32.mrb[0].mxu0
        %v1322 = vadd.f32 0.0, %v1321
        %v1323 = vpop.f32.mrb[0].mxu0
        %1324 = vmatprep.mubr.bf16.mxu0 0
        %1325 = vmatmul.mubr.bf16.gmra.mrb[0].mxu0 %v949
        %v1326 = vpop.f32.mrb[0].mxu0
        %v1327 = vadd.f32 0.0, %v1326
        %v1328 = vpop.f32.mrb[0].mxu0
        %v1329 = vpop.f32.mrb[0].mxu0
        %v1330 = vadd.f32 0.0, %v1329
        %v1331 = vpop.f32.mrb[0].mxu0
        %1332 = vmatprep.mubr.bf16.mxu0 0
        %1333 = vmatmul.mubr.bf16.gmra.mrb[0].mxu0 %v952
        %v1334 = vpop.f32.mrb[0].mxu0
        %v1335 = vadd.f32 0.0, %v1334
        %v1336 = vpop.f32.mrb[0].mxu0
        %v1337 = vpop.f32.mrb[0].mxu0
        %v1338 = vadd.f32 0.0, %v1337
        %v1339 = vpop.f32.mrb[0].mxu0
        %1340 = vmatprep.mubr.bf16.mxu0 0
        %1341 = vmatmul.mubr.bf16.gmra.mrb[0].mxu0 %v955
        %v1342 = vpop.f32.mrb[0].mxu0
        %v1343 = vadd.f32 0.0, %v1342
        %v1344 = vpop.f32.mrb[0].mxu0
        %v1345 = vpop.f32.mrb[0].mxu0
        %v1346 = vadd.f32 0.0, %v1345
        %v1347 = vpop.f32.mrb[0].mxu0
        %1348 = vmatprep.mubr.bf16.mxu0 0
        %1349 = vmatmul.mubr.bf16.gmra.mrb[0].mxu0 %v958
        %v1350 = vpop.f32.mrb[0].mxu0
        %v1351 = vadd.f32 0.0, %v1350
        %v1352 = vpop.f32.mrb[0].mxu0
        %v1353 = vpop.f32.mrb[0].mxu0
        %v1354 = vadd.f32 0.0, %v1353
        %v1355 = vpop.f32.mrb[0].mxu0
        %1356 = vmatprep.mubr.bf16.mxu0 0
        %1357 = vmatmul.mubr.bf16.gmra.mrb[0].mxu0 %v961
        %v1358 = vpop.f32.mrb[0].mxu0
        %v1359 = vadd.f32 0.0, %v1358
        %v1360 = vpop.f32.mrb[0].mxu0
        %v1361 = vpop.f32.mrb[0].mxu0
        %v1362 = vadd.f32 0.0, %v1361
        %v1363 = vpop.f32.mrb[0].mxu0
        %1364 = vmatprep.mubr.bf16.mxu0 0
        %1365 = vmatmul.mubr.bf16.gmra.mrb[0].mxu0 %v964
        %v1366 = vpop.f32.mrb[0].mxu0
        %v1367 = vadd.f32 0.0, %v1366
        %v1368 = vpop.f32.mrb[0].mxu0
        %v1369 = vpop.f32.mrb[0].mxu0
        %v1370 = vadd.f32 0.0, %v1369
        %v1371 = vpop.f32.mrb[0].mxu0
        %1372 = vmatprep.mubr.bf16.mxu0 0
        %1373 = vmatmul.mubr.bf16.gmra.mrb[0].mxu0 %v967
        %v1374 = vpop.f32.mrb[0].mxu0
        %v1375 = vadd.f32 0.0, %v1374
        %v1376 = vpop.f32.mrb[0].mxu0
        %v1377 = vpop.f32.mrb[0].mxu0
        %v1378 = vadd.f32 0.0, %v1377
        %v1379 = vpop.f32.mrb[0].mxu0
        %1380 = vmatprep.mubr.bf16.mxu0 0
        %1381 = vmatmul.mubr.bf16.gmra.mrb[0].mxu0 %v970
        %v1382 = vpop.f32.mrb[0].mxu0
        %v1383 = vadd.f32 0.0, %v1382
        %v1384 = vpop.f32.mrb[0].mxu0
        %v1385 = vpop.f32.mrb[0].mxu0
        %v1386 = vadd.f32 0.0, %v1385
        %v1387 = vpop.f32.mrb[0].mxu0
        %1388 = vmatprep.mubr.bf16.mxu0 0
        %1389 = vmatmul.mubr.bf16.gmra.mrb[0].mxu0 %v973
        %v1390 = vpop.f32.mrb[0].mxu0
        %v1391 = vadd.f32 0.0, %v1390
        %v1392 = vpop.f32.mrb[0].mxu0
        %v1393 = vpop.f32.mrb[0].mxu0
        %v1394 = vadd.f32 0.0, %v1393
        %v1395 = vpop.f32.mrb[0].mxu0
        %1396 = vmatprep.mubr.bf16.mxu0 0
        %1397 = vmatmul.mubr.bf16.gmra.mrb[0].mxu0 %v976
        %v1398 = vpop.f32.mrb[0].mxu0
        %v1399 = vadd.f32 0.0, %v1398
        %v1400 = vpop.f32.mrb[0].mxu0
        %v1401 = vpop.f32.mrb[0].mxu0
        %v1402 = vadd.f32 0.0, %v1401
        %v1403 = vpop.f32.mrb[0].mxu0
        %1404 = vmatprep.mubr.bf16.mxu0 0
        %1405 = vmatmul.mubr.bf16.gmra.mrb[0].mxu0 %v979
        %v1406 = vpop.f32.mrb[0].mxu0
        %v1407 = vadd.f32 0.0, %v1406
        %v1408 = vpop.f32.mrb[0].mxu0
        %v1409 = vpop.f32.mrb[0].mxu0
        %v1410 = vadd.f32 0.0, %v1409
        %v1411 = vpop.f32.mrb[0].mxu0
        %1412 = vdwg.mxu0
        %1413 = vst [vmem:[#allocation2] sm:$0xff] %v1023
        %1414 = vst [vmem:[#allocation2 + $0x8] sm:$0xff] %v1026
        %1415 = vst [vmem:[#allocation2 + $0x10] sm:$0xff] %v1031
        %1416 = vst [vmem:[#allocation2 + $0x18] sm:$0xff] %v1034
        %1417 = vst [vmem:[#allocation2 + $0x20] sm:$0xff] %v1039
        %1418 = vst [vmem:[#allocation2 + $0x28] sm:$0xff] %v1042
        %1419 = vst [vmem:[#allocation2 + $0x30] sm:$0xff] %v1047
        %1420 = vst [vmem:[#allocation2 + $0x38] sm:$0xff] %v1050
        %1421 = vst [vmem:[#allocation2 + $0x40] sm:$0xff] %v1055
        %1422 = vst [vmem:[#allocation2 + $0x48] sm:$0xff] %v1058
        %1423 = vst [vmem:[#allocation2 + $0x50] sm:$0xff] %v1063
        %1424 = vst [vmem:[#allocation2 + $0x58] sm:$0xff] %v1066
        %1425 = vst [vmem:[#allocation2 + $0x60] sm:$0xff] %v1071
        %1426 = vst [vmem:[#allocation2 + $0x68] sm:$0xff] %v1074
        %1427 = vst [vmem:[#allocation2 + $0x70] sm:$0xff] %v1079
        %1428 = vst [vmem:[#allocation2 + $0x78] sm:$0xff] %v1082
        %1429 = vst [vmem:[#allocation2 + $0x80] sm:$0xff] %v1087
        %1430 = vst [vmem:[#allocation2 + $0x88] sm:$0xff] %v1090
        %1431 = vst [vmem:[#allocation2 + $0x90] sm:$0xff] %v1095
        %1432 = vst [vmem:[#allocation2 + $0x98] sm:$0xff] %v1098
        %1433 = vst [vmem:[#allocation2 + $0xa0] sm:$0xff] %v1103
        %1434 = vst [vmem:[#allocation2 + $0xa8] sm:$0xff] %v1106
        %1435 = vst [vmem:[#allocation2 + $0xb0] sm:$0xff] %v1111
        %1436 = vst [vmem:[#allocation2 + $0xb8] sm:$0xff] %v1114
        %1437 = vst [vmem:[#allocation2 + $0xc0] sm:$0xff] %v1119
        %1438 = vst [vmem:[#allocation2 + $0xc8] sm:$0xff] %v1122
        %1439 = vst [vmem:[#allocation2 + $0xd0] sm:$0xff] %v1127
        %1440 = vst [vmem:[#allocation2 + $0xd8] sm:$0xff] %v1130
        %1441 = vst [vmem:[#allocation2 + $0xe0] sm:$0xff] %v1135
        %1442 = vst [vmem:[#allocation2 + $0xe8] sm:$0xff] %v1138
        %1443 = vst [vmem:[#allocation2 + $0xf0] sm:$0xff] %v1143
        %1444 = vst [vmem:[#allocation2 + $0xf8] sm:$0xff] %v1146
        %1445 = vst [vmem:[#allocation2 + $0x100] sm:$0xff] %v1151
        %1446 = vst [vmem:[#allocation2 + $0x108] sm:$0xff] %v1154
        %1447 = vst [vmem:[#allocation2 + $0x110] sm:$0xff] %v1159
        %1448 = vst [vmem:[#allocation2 + $0x118] sm:$0xff] %v1162
        %1449 = vst [vmem:[#allocation2 + $0x120] sm:$0xff] %v1167
        %1450 = vst [vmem:[#allocation2 + $0x128] sm:$0xff] %v1170
        %1451 = vst [vmem:[#allocation2 + $0x130] sm:$0xff] %v1175
        %1452 = vst [vmem:[#allocation2 + $0x138] sm:$0xff] %v1178
        %1453 = vst [vmem:[#allocation2 + $0x140] sm:$0xff] %v1183
        %1454 = vst [vmem:[#allocation2 + $0x148] sm:$0xff] %v1186
        %1455 = vst [vmem:[#allocation2 + $0x150] sm:$0xff] %v1191
        %1456 = vst [vmem:[#allocation2 + $0x158] sm:$0xff] %v1194
        %1457 = vst [vmem:[#allocation2 + $0x160] sm:$0xff] %v1199
        %1458 = vst [vmem:[#allocation2 + $0x168] sm:$0xff] %v1202
        %1459 = vst [vmem:[#allocation2 + $0x170] sm:$0xff] %v1207
        %1460 = vst [vmem:[#allocation2 + $0x178] sm:$0xff] %v1210
        %1461 = vst [vmem:[#allocation2 + $0x180] sm:$0xff] %v1215
        %1462 = vst [vmem:[#allocation2 + $0x188] sm:$0xff] %v1218
        %1463 = vst [vmem:[#allocation2 + $0x190] sm:$0xff] %v1223
        %1464 = vst [vmem:[#allocation2 + $0x198] sm:$0xff] %v1226
        %1465 = vst [vmem:[#allocation2 + $0x1a0] sm:$0xff] %v1231
        %1466 = vst [vmem:[#allocation2 + $0x1a8] sm:$0xff] %v1234
        %1467 = vst [vmem:[#allocation2 + $0x1b0] sm:$0xff] %v1239
        %1468 = vst [vmem:[#allocation2 + $0x1b8] sm:$0xff] %v1242
        %1469 = vst [vmem:[#allocation2 + $0x1c0] sm:$0xff] %v1247
        %1470 = vst [vmem:[#allocation2 + $0x1c8] sm:$0xff] %v1250
        %1471 = vst [vmem:[#allocation2 + $0x1d0] sm:$0xff] %v1255
        %1472 = vst [vmem:[#allocation2 + $0x1d8] sm:$0xff] %v1258
        %1473 = vst [vmem:[#allocation2 + $0x1e0] sm:$0xff] %v1263
        %1474 = vst [vmem:[#allocation2 + $0x1e8] sm:$0xff] %v1266
        %1475 = vst [vmem:[#allocation2 + $0x1f0] sm:$0xff] %v1271
        %1476 = vst [vmem:[#allocation2 + $0x1f8] sm:$0xff] %v1274
        %1477 = vst [vmem:[#allocation2 + $0x200] sm:$0xff] %v1279
        %1478 = vst [vmem:[#allocation2 + $0x208] sm:$0xff] %v1282
        %1479 = vst [vmem:[#allocation2 + $0x210] sm:$0xff] %v1287
        %1480 = vst [vmem:[#allocation2 + $0x218] sm:$0xff] %v1290
        %1481 = vst [vmem:[#allocation2 + $0x220] sm:$0xff] %v1295
        %1482 = vst [vmem:[#allocation2 + $0x228] sm:$0xff] %v1298
        %1483 = vst [vmem:[#allocation2 + $0x230] sm:$0xff] %v1303
        %1484 = vst [vmem:[#allocation2 + $0x238] sm:$0xff] %v1306
        %1485 = vst [vmem:[#allocation2 + $0x240] sm:$0xff] %v1311
        %1486 = vst [vmem:[#allocation2 + $0x248] sm:$0xff] %v1314
        %1487 = vst [vmem:[#allocation2 + $0x250] sm:$0xff] %v1319
        %1488 = vst [vmem:[#allocation2 + $0x258] sm:$0xff] %v1322
        %1489 = vst [vmem:[#allocation2 + $0x260] sm:$0xff] %v1327
        %1490 = vst [vmem:[#allocation2 + $0x268] sm:$0xff] %v1330
        %1491 = vst [vmem:[#allocation2 + $0x270] sm:$0xff] %v1335
        %1492 = vst [vmem:[#allocation2 + $0x278] sm:$0xff] %v1338
        %1493 = vst [vmem:[#allocation2 + $0x280] sm:$0xff] %v1343
        %1494 = vst [vmem:[#allocation2 + $0x288] sm:$0xff] %v1346
        %1495 = vst [vmem:[#allocation2 + $0x290] sm:$0xff] %v1351
        %1496 = vst [vmem:[#allocation2 + $0x298] sm:$0xff] %v1354
        %1497 = vst [vmem:[#allocation2 + $0x2a0] sm:$0xff] %v1359
        %1498 = vst [vmem:[#allocation2 + $0x2a8] sm:$0xff] %v1362
        %1499 = vst [vmem:[#allocation2 + $0x2b0] sm:$0xff] %v1367
        %1500 = vst [vmem:[#allocation2 + $0x2b8] sm:$0xff] %v1370
        %1501 = vst [vmem:[#allocation2 + $0x2c0] sm:$0xff] %v1375
        %1502 = vst [vmem:[#allocation2 + $0x2c8] sm:$0xff] %v1378
        %1503 = vst [vmem:[#allocation2 + $0x2d0] sm:$0xff] %v1383
        %1504 = vst [vmem:[#allocation2 + $0x2d8] sm:$0xff] %v1386
        %1505 = vst [vmem:[#allocation2 + $0x2e0] sm:$0xff] %v1391
        %1506 = vst [vmem:[#allocation2 + $0x2e8] sm:$0xff] %v1394
        %1507 = vst [vmem:[#allocation2 + $0x2f0] sm:$0xff] %v1399
        %1508 = vst [vmem:[#allocation2 + $0x2f8] sm:$0xff] %v1402
        %1509 = vst [vmem:[#allocation2 + $0x300] sm:$0xff] %v1407
        %1510 = vst [vmem:[#allocation2 + $0x308] sm:$0xff] %v1410
        %v1511 = vld [vmem:[%s2] sm:$0x1]
        %v1513 = vlaneseq
        %v1514 = vshrl.u32 %v1513, 7
        %v1515 = vsub.s32 0, %v1514
        %v1516 = vrot.slane %v1511, %v1515
        %v1518 = vld [vmem:[#allocation2] ss:$2 sm:$0xff]
        %s1519 = scalar_lea.vmem [#allocation2], 16
        %v1520 = vld [vmem:[%s1519] ss:$2 sm:$0x3f]
        %s1521 = scalar_lea.vmem [#allocation2], 1
        %v1522 = vld [vmem:[%s1521] ss:$2 sm:$0xff]
        %s1523 = scalar_lea.vmem [#allocation2], 17
        %v1524 = vld [vmem:[%s1523] ss:$2 sm:$0x3f]
        %v1525 = vmax.f32 %v1518, %v1522
        %v1526 = vmax.f32 %v1520, %v1524
        %s1527 = scalar_lea.vmem [#allocation2], 28
        %v1528 = vld [vmem:[%s1527] ss:$2 sm:$0xff]
        %s1529 = scalar_lea.vmem [#allocation2], 44
        %v1530 = vld [vmem:[%s1529] ss:$2 sm:$0x3f]
        %s1531 = scalar_lea.vmem [#allocation2], 29
        %v1532 = vld [vmem:[%s1531] ss:$2 sm:$0xff]
        %s1533 = scalar_lea.vmem [#allocation2], 45
        %v1534 = vld [vmem:[%s1533] ss:$2 sm:$0x3f]
        %v1535 = vmax.f32 %v1528, %v1532
        %v1536 = vmax.f32 %v1530, %v1534
        %v1537 = vmax.f32 %v1525, %v1535
        %v1538 = vmax.f32 %v1526, %v1536
        %v1539 = vadd.f32 %v1537, %v1516
        %v1540 = vadd.f32 %v1538, %v1516
        %v1541 = vmax.f32 %v1539, 0.0
        %v1542 = vmax.f32 %v1540, 0.0
        %v1543 = vpack.c.bf16 %v1542, %v1541
        %v1545 = vshrl.u32 %v1543, 16
        %v1547 = vrot.slane %v1545, 7
        %v1548 = vshll.u32 %v1543, 16
        %v1550 = vor.u32 %v1547, %v1548
        %v1553 = vrot.slane %v1543, 7
        %vm1555 = vcmask 1040384
        %vm1556 = vsmask.f32 256
        %vm1557 = vmand %vm1555, %vm1556
        %v1558 = vsel %vm1557, %v1543, %v1550
        %vm1559 = vcmask 1047552
        %vm1560 = vsmask.f32 7424
        %vm1561 = vmand %vm1559, %vm1560
        %v1562 = vsel %vm1561, %v1558, %v1553
        %1563 = vst [vmem:[#allocation3 + $0x8] sm:$0xff] %v1562
        %1564 = vst [vmem:[#allocation3] sm:$0xff] %v1562
        %s1565 = scalar_lea.vmem [#allocation2], 56
        %v1566 = vld [vmem:[%s1565] ss:$2 sm:$0xff]
        %s1567 = scalar_lea.vmem [#allocation2], 72
        %v1568 = vld [vmem:[%s1567] ss:$2 sm:$0x3f]
        %s1569 = scalar_lea.vmem [#allocation2], 57
        %v1570 = vld [vmem:[%s1569] ss:$2 sm:$0xff]
        %s1571 = scalar_lea.vmem [#allocation2], 73
        %v1572 = vld [vmem:[%s1571] ss:$2 sm:$0x3f]
        %v1573 = vmax.f32 %v1566, %v1570
        %v1574 = vmax.f32 %v1568, %v1572
        %s1575 = scalar_lea.vmem [#allocation2], 84
        %v1576 = vld [vmem:[%s1575] ss:$2 sm:$0xff]
        %s1577 = scalar_lea.vmem [#allocation2], 100
        %v1578 = vld [vmem:[%s1577] ss:$2 sm:$0x3f]
        %s1579 = scalar_lea.vmem [#allocation2], 85
        %v1580 = vld [vmem:[%s1579] ss:$2 sm:$0xff]
        %s1581 = scalar_lea.vmem [#allocation2], 101
        %v1582 = vld [vmem:[%s1581] ss:$2 sm:$0x3f]
        %v1583 = vmax.f32 %v1576, %v1580
        %v1584 = vmax.f32 %v1578, %v1582
        %v1585 = vmax.f32 %v1573, %v1583
        %v1586 = vmax.f32 %v1574, %v1584
        %v1587 = vadd.f32 %v1585, %v1516
        %v1588 = vadd.f32 %v1586, %v1516
        %v1589 = vmax.f32 %v1587, 0.0
        %v1590 = vmax.f32 %v1588, 0.0
        %v1591 = vpack.c.bf16 %v1590, %v1589
        %v1593 = vshrl.u32 %v1591, 16
        %v1595 = vrot.slane %v1593, 7
        %v1596 = vshll.u32 %v1591, 16
        %v1598 = vor.u32 %v1595, %v1596
        %v1601 = vrot.slane %v1591, 7
        %v1603 = vsel %vm1557, %v1591, %v1598
        %v1604 = vsel %vm1561, %v1603, %v1601
        %1605 = vst [vmem:[#allocation3 + $0x10] sm:$0xff] %v1604
        %s1606 = scalar_lea.vmem [#allocation2], 112
        %v1607 = vld [vmem:[%s1606] ss:$2 sm:$0xff]
        %s1608 = scalar_lea.vmem [#allocation2], 128
        %v1609 = vld [vmem:[%s1608] ss:$2 sm:$0x3f]
        %s1610 = scalar_lea.vmem [#allocation2], 113
        %v1611 = vld [vmem:[%s1610] ss:$2 sm:$0xff]
        %s1612 = scalar_lea.vmem [#allocation2], 129
        %v1613 = vld [vmem:[%s1612] ss:$2 sm:$0x3f]
        %v1614 = vmax.f32 %v1607, %v1611
        %v1615 = vmax.f32 %v1609, %v1613
        %s1616 = scalar_lea.vmem [#allocation2], 140
        %v1617 = vld [vmem:[%s1616] ss:$2 sm:$0xff]
        %s1618 = scalar_lea.vmem [#allocation2], 156
        %v1619 = vld [vmem:[%s1618] ss:$2 sm:$0x3f]
        %s1620 = scalar_lea.vmem [#allocation2], 141
        %v1621 = vld [vmem:[%s1620] ss:$2 sm:$0xff]
        %s1622 = scalar_lea.vmem [#allocation2], 157
        %v1623 = vld [vmem:[%s1622] ss:$2 sm:$0x3f]
        %v1624 = vmax.f32 %v1617, %v1621
        %v1625 = vmax.f32 %v1619, %v1623
        %v1626 = vmax.f32 %v1614, %v1624
        %v1627 = vmax.f32 %v1615, %v1625
        %v1628 = vadd.f32 %v1626, %v1516
        %v1629 = vadd.f32 %v1627, %v1516
        %v1630 = vmax.f32 %v1628, 0.0
        %v1631 = vmax.f32 %v1629, 0.0
        %v1632 = vpack.c.bf16 %v1631, %v1630
        %v1634 = vshrl.u32 %v1632, 16
        %v1636 = vrot.slane %v1634, 7
        %v1637 = vshll.u32 %v1632, 16
        %v1639 = vor.u32 %v1636, %v1637
        %v1642 = vrot.slane %v1632, 7
        %v1644 = vsel %vm1557, %v1632, %v1639
        %v1645 = vsel %vm1561, %v1644, %v1642
        %1646 = vst [vmem:[#allocation3 + $0x18] sm:$0xff] %v1645
        %s1647 = scalar_lea.vmem [#allocation2], 168
        %v1648 = vld [vmem:[%s1647] ss:$2 sm:$0xff]
        %s1649 = scalar_lea.vmem [#allocation2], 184
        %v1650 = vld [vmem:[%s1649] ss:$2 sm:$0x3f]
        %s1651 = scalar_lea.vmem [#allocation2], 169
        %v1652 = vld [vmem:[%s1651] ss:$2 sm:$0xff]
        %s1653 = scalar_lea.vmem [#allocation2], 185
        %v1654 = vld [vmem:[%s1653] ss:$2 sm:$0x3f]
        %v1655 = vmax.f32 %v1648, %v1652
        %v1656 = vmax.f32 %v1650, %v1654
        %s1657 = scalar_lea.vmem [#allocation2], 196
        %v1658 = vld [vmem:[%s1657] ss:$2 sm:$0xff]
        %s1659 = scalar_lea.vmem [#allocation2], 212
        %v1660 = vld [vmem:[%s1659] ss:$2 sm:$0x3f]
        %s1661 = scalar_lea.vmem [#allocation2], 197
        %v1662 = vld [vmem:[%s1661] ss:$2 sm:$0xff]
        %s1663 = scalar_lea.vmem [#allocation2], 213
        %v1664 = vld [vmem:[%s1663] ss:$2 sm:$0x3f]
        %v1665 = vmax.f32 %v1658, %v1662
        %v1666 = vmax.f32 %v1660, %v1664
        %v1667 = vmax.f32 %v1655, %v1665
        %v1668 = vmax.f32 %v1656, %v1666
        %v1669 = vadd.f32 %v1667, %v1516
        %v1670 = vadd.f32 %v1668, %v1516
        %v1671 = vmax.f32 %v1669, 0.0
        %v1672 = vmax.f32 %v1670, 0.0
        %v1673 = vpack.c.bf16 %v1672, %v1671
        %v1675 = vshrl.u32 %v1673, 16
        %v1677 = vrot.slane %v1675, 7
        %v1678 = vshll.u32 %v1673, 16
        %v1680 = vor.u32 %v1677, %v1678
        %v1683 = vrot.slane %v1673, 7
        %v1685 = vsel %vm1557, %v1673, %v1680
        %v1686 = vsel %vm1561, %v1685, %v1683
        %1687 = vst [vmem:[#allocation3 + $0x20] sm:$0xff] %v1686
        %s1688 = scalar_lea.vmem [#allocation2], 224
        %v1689 = vld [vmem:[%s1688] ss:$2 sm:$0xff]
        %s1690 = scalar_lea.vmem [#allocation2], 240
        %v1691 = vld [vmem:[%s1690] ss:$2 sm:$0x3f]
        %s1692 = scalar_lea.vmem [#allocation2], 225
        %v1693 = vld [vmem:[%s1692] ss:$2 sm:$0xff]
        %s1694 = scalar_lea.vmem [#allocation2], 241
        %v1695 = vld [vmem:[%s1694] ss:$2 sm:$0x3f]
        %v1696 = vmax.f32 %v1689, %v1693
        %v1697 = vmax.f32 %v1691, %v1695
        %s1698 = scalar_lea.vmem [#allocation2], 252
        %v1699 = vld [vmem:[%s1698] ss:$2 sm:$0xff]
        %s1700 = scalar_lea.vmem [#allocation2], 268
        %v1701 = vld [vmem:[%s1700] ss:$2 sm:$0x3f]
        %s1702 = scalar_lea.vmem [#allocation2], 253
        %v1703 = vld [vmem:[%s1702] ss:$2 sm:$0xff]
        %s1704 = scalar_lea.vmem [#allocation2], 269
        %v1705 = vld [vmem:[%s1704] ss:$2 sm:$0x3f]
        %v1706 = vmax.f32 %v1699, %v1703
        %v1707 = vmax.f32 %v1701, %v1705
        %v1708 = vmax.f32 %v1696, %v1706
        %v1709 = vmax.f32 %v1697, %v1707
        %v1710 = vadd.f32 %v1708, %v1516
        %v1711 = vadd.f32 %v1709, %v1516
        %v1712 = vmax.f32 %v1710, 0.0
        %v1713 = vmax.f32 %v1711, 0.0
        %v1714 = vpack.c.bf16 %v1713, %v1712
        %v1716 = vshrl.u32 %v1714, 16
        %v1718 = vrot.slane %v1716, 7
        %v1719 = vshll.u32 %v1714, 16
        %v1721 = vor.u32 %v1718, %v1719
        %v1724 = vrot.slane %v1714, 7
        %v1726 = vsel %vm1557, %v1714, %v1721
        %v1727 = vsel %vm1561, %v1726, %v1724
        %1728 = vst [vmem:[#allocation3 + $0x28] sm:$0xff] %v1727
        %s1729 = scalar_lea.vmem [#allocation2], 280
        %v1730 = vld [vmem:[%s1729] ss:$2 sm:$0xff]
        %s1731 = scalar_lea.vmem [#allocation2], 296
        %v1732 = vld [vmem:[%s1731] ss:$2 sm:$0x3f]
        %s1733 = scalar_lea.vmem [#allocation2], 281
        %v1734 = vld [vmem:[%s1733] ss:$2 sm:$0xff]
        %s1735 = scalar_lea.vmem [#allocation2], 297
        %v1736 = vld [vmem:[%s1735] ss:$2 sm:$0x3f]
        %v1737 = vmax.f32 %v1730, %v1734
        %v1738 = vmax.f32 %v1732, %v1736
        %s1739 = scalar_lea.vmem [#allocation2], 308
        %v1740 = vld [vmem:[%s1739] ss:$2 sm:$0xff]
        %s1741 = scalar_lea.vmem [#allocation2], 324
        %v1742 = vld [vmem:[%s1741] ss:$2 sm:$0x3f]
        %s1743 = scalar_lea.vmem [#allocation2], 309
        %v1744 = vld [vmem:[%s1743] ss:$2 sm:$0xff]
        %s1745 = scalar_lea.vmem [#allocation2], 325
        %v1746 = vld [vmem:[%s1745] ss:$2 sm:$0x3f]
        %v1747 = vmax.f32 %v1740, %v1744
        %v1748 = vmax.f32 %v1742, %v1746
        %v1749 = vmax.f32 %v1737, %v1747
        %v1750 = vmax.f32 %v1738, %v1748
        %v1751 = vadd.f32 %v1749, %v1516
        %v1752 = vadd.f32 %v1750, %v1516
        %v1753 = vmax.f32 %v1751, 0.0
        %v1754 = vmax.f32 %v1752, 0.0
        %v1755 = vpack.c.bf16 %v1754, %v1753
        %v1757 = vshrl.u32 %v1755, 16
        %v1759 = vrot.slane %v1757, 7
        %v1760 = vshll.u32 %v1755, 16
        %v1762 = vor.u32 %v1759, %v1760
        %v1765 = vrot.slane %v1755, 7
        %v1767 = vsel %vm1557, %v1755, %v1762
        %v1768 = vsel %vm1561, %v1767, %v1765
        %1769 = vst [vmem:[#allocation3 + $0x30] sm:$0xff] %v1768
        %s1770 = scalar_lea.vmem [#allocation2], 336
        %v1771 = vld [vmem:[%s1770] ss:$2 sm:$0xff]
        %s1772 = scalar_lea.vmem [#allocation2], 352
        %v1773 = vld [vmem:[%s1772] ss:$2 sm:$0x3f]
        %s1774 = scalar_lea.vmem [#allocation2], 337
        %v1775 = vld [vmem:[%s1774] ss:$2 sm:$0xff]
        %s1776 = scalar_lea.vmem [#allocation2], 353
        %v1777 = vld [vmem:[%s1776] ss:$2 sm:$0x3f]
        %v1778 = vmax.f32 %v1771, %v1775
        %v1779 = vmax.f32 %v1773, %v1777
        %s1780 = scalar_lea.vmem [#allocation2], 364
        %v1781 = vld [vmem:[%s1780] ss:$2 sm:$0xff]
        %s1782 = scalar_lea.vmem [#allocation2], 380
        %v1783 = vld [vmem:[%s1782] ss:$2 sm:$0x3f]
        %s1784 = scalar_lea.vmem [#allocation2], 365
        %v1785 = vld [vmem:[%s1784] ss:$2 sm:$0xff]
        %s1786 = scalar_lea.vmem [#allocation2], 381
        %v1787 = vld [vmem:[%s1786] ss:$2 sm:$0x3f]
        %v1788 = vmax.f32 %v1781, %v1785
        %v1789 = vmax.f32 %v1783, %v1787
        %v1790 = vmax.f32 %v1778, %v1788
        %v1791 = vmax.f32 %v1779, %v1789
        %v1792 = vadd.f32 %v1790, %v1516
        %v1793 = vadd.f32 %v1791, %v1516
        %v1794 = vmax.f32 %v1792, 0.0
        %v1795 = vmax.f32 %v1793, 0.0
        %v1796 = vpack.c.bf16 %v1795, %v1794
        %v1798 = vshrl.u32 %v1796, 16
        %v1800 = vrot.slane %v1798, 7
        %v1801 = vshll.u32 %v1796, 16
        %v1803 = vor.u32 %v1800, %v1801
        %v1806 = vrot.slane %v1796, 7
        %v1808 = vsel %vm1557, %v1796, %v1803
        %v1809 = vsel %vm1561, %v1808, %v1806
        %1810 = vst [vmem:[#allocation3 + $0x38] sm:$0xff] %v1809
        %s1811 = scalar_lea.vmem [#allocation2], 392
        %v1812 = vld [vmem:[%s1811] ss:$2 sm:$0xff]
        %s1813 = scalar_lea.vmem [#allocation2], 408
        %v1814 = vld [vmem:[%s1813] ss:$2 sm:$0x3f]
        %s1815 = scalar_lea.vmem [#allocation2], 393
        %v1816 = vld [vmem:[%s1815] ss:$2 sm:$0xff]
        %s1817 = scalar_lea.vmem [#allocation2], 409
        %v1818 = vld [vmem:[%s1817] ss:$2 sm:$0x3f]
        %v1819 = vmax.f32 %v1812, %v1816
        %v1820 = vmax.f32 %v1814, %v1818
        %s1821 = scalar_lea.vmem [#allocation2], 420
        %v1822 = vld [vmem:[%s1821] ss:$2 sm:$0xff]
        %s1823 = scalar_lea.vmem [#allocation2], 436
        %v1824 = vld [vmem:[%s1823] ss:$2 sm:$0x3f]
        %s1825 = scalar_lea.vmem [#allocation2], 421
        %v1826 = vld [vmem:[%s1825] ss:$2 sm:$0xff]
        %s1827 = scalar_lea.vmem [#allocation2], 437
        %v1828 = vld [vmem:[%s1827] ss:$2 sm:$0x3f]
        %v1829 = vmax.f32 %v1822, %v1826
        %v1830 = vmax.f32 %v1824, %v1828
        %v1831 = vmax.f32 %v1819, %v1829
        %v1832 = vmax.f32 %v1820, %v1830
        %v1833 = vadd.f32 %v1831, %v1516
        %v1834 = vadd.f32 %v1832, %v1516
        %v1835 = vmax.f32 %v1833, 0.0
        %v1836 = vmax.f32 %v1834, 0.0
        %v1837 = vpack.c.bf16 %v1836, %v1835
        %v1839 = vshrl.u32 %v1837, 16
        %v1841 = vrot.slane %v1839, 7
        %v1842 = vshll.u32 %v1837, 16
        %v1844 = vor.u32 %v1841, %v1842
        %v1847 = vrot.slane %v1837, 7
        %v1849 = vsel %vm1557, %v1837, %v1844
        %v1850 = vsel %vm1561, %v1849, %v1847
        %1851 = vst [vmem:[#allocation3 + $0x40] sm:$0xff] %v1850
        %s1852 = scalar_lea.vmem [#allocation2], 448
        %v1853 = vld [vmem:[%s1852] ss:$2 sm:$0xff]
        %s1854 = scalar_lea.vmem [#allocation2], 464
        %v1855 = vld [vmem:[%s1854] ss:$2 sm:$0x3f]
        %s1856 = scalar_lea.vmem [#allocation2], 449
        %v1857 = vld [vmem:[%s1856] ss:$2 sm:$0xff]
        %s1858 = scalar_lea.vmem [#allocation2], 465
        %v1859 = vld [vmem:[%s1858] ss:$2 sm:$0x3f]
        %v1860 = vmax.f32 %v1853, %v1857
        %v1861 = vmax.f32 %v1855, %v1859
        %s1862 = scalar_lea.vmem [#allocation2], 476
        %v1863 = vld [vmem:[%s1862] ss:$2 sm:$0xff]
        %s1864 = scalar_lea.vmem [#allocation2], 492
        %v1865 = vld [vmem:[%s1864] ss:$2 sm:$0x3f]
        %s1866 = scalar_lea.vmem [#allocation2], 477
        %v1867 = vld [vmem:[%s1866] ss:$2 sm:$0xff]
        %s1868 = scalar_lea.vmem [#allocation2], 493
        %v1869 = vld [vmem:[%s1868] ss:$2 sm:$0x3f]
        %v1870 = vmax.f32 %v1863, %v1867
        %v1871 = vmax.f32 %v1865, %v1869
        %v1872 = vmax.f32 %v1860, %v1870
        %v1873 = vmax.f32 %v1861, %v1871
        %v1874 = vadd.f32 %v1872, %v1516
        %v1875 = vadd.f32 %v1873, %v1516
        %v1876 = vmax.f32 %v1874, 0.0
        %v1877 = vmax.f32 %v1875, 0.0
        %v1878 = vpack.c.bf16 %v1877, %v1876
        %v1880 = vshrl.u32 %v1878, 16
        %v1882 = vrot.slane %v1880, 7
        %v1883 = vshll.u32 %v1878, 16
        %v1885 = vor.u32 %v1882, %v1883
        %v1888 = vrot.slane %v1878, 7
        %v1890 = vsel %vm1557, %v1878, %v1885
        %v1891 = vsel %vm1561, %v1890, %v1888
        %1892 = vst [vmem:[#allocation3 + $0x48] sm:$0xff] %v1891
        %s1893 = scalar_lea.vmem [#allocation2], 504
        %v1894 = vld [vmem:[%s1893] ss:$2 sm:$0xff]
        %s1895 = scalar_lea.vmem [#allocation2], 520
        %v1896 = vld [vmem:[%s1895] ss:$2 sm:$0x3f]
        %s1897 = scalar_lea.vmem [#allocation2], 505
        %v1898 = vld [vmem:[%s1897] ss:$2 sm:$0xff]
        %s1899 = scalar_lea.vmem [#allocation2], 521
        %v1900 = vld [vmem:[%s1899] ss:$2 sm:$0x3f]
        %v1901 = vmax.f32 %v1894, %v1898
        %v1902 = vmax.f32 %v1896, %v1900
        %s1903 = scalar_lea.vmem [#allocation2], 532
        %v1904 = vld [vmem:[%s1903] ss:$2 sm:$0xff]
        %s1905 = scalar_lea.vmem [#allocation2], 548
        %v1906 = vld [vmem:[%s1905] ss:$2 sm:$0x3f]
        %s1907 = scalar_lea.vmem [#allocation2], 533
        %v1908 = vld [vmem:[%s1907] ss:$2 sm:$0xff]
        %s1909 = scalar_lea.vmem [#allocation2], 549
        %v1910 = vld [vmem:[%s1909] ss:$2 sm:$0x3f]
        %v1911 = vmax.f32 %v1904, %v1908
        %v1912 = vmax.f32 %v1906, %v1910
        %v1913 = vmax.f32 %v1901, %v1911
        %v1914 = vmax.f32 %v1902, %v1912
        %v1915 = vadd.f32 %v1913, %v1516
        %v1916 = vadd.f32 %v1914, %v1516
        %v1917 = vmax.f32 %v1915, 0.0
        %v1918 = vmax.f32 %v1916, 0.0
        %v1919 = vpack.c.bf16 %v1918, %v1917
        %v1921 = vshrl.u32 %v1919, 16
        %v1923 = vrot.slane %v1921, 7
        %v1924 = vshll.u32 %v1919, 16
        %v1926 = vor.u32 %v1923, %v1924
        %v1929 = vrot.slane %v1919, 7
        %v1931 = vsel %vm1557, %v1919, %v1926
        %v1932 = vsel %vm1561, %v1931, %v1929
        %1933 = vst [vmem:[#allocation3 + $0x50] sm:$0xff] %v1932
        %s1934 = scalar_lea.vmem [#allocation2], 560
        %v1935 = vld [vmem:[%s1934] ss:$2 sm:$0xff]
        %s1936 = scalar_lea.vmem [#allocation2], 576
        %v1937 = vld [vmem:[%s1936] ss:$2 sm:$0x3f]
        %s1938 = scalar_lea.vmem [#allocation2], 561
        %v1939 = vld [vmem:[%s1938] ss:$2 sm:$0xff]
        %s1940 = scalar_lea.vmem [#allocation2], 577
        %v1941 = vld [vmem:[%s1940] ss:$2 sm:$0x3f]
        %v1942 = vmax.f32 %v1935, %v1939
        %v1943 = vmax.f32 %v1937, %v1941
        %s1944 = scalar_lea.vmem [#allocation2], 588
        %v1945 = vld [vmem:[%s1944] ss:$2 sm:$0xff]
        %s1946 = scalar_lea.vmem [#allocation2], 604
        %v1947 = vld [vmem:[%s1946] ss:$2 sm:$0x3f]
        %s1948 = scalar_lea.vmem [#allocation2], 589
        %v1949 = vld [vmem:[%s1948] ss:$2 sm:$0xff]
        %s1950 = scalar_lea.vmem [#allocation2], 605
        %v1951 = vld [vmem:[%s1950] ss:$2 sm:$0x3f]
        %v1952 = vmax.f32 %v1945, %v1949
        %v1953 = vmax.f32 %v1947, %v1951
        %v1954 = vmax.f32 %v1942, %v1952
        %v1955 = vmax.f32 %v1943, %v1953
        %v1956 = vadd.f32 %v1954, %v1516
        %v1957 = vadd.f32 %v1955, %v1516
        %v1958 = vmax.f32 %v1956, 0.0
        %v1959 = vmax.f32 %v1957, 0.0
        %v1960 = vpack.c.bf16 %v1959, %v1958
        %v1962 = vshrl.u32 %v1960, 16
        %v1964 = vrot.slane %v1962, 7
        %v1965 = vshll.u32 %v1960, 16
        %v1967 = vor.u32 %v1964, %v1965
        %v1970 = vrot.slane %v1960, 7
        %v1972 = vsel %vm1557, %v1960, %v1967
        %v1973 = vsel %vm1561, %v1972, %v1970
        %1974 = vst [vmem:[#allocation3 + $0x58] sm:$0xff] %v1973
        %s1975 = scalar_lea.vmem [#allocation2], 616
        %v1976 = vld [vmem:[%s1975] ss:$2 sm:$0xff]
        %s1977 = scalar_lea.vmem [#allocation2], 632
        %v1978 = vld [vmem:[%s1977] ss:$2 sm:$0x3f]
        %s1979 = scalar_lea.vmem [#allocation2], 617
        %v1980 = vld [vmem:[%s1979] ss:$2 sm:$0xff]
        %s1981 = scalar_lea.vmem [#allocation2], 633
        %v1982 = vld [vmem:[%s1981] ss:$2 sm:$0x3f]
        %v1983 = vmax.f32 %v1976, %v1980
        %v1984 = vmax.f32 %v1978, %v1982
        %s1985 = scalar_lea.vmem [#allocation2], 644
        %v1986 = vld [vmem:[%s1985] ss:$2 sm:$0xff]
        %s1987 = scalar_lea.vmem [#allocation2], 660
        %v1988 = vld [vmem:[%s1987] ss:$2 sm:$0x3f]
        %s1989 = scalar_lea.vmem [#allocation2], 645
        %v1990 = vld [vmem:[%s1989] ss:$2 sm:$0xff]
        %s1991 = scalar_lea.vmem [#allocation2], 661
        %v1992 = vld [vmem:[%s1991] ss:$2 sm:$0x3f]
        %v1993 = vmax.f32 %v1986, %v1990
        %v1994 = vmax.f32 %v1988, %v1992
        %v1995 = vmax.f32 %v1983, %v1993
        %v1996 = vmax.f32 %v1984, %v1994
        %v1997 = vadd.f32 %v1995, %v1516
        %v1998 = vadd.f32 %v1996, %v1516
        %v1999 = vmax.f32 %v1997, 0.0
        %v2000 = vmax.f32 %v1998, 0.0
        %v2001 = vpack.c.bf16 %v2000, %v1999
        %v2003 = vshrl.u32 %v2001, 16
        %v2005 = vrot.slane %v2003, 7
        %v2006 = vshll.u32 %v2001, 16
        %v2008 = vor.u32 %v2005, %v2006
        %v2011 = vrot.slane %v2001, 7
        %v2013 = vsel %vm1557, %v2001, %v2008
        %v2014 = vsel %vm1561, %v2013, %v2011
        %2015 = vst [vmem:[#allocation3 + $0x60] sm:$0xff] %v2014
        %s2016 = scalar_lea.vmem [#allocation2], 672
        %v2017 = vld [vmem:[%s2016] ss:$2 sm:$0xff]
        %s2018 = scalar_lea.vmem [#allocation2], 688
        %v2019 = vld [vmem:[%s2018] ss:$2 sm:$0x3f]
        %s2020 = scalar_lea.vmem [#allocation2], 673
        %v2021 = vld [vmem:[%s2020] ss:$2 sm:$0xff]
        %s2022 = scalar_lea.vmem [#allocation2], 689
        %v2023 = vld [vmem:[%s2022] ss:$2 sm:$0x3f]
        %v2024 = vmax.f32 %v2017, %v2021
        %v2025 = vmax.f32 %v2019, %v2023
        %s2026 = scalar_lea.vmem [#allocation2], 700
        %v2027 = vld [vmem:[%s2026] ss:$2 sm:$0xff]
        %s2028 = scalar_lea.vmem [#allocation2], 716
        %v2029 = vld [vmem:[%s2028] ss:$2 sm:$0x3f]
        %s2030 = scalar_lea.vmem [#allocation2], 701
        %v2031 = vld [vmem:[%s2030] ss:$2 sm:$0xff]
        %s2032 = scalar_lea.vmem [#allocation2], 717
        %v2033 = vld [vmem:[%s2032] ss:$2 sm:$0x3f]
        %v2034 = vmax.f32 %v2027, %v2031
        %v2035 = vmax.f32 %v2029, %v2033
        %v2036 = vmax.f32 %v2024, %v2034
        %v2037 = vmax.f32 %v2025, %v2035
        %v2038 = vadd.f32 %v2036, %v1516
        %v2039 = vadd.f32 %v2037, %v1516
        %v2040 = vmax.f32 %v2038, 0.0
        %v2041 = vmax.f32 %v2039, 0.0
        %v2042 = vpack.c.bf16 %v2041, %v2040
        %v2044 = vshrl.u32 %v2042, 16
        %v2046 = vrot.slane %v2044, 7
        %v2047 = vshll.u32 %v2042, 16
        %v2049 = vor.u32 %v2046, %v2047
        %v2052 = vrot.slane %v2042, 7
        %v2054 = vsel %vm1557, %v2042, %v2049
        %v2055 = vsel %vm1561, %v2054, %v2052
        %2056 = vst [vmem:[#allocation3 + $0x68] sm:$0xff] %v2055
        %s2057 = scalar_lea.vmem [#allocation2], 728
        %v2058 = vld [vmem:[%s2057] ss:$2 sm:$0xff]
        %s2059 = scalar_lea.vmem [#allocation2], 744
        %v2060 = vld [vmem:[%s2059] ss:$2 sm:$0x3f]
        %s2061 = scalar_lea.vmem [#allocation2], 729
        %v2062 = vld [vmem:[%s2061] ss:$2 sm:$0xff]
        %s2063 = scalar_lea.vmem [#allocation2], 745
        %v2064 = vld [vmem:[%s2063] ss:$2 sm:$0x3f]
        %v2065 = vmax.f32 %v2058, %v2062
        %v2066 = vmax.f32 %v2060, %v2064
        %s2067 = scalar_lea.vmem [#allocation2], 756
        %v2068 = vld [vmem:[%s2067] ss:$2 sm:$0xff]
        %s2069 = scalar_lea.vmem [#allocation2], 772
        %v2070 = vld [vmem:[%s2069] ss:$2 sm:$0x3f]
        %s2071 = scalar_lea.vmem [#allocation2], 757
        %v2072 = vld [vmem:[%s2071] ss:$2 sm:$0xff]
        %s2073 = scalar_lea.vmem [#allocation2], 773
        %v2074 = vld [vmem:[%s2073] ss:$2 sm:$0x3f]
        %v2075 = vmax.f32 %v2068, %v2072
        %v2076 = vmax.f32 %v2070, %v2074
        %v2077 = vmax.f32 %v2065, %v2075
        %v2078 = vmax.f32 %v2066, %v2076
        %v2079 = vadd.f32 %v2077, %v1516
        %v2080 = vadd.f32 %v2078, %v1516
        %v2081 = vmax.f32 %v2079, 0.0
        %v2082 = vmax.f32 %v2080, 0.0
        %v2083 = vpack.c.bf16 %v2082, %v2081
        %v2085 = vshrl.u32 %v2083, 16
        %v2087 = vrot.slane %v2085, 7
        %v2088 = vshll.u32 %v2083, 16
        %v2090 = vor.u32 %v2087, %v2088
        %v2093 = vrot.slane %v2083, 7
        %v2095 = vsel %vm1557, %v2083, %v2090
        %v2096 = vsel %vm1561, %v2095, %v2093
        %2097 = vst [vmem:[#allocation3 + $0x70] sm:$0xff] %v2096
        %2098 = vst [vmem:[#allocation3 + $0x78] sm:$0xff] %v2096
        %v2099 = vld [vmem:[#allocation3] sm:$0xff]
        %v2100 = vld [vmem:[#allocation3 + $0x8] sm:$0xff]
        %v2101 = vld [vmem:[#allocation3 + $0x10] sm:$0xff]
        %v2102 = vld [vmem:[#allocation3 + $0x18] sm:$0xff]
        %v2103 = vld [vmem:[#allocation3 + $0x20] sm:$0xff]
        %v2104 = vld [vmem:[#allocation3 + $0x28] sm:$0xff]
        %v2105 = vld [vmem:[#allocation3 + $0x30] sm:$0xff]
        %v2106 = vld [vmem:[#allocation3 + $0x38] sm:$0xff]
        %v2107 = vld [vmem:[#allocation3 + $0x40] sm:$0xff]
        %v2108 = vld [vmem:[#allocation3 + $0x48] sm:$0xff]
        %v2109 = vld [vmem:[#allocation3 + $0x50] sm:$0xff]
        %v2110 = vld [vmem:[#allocation3 + $0x58] sm:$0xff]
        %v2111 = vld [vmem:[#allocation3 + $0x60] sm:$0xff]
        %v2112 = vld [vmem:[#allocation3 + $0x68] sm:$0xff]
        %v2113 = vld [vmem:[#allocation3 + $0x70] sm:$0x1]
        %v2114 = vld [vmem:[#allocation3] sm:$0xfe]
        %v2115 = vld [vmem:[#allocation3 + $0x70] sm:$0xff]
        %v2116 = vld [vmem:[#allocation3 + $0x78] sm:$0x1]
        %v2117 = vld [vmem:[#allocation3 + $0x8] sm:$0xfe]
        %v2118 = vld [vmem:[#allocation3 + $0x78] sm:$0xff]
        %v2119 = vld [vmem:[#allocation3 + $0x10] sm:$0xff]
        %v2120 = vld [vmem:[#allocation3 + $0x18] sm:$0xff]
        %v2121 = vld [vmem:[#allocation3 + $0x20] sm:$0xff]
        %v2122 = vld [vmem:[#allocation3 + $0x28] sm:$0xff]
        %v2123 = vld [vmem:[#allocation3 + $0x30] sm:$0xff]
        %v2124 = vld [vmem:[#allocation3 + $0x38] sm:$0xff]
        %v2125 = vld [vmem:[#allocation3 + $0x40] sm:$0xff]
        %v2126 = vld [vmem:[#allocation3 + $0x48] sm:$0xff]
        %v2127 = vld [vmem:[#allocation3 + $0x50] sm:$0xff]
        %v2128 = vld [vmem:[#allocation3 + $0x58] sm:$0xff]
        %v2129 = vld [vmem:[#allocation3 + $0x60] sm:$0xff]
        %v2130 = vld [vmem:[#allocation3 + $0x68] sm:$0xff]
        %v2131 = vld [vmem:[#allocation3 + $0x70] sm:$0xff]
        %v2132 = vld [vmem:[#allocation3 + $0x78] sm:$0xff]
        %v2133 = vld [vmem:[#allocation3 + $0x80] sm:$0x1]
        %v2134 = vld [vmem:[#allocation3 + $0x10] sm:$0xfe]
        %v2136 = vshrl.u32 %v2099, 16
        %v2138 = vshll.u32 %v2099, 16
        %v2140 = vrot.slane %v2138, 1
        %v2141 = vor.u32 %v2136, %v2140
        %v2143 = vshll.u32 %v2100, 16
        %v2145 = vrot.slane %v2143, 1
        %v2146 = vsel %vm1560, %v2141, %v2145
        %v2147 = vshrl.u32 %v2100, 16
        %v2149 = vor.u32 %v2147, %v2145
        %v2151 = vshll.u32 %v2101, 16
        %v2153 = vrot.slane %v2151, 1
        %v2154 = vsel %vm1560, %v2149, %v2153
        %v2155 = vshrl.u32 %v2101, 16
        %v2157 = vor.u32 %v2155, %v2153
        %v2159 = vshll.u32 %v2102, 16
        %v2161 = vrot.slane %v2159, 1
        %v2162 = vsel %vm1560, %v2157, %v2161
        %v2163 = vshrl.u32 %v2102, 16
        %v2165 = vor.u32 %v2163, %v2161
        %v2167 = vshll.u32 %v2103, 16
        %v2169 = vrot.slane %v2167, 1
        %v2170 = vsel %vm1560, %v2165, %v2169
        %v2171 = vshrl.u32 %v2103, 16
        %v2173 = vor.u32 %v2171, %v2169
        %v2175 = vshll.u32 %v2104, 16
        %v2177 = vrot.slane %v2175, 1
        %v2178 = vsel %vm1560, %v2173, %v2177
        %v2179 = vshrl.u32 %v2104, 16
        %v2181 = vor.u32 %v2179, %v2177
        %v2183 = vshll.u32 %v2105, 16
        %v2185 = vrot.slane %v2183, 1
        %v2186 = vsel %vm1560, %v2181, %v2185
        %v2187 = vshrl.u32 %v2105, 16
        %v2189 = vor.u32 %v2187, %v2185
        %v2191 = vshll.u32 %v2106, 16
        %v2193 = vrot.slane %v2191, 1
        %v2194 = vsel %vm1560, %v2189, %v2193
        %v2195 = vshrl.u32 %v2106, 16
        %v2197 = vor.u32 %v2195, %v2193
        %v2199 = vshll.u32 %v2107, 16
        %v2201 = vrot.slane %v2199, 1
        %v2202 = vsel %vm1560, %v2197, %v2201
        %v2203 = vshrl.u32 %v2107, 16
        %v2205 = vor.u32 %v2203, %v2201
        %v2207 = vshll.u32 %v2108, 16
        %v2209 = vrot.slane %v2207, 1
        %v2210 = vsel %vm1560, %v2205, %v2209
        %v2211 = vshrl.u32 %v2108, 16
        %v2213 = vor.u32 %v2211, %v2209
        %v2215 = vshll.u32 %v2109, 16
        %v2217 = vrot.slane %v2215, 1
        %v2218 = vsel %vm1560, %v2213, %v2217
        %v2219 = vshrl.u32 %v2109, 16
        %v2221 = vor.u32 %v2219, %v2217
        %v2223 = vshll.u32 %v2110, 16
        %v2225 = vrot.slane %v2223, 1
        %v2226 = vsel %vm1560, %v2221, %v2225
        %v2227 = vshrl.u32 %v2110, 16
        %v2229 = vor.u32 %v2227, %v2225
        %v2231 = vshll.u32 %v2111, 16
        %v2233 = vrot.slane %v2231, 1
        %v2234 = vsel %vm1560, %v2229, %v2233
        %v2235 = vshrl.u32 %v2111, 16
        %v2237 = vor.u32 %v2235, %v2233
        %v2239 = vshll.u32 %v2112, 16
        %v2241 = vrot.slane %v2239, 1
        %v2242 = vsel %vm1560, %v2237, %v2241
        %v2243 = vshrl.u32 %v2112, 16
        %v2245 = vor.u32 %v2243, %v2241
        %v2247 = vshll.u32 %v2113, 16
        %v2249 = vrot.slane %v2247, 1
        %v2250 = vsel %vm1560, %v2245, %v2249
        %vm2280 = vcmask 1046528
        %v2281 = vrot.slane %v2114, 1
        %v2282 = vrot.slane %v2100, 1
        %v2283 = vsel %vm2280, %v2281, %v2282
        %v2284 = vrot.slane %v2101, 1
        %v2285 = vsel %vm2280, %v2282, %v2284
        %v2286 = vrot.slane %v2102, 1
        %v2287 = vsel %vm2280, %v2284, %v2286
        %v2288 = vrot.slane %v2103, 1
        %v2289 = vsel %vm2280, %v2286, %v2288
        %v2290 = vrot.slane %v2104, 1
        %v2291 = vsel %vm2280, %v2288, %v2290
        %v2292 = vrot.slane %v2105, 1
        %v2293 = vsel %vm2280, %v2290, %v2292
        %v2294 = vrot.slane %v2106, 1
        %v2295 = vsel %vm2280, %v2292, %v2294
        %v2296 = vrot.slane %v2107, 1
        %v2297 = vsel %vm2280, %v2294, %v2296
        %v2298 = vrot.slane %v2108, 1
        %v2299 = vsel %vm2280, %v2296, %v2298
        %v2300 = vrot.slane %v2109, 1
        %v2301 = vsel %vm2280, %v2298, %v2300
        %v2302 = vrot.slane %v2110, 1
        %v2303 = vsel %vm2280, %v2300, %v2302
        %v2304 = vrot.slane %v2111, 1
        %v2305 = vsel %vm2280, %v2302, %v2304
        %v2306 = vrot.slane %v2112, 1
        %v2307 = vsel %vm2280, %v2304, %v2306
        %v2308 = vrot.slane %v2113, 1
        %v2309 = vsel %vm2280, %v2306, %v2308
        %v2325 = vshll.u32 %v2115, 16
        %v2327 = vrot.slane %v2325, 1
        %v2328 = vsel %vm1560, %v2245, %v2327
        %v2329 = vshrl.u32 %v2115, 16
        %v2331 = vor.u32 %v2329, %v2327
        %v2333 = vshll.u32 %v2116, 16
        %v2335 = vrot.slane %v2333, 1
        %v2336 = vsel %vm1560, %v2331, %v2335
        %v2342 = vrot.slane %v2117, 1
        %v2343 = vsel %vm2280, %v2342, %v2284
        %v2344 = vrot.slane %v2115, 1
        %v2345 = vsel %vm2280, %v2306, %v2344
        %v2346 = vrot.slane %v2116, 1
        %v2347 = vsel %vm2280, %v2344, %v2346
        %v2352 = vshrl.u32 %v2119, 16
        %v2354 = vshll.u32 %v2119, 16
        %v2356 = vrot.slane %v2354, 1
        %v2357 = vor.u32 %v2352, %v2356
        %v2359 = vshll.u32 %v2120, 16
        %v2361 = vrot.slane %v2359, 1
        %v2362 = vsel %vm1560, %v2357, %v2361
        %v2363 = vshrl.u32 %v2120, 16
        %v2365 = vor.u32 %v2363, %v2361
        %v2367 = vshll.u32 %v2121, 16
        %v2369 = vrot.slane %v2367, 1
        %v2370 = vsel %vm1560, %v2365, %v2369
        %v2371 = vshrl.u32 %v2121, 16
        %v2373 = vor.u32 %v2371, %v2369
        %v2375 = vshll.u32 %v2122, 16
        %v2377 = vrot.slane %v2375, 1
        %v2378 = vsel %vm1560, %v2373, %v2377
        %v2379 = vshrl.u32 %v2122, 16
        %v2381 = vor.u32 %v2379, %v2377
        %v2383 = vshll.u32 %v2123, 16
        %v2385 = vrot.slane %v2383, 1
        %v2386 = vsel %vm1560, %v2381, %v2385
        %v2387 = vshrl.u32 %v2123, 16
        %v2389 = vor.u32 %v2387, %v2385
        %v2391 = vshll.u32 %v2124, 16
        %v2393 = vrot.slane %v2391, 1
        %v2394 = vsel %vm1560, %v2389, %v2393
        %v2395 = vshrl.u32 %v2124, 16
        %v2397 = vor.u32 %v2395, %v2393
        %v2399 = vshll.u32 %v2125, 16
        %v2401 = vrot.slane %v2399, 1
        %v2402 = vsel %vm1560, %v2397, %v2401
        %v2403 = vshrl.u32 %v2125, 16
        %v2405 = vor.u32 %v2403, %v2401
        %v2407 = vshll.u32 %v2126, 16
        %v2409 = vrot.slane %v2407, 1
        %v2410 = vsel %vm1560, %v2405, %v2409
        %v2411 = vshrl.u32 %v2126, 16
        %v2413 = vor.u32 %v2411, %v2409
        %v2415 = vshll.u32 %v2127, 16
        %v2417 = vrot.slane %v2415, 1
        %v2418 = vsel %vm1560, %v2413, %v2417
        %v2419 = vshrl.u32 %v2127, 16
        %v2421 = vor.u32 %v2419, %v2417
        %v2423 = vshll.u32 %v2128, 16
        %v2425 = vrot.slane %v2423, 1
        %v2426 = vsel %vm1560, %v2421, %v2425
        %v2427 = vshrl.u32 %v2128, 16
        %v2429 = vor.u32 %v2427, %v2425
        %v2431 = vshll.u32 %v2129, 16
        %v2433 = vrot.slane %v2431, 1
        %v2434 = vsel %vm1560, %v2429, %v2433
        %v2435 = vshrl.u32 %v2129, 16
        %v2437 = vor.u32 %v2435, %v2433
        %v2439 = vshll.u32 %v2130, 16
        %v2441 = vrot.slane %v2439, 1
        %v2442 = vsel %vm1560, %v2437, %v2441
        %v2443 = vshrl.u32 %v2130, 16
        %v2445 = vor.u32 %v2443, %v2441
        %v2447 = vshll.u32 %v2131, 16
        %v2449 = vrot.slane %v2447, 1
        %v2450 = vsel %vm1560, %v2445, %v2449
        %v2451 = vshrl.u32 %v2131, 16
        %v2453 = vor.u32 %v2451, %v2449
        %v2455 = vshll.u32 %v2132, 16
        %v2457 = vrot.slane %v2455, 1
        %v2458 = vsel %vm1560, %v2453, %v2457
        %v2459 = vshrl.u32 %v2132, 16
        %v2461 = vor.u32 %v2459, %v2457
        %v2463 = vshll.u32 %v2133, 16
        %v2465 = vrot.slane %v2463, 1
        %v2466 = vsel %vm1560, %v2461, %v2465
        %v2496 = vrot.slane %v2134, 1
        %v2497 = vrot.slane %v2120, 1
        %v2498 = vsel %vm2280, %v2496, %v2497
        %v2499 = vrot.slane %v2121, 1
        %v2500 = vsel %vm2280, %v2497, %v2499
        %v2501 = vrot.slane %v2122, 1
        %v2502 = vsel %vm2280, %v2499, %v2501
        %v2503 = vrot.slane %v2123, 1
        %v2504 = vsel %vm2280, %v2501, %v2503
        %v2505 = vrot.slane %v2124, 1
        %v2506 = vsel %vm2280, %v2503, %v2505
        %v2507 = vrot.slane %v2125, 1
        %v2508 = vsel %vm2280, %v2505, %v2507
        %v2509 = vrot.slane %v2126, 1
        %v2510 = vsel %vm2280, %v2507, %v2509
        %v2511 = vrot.slane %v2127, 1
        %v2512 = vsel %vm2280, %v2509, %v2511
        %v2513 = vrot.slane %v2128, 1
        %v2514 = vsel %vm2280, %v2511, %v2513
        %v2515 = vrot.slane %v2129, 1
        %v2516 = vsel %vm2280, %v2513, %v2515
        %v2517 = vrot.slane %v2130, 1
        %v2518 = vsel %vm2280, %v2515, %v2517
        %v2519 = vrot.slane %v2131, 1
        %v2520 = vsel %vm2280, %v2517, %v2519
        %v2521 = vrot.slane %v2132, 1
        %v2522 = vsel %vm2280, %v2519, %v2521
        %v2523 = vrot.slane %v2133, 1
        %v2524 = vsel %vm2280, %v2521, %v2523
        %v2539 = vld [vmem:[#allocation9] sm:$0xf]
        %v2540 = vld [vmem:[#allocation9 + $0x4] sm:$0xf]
        %v2541 = vld [vmem:[#allocation9 + $0x8] sm:$0xf]
        %v2542 = vld [vmem:[#allocation9 + $0xc] sm:$0xf]
        %v2543 = vld [vmem:[#allocation9 + $0x10] sm:$0xf]
        %v2544 = vld [vmem:[#allocation9 + $0x14] sm:$0xf]
        %v2545 = vld [vmem:[#allocation9 + $0x18] sm:$0xf]
        %v2546 = vld [vmem:[#allocation9 + $0x1c] sm:$0xf]
        %v2547 = vld [vmem:[#allocation9 + $0x20] sm:$0xf]
        %v2548 = vld [vmem:[#allocation9 + $0x24] sm:$0xf]
        %v2549 = vld [vmem:[#allocation9 + $0x28] sm:$0xf]
        %v2550 = vld [vmem:[#allocation9 + $0x2c] sm:$0xf]
        %v2551 = vld [vmem:[#allocation9 + $0x30] sm:$0xf]
        %v2552 = vld [vmem:[#allocation9 + $0x34] sm:$0xf]
        %v2553 = vld [vmem:[#allocation9 + $0x38] sm:$0xf]
        %v2554 = vld [vmem:[#allocation9 + $0x3c] sm:$0xf]
        %v2555 = vld [vmem:[#allocation9 + $0x40] sm:$0xf]
        %v2556 = vld [vmem:[#allocation9 + $0x44] sm:$0xf]
        %v2557 = vld [vmem:[#allocation9 + $0x48] sm:$0xf]
        %v2558 = vld [vmem:[#allocation9 + $0x4c] sm:$0xf]
        %v2559 = vld [vmem:[#allocation9 + $0x50] sm:$0xf]
        %v2560 = vld [vmem:[#allocation9 + $0x54] sm:$0xf]
        %v2561 = vld [vmem:[#allocation9 + $0x58] sm:$0xf]
        %v2562 = vld [vmem:[#allocation9 + $0x5c] sm:$0xf]
        %v2563 = vld [vmem:[#allocation9 + $0x60] sm:$0xf]
        %v2564 = vld [vmem:[#allocation9 + $0x64] sm:$0xf]
        %v2565 = vld [vmem:[#allocation9 + $0x68] sm:$0xf]
        %v2566 = vld [vmem:[#allocation9 + $0x6c] sm:$0xf]
        %v2567 = vld [vmem:[#allocation9 + $0x70] sm:$0xf]
        %v2568 = vld [vmem:[#allocation9 + $0x74] sm:$0xf]
        %v2569 = vld [vmem:[#allocation9 + $0x78] sm:$0xf]
        %v2570 = vld [vmem:[#allocation9 + $0x7c] sm:$0xf]
        %v2571 = vld [vmem:[#allocation9 + $0x80] sm:$0xf]
        %v2572 = vld [vmem:[#allocation9 + $0x84] sm:$0xf]
        %v2573 = vld [vmem:[#allocation9 + $0x88] sm:$0xf]
        %v2574 = vld [vmem:[#allocation9 + $0x8c] sm:$0xf]
        %v2575 = vld [vmem:[#allocation9 + $0x90] sm:$0xf]
        %v2576 = vld [vmem:[#allocation9 + $0x94] sm:$0xf]
        %v2577 = vld [vmem:[#allocation9 + $0x98] sm:$0xf]
        %v2578 = vld [vmem:[#allocation9 + $0x9c] sm:$0xf]
        %v2579 = vld [vmem:[#allocation9 + $0xa0] sm:$0xf]
        %v2580 = vld [vmem:[#allocation9 + $0xa4] sm:$0xf]
        %v2581 = vld [vmem:[#allocation9 + $0xa8] sm:$0xf]
        %v2582 = vld [vmem:[#allocation9 + $0xac] sm:$0xf]
        %v2583 = vld [vmem:[#allocation9 + $0xb0] sm:$0xf]
        %v2584 = vld [vmem:[#allocation9 + $0xb4] sm:$0xf]
        %v2585 = vld [vmem:[#allocation9 + $0xb8] sm:$0xf]
        %v2586 = vld [vmem:[#allocation9 + $0xbc] sm:$0xf]
        %v2587 = vld [vmem:[#allocation9 + $0xc0] sm:$0xf]
        %v2588 = vld [vmem:[#allocation9 + $0xc4] sm:$0xf]
        %v2589 = vld [vmem:[#allocation9 + $0xc8] sm:$0xf]
        %v2590 = vld [vmem:[#allocation9 + $0xcc] sm:$0xf]
        %v2591 = vld [vmem:[#allocation9 + $0xd0] sm:$0xf]
        %v2592 = vld [vmem:[#allocation9 + $0xd4] sm:$0xf]
        %v2593 = vld [vmem:[#allocation9 + $0xd8] sm:$0xf]
        %v2594 = vld [vmem:[#allocation9 + $0xdc] sm:$0xf]
        %v2595 = vld [vmem:[#allocation9 + $0xe0] sm:$0xf]
        %v2596 = vld [vmem:[#allocation9 + $0xe4] sm:$0xf]
        %v2597 = vld [vmem:[#allocation9 + $0xe8] sm:$0xf]
        %v2598 = vld [vmem:[#allocation9 + $0xec] sm:$0xf]
        %v2599 = vld [vmem:[#allocation9 + $0xf0] sm:$0xf]
        %v2600 = vld [vmem:[#allocation9 + $0xf4] sm:$0xf]
        %v2601 = vld [vmem:[#allocation9 + $0xf8] sm:$0xf]
        %v2602 = vld [vmem:[#allocation9 + $0xfc] sm:$0xf]
        %v2603 = vld [vmem:[#allocation9 + $0x100] sm:$0xf]
        %v2604 = vld [vmem:[#allocation9 + $0x104] sm:$0xf]
        %v2605 = vld [vmem:[#allocation9 + $0x108] sm:$0xf]
        %v2606 = vld [vmem:[#allocation9 + $0x10c] sm:$0xf]
        %v2607 = vld [vmem:[#allocation9 + $0x110] sm:$0xf]
        %v2608 = vld [vmem:[#allocation9 + $0x114] sm:$0xf]
        %v2609 = vld [vmem:[#allocation9 + $0x118] sm:$0xf]
        %v2610 = vld [vmem:[#allocation9 + $0x11c] sm:$0xf]
        %v2611 = vld [vmem:[#allocation9 + $0x120] sm:$0xf]
        %v2612 = vld [vmem:[#allocation9 + $0x124] sm:$0xf]
        %v2613 = vld [vmem:[#allocation9 + $0x128] sm:$0xf]
        %v2614 = vld [vmem:[#allocation9 + $0x12c] sm:$0xf]
        %v2615 = vld [vmem:[#allocation9 + $0x130] sm:$0xf]
        %v2616 = vld [vmem:[#allocation9 + $0x134] sm:$0xf]
        %v2617 = vld [vmem:[#allocation9 + $0x138] sm:$0xf]
        %v2618 = vld [vmem:[#allocation9 + $0x13c] sm:$0xf]
        %v2619 = vld [vmem:[#allocation9 + $0x140] sm:$0xf]
        %v2620 = vld [vmem:[#allocation9 + $0x144] sm:$0xf]
        %v2621 = vld [vmem:[#allocation9 + $0x148] sm:$0xf]
        %v2622 = vld [vmem:[#allocation9 + $0x14c] sm:$0xf]
        %v2623 = vld [vmem:[#allocation9 + $0x150] sm:$0xf]
        %v2624 = vld [vmem:[#allocation9 + $0x154] sm:$0xf]
        %v2625 = vld [vmem:[#allocation9 + $0x158] sm:$0xf]
        %v2626 = vld [vmem:[#allocation9 + $0x15c] sm:$0xf]
        %v2627 = vld [vmem:[#allocation9 + $0x160] sm:$0xf]
        %v2628 = vld [vmem:[#allocation9 + $0x164] sm:$0xf]
        %v2629 = vld [vmem:[#allocation9 + $0x168] sm:$0xf]
        %v2630 = vld [vmem:[#allocation9 + $0x16c] sm:$0xf]
        %v2631 = vld [vmem:[#allocation9 + $0x170] sm:$0xf]
        %v2632 = vld [vmem:[#allocation9 + $0x174] sm:$0xf]
        %v2633 = vld [vmem:[#allocation9 + $0x178] sm:$0xf]
        %v2634 = vld [vmem:[#allocation9 + $0x17c] sm:$0xf]
        %v2635 = vld [vmem:[#allocation9 + $0x180] sm:$0xf]
        %v2636 = vld [vmem:[#allocation9 + $0x184] sm:$0xf]
        %v2637 = vld [vmem:[#allocation9 + $0x188] sm:$0xf]
        %v2638 = vld [vmem:[#allocation9 + $0x18c] sm:$0xf]
        %v2639 = vld [vmem:[#allocation9 + $0x190] sm:$0xf]
        %v2640 = vld [vmem:[#allocation9 + $0x194] sm:$0xf]
        %v2641 = vld [vmem:[#allocation9 + $0x198] sm:$0xf]
        %v2642 = vld [vmem:[#allocation9 + $0x19c] sm:$0xf]
        %v2643 = vld [vmem:[#allocation9 + $0x1a0] sm:$0xf]
        %v2644 = vld [vmem:[#allocation9 + $0x1a4] sm:$0xf]
        %v2645 = vld [vmem:[#allocation9 + $0x1a8] sm:$0xf]
        %v2646 = vld [vmem:[#allocation9 + $0x1ac] sm:$0xf]
        %v2647 = vld [vmem:[#allocation9 + $0x1b0] sm:$0xf]
        %v2648 = vld [vmem:[#allocation9 + $0x1b4] sm:$0xf]
        %v2649 = vld [vmem:[#allocation9 + $0x1b8] sm:$0xf]
        %v2650 = vld [vmem:[#allocation9 + $0x1bc] sm:$0xf]
        %v2651 = vld [vmem:[#allocation9 + $0x1c0] sm:$0xf]
        %v2652 = vld [vmem:[#allocation9 + $0x1c4] sm:$0xf]
        %v2653 = vld [vmem:[#allocation9 + $0x1c8] sm:$0xf]
        %v2654 = vld [vmem:[#allocation9 + $0x1cc] sm:$0xf]
        %v2655 = vld [vmem:[#allocation9 + $0x1d0] sm:$0xf]
        %v2656 = vld [vmem:[#allocation9 + $0x1d4] sm:$0xf]
        %v2657 = vld [vmem:[#allocation9 + $0x1d8] sm:$0xf]
        %v2658 = vld [vmem:[#allocation9 + $0x1dc] sm:$0xf]
        %v2659 = vld [vmem:[#allocation9 + $0x1e0] sm:$0xf]
        %v2660 = vld [vmem:[#allocation9 + $0x1e4] sm:$0xf]
        %v2661 = vld [vmem:[#allocation9 + $0x1e8] sm:$0xf]
        %v2662 = vld [vmem:[#allocation9 + $0x1ec] sm:$0xf]
        %v2663 = vld [vmem:[#allocation9 + $0x1f0] sm:$0xf]
        %v2664 = vld [vmem:[#allocation9 + $0x1f4] sm:$0xf]
        %v2665 = vld [vmem:[#allocation9 + $0x1f8] sm:$0xf]
        %v2666 = vld [vmem:[#allocation9 + $0x1fc] sm:$0xf]
        %v2667 = vld [vmem:[#allocation9 + $0x200] sm:$0xf]
        %v2668 = vld [vmem:[#allocation9 + $0x204] sm:$0xf]
        %v2669 = vld [vmem:[#allocation9 + $0x208] sm:$0xf]
        %v2670 = vld [vmem:[#allocation9 + $0x20c] sm:$0xf]
        %v2671 = vld [vmem:[#allocation9 + $0x210] sm:$0xf]
        %v2672 = vld [vmem:[#allocation9 + $0x214] sm:$0xf]
        %v2673 = vld [vmem:[#allocation9 + $0x218] sm:$0xf]
        %v2674 = vld [vmem:[#allocation9 + $0x21c] sm:$0xf]
        %v2675 = vld [vmem:[#allocation9 + $0x220] sm:$0xf]
        %v2676 = vld [vmem:[#allocation9 + $0x224] sm:$0xf]
        %v2677 = vld [vmem:[#allocation9 + $0x228] sm:$0xf]
        %v2678 = vld [vmem:[#allocation9 + $0x22c] sm:$0xf]
        %v2679 = vld [vmem:[#allocation9 + $0x230] sm:$0xf]
        %v2680 = vld [vmem:[#allocation9 + $0x234] sm:$0xf]
        %v2681 = vld [vmem:[#allocation9 + $0x238] sm:$0xf]
        %v2682 = vld [vmem:[#allocation9 + $0x23c] sm:$0xf]
        %v2827 = vunpack.c.l.b16 %v2539
        %v2828 = vunpack.c.l.b16 %v2540
        %v2829 = vunpack.c.l.b16 %v2541
        %v2830 = vunpack.c.l.b16 %v2542
        %v2831 = vunpack.c.l.b16 %v2543
        %v2832 = vunpack.c.l.b16 %v2544
        %v2833 = vunpack.c.l.b16 %v2545
        %v2834 = vunpack.c.l.b16 %v2546
        %v2835 = vunpack.c.l.b16 %v2547
        %v2836 = vunpack.c.l.b16 %v2548
        %v2837 = vunpack.c.l.b16 %v2549
        %v2838 = vunpack.c.l.b16 %v2550
        %v2839 = vunpack.c.l.b16 %v2551
        %v2840 = vunpack.c.l.b16 %v2552
        %v2841 = vunpack.c.l.b16 %v2553
        %v2842 = vunpack.c.l.b16 %v2554
        %v2843 = vunpack.c.l.b16 %v2555
        %v2844 = vunpack.c.l.b16 %v2556
        %v2845 = vunpack.c.l.b16 %v2557
        %v2846 = vunpack.c.l.b16 %v2558
        %v2847 = vunpack.c.l.b16 %v2559
        %v2848 = vunpack.c.l.b16 %v2560
        %v2849 = vunpack.c.l.b16 %v2561
        %v2850 = vunpack.c.l.b16 %v2562
        %v2851 = vunpack.c.l.b16 %v2563
        %v2852 = vunpack.c.l.b16 %v2564
        %v2853 = vunpack.c.l.b16 %v2565
        %v2854 = vunpack.c.l.b16 %v2566
        %v2855 = vunpack.c.l.b16 %v2567
        %v2856 = vunpack.c.l.b16 %v2568
        %v2857 = vunpack.c.l.b16 %v2569
        %v2858 = vunpack.c.l.b16 %v2570
        %v2859 = vunpack.c.l.b16 %v2571
        %v2860 = vunpack.c.l.b16 %v2572
        %v2861 = vunpack.c.l.b16 %v2573
        %v2862 = vunpack.c.l.b16 %v2574
        %v2863 = vunpack.c.l.b16 %v2575
        %v2864 = vunpack.c.l.b16 %v2576
        %v2865 = vunpack.c.l.b16 %v2577
        %v2866 = vunpack.c.l.b16 %v2578
        %v2867 = vunpack.c.l.b16 %v2579
        %v2868 = vunpack.c.l.b16 %v2580
        %v2869 = vunpack.c.l.b16 %v2581
        %v2870 = vunpack.c.l.b16 %v2582
        %v2871 = vunpack.c.l.b16 %v2583
        %v2872 = vunpack.c.l.b16 %v2584
        %v2873 = vunpack.c.l.b16 %v2585
        %v2874 = vunpack.c.l.b16 %v2586
        %v2875 = vunpack.c.l.b16 %v2587
        %v2876 = vunpack.c.l.b16 %v2588
        %v2877 = vunpack.c.l.b16 %v2589
        %v2878 = vunpack.c.l.b16 %v2590
        %v2879 = vunpack.c.l.b16 %v2591
        %v2880 = vunpack.c.l.b16 %v2592
        %v2881 = vunpack.c.l.b16 %v2593
        %v2882 = vunpack.c.l.b16 %v2594
        %v2883 = vunpack.c.l.b16 %v2595
        %v2884 = vunpack.c.l.b16 %v2596
        %v2885 = vunpack.c.l.b16 %v2597
        %v2886 = vunpack.c.l.b16 %v2598
        %v2887 = vunpack.c.l.b16 %v2599
        %v2888 = vunpack.c.l.b16 %v2600
        %v2889 = vunpack.c.l.b16 %v2601
        %v2890 = vunpack.c.l.b16 %v2602
        %v2891 = vunpack.c.l.b16 %v2603
        %v2892 = vunpack.c.l.b16 %v2604
        %v2893 = vunpack.c.l.b16 %v2605
        %v2894 = vunpack.c.l.b16 %v2606
        %v2895 = vunpack.c.l.b16 %v2607
        %v2896 = vunpack.c.l.b16 %v2608
        %v2897 = vunpack.c.l.b16 %v2609
        %v2898 = vunpack.c.l.b16 %v2610
        %v2899 = vunpack.c.l.b16 %v2611
        %v2900 = vunpack.c.l.b16 %v2612
        %v2901 = vunpack.c.l.b16 %v2613
        %v2902 = vunpack.c.l.b16 %v2614
        %v2903 = vunpack.c.l.b16 %v2615
        %v2904 = vunpack.c.l.b16 %v2616
        %v2905 = vunpack.c.l.b16 %v2617
        %v2906 = vunpack.c.l.b16 %v2618
        %v2907 = vunpack.c.l.b16 %v2619
        %v2908 = vunpack.c.l.b16 %v2620
        %v2909 = vunpack.c.l.b16 %v2621
        %v2910 = vunpack.c.l.b16 %v2622
        %v2911 = vunpack.c.l.b16 %v2623
        %v2912 = vunpack.c.l.b16 %v2624
        %v2913 = vunpack.c.l.b16 %v2625
        %v2914 = vunpack.c.l.b16 %v2626
        %v2915 = vunpack.c.l.b16 %v2627
        %v2916 = vunpack.c.l.b16 %v2628
        %v2917 = vunpack.c.l.b16 %v2629
        %v2918 = vunpack.c.l.b16 %v2630
        %v2919 = vunpack.c.l.b16 %v2631
        %v2920 = vunpack.c.l.b16 %v2632
        %v2921 = vunpack.c.l.b16 %v2633
        %v2922 = vunpack.c.l.b16 %v2634
        %v2923 = vunpack.c.l.b16 %v2635
        %v2924 = vunpack.c.l.b16 %v2636
        %v2925 = vunpack.c.l.b16 %v2637
        %v2926 = vunpack.c.l.b16 %v2638
        %v2927 = vunpack.c.l.b16 %v2639
        %v2928 = vunpack.c.l.b16 %v2640
        %v2929 = vunpack.c.l.b16 %v2641
        %v2930 = vunpack.c.l.b16 %v2642
        %v2931 = vunpack.c.l.b16 %v2643
        %v2932 = vunpack.c.l.b16 %v2644
        %v2933 = vunpack.c.l.b16 %v2645
        %v2934 = vunpack.c.l.b16 %v2646
        %v2935 = vunpack.c.l.b16 %v2647
        %v2936 = vunpack.c.l.b16 %v2648
        %v2937 = vunpack.c.l.b16 %v2649
        %v2938 = vunpack.c.l.b16 %v2650
        %v2939 = vunpack.c.l.b16 %v2651
        %v2940 = vunpack.c.l.b16 %v2652
        %v2941 = vunpack.c.l.b16 %v2653
        %v2942 = vunpack.c.l.b16 %v2654
        %v2943 = vunpack.c.l.b16 %v2655
        %v2944 = vunpack.c.l.b16 %v2656
        %v2945 = vunpack.c.l.b16 %v2657
        %v2946 = vunpack.c.l.b16 %v2658
        %v2947 = vunpack.c.l.b16 %v2659
        %v2948 = vunpack.c.l.b16 %v2660
        %v2949 = vunpack.c.l.b16 %v2661
        %v2950 = vunpack.c.l.b16 %v2662
        %v2951 = vunpack.c.l.b16 %v2663
        %v2952 = vunpack.c.l.b16 %v2664
        %v2953 = vunpack.c.l.b16 %v2665
        %v2954 = vunpack.c.l.b16 %v2666
        %v2955 = vunpack.c.l.b16 %v2667
        %v2956 = vunpack.c.l.b16 %v2668
        %v2957 = vunpack.c.l.b16 %v2669
        %v2958 = vunpack.c.l.b16 %v2670
        %v2959 = vunpack.c.l.b16 %v2671
        %v2960 = vunpack.c.l.b16 %v2672
        %v2961 = vunpack.c.l.b16 %v2673
        %v2962 = vunpack.c.l.b16 %v2674
        %v2963 = vunpack.c.l.b16 %v2675
        %v2964 = vunpack.c.l.b16 %v2676
        %v2965 = vunpack.c.l.b16 %v2677
        %v2966 = vunpack.c.l.b16 %v2678
        %v2967 = vunpack.c.l.b16 %v2679
        %v2968 = vunpack.c.l.b16 %v2680
        %v2969 = vunpack.c.l.b16 %v2681
        %v2970 = vunpack.c.l.b16 %v2682
        %v2971 = vpack.c.b16 %v2828, %v2827
        %v2972 = vpack.c.b16 %v2830, %v2829
        %v2973 = vpack.c.b16 %v2832, %v2831
        %v2974 = vpack.c.b16 %v2834, %v2833
        %v2975 = vpack.c.b16 %v2836, %v2835
        %v2976 = vpack.c.b16 %v2838, %v2837
        %v2977 = vpack.c.b16 %v2840, %v2839
        %v2978 = vpack.c.b16 %v2842, %v2841
        %v2979 = vpack.c.b16 %v2844, %v2843
        %v2980 = vpack.c.b16 %v2846, %v2845
        %v2981 = vpack.c.b16 %v2848, %v2847
        %v2982 = vpack.c.b16 %v2850, %v2849
        %v2983 = vpack.c.b16 %v2852, %v2851
        %v2984 = vpack.c.b16 %v2854, %v2853
        %v2985 = vpack.c.b16 %v2856, %v2855
        %v2986 = vpack.c.b16 %v2858, %v2857
        %v2987 = vpack.c.b16 %v2860, %v2859
        %v2988 = vpack.c.b16 %v2862, %v2861
        %v2989 = vpack.c.b16 %v2864, %v2863
        %v2990 = vpack.c.b16 %v2866, %v2865
        %v2991 = vpack.c.b16 %v2868, %v2867
        %v2992 = vpack.c.b16 %v2870, %v2869
        %v2993 = vpack.c.b16 %v2872, %v2871
        %v2994 = vpack.c.b16 %v2874, %v2873
        %v2995 = vpack.c.b16 %v2876, %v2875
        %v2996 = vpack.c.b16 %v2878, %v2877
        %v2997 = vpack.c.b16 %v2880, %v2879
        %v2998 = vpack.c.b16 %v2882, %v2881
        %v2999 = vpack.c.b16 %v2884, %v2883
        %v3000 = vpack.c.b16 %v2886, %v2885
        %v3001 = vpack.c.b16 %v2888, %v2887
        %v3002 = vpack.c.b16 %v2890, %v2889
        %v3003 = vpack.c.b16 %v2892, %v2891
        %v3004 = vpack.c.b16 %v2894, %v2893
        %v3005 = vpack.c.b16 %v2896, %v2895
        %v3006 = vpack.c.b16 %v2898, %v2897
        %v3007 = vpack.c.b16 %v2900, %v2899
        %v3008 = vpack.c.b16 %v2902, %v2901
        %v3009 = vpack.c.b16 %v2904, %v2903
        %v3010 = vpack.c.b16 %v2906, %v2905
        %v3011 = vpack.c.b16 %v2908, %v2907
        %v3012 = vpack.c.b16 %v2910, %v2909
        %v3013 = vpack.c.b16 %v2912, %v2911
        %v3014 = vpack.c.b16 %v2914, %v2913
        %v3015 = vpack.c.b16 %v2916, %v2915
        %v3016 = vpack.c.b16 %v2918, %v2917
        %v3017 = vpack.c.b16 %v2920, %v2919
        %v3018 = vpack.c.b16 %v2922, %v2921
        %v3019 = vpack.c.b16 %v2924, %v2923
        %v3020 = vpack.c.b16 %v2926, %v2925
        %v3021 = vpack.c.b16 %v2928, %v2927
        %v3022 = vpack.c.b16 %v2930, %v2929
        %v3023 = vpack.c.b16 %v2932, %v2931
        %v3024 = vpack.c.b16 %v2934, %v2933
        %v3025 = vpack.c.b16 %v2936, %v2935
        %v3026 = vpack.c.b16 %v2938, %v2937
        %v3027 = vpack.c.b16 %v2940, %v2939
        %v3028 = vpack.c.b16 %v2942, %v2941
        %v3029 = vpack.c.b16 %v2944, %v2943
        %v3030 = vpack.c.b16 %v2946, %v2945
        %v3031 = vpack.c.b16 %v2948, %v2947
        %v3032 = vpack.c.b16 %v2950, %v2949
        %v3033 = vpack.c.b16 %v2952, %v2951
        %v3034 = vpack.c.b16 %v2954, %v2953
        %v3035 = vpack.c.b16 %v2956, %v2955
        %v3036 = vpack.c.b16 %v2958, %v2957
        %v3037 = vpack.c.b16 %v2960, %v2959
        %v3038 = vpack.c.b16 %v2962, %v2961
        %v3039 = vpack.c.b16 %v2964, %v2963
        %v3040 = vpack.c.b16 %v2966, %v2965
        %v3041 = vpack.c.b16 %v2968, %v2967
        %v3042 = vpack.c.b16 %v2970, %v2969
        %3115 = vmatprep.subr.bf16.mxu0 0
        %3116 = vmatpush1.bf16.msra.mxu0 %v2971
        %3117 = vmatprep.subr.bf16.mxu0 0
        %3118 = vmatpush1.bf16.msra.mxu0 %v2972
        %3119 = vmatprep.subr.bf16.mxu0 0
        %3120 = vmatpush1.bf16.msra.mxu0 %v2973
        %3121 = vmatprep.subr.bf16.mxu0 0
        %3122 = vmatpush1.bf16.msra.mxu0 %v2974
        %3123 = vmatprep.subr.bf16.mxu0 0
        %3124 = vmatpush1.bf16.msra.mxu0 %v2975
        %3125 = vmatprep.subr.bf16.mxu0 0
        %3126 = vmatpush1.bf16.msra.mxu0 %v2976
        %3127 = vmatprep.subr.bf16.mxu0 0
        %3128 = vmatpush1.bf16.msra.mxu0 %v2977
        %3129 = vmatprep.subr.bf16.mxu0 0
        %3130 = vmatpush1.bf16.msra.mxu0 %v2978
        %3131 = vmatprep.subr.bf16.mxu0 0
        %3132 = vmatpush1.bf16.msra.mxu0 %v2979
        %3133 = vmatprep.subr.bf16.mxu0 0
        %3134 = vmatpush1.bf16.msra.mxu0 %v2980
        %3135 = vmatprep.subr.bf16.mxu0 0
        %3136 = vmatpush1.bf16.msra.mxu0 %v2981
        %3137 = vmatprep.subr.bf16.mxu0 0
        %3138 = vmatpush1.bf16.msra.mxu0 %v2982
        %3139 = vmatprep.subr.bf16.mxu0 0
        %3140 = vmatpush1.bf16.msra.mxu0 %v2983
        %3141 = vmatprep.subr.bf16.mxu0 0
        %3142 = vmatpush1.bf16.msra.mxu0 %v2984
        %3143 = vmatprep.subr.bf16.mxu0 0
        %3144 = vmatpush1.bf16.msra.mxu0 %v2985
        %3145 = vmatprep.subr.bf16.mxu0 0
        %3146 = vmatpush1.bf16.msra.mxu0 %v2986
        %3147 = vmatprep.mubr.bf16.mxu0 %v2146
        %3148 = vmatmul.mubr.bf16.gmra.mrb[0].mxu0 %v2099
        %v3149 = vpop.f32.mrb[0].mxu0
        %v3150 = vadd.f32 0.0, %v3149
        %v3151 = vpop.f32.mrb[0].mxu0
        %v3152 = vpop.f32.mrb[0].mxu0
        %v3153 = vadd.f32 0.0, %v3152
        %v3154 = vpop.f32.mrb[0].mxu0
        %3155 = vmatprep.mubr.bf16.mxu0 %v2154
        %3156 = vmatmul.mubr.bf16.gmra.mrb[0].mxu0 %v2100
        %v3157 = vpop.f32.mrb[0].mxu0
        %v3158 = vadd.f32 0.0, %v3157
        %v3159 = vpop.f32.mrb[0].mxu0
        %v3160 = vpop.f32.mrb[0].mxu0
        %v3161 = vadd.f32 0.0, %v3160
        %v3162 = vpop.f32.mrb[0].mxu0
        %3163 = vmatprep.mubr.bf16.mxu0 %v2162
        %3164 = vmatmul.mubr.bf16.gmra.mrb[0].mxu0 %v2101
        %v3165 = vpop.f32.mrb[0].mxu0
        %v3166 = vadd.f32 0.0, %v3165
        %v3167 = vpop.f32.mrb[0].mxu0
        %v3168 = vpop.f32.mrb[0].mxu0
        %v3169 = vadd.f32 0.0, %v3168
        %v3170 = vpop.f32.mrb[0].mxu0
        %3171 = vmatprep.mubr.bf16.mxu0 %v2170
        %3172 = vmatmul.mubr.bf16.gmra.mrb[0].mxu0 %v2102
        %v3173 = vpop.f32.mrb[0].mxu0
        %v3174 = vadd.f32 0.0, %v3173
        %v3175 = vpop.f32.mrb[0].mxu0
        %v3176 = vpop.f32.mrb[0].mxu0
        %v3177 = vadd.f32 0.0, %v3176
        %v3178 = vpop.f32.mrb[0].mxu0
        %3179 = vmatprep.mubr.bf16.mxu0 %v2178
        %3180 = vmatmul.mubr.bf16.gmra.mrb[0].mxu0 %v2103
        %v3181 = vpop.f32.mrb[0].mxu0
        %v3182 = vadd.f32 0.0, %v3181
        %v3183 = vpop.f32.mrb[0].mxu0
        %v3184 = vpop.f32.mrb[0].mxu0
        %v3185 = vadd.f32 0.0, %v3184
        %v3186 = vpop.f32.mrb[0].mxu0
        %3187 = vmatprep.mubr.bf16.mxu0 %v2186
        %3188 = vmatmul.mubr.bf16.gmra.mrb[0].mxu0 %v2104
        %v3189 = vpop.f32.mrb[0].mxu0
        %v3190 = vadd.f32 0.0, %v3189
        %v3191 = vpop.f32.mrb[0].mxu0
        %v3192 = vpop.f32.mrb[0].mxu0
        %v3193 = vadd.f32 0.0, %v3192
        %v3194 = vpop.f32.mrb[0].mxu0
        %3195 = vmatprep.mubr.bf16.mxu0 %v2194
        %3196 = vmatmul.mubr.bf16.gmra.mrb[0].mxu0 %v2105
        %v3197 = vpop.f32.mrb[0].mxu0
        %v3198 = vadd.f32 0.0, %v3197
        %v3199 = vpop.f32.mrb[0].mxu0
        %v3200 = vpop.f32.mrb[0].mxu0
        %v3201 = vadd.f32 0.0, %v3200
        %v3202 = vpop.f32.mrb[0].mxu0
        %3203 = vmatprep.mubr.bf16.mxu0 %v2202
        %3204 = vmatmul.mubr.bf16.gmra.mrb[0].mxu0 %v2106
        %v3205 = vpop.f32.mrb[0].mxu0
        %v3206 = vadd.f32 0.0, %v3205
        %v3207 = vpop.f32.mrb[0].mxu0
        %v3208 = vpop.f32.mrb[0].mxu0
        %v3209 = vadd.f32 0.0, %v3208
        %v3210 = vpop.f32.mrb[0].mxu0
        %3211 = vmatprep.mubr.bf16.mxu0 %v2210
        %3212 = vmatmul.mubr.bf16.gmra.mrb[0].mxu0 %v2107
        %v3213 = vpop.f32.mrb[0].mxu0
        %v3214 = vadd.f32 0.0, %v3213
        %v3215 = vpop.f32.mrb[0].mxu0
        %v3216 = vpop.f32.mrb[0].mxu0
        %v3217 = vadd.f32 0.0, %v3216
        %v3218 = vpop.f32.mrb[0].mxu0
        %3219 = vmatprep.mubr.bf16.mxu0 %v2218
        %3220 = vmatmul.mubr.bf16.gmra.mrb[0].mxu0 %v2108
        %v3221 = vpop.f32.mrb[0].mxu0
        %v3222 = vadd.f32 0.0, %v3221
        %v3223 = vpop.f32.mrb[0].mxu0
        %v3224 = vpop.f32.mrb[0].mxu0
        %v3225 = vadd.f32 0.0, %v3224
        %v3226 = vpop.f32.mrb[0].mxu0
        %3227 = vmatprep.mubr.bf16.mxu0 %v2226
        %3228 = vmatmul.mubr.bf16.gmra.mrb[0].mxu0 %v2109
        %v3229 = vpop.f32.mrb[0].mxu0
        %v3230 = vadd.f32 0.0, %v3229
        %v3231 = vpop.f32.mrb[0].mxu0
        %v3232 = vpop.f32.mrb[0].mxu0
        %v3233 = vadd.f32 0.0, %v3232
        %v3234 = vpop.f32.mrb[0].mxu0
        %3235 = vmatprep.mubr.bf16.mxu0 %v2234
        %3236 = vmatmul.mubr.bf16.gmra.mrb[0].mxu0 %v2110
        %v3237 = vpop.f32.mrb[0].mxu0
        %v3238 = vadd.f32 0.0, %v3237
        %v3239 = vpop.f32.mrb[0].mxu0
        %v3240 = vpop.f32.mrb[0].mxu0
        %v3241 = vadd.f32 0.0, %v3240
        %v3242 = vpop.f32.mrb[0].mxu0
        %3243 = vmatprep.mubr.bf16.mxu0 %v2242
        %3244 = vmatmul.mubr.bf16.gmra.mrb[0].mxu0 %v2111
        %v3245 = vpop.f32.mrb[0].mxu0
        %v3246 = vadd.f32 0.0, %v3245
        %v3247 = vpop.f32.mrb[0].mxu0
        %v3248 = vpop.f32.mrb[0].mxu0
        %v3249 = vadd.f32 0.0, %v3248
        %v3250 = vpop.f32.mrb[0].mxu0
        %3251 = vmatprep.mubr.bf16.mxu0 %v2250
        %3252 = vmatmul.mubr.bf16.gmra.mrb[0].mxu0 %v2112
        %v3253 = vpop.f32.mrb[0].mxu0
        %v3254 = vadd.f32 0.0, %v3253
        %v3255 = vpop.f32.mrb[0].mxu0
        %v3256 = vpop.f32.mrb[0].mxu0
        %v3257 = vadd.f32 0.0, %v3256
        %v3258 = vpop.f32.mrb[0].mxu0
        %3259 = vdwg.mxu0
        %3260 = vmatprep.subr.bf16.mxu0 0
        %3261 = vmatpush1.bf16.msra.mxu0 %v2987
        %3262 = vmatprep.subr.bf16.mxu0 0
        %3263 = vmatpush1.bf16.msra.mxu0 %v2988
        %3264 = vmatprep.subr.bf16.mxu0 0
        %3265 = vmatpush1.bf16.msra.mxu0 %v2989
        %3266 = vmatprep.subr.bf16.mxu0 0
        %3267 = vmatpush1.bf16.msra.mxu0 %v2990
        %3268 = vmatprep.subr.bf16.mxu0 0
        %3269 = vmatpush1.bf16.msra.mxu0 %v2991
        %3270 = vmatprep.subr.bf16.mxu0 0
        %3271 = vmatpush1.bf16.msra.mxu0 %v2992
        %3272 = vmatprep.subr.bf16.mxu0 0
        %3273 = vmatpush1.bf16.msra.mxu0 %v2993
        %3274 = vmatprep.subr.bf16.mxu0 0
        %3275 = vmatpush1.bf16.msra.mxu0 %v2994
        %3276 = vmatprep.subr.bf16.mxu0 0
        %3277 = vmatpush1.bf16.msra.mxu0 %v2995
        %3278 = vmatprep.subr.bf16.mxu0 0
        %3279 = vmatpush1.bf16.msra.mxu0 %v2996
        %3280 = vmatprep.subr.bf16.mxu0 0
        %3281 = vmatpush1.bf16.msra.mxu0 %v2997
        %3282 = vmatprep.subr.bf16.mxu0 0
        %3283 = vmatpush1.bf16.msra.mxu0 %v2998
        %3284 = vmatprep.subr.bf16.mxu0 0
        %3285 = vmatpush1.bf16.msra.mxu0 %v2999
        %3286 = vmatprep.subr.bf16.mxu0 0
        %3287 = vmatpush1.bf16.msra.mxu0 %v3000
        %3288 = vmatprep.subr.bf16.mxu0 0
        %3289 = vmatpush1.bf16.msra.mxu0 %v3001
        %3290 = vmatprep.subr.bf16.mxu0 0
        %3291 = vmatpush1.bf16.msra.mxu0 %v3002
        %3292 = vmatprep.mubr.bf16.mxu0 %v2100
        %3293 = vmatmul.mubr.bf16.gmra.mrb[0].mxu0 %v2283
        %v3294 = vpop.f32.mrb[0].mxu0
        %v3295 = vadd.f32 %v3150, %v3294
        %v3296 = vpop.f32.mrb[0].mxu0
        %v3297 = vpop.f32.mrb[0].mxu0
        %v3298 = vadd.f32 %v3153, %v3297
        %v3299 = vpop.f32.mrb[0].mxu0
        %3300 = vmatprep.mubr.bf16.mxu0 %v2101
        %3301 = vmatmul.mubr.bf16.gmra.mrb[0].mxu0 %v2285
        %v3302 = vpop.f32.mrb[0].mxu0
        %v3303 = vadd.f32 %v3158, %v3302
        %v3304 = vpop.f32.mrb[0].mxu0
        %v3305 = vpop.f32.mrb[0].mxu0
        %v3306 = vadd.f32 %v3161, %v3305
        %v3307 = vpop.f32.mrb[0].mxu0
        %3308 = vmatprep.mubr.bf16.mxu0 %v2102
        %3309 = vmatmul.mubr.bf16.gmra.mrb[0].mxu0 %v2287
        %v3310 = vpop.f32.mrb[0].mxu0
        %v3311 = vadd.f32 %v3166, %v3310
        %v3312 = vpop.f32.mrb[0].mxu0
        %v3313 = vpop.f32.mrb[0].mxu0
        %v3314 = vadd.f32 %v3169, %v3313
        %v3315 = vpop.f32.mrb[0].mxu0
        %3316 = vmatprep.mubr.bf16.mxu0 %v2103
        %3317 = vmatmul.mubr.bf16.gmra.mrb[0].mxu0 %v2289
        %v3318 = vpop.f32.mrb[0].mxu0
        %v3319 = vadd.f32 %v3174, %v3318
        %v3320 = vpop.f32.mrb[0].mxu0
        %v3321 = vpop.f32.mrb[0].mxu0
        %v3322 = vadd.f32 %v3177, %v3321
        %v3323 = vpop.f32.mrb[0].mxu0
        %3324 = vmatprep.mubr.bf16.mxu0 %v2104
        %3325 = vmatmul.mubr.bf16.gmra.mrb[0].mxu0 %v2291
        %v3326 = vpop.f32.mrb[0].mxu0
        %v3327 = vadd.f32 %v3182, %v3326
        %v3328 = vpop.f32.mrb[0].mxu0
        %v3329 = vpop.f32.mrb[0].mxu0
        %v3330 = vadd.f32 %v3185, %v3329
        %v3331 = vpop.f32.mrb[0].mxu0
        %3332 = vmatprep.mubr.bf16.mxu0 %v2105
        %3333 = vmatmul.mubr.bf16.gmra.mrb[0].mxu0 %v2293
        %v3334 = vpop.f32.mrb[0].mxu0
        %v3335 = vadd.f32 %v3190, %v3334
        %v3336 = vpop.f32.mrb[0].mxu0
        %v3337 = vpop.f32.mrb[0].mxu0
        %v3338 = vadd.f32 %v3193, %v3337
        %v3339 = vpop.f32.mrb[0].mxu0
        %3340 = vmatprep.mubr.bf16.mxu0 %v2106
        %3341 = vmatmul.mubr.bf16.gmra.mrb[0].mxu0 %v2295
        %v3342 = vpop.f32.mrb[0].mxu0
        %v3343 = vadd.f32 %v3198, %v3342
        %v3344 = vpop.f32.mrb[0].mxu0
        %v3345 = vpop.f32.mrb[0].mxu0
        %v3346 = vadd.f32 %v3201, %v3345
        %v3347 = vpop.f32.mrb[0].mxu0
        %3348 = vmatprep.mubr.bf16.mxu0 %v2107
        %3349 = vmatmul.mubr.bf16.gmra.mrb[0].mxu0 %v2297
        %v3350 = vpop.f32.mrb[0].mxu0
        %v3351 = vadd.f32 %v3206, %v3350
        %v3352 = vpop.f32.mrb[0].mxu0
        %v3353 = vpop.f32.mrb[0].mxu0
        %v3354 = vadd.f32 %v3209, %v3353
        %v3355 = vpop.f32.mrb[0].mxu0
        %3356 = vmatprep.mubr.bf16.mxu0 %v2108
        %3357 = vmatmul.mubr.bf16.gmra.mrb[0].mxu0 %v2299
        %v3358 = vpop.f32.mrb[0].mxu0
        %v3359 = vadd.f32 %v3214, %v3358
        %v3360 = vpop.f32.mrb[0].mxu0
        %v3361 = vpop.f32.mrb[0].mxu0
        %v3362 = vadd.f32 %v3217, %v3361
        %v3363 = vpop.f32.mrb[0].mxu0
        %3364 = vmatprep.mubr.bf16.mxu0 %v2109
        %3365 = vmatmul.mubr.bf16.gmra.mrb[0].mxu0 %v2301
        %v3366 = vpop.f32.mrb[0].mxu0
        %v3367 = vadd.f32 %v3222, %v3366
        %v3368 = vpop.f32.mrb[0].mxu0
        %v3369 = vpop.f32.mrb[0].mxu0
        %v3370 = vadd.f32 %v3225, %v3369
        %v3371 = vpop.f32.mrb[0].mxu0
        %3372 = vmatprep.mubr.bf16.mxu0 %v2110
        %3373 = vmatmul.mubr.bf16.gmra.mrb[0].mxu0 %v2303
        %v3374 = vpop.f32.mrb[0].mxu0
        %v3375 = vadd.f32 %v3230, %v3374
        %v3376 = vpop.f32.mrb[0].mxu0
        %v3377 = vpop.f32.mrb[0].mxu0
        %v3378 = vadd.f32 %v3233, %v3377
        %v3379 = vpop.f32.mrb[0].mxu0
        %3380 = vmatprep.mubr.bf16.mxu0 %v2111
        %3381 = vmatmul.mubr.bf16.gmra.mrb[0].mxu0 %v2305
        %v3382 = vpop.f32.mrb[0].mxu0
        %v3383 = vadd.f32 %v3238, %v3382
        %v3384 = vpop.f32.mrb[0].mxu0
        %v3385 = vpop.f32.mrb[0].mxu0
        %v3386 = vadd.f32 %v3241, %v3385
        %v3387 = vpop.f32.mrb[0].mxu0
        %3388 = vmatprep.mubr.bf16.mxu0 %v2112
        %3389 = vmatmul.mubr.bf16.gmra.mrb[0].mxu0 %v2307
        %v3390 = vpop.f32.mrb[0].mxu0
        %v3391 = vadd.f32 %v3246, %v3390
        %v3392 = vpop.f32.mrb[0].mxu0
        %v3393 = vpop.f32.mrb[0].mxu0
        %v3394 = vadd.f32 %v3249, %v3393
        %v3395 = vpop.f32.mrb[0].mxu0
        %3396 = vmatprep.mubr.bf16.mxu0 %v2115
        %3397 = vmatmul.mubr.bf16.gmra.mrb[0].mxu0 %v2309
        %v3398 = vpop.f32.mrb[0].mxu0
        %v3399 = vadd.f32 %v3254, %v3398
        %v3400 = vpop.f32.mrb[0].mxu0
        %v3401 = vpop.f32.mrb[0].mxu0
        %v3402 = vadd.f32 %v3257, %v3401
        %v3403 = vpop.f32.mrb[0].mxu0
        %3404 = vdwg.mxu0
        %3405 = vmatprep.subr.bf16.mxu0 0
        %3406 = vmatpush1.bf16.msra.mxu0 %v3003
        %3407 = vmatprep.subr.bf16.mxu0 0
        %3408 = vmatpush1.bf16.msra.mxu0 %v3004
        %3409 = vmatprep.subr.bf16.mxu0 0
        %3410 = vmatpush1.bf16.msra.mxu0 %v3005
        %3411 = vmatprep.subr.bf16.mxu0 0
        %3412 = vmatpush1.bf16.msra.mxu0 %v3006
        %3413 = vmatprep.subr.bf16.mxu0 0
        %3414 = vmatpush1.bf16.msra.mxu0 %v3007
        %3415 = vmatprep.subr.bf16.mxu0 0
        %3416 = vmatpush1.bf16.msra.mxu0 %v3008
        %3417 = vmatprep.subr.bf16.mxu0 0
        %3418 = vmatpush1.bf16.msra.mxu0 %v3009
        %3419 = vmatprep.subr.bf16.mxu0 0
        %3420 = vmatpush1.bf16.msra.mxu0 %v3010
        %3421 = vmatprep.subr.bf16.mxu0 0
        %3422 = vmatpush1.bf16.msra.mxu0 %v3011
        %3423 = vmatprep.subr.bf16.mxu0 0
        %3424 = vmatpush1.bf16.msra.mxu0 %v3012
        %3425 = vmatprep.subr.bf16.mxu0 0
        %3426 = vmatpush1.bf16.msra.mxu0 %v3013
        %3427 = vmatprep.subr.bf16.mxu0 0
        %3428 = vmatpush1.bf16.msra.mxu0 %v3014
        %3429 = vmatprep.subr.bf16.mxu0 0
        %3430 = vmatpush1.bf16.msra.mxu0 %v3015
        %3431 = vmatprep.subr.bf16.mxu0 0
        %3432 = vmatpush1.bf16.msra.mxu0 %v3016
        %3433 = vmatprep.subr.bf16.mxu0 0
        %3434 = vmatpush1.bf16.msra.mxu0 %v3017
        %3435 = vmatprep.subr.bf16.mxu0 0
        %3436 = vmatpush1.bf16.msra.mxu0 %v3018
        %3437 = vmatprep.mubr.bf16.mxu0 %v2343
        %3438 = vmatmul.mubr.bf16.gmra.mrb[0].mxu0 %v2154
        %v3439 = vpop.f32.mrb[0].mxu0
        %v3440 = vadd.f32 %v3295, %v3439
        %v3441 = vpop.f32.mrb[0].mxu0
        %v3442 = vpop.f32.mrb[0].mxu0
        %v3443 = vadd.f32 %v3298, %v3442
        %v3444 = vpop.f32.mrb[0].mxu0
        %3445 = vmatprep.mubr.bf16.mxu0 %v2287
        %3446 = vmatmul.mubr.bf16.gmra.mrb[0].mxu0 %v2162
        %v3447 = vpop.f32.mrb[0].mxu0
        %v3448 = vadd.f32 %v3303, %v3447
        %v3449 = vpop.f32.mrb[0].mxu0
        %v3450 = vpop.f32.mrb[0].mxu0
        %v3451 = vadd.f32 %v3306, %v3450
        %v3452 = vpop.f32.mrb[0].mxu0
        %3453 = vmatprep.mubr.bf16.mxu0 %v2289
        %3454 = vmatmul.mubr.bf16.gmra.mrb[0].mxu0 %v2170
        %v3455 = vpop.f32.mrb[0].mxu0
        %v3456 = vadd.f32 %v3311, %v3455
        %v3457 = vpop.f32.mrb[0].mxu0
        %v3458 = vpop.f32.mrb[0].mxu0
        %v3459 = vadd.f32 %v3314, %v3458
        %v3460 = vpop.f32.mrb[0].mxu0
        %3461 = vmatprep.mubr.bf16.mxu0 %v2291
        %3462 = vmatmul.mubr.bf16.gmra.mrb[0].mxu0 %v2178
        %v3463 = vpop.f32.mrb[0].mxu0
        %v3464 = vadd.f32 %v3319, %v3463
        %v3465 = vpop.f32.mrb[0].mxu0
        %v3466 = vpop.f32.mrb[0].mxu0
        %v3467 = vadd.f32 %v3322, %v3466
        %v3468 = vpop.f32.mrb[0].mxu0
        %3469 = vmatprep.mubr.bf16.mxu0 %v2293
        %3470 = vmatmul.mubr.bf16.gmra.mrb[0].mxu0 %v2186
        %v3471 = vpop.f32.mrb[0].mxu0
        %v3472 = vadd.f32 %v3327, %v3471
        %v3473 = vpop.f32.mrb[0].mxu0
        %v3474 = vpop.f32.mrb[0].mxu0
        %v3475 = vadd.f32 %v3330, %v3474
        %v3476 = vpop.f32.mrb[0].mxu0
        %3477 = vmatprep.mubr.bf16.mxu0 %v2295
        %3478 = vmatmul.mubr.bf16.gmra.mrb[0].mxu0 %v2194
        %v3479 = vpop.f32.mrb[0].mxu0
        %v3480 = vadd.f32 %v3335, %v3479
        %v3481 = vpop.f32.mrb[0].mxu0
        %v3482 = vpop.f32.mrb[0].mxu0
        %v3483 = vadd.f32 %v3338, %v3482
        %v3484 = vpop.f32.mrb[0].mxu0
        %3485 = vmatprep.mubr.bf16.mxu0 %v2297
        %3486 = vmatmul.mubr.bf16.gmra.mrb[0].mxu0 %v2202
        %v3487 = vpop.f32.mrb[0].mxu0
        %v3488 = vadd.f32 %v3343, %v3487
        %v3489 = vpop.f32.mrb[0].mxu0
        %v3490 = vpop.f32.mrb[0].mxu0
        %v3491 = vadd.f32 %v3346, %v3490
        %v3492 = vpop.f32.mrb[0].mxu0
        %3493 = vmatprep.mubr.bf16.mxu0 %v2299
        %3494 = vmatmul.mubr.bf16.gmra.mrb[0].mxu0 %v2210
        %v3495 = vpop.f32.mrb[0].mxu0
        %v3496 = vadd.f32 %v3351, %v3495
        %v3497 = vpop.f32.mrb[0].mxu0
        %v3498 = vpop.f32.mrb[0].mxu0
        %v3499 = vadd.f32 %v3354, %v3498
        %v3500 = vpop.f32.mrb[0].mxu0
        %3501 = vmatprep.mubr.bf16.mxu0 %v2301
        %3502 = vmatmul.mubr.bf16.gmra.mrb[0].mxu0 %v2218
        %v3503 = vpop.f32.mrb[0].mxu0
        %v3504 = vadd.f32 %v3359, %v3503
        %v3505 = vpop.f32.mrb[0].mxu0
        %v3506 = vpop.f32.mrb[0].mxu0
        %v3507 = vadd.f32 %v3362, %v3506
        %v3508 = vpop.f32.mrb[0].mxu0
        %3509 = vmatprep.mubr.bf16.mxu0 %v2303
        %3510 = vmatmul.mubr.bf16.gmra.mrb[0].mxu0 %v2226
        %v3511 = vpop.f32.mrb[0].mxu0
        %v3512 = vadd.f32 %v3367, %v3511
        %v3513 = vpop.f32.mrb[0].mxu0
        %v3514 = vpop.f32.mrb[0].mxu0
        %v3515 = vadd.f32 %v3370, %v3514
        %v3516 = vpop.f32.mrb[0].mxu0
        %3517 = vmatprep.mubr.bf16.mxu0 %v2305
        %3518 = vmatmul.mubr.bf16.gmra.mrb[0].mxu0 %v2234
        %v3519 = vpop.f32.mrb[0].mxu0
        %v3520 = vadd.f32 %v3375, %v3519
        %v3521 = vpop.f32.mrb[0].mxu0
        %v3522 = vpop.f32.mrb[0].mxu0
        %v3523 = vadd.f32 %v3378, %v3522
        %v3524 = vpop.f32.mrb[0].mxu0
        %3525 = vmatprep.mubr.bf16.mxu0 %v2307
        %3526 = vmatmul.mubr.bf16.gmra.mrb[0].mxu0 %v2242
        %v3527 = vpop.f32.mrb[0].mxu0
        %v3528 = vadd.f32 %v3383, %v3527
        %v3529 = vpop.f32.mrb[0].mxu0
        %v3530 = vpop.f32.mrb[0].mxu0
        %v3531 = vadd.f32 %v3386, %v3530
        %v3532 = vpop.f32.mrb[0].mxu0
        %3533 = vmatprep.mubr.bf16.mxu0 %v2345
        %3534 = vmatmul.mubr.bf16.gmra.mrb[0].mxu0 %v2328
        %v3535 = vpop.f32.mrb[0].mxu0
        %v3536 = vadd.f32 %v3391, %v3535
        %v3537 = vpop.f32.mrb[0].mxu0
        %v3538 = vpop.f32.mrb[0].mxu0
        %v3539 = vadd.f32 %v3394, %v3538
        %v3540 = vpop.f32.mrb[0].mxu0
        %3541 = vmatprep.mubr.bf16.mxu0 %v2347
        %3542 = vmatmul.mubr.bf16.gmra.mrb[0].mxu0 %v2336
        %v3543 = vpop.f32.mrb[0].mxu0
        %v3544 = vadd.f32 %v3399, %v3543
        %v3545 = vpop.f32.mrb[0].mxu0
        %v3546 = vpop.f32.mrb[0].mxu0
        %v3547 = vadd.f32 %v3402, %v3546
        %v3548 = vpop.f32.mrb[0].mxu0
        %3549 = vdwg.mxu0
        %3550 = vmatprep.subr.bf16.mxu0 0
        %3551 = vmatpush1.bf16.msra.mxu0 %v3019
        %3552 = vmatprep.subr.bf16.mxu0 0
        %3553 = vmatpush1.bf16.msra.mxu0 %v3020
        %3554 = vmatprep.subr.bf16.mxu0 0
        %3555 = vmatpush1.bf16.msra.mxu0 %v3021
        %3556 = vmatprep.subr.bf16.mxu0 0
        %3557 = vmatpush1.bf16.msra.mxu0 %v3022
        %3558 = vmatprep.subr.bf16.mxu0 0
        %3559 = vmatpush1.bf16.msra.mxu0 %v3023
        %3560 = vmatprep.subr.bf16.mxu0 0
        %3561 = vmatpush1.bf16.msra.mxu0 %v3024
        %3562 = vmatprep.subr.bf16.mxu0 0
        %3563 = vmatpush1.bf16.msra.mxu0 %v3025
        %3564 = vmatprep.subr.bf16.mxu0 0
        %3565 = vmatpush1.bf16.msra.mxu0 %v3026
        %3566 = vmatprep.subr.bf16.mxu0 0
        %3567 = vmatpush1.bf16.msra.mxu0 %v3027
        %3568 = vmatprep.subr.bf16.mxu0 0
        %3569 = vmatpush1.bf16.msra.mxu0 %v3028
        %3570 = vmatprep.subr.bf16.mxu0 0
        %3571 = vmatpush1.bf16.msra.mxu0 %v3029
        %3572 = vmatprep.subr.bf16.mxu0 0
        %3573 = vmatpush1.bf16.msra.mxu0 %v3030
        %3574 = vmatprep.subr.bf16.mxu0 0
        %3575 = vmatpush1.bf16.msra.mxu0 %v3031
        %3576 = vmatprep.subr.bf16.mxu0 0
        %3577 = vmatpush1.bf16.msra.mxu0 %v3032
        %3578 = vmatprep.subr.bf16.mxu0 0
        %3579 = vmatpush1.bf16.msra.mxu0 %v3033
        %3580 = vmatprep.subr.bf16.mxu0 0
        %3581 = vmatpush1.bf16.msra.mxu0 %v3034
        %3582 = vmatprep.mubr.bf16.mxu0 %v2362
        %3583 = vmatmul.mubr.bf16.gmra.mrb[0].mxu0 %v2101
        %v3584 = vpop.f32.mrb[0].mxu0
        %v3585 = vadd.f32 %v3440, %v3584
        %v3586 = vpop.f32.mrb[0].mxu0
        %v3587 = vpop.f32.mrb[0].mxu0
        %v3588 = vadd.f32 %v3443, %v3587
        %v3589 = vpop.f32.mrb[0].mxu0
        %3590 = vmatprep.mubr.bf16.mxu0 %v2370
        %3591 = vmatmul.mubr.bf16.gmra.mrb[0].mxu0 %v2102
        %v3592 = vpop.f32.mrb[0].mxu0
        %v3593 = vadd.f32 %v3448, %v3592
        %v3594 = vpop.f32.mrb[0].mxu0
        %v3595 = vpop.f32.mrb[0].mxu0
        %v3596 = vadd.f32 %v3451, %v3595
        %v3597 = vpop.f32.mrb[0].mxu0
        %3598 = vmatprep.mubr.bf16.mxu0 %v2378
        %3599 = vmatmul.mubr.bf16.gmra.mrb[0].mxu0 %v2103
        %v3600 = vpop.f32.mrb[0].mxu0
        %v3601 = vadd.f32 %v3456, %v3600
        %v3602 = vpop.f32.mrb[0].mxu0
        %v3603 = vpop.f32.mrb[0].mxu0
        %v3604 = vadd.f32 %v3459, %v3603
        %v3605 = vpop.f32.mrb[0].mxu0
        %3606 = vmatprep.mubr.bf16.mxu0 %v2386
        %3607 = vmatmul.mubr.bf16.gmra.mrb[0].mxu0 %v2104
        %v3608 = vpop.f32.mrb[0].mxu0
        %v3609 = vadd.f32 %v3464, %v3608
        %v3610 = vpop.f32.mrb[0].mxu0
        %v3611 = vpop.f32.mrb[0].mxu0
        %v3612 = vadd.f32 %v3467, %v3611
        %v3613 = vpop.f32.mrb[0].mxu0
        %3614 = vmatprep.mubr.bf16.mxu0 %v2394
        %3615 = vmatmul.mubr.bf16.gmra.mrb[0].mxu0 %v2105
        %v3616 = vpop.f32.mrb[0].mxu0
        %v3617 = vadd.f32 %v3472, %v3616
        %v3618 = vpop.f32.mrb[0].mxu0
        %v3619 = vpop.f32.mrb[0].mxu0
        %v3620 = vadd.f32 %v3475, %v3619
        %v3621 = vpop.f32.mrb[0].mxu0
        %3622 = vmatprep.mubr.bf16.mxu0 %v2402
        %3623 = vmatmul.mubr.bf16.gmra.mrb[0].mxu0 %v2106
        %v3624 = vpop.f32.mrb[0].mxu0
        %v3625 = vadd.f32 %v3480, %v3624
        %v3626 = vpop.f32.mrb[0].mxu0
        %v3627 = vpop.f32.mrb[0].mxu0
        %v3628 = vadd.f32 %v3483, %v3627
        %v3629 = vpop.f32.mrb[0].mxu0
        %3630 = vmatprep.mubr.bf16.mxu0 %v2410
        %3631 = vmatmul.mubr.bf16.gmra.mrb[0].mxu0 %v2107
        %v3632 = vpop.f32.mrb[0].mxu0
        %v3633 = vadd.f32 %v3488, %v3632
        %v3634 = vpop.f32.mrb[0].mxu0
        %v3635 = vpop.f32.mrb[0].mxu0
        %v3636 = vadd.f32 %v3491, %v3635
        %v3637 = vpop.f32.mrb[0].mxu0
        %3638 = vmatprep.mubr.bf16.mxu0 %v2418
        %3639 = vmatmul.mubr.bf16.gmra.mrb[0].mxu0 %v2108
        %v3640 = vpop.f32.mrb[0].mxu0
        %v3641 = vadd.f32 %v3496, %v3640
        %v3642 = vpop.f32.mrb[0].mxu0
        %v3643 = vpop.f32.mrb[0].mxu0
        %v3644 = vadd.f32 %v3499, %v3643
        %v3645 = vpop.f32.mrb[0].mxu0
        %3646 = vmatprep.mubr.bf16.mxu0 %v2426
        %3647 = vmatmul.mubr.bf16.gmra.mrb[0].mxu0 %v2109
        %v3648 = vpop.f32.mrb[0].mxu0
        %v3649 = vadd.f32 %v3504, %v3648
        %v3650 = vpop.f32.mrb[0].mxu0
        %v3651 = vpop.f32.mrb[0].mxu0
        %v3652 = vadd.f32 %v3507, %v3651
        %v3653 = vpop.f32.mrb[0].mxu0
        %3654 = vmatprep.mubr.bf16.mxu0 %v2434
        %3655 = vmatmul.mubr.bf16.gmra.mrb[0].mxu0 %v2110
        %v3656 = vpop.f32.mrb[0].mxu0
        %v3657 = vadd.f32 %v3512, %v3656
        %v3658 = vpop.f32.mrb[0].mxu0
        %v3659 = vpop.f32.mrb[0].mxu0
        %v3660 = vadd.f32 %v3515, %v3659
        %v3661 = vpop.f32.mrb[0].mxu0
        %3662 = vmatprep.mubr.bf16.mxu0 %v2442
        %3663 = vmatmul.mubr.bf16.gmra.mrb[0].mxu0 %v2111
        %v3664 = vpop.f32.mrb[0].mxu0
        %v3665 = vadd.f32 %v3520, %v3664
        %v3666 = vpop.f32.mrb[0].mxu0
        %v3667 = vpop.f32.mrb[0].mxu0
        %v3668 = vadd.f32 %v3523, %v3667
        %v3669 = vpop.f32.mrb[0].mxu0
        %3670 = vmatprep.mubr.bf16.mxu0 %v2450
        %3671 = vmatmul.mubr.bf16.gmra.mrb[0].mxu0 %v2112
        %v3672 = vpop.f32.mrb[0].mxu0
        %v3673 = vadd.f32 %v3528, %v3672
        %v3674 = vpop.f32.mrb[0].mxu0
        %v3675 = vpop.f32.mrb[0].mxu0
        %v3676 = vadd.f32 %v3531, %v3675
        %v3677 = vpop.f32.mrb[0].mxu0
        %3678 = vmatprep.mubr.bf16.mxu0 %v2458
        %3679 = vmatmul.mubr.bf16.gmra.mrb[0].mxu0 %v2115
        %v3680 = vpop.f32.mrb[0].mxu0
        %v3681 = vadd.f32 %v3536, %v3680
        %v3682 = vpop.f32.mrb[0].mxu0
        %v3683 = vpop.f32.mrb[0].mxu0
        %v3684 = vadd.f32 %v3539, %v3683
        %v3685 = vpop.f32.mrb[0].mxu0
        %3686 = vmatprep.mubr.bf16.mxu0 %v2466
        %3687 = vmatmul.mubr.bf16.gmra.mrb[0].mxu0 %v2118
        %v3688 = vpop.f32.mrb[0].mxu0
        %v3689 = vadd.f32 %v3544, %v3688
        %v3690 = vpop.f32.mrb[0].mxu0
        %v3691 = vpop.f32.mrb[0].mxu0
        %v3692 = vadd.f32 %v3547, %v3691
        %v3693 = vpop.f32.mrb[0].mxu0
        %3694 = vdwg.mxu0
        %3695 = vmatprep.subr.bf16.mxu0 0
        %3696 = vmatpush1.bf16.msra.mxu0 %v3035
        %3697 = vmatprep.subr.bf16.mxu0 0
        %3698 = vmatpush1.bf16.msra.mxu0 %v3036
        %3699 = vmatprep.subr.bf16.mxu0 0
        %3700 = vmatpush1.bf16.msra.mxu0 %v3037
        %3701 = vmatprep.subr.bf16.mxu0 0
        %3702 = vmatpush1.bf16.msra.mxu0 %v3038
        %3703 = vmatprep.subr.bf16.mxu0 0
        %3704 = vmatpush1.bf16.msra.mxu0 %v3039
        %3705 = vmatprep.subr.bf16.mxu0 0
        %3706 = vmatpush1.bf16.msra.mxu0 %v3040
        %3707 = vmatprep.subr.bf16.mxu0 0
        %3708 = vmatpush1.bf16.msra.mxu0 %v3041
        %3709 = vmatprep.subr.bf16.mxu0 0
        %3710 = vmatpush1.bf16.msra.mxu0 %v3042
        %3711 = vmatprep.subr.bf16.mxu0 0
        %3712 = vmatpush1.bf16.msra.mxu0 0
        %3713 = vmatprep.subr.bf16.mxu0 0
        %3714 = vmatpush1.bf16.msra.mxu0 0
        %3715 = vmatprep.subr.bf16.mxu0 0
        %3716 = vmatpush1.bf16.msra.mxu0 0
        %3717 = vmatprep.subr.bf16.mxu0 0
        %3718 = vmatpush1.bf16.msra.mxu0 0
        %3719 = vmatprep.subr.bf16.mxu0 0
        %3720 = vmatpush1.bf16.msra.mxu0 0
        %3721 = vmatprep.subr.bf16.mxu0 0
        %3722 = vmatpush1.bf16.msra.mxu0 0
        %3723 = vmatprep.subr.bf16.mxu0 0
        %3724 = vmatpush1.bf16.msra.mxu0 0
        %3725 = vmatprep.subr.bf16.mxu0 0
        %3726 = vmatpush1.bf16.msra.mxu0 0
        %3727 = vmatprep.mubr.bf16.mxu0 0
        %3728 = vmatmul.mubr.bf16.gmra.mrb[0].mxu0 %v2498
        %v3729 = vpop.f32.mrb[0].mxu0
        %v3730 = vadd.f32 %v3585, %v3729
        %v3731 = vpop.f32.mrb[0].mxu0
        %v3732 = vpop.f32.mrb[0].mxu0
        %v3733 = vadd.f32 %v3588, %v3732
        %v3734 = vpop.f32.mrb[0].mxu0
        %3735 = vmatprep.mubr.bf16.mxu0 0
        %3736 = vmatmul.mubr.bf16.gmra.mrb[0].mxu0 %v2500
        %v3737 = vpop.f32.mrb[0].mxu0
        %v3738 = vadd.f32 %v3593, %v3737
        %v3739 = vpop.f32.mrb[0].mxu0
        %v3740 = vpop.f32.mrb[0].mxu0
        %v3741 = vadd.f32 %v3596, %v3740
        %v3742 = vpop.f32.mrb[0].mxu0
        %3743 = vmatprep.mubr.bf16.mxu0 0
        %3744 = vmatmul.mubr.bf16.gmra.mrb[0].mxu0 %v2502
        %v3745 = vpop.f32.mrb[0].mxu0
        %v3746 = vadd.f32 %v3601, %v3745
        %v3747 = vpop.f32.mrb[0].mxu0
        %v3748 = vpop.f32.mrb[0].mxu0
        %v3749 = vadd.f32 %v3604, %v3748
        %v3750 = vpop.f32.mrb[0].mxu0
        %3751 = vmatprep.mubr.bf16.mxu0 0
        %3752 = vmatmul.mubr.bf16.gmra.mrb[0].mxu0 %v2504
        %v3753 = vpop.f32.mrb[0].mxu0
        %v3754 = vadd.f32 %v3609, %v3753
        %v3755 = vpop.f32.mrb[0].mxu0
        %v3756 = vpop.f32.mrb[0].mxu0
        %v3757 = vadd.f32 %v3612, %v3756
        %v3758 = vpop.f32.mrb[0].mxu0
        %3759 = vmatprep.mubr.bf16.mxu0 0
        %3760 = vmatmul.mubr.bf16.gmra.mrb[0].mxu0 %v2506
        %v3761 = vpop.f32.mrb[0].mxu0
        %v3762 = vadd.f32 %v3617, %v3761
        %v3763 = vpop.f32.mrb[0].mxu0
        %v3764 = vpop.f32.mrb[0].mxu0
        %v3765 = vadd.f32 %v3620, %v3764
        %v3766 = vpop.f32.mrb[0].mxu0
        %3767 = vmatprep.mubr.bf16.mxu0 0
        %3768 = vmatmul.mubr.bf16.gmra.mrb[0].mxu0 %v2508
        %v3769 = vpop.f32.mrb[0].mxu0
        %v3770 = vadd.f32 %v3625, %v3769
        %v3771 = vpop.f32.mrb[0].mxu0
        %v3772 = vpop.f32.mrb[0].mxu0
        %v3773 = vadd.f32 %v3628, %v3772
        %v3774 = vpop.f32.mrb[0].mxu0
        %3775 = vmatprep.mubr.bf16.mxu0 0
        %3776 = vmatmul.mubr.bf16.gmra.mrb[0].mxu0 %v2510
        %v3777 = vpop.f32.mrb[0].mxu0
        %v3778 = vadd.f32 %v3633, %v3777
        %v3779 = vpop.f32.mrb[0].mxu0
        %v3780 = vpop.f32.mrb[0].mxu0
        %v3781 = vadd.f32 %v3636, %v3780
        %v3782 = vpop.f32.mrb[0].mxu0
        %3783 = vmatprep.mubr.bf16.mxu0 0
        %3784 = vmatmul.mubr.bf16.gmra.mrb[0].mxu0 %v2512
        %v3785 = vpop.f32.mrb[0].mxu0
        %v3786 = vadd.f32 %v3641, %v3785
        %v3787 = vpop.f32.mrb[0].mxu0
        %v3788 = vpop.f32.mrb[0].mxu0
        %v3789 = vadd.f32 %v3644, %v3788
        %v3790 = vpop.f32.mrb[0].mxu0
        %3791 = vmatprep.mubr.bf16.mxu0 0
        %3792 = vmatmul.mubr.bf16.gmra.mrb[0].mxu0 %v2514
        %v3793 = vpop.f32.mrb[0].mxu0
        %v3794 = vadd.f32 %v3649, %v3793
        %v3795 = vpop.f32.mrb[0].mxu0
        %v3796 = vpop.f32.mrb[0].mxu0
        %v3797 = vadd.f32 %v3652, %v3796
        %v3798 = vpop.f32.mrb[0].mxu0
        %3799 = vmatprep.mubr.bf16.mxu0 0
        %3800 = vmatmul.mubr.bf16.gmra.mrb[0].mxu0 %v2516
        %v3801 = vpop.f32.mrb[0].mxu0
        %v3802 = vadd.f32 %v3657, %v3801
        %v3803 = vpop.f32.mrb[0].mxu0
        %v3804 = vpop.f32.mrb[0].mxu0
        %v3805 = vadd.f32 %v3660, %v3804
        %v3806 = vpop.f32.mrb[0].mxu0
        %3807 = vmatprep.mubr.bf16.mxu0 0
        %3808 = vmatmul.mubr.bf16.gmra.mrb[0].mxu0 %v2518
        %v3809 = vpop.f32.mrb[0].mxu0
        %v3810 = vadd.f32 %v3665, %v3809
        %v3811 = vpop.f32.mrb[0].mxu0
        %v3812 = vpop.f32.mrb[0].mxu0
        %v3813 = vadd.f32 %v3668, %v3812
        %v3814 = vpop.f32.mrb[0].mxu0
        %3815 = vmatprep.mubr.bf16.mxu0 0
        %3816 = vmatmul.mubr.bf16.gmra.mrb[0].mxu0 %v2520
        %v3817 = vpop.f32.mrb[0].mxu0
        %v3818 = vadd.f32 %v3673, %v3817
        %v3819 = vpop.f32.mrb[0].mxu0
        %v3820 = vpop.f32.mrb[0].mxu0
        %v3821 = vadd.f32 %v3676, %v3820
        %v3822 = vpop.f32.mrb[0].mxu0
        %3823 = vmatprep.mubr.bf16.mxu0 0
        %3824 = vmatmul.mubr.bf16.gmra.mrb[0].mxu0 %v2522
        %v3825 = vpop.f32.mrb[0].mxu0
        %v3826 = vadd.f32 %v3681, %v3825
        %v3827 = vpop.f32.mrb[0].mxu0
        %v3828 = vpop.f32.mrb[0].mxu0
        %v3829 = vadd.f32 %v3684, %v3828
        %v3830 = vpop.f32.mrb[0].mxu0
        %3831 = vmatprep.mubr.bf16.mxu0 0
        %3832 = vmatmul.mubr.bf16.gmra.mrb[0].mxu0 %v2524
        %v3833 = vpop.f32.mrb[0].mxu0
        %v3834 = vadd.f32 %v3689, %v3833
        %v3835 = vpop.f32.mrb[0].mxu0
        %v3836 = vpop.f32.mrb[0].mxu0
        %v3837 = vadd.f32 %v3692, %v3836
        %v3838 = vpop.f32.mrb[0].mxu0
        %3839 = vdwg.mxu0
        %3840 = vst [vmem:[#allocation4] sm:$0xff] %v3730
        %3841 = vst [vmem:[#allocation4 + $0x8] sm:$0xff] %v3733
        %3842 = vst [vmem:[#allocation4 + $0x10] sm:$0xff] %v3738
        %3843 = vst [vmem:[#allocation4 + $0x18] sm:$0xff] %v3741
        %3844 = vst [vmem:[#allocation4 + $0x20] sm:$0xff] %v3746
        %3845 = vst [vmem:[#allocation4 + $0x28] sm:$0xff] %v3749
        %3846 = vst [vmem:[#allocation4 + $0x30] sm:$0xff] %v3754
        %3847 = vst [vmem:[#allocation4 + $0x38] sm:$0xff] %v3757
        %3848 = vst [vmem:[#allocation4 + $0x40] sm:$0xff] %v3762
        %3849 = vst [vmem:[#allocation4 + $0x48] sm:$0xff] %v3765
        %3850 = vst [vmem:[#allocation4 + $0x50] sm:$0xff] %v3770
        %3851 = vst [vmem:[#allocation4 + $0x58] sm:$0xff] %v3773
        %3852 = vst [vmem:[#allocation4 + $0x60] sm:$0xff] %v3778
        %3853 = vst [vmem:[#allocation4 + $0x68] sm:$0xff] %v3781
        %3854 = vst [vmem:[#allocation4 + $0x70] sm:$0xff] %v3786
        %3855 = vst [vmem:[#allocation4 + $0x78] sm:$0xff] %v3789
        %3856 = vst [vmem:[#allocation4 + $0x80] sm:$0xff] %v3794
        %3857 = vst [vmem:[#allocation4 + $0x88] sm:$0xff] %v3797
        %3858 = vst [vmem:[#allocation4 + $0x90] sm:$0xff] %v3802
        %3859 = vst [vmem:[#allocation4 + $0x98] sm:$0xff] %v3805
        %3860 = vst [vmem:[#allocation4 + $0xa0] sm:$0xff] %v3810
        %3861 = vst [vmem:[#allocation4 + $0xa8] sm:$0xff] %v3813
        %3862 = vst [vmem:[#allocation4 + $0xb0] sm:$0xff] %v3818
        %3863 = vst [vmem:[#allocation4 + $0xb8] sm:$0xff] %v3821
        %3864 = vst [vmem:[#allocation4 + $0xc0] sm:$0xff] %v3826
        %3865 = vst [vmem:[#allocation4 + $0xc8] sm:$0xff] %v3829
        %3866 = vst [vmem:[#allocation4 + $0xd0] sm:$0xff] %v3834
        %3867 = vst [vmem:[#allocation4 + $0xd8] sm:$0xff] %v3837
        %v3868 = vld [vmem:[%s4] sm:$0x1]
        %v3870 = vlaneseq
        %v3871 = vshrl.u32 %v3870, 7
        %v3872 = vsub.s32 0, %v3871
        %v3873 = vrot.slane %v3868, %v3872
        %v3875 = vld [vmem:[#allocation4] ss:$2 sm:$0x7f]
        %s3876 = scalar_lea.vmem [#allocation4], 1
        %v3877 = vld [vmem:[%s3876] ss:$2 sm:$0x7f]
        %v3878 = vmax.f32 %v3875, %v3877
        %s3879 = scalar_lea.vmem [#allocation4], 16
        %v3880 = vld [vmem:[%s3879] ss:$2 sm:$0x7f]
        %s3881 = scalar_lea.vmem [#allocation4], 17
        %v3882 = vld [vmem:[%s3881] ss:$2 sm:$0x7f]
        %v3883 = vmax.f32 %v3880, %v3882
        %v3884 = vmax.f32 %v3878, %v3883
        %v3885 = vadd.f32 %v3884, %v3873
        %v3886 = vmax.f32 %v3885, 0.0
        %v3887 = vpack.c.bf16 %v3886, %v3886
        %v3889 = vshrl.u32 %v3887, 16
        %v3891 = vrot.slane %v3889, 7
        %v3892 = vshll.u32 %v3887, 16
        %v3894 = vor.u32 %v3891, %v3892
        %v3897 = vrot.slane %v3887, 7
        %v3898 = vsel %vm1557, %v3887, %v3894
        %v3901 = vsel %vm981, %v3898, %v3897
        %v3903 = vunpack.c.l.b16 %v3901
        %v3904 = vunpack.c.h.b16 %v3901
        %v3905 = vpack.c.b16 %v3903, %v3903
        %v3906 = vpack.c.b16 %v3904, %v3904
        %vm3907 = vsmask.f32 4368
        %vm3908 = vmor %vm1556, %vm3907
        %v3910 = vshrl.u32 %v3905, 16
        %v3912 = vrot.slane %v3910, 7
        %v3913 = vshll.u32 %v3905, 16
        %v3915 = vor.u32 %v3912, %v3913
        %v3916 = vrot.slane %v3912, 4
        %v3918 = vshll.u32 %v3906, 16
        %v3920 = vsel %vm3908, %v3916, %v3918
        %vm3923 = vcmask 1043456
        %vm3924 = vsmask.f32 7938
        %vm3925 = vmand %vm3923, %vm3924
        %v3926 = vld [vmem:[#allocation5 + $0x4] sm:$0xf]
        %v3927 = vsel %vm3925, %v3915, %v3926
        %3928 = vst [vmem:[#allocation5 + $0x4] sm:$0xf] %v3927
        %3929 = vst [vmem:[#allocation5 + $0x8] sm:$0x1] %v3920
        %3932 = vst [vmem:[#allocation5] sm:$0xf] %v3905
        %v3933 = vld [vmem:[#allocation5 + $0x4] sm:$0x1]
        %v3934 = vsel %vm1557, %v3906, %v3933
        %3935 = vst [vmem:[#allocation5 + $0x4] sm:$0x1] %v3934
        %s3936 = scalar_lea.vmem [#allocation4], 32
        %v3937 = vld [vmem:[%s3936] ss:$2 sm:$0x7f]
        %s3938 = scalar_lea.vmem [#allocation4], 33
        %v3939 = vld [vmem:[%s3938] ss:$2 sm:$0x7f]
        %v3940 = vmax.f32 %v3937, %v3939
        %s3941 = scalar_lea.vmem [#allocation4], 48
        %v3942 = vld [vmem:[%s3941] ss:$2 sm:$0x7f]
        %s3943 = scalar_lea.vmem [#allocation4], 49
        %v3944 = vld [vmem:[%s3943] ss:$2 sm:$0x7f]
        %v3945 = vmax.f32 %v3942, %v3944
        %v3946 = vmax.f32 %v3940, %v3945
        %v3947 = vadd.f32 %v3946, %v3873
        %v3948 = vmax.f32 %v3947, 0.0
        %v3949 = vpack.c.bf16 %v3948, %v3948
        %v3951 = vshrl.u32 %v3949, 16
        %v3953 = vrot.slane %v3951, 7
        %v3954 = vshll.u32 %v3949, 16
        %v3956 = vor.u32 %v3953, %v3954
        %v3959 = vrot.slane %v3949, 7
        %v3960 = vsel %vm1557, %v3949, %v3956
        %v3963 = vsel %vm981, %v3960, %v3959
        %v3965 = vunpack.c.l.b16 %v3963
        %v3966 = vunpack.c.h.b16 %v3963
        %v3967 = vpack.c.b16 %v3965, %v3965
        %v3968 = vpack.c.b16 %v3966, %v3966
        %vm3969 = vcmask 1044484
        %vm3970 = vmor %vm1555, %vm3969
        %v3971 = vrot.slane %v3967, 7
        %v3972 = vrot.slane %v3971, 4
        %v3973 = vrot.slane %v3968, 7
        %v3974 = vsel %vm3970, %v3972, %v3973
        %3977 = vst [vmem:[#allocation5 + $0x8] sm:$0xe] %v3971
        %vm3978 = vcmask 1041408
        %vm3979 = vsmask.f32 1280
        %vm3980 = vmand %vm3978, %vm3979
        %v3981 = vld [vmem:[#allocation5 + $0xc] sm:$0x3]
        %v3982 = vsel %vm3980, %v3974, %v3981
        %3983 = vst [vmem:[#allocation5 + $0xc] sm:$0x3] %v3982
        %s3984 = scalar_lea.vmem [#allocation4], 64
        %v3985 = vld [vmem:[%s3984] ss:$2 sm:$0x7f]
        %s3986 = scalar_lea.vmem [#allocation4], 65
        %v3987 = vld [vmem:[%s3986] ss:$2 sm:$0x7f]
        %v3988 = vmax.f32 %v3985, %v3987
        %s3989 = scalar_lea.vmem [#allocation4], 80
        %v3990 = vld [vmem:[%s3989] ss:$2 sm:$0x7f]
        %s3991 = scalar_lea.vmem [#allocation4], 81
        %v3992 = vld [vmem:[%s3991] ss:$2 sm:$0x7f]
        %v3993 = vmax.f32 %v3990, %v3992
        %v3994 = vmax.f32 %v3988, %v3993
        %v3995 = vadd.f32 %v3994, %v3873
        %v3996 = vmax.f32 %v3995, 0.0
        %v3997 = vpack.c.bf16 %v3996, %v3996
        %v3999 = vshrl.u32 %v3997, 16
        %v4001 = vrot.slane %v3999, 7
        %v4002 = vshll.u32 %v3997, 16
        %v4004 = vor.u32 %v4001, %v4002
        %v4007 = vrot.slane %v3997, 7
        %v4008 = vsel %vm1557, %v3997, %v4004
        %v4011 = vsel %vm981, %v4008, %v4007
        %v4013 = vunpack.c.l.b16 %v4011
        %v4014 = vunpack.c.h.b16 %v4011
        %v4015 = vpack.c.b16 %v4013, %v4013
        %v4016 = vpack.c.b16 %v4014, %v4014
        %vm4017 = vsmask.f32 5392
        %vm4018 = vmor %vm3979, %vm4017
        %v4020 = vshrl.u32 %v4015, 16
        %v4022 = vrot.slane %v4020, 6
        %v4023 = vshll.u32 %v4015, 16
        %v4025 = vrot.slane %v4023, 7
        %v4026 = vor.u32 %v4022, %v4025
        %v4027 = vrot.slane %v4026, 4
        %v4029 = vshll.u32 %v4016, 16
        %v4031 = vrot.slane %v4029, 7
        %v4032 = vsel %vm4018, %v4027, %v4031
        %vm4035 = vcmask 1043457
        %vm4036 = vsmask.f32 7942
        %vm4037 = vmand %vm4035, %vm4036
        %v4038 = vld [vmem:[#allocation5 + $0xc] sm:$0xe]
        %v4039 = vsel %vm4037, %v4026, %v4038
        %4040 = vst [vmem:[#allocation5 + $0xc] sm:$0xe] %v4039
        %4041 = vst [vmem:[#allocation5 + $0x10] sm:$0x3] %v4032
        %s4042 = scalar_lea.vmem [#allocation4], 96
        %v4043 = vld [vmem:[%s4042] ss:$2 sm:$0x7f]
        %s4044 = scalar_lea.vmem [#allocation4], 97
        %v4045 = vld [vmem:[%s4044] ss:$2 sm:$0x7f]
        %v4046 = vmax.f32 %v4043, %v4045
        %s4047 = scalar_lea.vmem [#allocation4], 112
        %v4048 = vld [vmem:[%s4047] ss:$2 sm:$0x7f]
        %s4049 = scalar_lea.vmem [#allocation4], 113
        %v4050 = vld [vmem:[%s4049] ss:$2 sm:$0x7f]
        %v4051 = vmax.f32 %v4048, %v4050
        %v4052 = vmax.f32 %v4046, %v4051
        %v4053 = vadd.f32 %v4052, %v3873
        %v4054 = vmax.f32 %v4053, 0.0
        %v4055 = vpack.c.bf16 %v4054, %v4054
        %v4057 = vshrl.u32 %v4055, 16
        %v4059 = vrot.slane %v4057, 7
        %v4060 = vshll.u32 %v4055, 16
        %v4062 = vor.u32 %v4059, %v4060
        %v4065 = vrot.slane %v4055, 7
        %v4066 = vsel %vm1557, %v4055, %v4062
        %v4069 = vsel %vm981, %v4066, %v4065
        %v4071 = vunpack.c.l.b16 %v4069
        %v4072 = vunpack.c.h.b16 %v4069
        %v4073 = vpack.c.b16 %v4071, %v4071
        %v4074 = vpack.c.b16 %v4072, %v4072
        %vm4075 = vcmask 1045508
        %vm4076 = vmor %vm3978, %vm4075
        %v4077 = vrot.slane %v4073, 6
        %v4078 = vrot.slane %v4077, 4
        %v4079 = vrot.slane %v4074, 6
        %v4080 = vsel %vm4076, %v4078, %v4079
        %4083 = vst [vmem:[#allocation5 + $0x10] sm:$0xc] %v4077
        %vm4084 = vcmask 1042432
        %vm4085 = vsmask.f32 2304
        %vm4086 = vmand %vm4084, %vm4085
        %v4087 = vld [vmem:[#allocation5 + $0x14] sm:$0x7]
        %v4088 = vsel %vm4086, %v4080, %v4087
        %4089 = vst [vmem:[#allocation5 + $0x14] sm:$0x7] %v4088
        %s4090 = scalar_lea.vmem [#allocation4], 128
        %v4091 = vld [vmem:[%s4090] ss:$2 sm:$0x7f]
        %s4092 = scalar_lea.vmem [#allocation4], 129
        %v4093 = vld [vmem:[%s4092] ss:$2 sm:$0x7f]
        %v4094 = vmax.f32 %v4091, %v4093
        %s4095 = scalar_lea.vmem [#allocation4], 144
        %v4096 = vld [vmem:[%s4095] ss:$2 sm:$0x7f]
        %s4097 = scalar_lea.vmem [#allocation4], 145
        %v4098 = vld [vmem:[%s4097] ss:$2 sm:$0x7f]
        %v4099 = vmax.f32 %v4096, %v4098
        %v4100 = vmax.f32 %v4094, %v4099
        %v4101 = vadd.f32 %v4100, %v3873
        %v4102 = vmax.f32 %v4101, 0.0
        %v4103 = vpack.c.bf16 %v4102, %v4102
        %v4105 = vshrl.u32 %v4103, 16
        %v4107 = vrot.slane %v4105, 7
        %v4108 = vshll.u32 %v4103, 16
        %v4110 = vor.u32 %v4107, %v4108
        %v4113 = vrot.slane %v4103, 7
        %v4114 = vsel %vm1557, %v4103, %v4110
        %v4117 = vsel %vm981, %v4114, %v4113
        %v4119 = vunpack.c.l.b16 %v4117
        %v4120 = vunpack.c.h.b16 %v4117
        %v4121 = vpack.c.b16 %v4119, %v4119
        %v4122 = vpack.c.b16 %v4120, %v4120
        %vm4123 = vsmask.f32 6416
        %vm4124 = vmor %vm4085, %vm4123
        %v4126 = vshrl.u32 %v4121, 16
        %v4128 = vrot.slane %v4126, 5
        %v4129 = vshll.u32 %v4121, 16
        %v4131 = vrot.slane %v4129, 6
        %v4132 = vor.u32 %v4128, %v4131
        %v4133 = vrot.slane %v4132, 4
        %v4135 = vshll.u32 %v4122, 16
        %v4137 = vrot.slane %v4135, 6
        %v4138 = vsel %vm4124, %v4133, %v4137
        %vm4141 = vcmask 1043458
        %vm4142 = vsmask.f32 7946
        %vm4143 = vmand %vm4141, %vm4142
        %v4144 = vld [vmem:[#allocation5 + $0x14] sm:$0xc]
        %v4145 = vsel %vm4143, %v4132, %v4144
        %4146 = vst [vmem:[#allocation5 + $0x14] sm:$0xc] %v4145
        %4147 = vst [vmem:[#allocation5 + $0x18] sm:$0x7] %v4138
        %s4148 = scalar_lea.vmem [#allocation4], 160
        %v4149 = vld [vmem:[%s4148] ss:$2 sm:$0x7f]
        %s4150 = scalar_lea.vmem [#allocation4], 161
        %v4151 = vld [vmem:[%s4150] ss:$2 sm:$0x7f]
        %v4152 = vmax.f32 %v4149, %v4151
        %s4153 = scalar_lea.vmem [#allocation4], 176
        %v4154 = vld [vmem:[%s4153] ss:$2 sm:$0x7f]
        %s4155 = scalar_lea.vmem [#allocation4], 177
        %v4156 = vld [vmem:[%s4155] ss:$2 sm:$0x7f]
        %v4157 = vmax.f32 %v4154, %v4156
        %v4158 = vmax.f32 %v4152, %v4157
        %v4159 = vadd.f32 %v4158, %v3873
        %v4160 = vmax.f32 %v4159, 0.0
        %v4161 = vpack.c.bf16 %v4160, %v4160
        %v4163 = vshrl.u32 %v4161, 16
        %v4165 = vrot.slane %v4163, 7
        %v4166 = vshll.u32 %v4161, 16
        %v4168 = vor.u32 %v4165, %v4166
        %v4171 = vrot.slane %v4161, 7
        %v4172 = vsel %vm1557, %v4161, %v4168
        %v4175 = vsel %vm981, %v4172, %v4171
        %v4177 = vunpack.c.l.b16 %v4175
        %v4178 = vunpack.c.h.b16 %v4175
        %v4179 = vpack.c.b16 %v4177, %v4177
        %v4180 = vpack.c.b16 %v4178, %v4178
        %vm4181 = vcmask 1046532
        %vm4182 = vmor %vm4084, %vm4181
        %v4183 = vrot.slane %v4179, 5
        %v4184 = vrot.slane %v4183, 4
        %v4185 = vrot.slane %v4180, 5
        %v4186 = vsel %vm4182, %v4184, %v4185
        %4189 = vst [vmem:[#allocation5 + $0x18] sm:$0x8] %v4183
        %vm4190 = vsmask.f32 3328
        %vm4191 = vmand %vm3923, %vm4190
        %v4192 = vld [vmem:[#allocation5 + $0x1c] sm:$0xf]
        %v4193 = vsel %vm4191, %v4186, %v4192
        %4194 = vst [vmem:[#allocation5 + $0x1c] sm:$0xf] %v4193
        %s4195 = scalar_lea.vmem [#allocation4], 192
        %v4196 = vld [vmem:[%s4195] ss:$2 sm:$0x7f]
        %s4197 = scalar_lea.vmem [#allocation4], 193
        %v4198 = vld [vmem:[%s4197] ss:$2 sm:$0x7f]
        %v4199 = vmax.f32 %v4196, %v4198
        %s4200 = scalar_lea.vmem [#allocation4], 208
        %v4201 = vld [vmem:[%s4200] ss:$2 sm:$0x7f]
        %s4202 = scalar_lea.vmem [#allocation4], 209
        %v4203 = vld [vmem:[%s4202] ss:$2 sm:$0x7f]
        %v4204 = vmax.f32 %v4201, %v4203
        %v4205 = vmax.f32 %v4199, %v4204
        %v4206 = vadd.f32 %v4205, %v3873
        %v4207 = vmax.f32 %v4206, 0.0
        %v4208 = vpack.c.bf16 %v4207, %v4207
        %v4210 = vshrl.u32 %v4208, 16
        %v4212 = vrot.slane %v4210, 7
        %v4213 = vshll.u32 %v4208, 16
        %v4215 = vor.u32 %v4212, %v4213
        %v4218 = vrot.slane %v4208, 7
        %v4219 = vsel %vm1557, %v4208, %v4215
        %v4222 = vsel %vm981, %v4219, %v4218
        %v4224 = vunpack.c.l.b16 %v4222
        %v4225 = vunpack.c.h.b16 %v4222
        %v4226 = vpack.c.b16 %v4224, %v4224
        %v4227 = vpack.c.b16 %v4225, %v4225
        %vm4228 = vsmask.f32 7440
        %vm4229 = vmor %vm4190, %vm4228
        %v4231 = vshll.u32 %v4226, 16
        %v4233 = vrot.slane %v4231, 5
        %v4234 = vshrl.u32 %v4226, 16
        %v4236 = vrot.slane %v4234, 4
        %v4237 = vor.u32 %v4236, %v4233
        %v4238 = vrot.slane %v4237, 4
        %v4240 = vshll.u32 %v4227, 16
        %v4242 = vrot.slane %v4240, 5
        %v4243 = vsel %vm4229, %v4238, %v4242
        %vm4246 = vcmask 1043459
        %vm4247 = vsmask.f32 7950
        %vm4248 = vmand %vm4246, %vm4247
        %v4249 = vld [vmem:[#allocation5 + $0x1c] sm:$0x8]
        %v4250 = vsel %vm4248, %v4233, %v4249
        %4251 = vst [vmem:[#allocation5 + $0x1c] sm:$0x8] %v4250
        %4252 = vst [vmem:[#allocation5 + $0x20] sm:$0xf] %v4243
        %4255 = vst [vmem:[#allocation5 + $0x24] sm:$0xf] %v4226
        %v4256 = vld [vmem:[#allocation5 + $0x28] sm:$0x1]
        %v4257 = vsel %vm1557, %v4227, %v4256
        %4258 = vst [vmem:[#allocation5 + $0x28] sm:$0x1] %v4257
        %v4259 = vld [vmem:[#allocation5] sm:$0xf]
        %v4260 = vld [vmem:[#allocation5 + $0x4] sm:$0xf]
        %v4261 = vld [vmem:[#allocation5 + $0x8] sm:$0xf]
        %v4262 = vld [vmem:[#allocation5 + $0xc] sm:$0xf]
        %v4263 = vld [vmem:[#allocation5 + $0x10] sm:$0xf]
        %v4264 = vld [vmem:[#allocation5 + $0x14] sm:$0xf]
        %v4265 = vld [vmem:[#allocation5 + $0x18] sm:$0xf]
        %v4266 = vld [vmem:[#allocation5 + $0x1c] sm:$0xf]
        %v4267 = vld [vmem:[#allocation5] sm:$0xe]
        %v4268 = vld [vmem:[#allocation5 + $0x20] sm:$0x1]
        %v4269 = vld [vmem:[#allocation5 + $0x20] sm:$0xf]
        %v4270 = vld [vmem:[#allocation5 + $0x4] sm:$0xe]
        %v4271 = vld [vmem:[#allocation5 + $0x24] sm:$0x1]
        %v4272 = vld [vmem:[#allocation5 + $0x8] sm:$0xe]
        %v4273 = vld [vmem:[#allocation5 + $0xc] sm:$0xf]
        %v4274 = vld [vmem:[#allocation5 + $0x10] sm:$0xf]
        %v4275 = vld [vmem:[#allocation5 + $0x14] sm:$0xf]
        %v4276 = vld [vmem:[#allocation5 + $0x18] sm:$0xf]
        %v4277 = vld [vmem:[#allocation5 + $0x1c] sm:$0xf]
        %v4278 = vld [vmem:[#allocation5 + $0x20] sm:$0xf]
        %v4279 = vld [vmem:[#allocation5 + $0x24] sm:$0xf]
        %v4280 = vld [vmem:[#allocation5 + $0x28] sm:$0x1]
        %v4281 = vld [vmem:[#allocation5 + $0x8] sm:$0xc]
        %v4282 = vld [vmem:[#allocation5 + $0x28] sm:$0x3]
        %v4291 = vunpack.c.l.b16 %v4259
        %v4292 = vunpack.c.l.b16 %v4260
        %v4293 = vunpack.c.l.b16 %v4261
        %v4294 = vunpack.c.l.b16 %v4262
        %v4295 = vunpack.c.l.b16 %v4263
        %v4296 = vunpack.c.l.b16 %v4264
        %v4297 = vunpack.c.l.b16 %v4265
        %v4298 = vunpack.c.l.b16 %v4266
        %v4299 = vpack.c.b16 %v4292, %v4291
        %v4300 = vpack.c.b16 %v4294, %v4293
        %v4301 = vpack.c.b16 %v4296, %v4295
        %v4302 = vpack.c.b16 %v4298, %v4297
        %v4308 = vshrl.u32 %v4299, 16
        %v4310 = vshll.u32 %v4299, 16
        %v4312 = vrot.slane %v4310, 1
        %v4313 = vor.u32 %v4308, %v4312
        %v4315 = vshll.u32 %v4300, 16
        %v4317 = vrot.slane %v4315, 1
        %v4318 = vsel %vm1560, %v4313, %v4317
        %v4319 = vshrl.u32 %v4300, 16
        %v4321 = vor.u32 %v4319, %v4317
        %v4323 = vshll.u32 %v4301, 16
        %v4325 = vrot.slane %v4323, 1
        %v4326 = vsel %vm1560, %v4321, %v4325
        %v4327 = vshrl.u32 %v4301, 16
        %v4329 = vor.u32 %v4327, %v4325
        %v4331 = vshll.u32 %v4302, 16
        %v4333 = vrot.slane %v4331, 1
        %v4334 = vsel %vm1560, %v4329, %v4333
        %v4335 = vshrl.u32 %v4302, 16
        %v4337 = vor.u32 %v4335, %v4333
        %v4344 = vunpack.c.l.b16 %v4267
        %v4345 = vunpack.c.l.b16 %v4268
        %v4346 = vpack.c.b16 %v4292, %v4344
        %v4347 = vpack.c.b16 %v4345, %v4345
        %v4348 = vrot.slane %v4346, 1
        %v4349 = vrot.slane %v4300, 1
        %v4350 = vsel %vm2280, %v4348, %v4349
        %v4351 = vrot.slane %v4301, 1
        %v4352 = vsel %vm2280, %v4349, %v4351
        %v4353 = vrot.slane %v4302, 1
        %v4354 = vsel %vm2280, %v4351, %v4353
        %v4355 = vrot.slane %v4347, 1
        %v4356 = vsel %vm2280, %v4353, %v4355
        %v4362 = vunpack.c.l.b16 %v4269
        %v4363 = vpack.c.b16 %v4293, %v4292
        %v4364 = vpack.c.b16 %v4295, %v4294
        %v4365 = vpack.c.b16 %v4297, %v4296
        %v4366 = vpack.c.b16 %v4362, %v4298
        %v4368 = vshrl.u32 %v4363, 16
        %v4370 = vshll.u32 %v4363, 16
        %v4372 = vrot.slane %v4370, 1
        %v4373 = vor.u32 %v4368, %v4372
        %v4375 = vshll.u32 %v4364, 16
        %v4377 = vrot.slane %v4375, 1
        %v4378 = vsel %vm1560, %v4373, %v4377
        %v4379 = vshrl.u32 %v4364, 16
        %v4381 = vor.u32 %v4379, %v4377
        %v4383 = vshll.u32 %v4365, 16
        %v4385 = vrot.slane %v4383, 1
        %v4386 = vsel %vm1560, %v4381, %v4385
        %v4387 = vshrl.u32 %v4365, 16
        %v4389 = vor.u32 %v4387, %v4385
        %v4391 = vshll.u32 %v4366, 16
        %v4393 = vrot.slane %v4391, 1
        %v4394 = vsel %vm1560, %v4389, %v4393
        %v4395 = vshrl.u32 %v4366, 16
        %v4397 = vor.u32 %v4395, %v4393
        %v4404 = vunpack.c.l.b16 %v4270
        %v4405 = vunpack.c.l.b16 %v4271
        %v4406 = vpack.c.b16 %v4293, %v4404
        %v4407 = vpack.c.b16 %v4405, %v4405
        %v4408 = vrot.slane %v4406, 1
        %v4409 = vrot.slane %v4364, 1
        %v4410 = vsel %vm2280, %v4408, %v4409
        %v4411 = vrot.slane %v4365, 1
        %v4412 = vsel %vm2280, %v4409, %v4411
        %v4413 = vrot.slane %v4366, 1
        %v4414 = vsel %vm2280, %v4411, %v4413
        %v4415 = vrot.slane %v4407, 1
        %v4416 = vsel %vm2280, %v4413, %v4415
        %vm4421 = vsmask.f32 6400
        %v4423 = vshrl.u32 %v4406, 16
        %v4425 = vrot.slane %v4423, 1
        %v4426 = vshll.u32 %v4406, 16
        %v4428 = vrot.slane %v4426, 2
        %v4429 = vor.u32 %v4425, %v4428
        %v4430 = vrot.slane %v4379, 1
        %v4431 = vrot.slane %v4375, 2
        %v4432 = vor.u32 %v4430, %v4431
        %v4433 = vsel %vm4421, %v4429, %v4432
        %v4434 = vrot.slane %v4387, 1
        %v4435 = vrot.slane %v4383, 2
        %v4436 = vor.u32 %v4434, %v4435
        %v4437 = vsel %vm4421, %v4432, %v4436
        %v4438 = vrot.slane %v4395, 1
        %v4439 = vrot.slane %v4391, 2
        %v4440 = vor.u32 %v4438, %v4439
        %v4441 = vsel %vm4421, %v4436, %v4440
        %v4443 = vshrl.u32 %v4407, 16
        %v4445 = vrot.slane %v4443, 1
        %v4446 = vshll.u32 %v4407, 16
        %v4448 = vrot.slane %v4446, 2
        %v4449 = vor.u32 %v4445, %v4448
        %v4450 = vsel %vm4421, %v4440, %v4449
        %v4464 = vunpack.c.l.b16 %v4272
        %v4465 = vunpack.c.l.b16 %v4273
        %v4466 = vunpack.c.l.b16 %v4274
        %v4467 = vunpack.c.l.b16 %v4275
        %v4468 = vunpack.c.l.b16 %v4276
        %v4469 = vunpack.c.l.b16 %v4277
        %v4470 = vunpack.c.l.b16 %v4278
        %v4471 = vunpack.c.l.b16 %v4279
        %v4472 = vunpack.c.l.b16 %v4280
        %v4473 = vpack.c.b16 %v4465, %v4464
        %v4474 = vpack.c.b16 %v4467, %v4466
        %v4475 = vpack.c.b16 %v4469, %v4468
        %v4476 = vpack.c.b16 %v4471, %v4470
        %v4477 = vpack.c.b16 %v4472, %v4472
        %v4478 = vrot.slane %v4473, 1
        %v4479 = vrot.slane %v4474, 1
        %v4480 = vsel %vm2280, %v4478, %v4479
        %v4481 = vrot.slane %v4475, 1
        %v4482 = vsel %vm2280, %v4479, %v4481
        %v4483 = vrot.slane %v4476, 1
        %v4484 = vsel %vm2280, %v4481, %v4483
        %v4485 = vrot.slane %v4477, 1
        %v4486 = vsel %vm2280, %v4483, %v4485
        %v4492 = vshrl.u32 %v4473, 16
        %v4494 = vrot.slane %v4492, 1
        %v4495 = vshll.u32 %v4473, 16
        %v4497 = vrot.slane %v4495, 2
        %v4498 = vor.u32 %v4494, %v4497
        %v4500 = vshrl.u32 %v4474, 16
        %v4502 = vrot.slane %v4500, 1
        %v4503 = vshll.u32 %v4474, 16
        %v4505 = vrot.slane %v4503, 2
        %v4506 = vor.u32 %v4502, %v4505
        %v4507 = vsel %vm4421, %v4498, %v4506
        %v4509 = vshrl.u32 %v4475, 16
        %v4511 = vrot.slane %v4509, 1
        %v4512 = vshll.u32 %v4475, 16
        %v4514 = vrot.slane %v4512, 2
        %v4515 = vor.u32 %v4511, %v4514
        %v4516 = vsel %vm4421, %v4506, %v4515
        %v4518 = vshrl.u32 %v4476, 16
        %v4520 = vrot.slane %v4518, 1
        %v4521 = vshll.u32 %v4476, 16
        %v4523 = vrot.slane %v4521, 2
        %v4524 = vor.u32 %v4520, %v4523
        %v4525 = vsel %vm4421, %v4515, %v4524
        %v4527 = vshrl.u32 %v4477, 16
        %v4529 = vrot.slane %v4527, 1
        %v4530 = vshll.u32 %v4477, 16
        %v4532 = vrot.slane %v4530, 2
        %v4533 = vor.u32 %v4529, %v4532
        %v4534 = vsel %vm4421, %v4524, %v4533
        %v4541 = vunpack.c.l.b16 %v4281
        %v4542 = vunpack.c.l.b16 %v4282
        %v4543 = vpack.c.b16 %v4465, %v4541
        %v4544 = vpack.c.b16 %v4542, %v4542
        %vm4545 = vcmask 1045504
        %v4546 = vrot.slane %v4543, 2
        %v4547 = vrot.slane %v4474, 2
        %v4548 = vsel %vm4545, %v4546, %v4547
        %v4549 = vrot.slane %v4475, 2
        %v4550 = vsel %vm4545, %v4547, %v4549
        %v4551 = vrot.slane %v4476, 2
        %v4552 = vsel %vm4545, %v4549, %v4551
        %v4553 = vrot.slane %v4544, 2
        %v4554 = vsel %vm4545, %v4551, %v4553
        %v4559 = vld [vmem:[#allocation12] sm:$0xf]
        %v4560 = vld [vmem:[#allocation12 + $0x4] sm:$0xf]
        %v4561 = vld [vmem:[#allocation12 + $0x8] sm:$0xf]
        %v4562 = vld [vmem:[#allocation12 + $0xc] sm:$0xf]
        %v4563 = vld [vmem:[#allocation12 + $0x10] sm:$0xf]
        %v4564 = vld [vmem:[#allocation12 + $0x14] sm:$0xf]
        %v4565 = vld [vmem:[#allocation12 + $0x18] sm:$0xf]
        %v4566 = vld [vmem:[#allocation12 + $0x1c] sm:$0xf]
        %v4567 = vld [vmem:[#allocation12 + $0x20] sm:$0xf]
        %v4568 = vld [vmem:[#allocation12 + $0x24] sm:$0xf]
        %v4569 = vld [vmem:[#allocation12 + $0x28] sm:$0xf]
        %v4570 = vld [vmem:[#allocation12 + $0x2c] sm:$0xf]
        %v4571 = vld [vmem:[#allocation12 + $0x30] sm:$0xf]
        %v4572 = vld [vmem:[#allocation12 + $0x34] sm:$0xf]
        %v4573 = vld [vmem:[#allocation12 + $0x38] sm:$0xf]
        %v4574 = vld [vmem:[#allocation12 + $0x3c] sm:$0xf]
        %v4575 = vld [vmem:[#allocation12 + $0x40] sm:$0xf]
        %v4576 = vld [vmem:[#allocation12 + $0x44] sm:$0xf]
        %v4577 = vld [vmem:[#allocation12 + $0x48] sm:$0xf]
        %v4578 = vld [vmem:[#allocation12 + $0x4c] sm:$0xf]
        %v4579 = vld [vmem:[#allocation12 + $0x50] sm:$0xf]
        %v4580 = vld [vmem:[#allocation12 + $0x54] sm:$0xf]
        %v4581 = vld [vmem:[#allocation12 + $0x58] sm:$0xf]
        %v4582 = vld [vmem:[#allocation12 + $0x5c] sm:$0xf]
        %v4583 = vld [vmem:[#allocation12 + $0x60] sm:$0xf]
        %v4584 = vld [vmem:[#allocation12 + $0x64] sm:$0xf]
        %v4585 = vld [vmem:[#allocation12 + $0x68] sm:$0xf]
        %v4586 = vld [vmem:[#allocation12 + $0x6c] sm:$0xf]
        %v4587 = vld [vmem:[#allocation12 + $0x70] sm:$0xf]
        %v4588 = vld [vmem:[#allocation12 + $0x74] sm:$0xf]
        %v4589 = vld [vmem:[#allocation12 + $0x78] sm:$0xf]
        %v4590 = vld [vmem:[#allocation12 + $0x7c] sm:$0xf]
        %v4591 = vld [vmem:[#allocation12 + $0x80] sm:$0xf]
        %v4592 = vld [vmem:[#allocation12 + $0x84] sm:$0xf]
        %v4593 = vld [vmem:[#allocation12 + $0x88] sm:$0xf]
        %v4594 = vld [vmem:[#allocation12 + $0x8c] sm:$0xf]
        %v4595 = vld [vmem:[#allocation12 + $0x90] sm:$0xf]
        %v4596 = vld [vmem:[#allocation12 + $0x94] sm:$0xf]
        %v4597 = vld [vmem:[#allocation12 + $0x98] sm:$0xf]
        %v4598 = vld [vmem:[#allocation12 + $0x9c] sm:$0xf]
        %v4599 = vld [vmem:[#allocation12 + $0xa0] sm:$0xf]
        %v4600 = vld [vmem:[#allocation12 + $0xa4] sm:$0xf]
        %v4601 = vld [vmem:[#allocation12 + $0xa8] sm:$0xf]
        %v4602 = vld [vmem:[#allocation12 + $0xac] sm:$0xf]
        %v4603 = vld [vmem:[#allocation12 + $0xb0] sm:$0xf]
        %v4604 = vld [vmem:[#allocation12 + $0xb4] sm:$0xf]
        %v4605 = vld [vmem:[#allocation12 + $0xb8] sm:$0xf]
        %v4606 = vld [vmem:[#allocation12 + $0xbc] sm:$0xf]
        %v4607 = vld [vmem:[#allocation12 + $0xc0] sm:$0xf]
        %v4608 = vld [vmem:[#allocation12 + $0xc4] sm:$0xf]
        %v4609 = vld [vmem:[#allocation12 + $0xc8] sm:$0xf]
        %v4610 = vld [vmem:[#allocation12 + $0xcc] sm:$0xf]
        %v4611 = vld [vmem:[#allocation12 + $0xd0] sm:$0xf]
        %v4612 = vld [vmem:[#allocation12 + $0xd4] sm:$0xf]
        %v4613 = vld [vmem:[#allocation12 + $0xd8] sm:$0xf]
        %v4614 = vld [vmem:[#allocation12 + $0xdc] sm:$0xf]
        %v4615 = vld [vmem:[#allocation12 + $0xe0] sm:$0xf]
        %v4616 = vld [vmem:[#allocation12 + $0xe4] sm:$0xf]
        %v4617 = vld [vmem:[#allocation12 + $0xe8] sm:$0xf]
        %v4618 = vld [vmem:[#allocation12 + $0xec] sm:$0xf]
        %v4619 = vld [vmem:[#allocation12 + $0xf0] sm:$0xf]
        %v4620 = vld [vmem:[#allocation12 + $0xf4] sm:$0xf]
        %v4621 = vld [vmem:[#allocation12 + $0xf8] sm:$0xf]
        %v4622 = vld [vmem:[#allocation12 + $0xfc] sm:$0xf]
        %v4623 = vld [vmem:[#allocation12 + $0x100] sm:$0xf]
        %v4624 = vld [vmem:[#allocation12 + $0x104] sm:$0xf]
        %v4625 = vld [vmem:[#allocation12 + $0x108] sm:$0xf]
        %v4626 = vld [vmem:[#allocation12 + $0x10c] sm:$0xf]
        %v4627 = vld [vmem:[#allocation12 + $0x110] sm:$0xf]
        %v4628 = vld [vmem:[#allocation12 + $0x114] sm:$0xf]
        %v4629 = vld [vmem:[#allocation12 + $0x118] sm:$0xf]
        %v4630 = vld [vmem:[#allocation12 + $0x11c] sm:$0xf]
        %v4631 = vld [vmem:[#allocation12 + $0x120] sm:$0xf]
        %v4632 = vld [vmem:[#allocation12 + $0x124] sm:$0xf]
        %v4633 = vld [vmem:[#allocation12 + $0x128] sm:$0xf]
        %v4634 = vld [vmem:[#allocation12 + $0x12c] sm:$0xf]
        %v4635 = vld [vmem:[#allocation12 + $0x130] sm:$0xf]
        %v4636 = vld [vmem:[#allocation12 + $0x134] sm:$0xf]
        %v4637 = vld [vmem:[#allocation12 + $0x138] sm:$0xf]
        %v4638 = vld [vmem:[#allocation12 + $0x13c] sm:$0xf]
        %v4639 = vld [vmem:[#allocation12 + $0x140] sm:$0xf]
        %v4640 = vld [vmem:[#allocation12 + $0x144] sm:$0xf]
        %v4641 = vld [vmem:[#allocation12 + $0x148] sm:$0xf]
        %v4642 = vld [vmem:[#allocation12 + $0x14c] sm:$0xf]
        %v4643 = vld [vmem:[#allocation12 + $0x150] sm:$0xf]
        %v4644 = vld [vmem:[#allocation12 + $0x154] sm:$0xf]
        %v4645 = vld [vmem:[#allocation12 + $0x158] sm:$0xf]
        %v4646 = vld [vmem:[#allocation12 + $0x15c] sm:$0xf]
        %v4647 = vld [vmem:[#allocation12 + $0x160] sm:$0xf]
        %v4648 = vld [vmem:[#allocation12 + $0x164] sm:$0xf]
        %v4649 = vld [vmem:[#allocation12 + $0x168] sm:$0xf]
        %v4650 = vld [vmem:[#allocation12 + $0x16c] sm:$0xf]
        %v4651 = vld [vmem:[#allocation12 + $0x170] sm:$0xf]
        %v4652 = vld [vmem:[#allocation12 + $0x174] sm:$0xf]
        %v4653 = vld [vmem:[#allocation12 + $0x178] sm:$0xf]
        %v4654 = vld [vmem:[#allocation12 + $0x17c] sm:$0xf]
        %v4655 = vld [vmem:[#allocation12 + $0x180] sm:$0xf]
        %v4656 = vld [vmem:[#allocation12 + $0x184] sm:$0xf]
        %v4657 = vld [vmem:[#allocation12 + $0x188] sm:$0xf]
        %v4658 = vld [vmem:[#allocation12 + $0x18c] sm:$0xf]
        %v4659 = vld [vmem:[#allocation12 + $0x190] sm:$0xf]
        %v4660 = vld [vmem:[#allocation12 + $0x194] sm:$0xf]
        %v4661 = vld [vmem:[#allocation12 + $0x198] sm:$0xf]
        %v4662 = vld [vmem:[#allocation12 + $0x19c] sm:$0xf]
        %v4663 = vld [vmem:[#allocation12 + $0x1a0] sm:$0xf]
        %v4664 = vld [vmem:[#allocation12 + $0x1a4] sm:$0xf]
        %v4665 = vld [vmem:[#allocation12 + $0x1a8] sm:$0xf]
        %v4666 = vld [vmem:[#allocation12 + $0x1ac] sm:$0xf]
        %v4667 = vld [vmem:[#allocation12 + $0x1b0] sm:$0xf]
        %v4668 = vld [vmem:[#allocation12 + $0x1b4] sm:$0xf]
        %v4669 = vld [vmem:[#allocation12 + $0x1b8] sm:$0xf]
        %v4670 = vld [vmem:[#allocation12 + $0x1bc] sm:$0xf]
        %v4671 = vld [vmem:[#allocation12 + $0x1c0] sm:$0xf]
        %v4672 = vld [vmem:[#allocation12 + $0x1c4] sm:$0xf]
        %v4673 = vld [vmem:[#allocation12 + $0x1c8] sm:$0xf]
        %v4674 = vld [vmem:[#allocation12 + $0x1cc] sm:$0xf]
        %v4675 = vld [vmem:[#allocation12 + $0x1d0] sm:$0xf]
        %v4676 = vld [vmem:[#allocation12 + $0x1d4] sm:$0xf]
        %v4677 = vld [vmem:[#allocation12 + $0x1d8] sm:$0xf]
        %v4678 = vld [vmem:[#allocation12 + $0x1dc] sm:$0xf]
        %v4679 = vld [vmem:[#allocation12 + $0x1e0] sm:$0xf]
        %v4680 = vld [vmem:[#allocation12 + $0x1e4] sm:$0xf]
        %v4681 = vld [vmem:[#allocation12 + $0x1e8] sm:$0xf]
        %v4682 = vld [vmem:[#allocation12 + $0x1ec] sm:$0xf]
        %v4683 = vld [vmem:[#allocation12 + $0x1f0] sm:$0xf]
        %v4684 = vld [vmem:[#allocation12 + $0x1f4] sm:$0xf]
        %v4685 = vld [vmem:[#allocation12 + $0x1f8] sm:$0xf]
        %v4686 = vld [vmem:[#allocation12 + $0x1fc] sm:$0xf]
        %v4687 = vld [vmem:[#allocation12 + $0x200] sm:$0xf]
        %v4688 = vld [vmem:[#allocation12 + $0x204] sm:$0xf]
        %v4689 = vld [vmem:[#allocation12 + $0x208] sm:$0xf]
        %v4690 = vld [vmem:[#allocation12 + $0x20c] sm:$0xf]
        %v4691 = vld [vmem:[#allocation12 + $0x210] sm:$0xf]
        %v4692 = vld [vmem:[#allocation12 + $0x214] sm:$0xf]
        %v4693 = vld [vmem:[#allocation12 + $0x218] sm:$0xf]
        %v4694 = vld [vmem:[#allocation12 + $0x21c] sm:$0xf]
        %v4695 = vld [vmem:[#allocation12 + $0x220] sm:$0xf]
        %v4696 = vld [vmem:[#allocation12 + $0x224] sm:$0xf]
        %v4697 = vld [vmem:[#allocation12 + $0x228] sm:$0xf]
        %v4698 = vld [vmem:[#allocation12 + $0x22c] sm:$0xf]
        %v4699 = vld [vmem:[#allocation12 + $0x230] sm:$0xf]
        %v4700 = vld [vmem:[#allocation12 + $0x234] sm:$0xf]
        %v4701 = vld [vmem:[#allocation12 + $0x238] sm:$0xf]
        %v4702 = vld [vmem:[#allocation12 + $0x23c] sm:$0xf]
        %v4703 = vld [vmem:[%s6] sm:$0x1]
        %v4705 = vlaneseq
        %v4706 = vshrl.u32 %v4705, 7
        %v4707 = vsub.s32 0, %v4706
        %v4708 = vrot.slane %v4703, %v4707
        %v4854 = vunpack.c.l.b16 %v4559
        %v4855 = vunpack.c.l.b16 %v4560
        %v4856 = vunpack.c.l.b16 %v4561
        %v4857 = vunpack.c.l.b16 %v4562
        %v4858 = vunpack.c.l.b16 %v4563
        %v4859 = vunpack.c.l.b16 %v4564
        %v4860 = vunpack.c.l.b16 %v4565
        %v4861 = vunpack.c.l.b16 %v4566
        %v4862 = vunpack.c.l.b16 %v4567
        %v4863 = vunpack.c.l.b16 %v4568
        %v4864 = vunpack.c.l.b16 %v4569
        %v4865 = vunpack.c.l.b16 %v4570
        %v4866 = vunpack.c.l.b16 %v4571
        %v4867 = vunpack.c.l.b16 %v4572
        %v4868 = vunpack.c.l.b16 %v4573
        %v4869 = vunpack.c.l.b16 %v4574
        %v4870 = vunpack.c.l.b16 %v4575
        %v4871 = vunpack.c.l.b16 %v4576
        %v4872 = vunpack.c.l.b16 %v4577
        %v4873 = vunpack.c.l.b16 %v4578
        %v4874 = vunpack.c.l.b16 %v4579
        %v4875 = vunpack.c.l.b16 %v4580
        %v4876 = vunpack.c.l.b16 %v4581
        %v4877 = vunpack.c.l.b16 %v4582
        %v4878 = vunpack.c.l.b16 %v4583
        %v4879 = vunpack.c.l.b16 %v4584
        %v4880 = vunpack.c.l.b16 %v4585
        %v4881 = vunpack.c.l.b16 %v4586
        %v4882 = vunpack.c.l.b16 %v4587
        %v4883 = vunpack.c.l.b16 %v4588
        %v4884 = vunpack.c.l.b16 %v4589
        %v4885 = vunpack.c.l.b16 %v4590
        %v4886 = vunpack.c.l.b16 %v4591
        %v4887 = vunpack.c.l.b16 %v4592
        %v4888 = vunpack.c.l.b16 %v4593
        %v4889 = vunpack.c.l.b16 %v4594
        %v4890 = vunpack.c.l.b16 %v4595
        %v4891 = vunpack.c.l.b16 %v4596
        %v4892 = vunpack.c.l.b16 %v4597
        %v4893 = vunpack.c.l.b16 %v4598
        %v4894 = vunpack.c.l.b16 %v4599
        %v4895 = vunpack.c.l.b16 %v4600
        %v4896 = vunpack.c.l.b16 %v4601
        %v4897 = vunpack.c.l.b16 %v4602
        %v4898 = vunpack.c.l.b16 %v4603
        %v4899 = vunpack.c.l.b16 %v4604
        %v4900 = vunpack.c.l.b16 %v4605
        %v4901 = vunpack.c.l.b16 %v4606
        %v4902 = vunpack.c.l.b16 %v4607
        %v4903 = vunpack.c.l.b16 %v4608
        %v4904 = vunpack.c.l.b16 %v4609
        %v4905 = vunpack.c.l.b16 %v4610
        %v4906 = vunpack.c.l.b16 %v4611
        %v4907 = vunpack.c.l.b16 %v4612
        %v4908 = vunpack.c.l.b16 %v4613
        %v4909 = vunpack.c.l.b16 %v4614
        %v4910 = vunpack.c.l.b16 %v4615
        %v4911 = vunpack.c.l.b16 %v4616
        %v4912 = vunpack.c.l.b16 %v4617
        %v4913 = vunpack.c.l.b16 %v4618
        %v4914 = vunpack.c.l.b16 %v4619
        %v4915 = vunpack.c.l.b16 %v4620
        %v4916 = vunpack.c.l.b16 %v4621
        %v4917 = vunpack.c.l.b16 %v4622
        %v4918 = vunpack.c.l.b16 %v4623
        %v4919 = vunpack.c.l.b16 %v4624
        %v4920 = vunpack.c.l.b16 %v4625
        %v4921 = vunpack.c.l.b16 %v4626
        %v4922 = vunpack.c.l.b16 %v4627
        %v4923 = vunpack.c.l.b16 %v4628
        %v4924 = vunpack.c.l.b16 %v4629
        %v4925 = vunpack.c.l.b16 %v4630
        %v4926 = vunpack.c.l.b16 %v4631
        %v4927 = vunpack.c.l.b16 %v4632
        %v4928 = vunpack.c.l.b16 %v4633
        %v4929 = vunpack.c.l.b16 %v4634
        %v4930 = vunpack.c.l.b16 %v4635
        %v4931 = vunpack.c.l.b16 %v4636
        %v4932 = vunpack.c.l.b16 %v4637
        %v4933 = vunpack.c.l.b16 %v4638
        %v4934 = vunpack.c.l.b16 %v4639
        %v4935 = vunpack.c.l.b16 %v4640
        %v4936 = vunpack.c.l.b16 %v4641
        %v4937 = vunpack.c.l.b16 %v4642
        %v4938 = vunpack.c.l.b16 %v4643
        %v4939 = vunpack.c.l.b16 %v4644
        %v4940 = vunpack.c.l.b16 %v4645
        %v4941 = vunpack.c.l.b16 %v4646
        %v4942 = vunpack.c.l.b16 %v4647
        %v4943 = vunpack.c.l.b16 %v4648
        %v4944 = vunpack.c.l.b16 %v4649
        %v4945 = vunpack.c.l.b16 %v4650
        %v4946 = vunpack.c.l.b16 %v4651
        %v4947 = vunpack.c.l.b16 %v4652
        %v4948 = vunpack.c.l.b16 %v4653
        %v4949 = vunpack.c.l.b16 %v4654
        %v4950 = vunpack.c.l.b16 %v4655
        %v4951 = vunpack.c.l.b16 %v4656
        %v4952 = vunpack.c.l.b16 %v4657
        %v4953 = vunpack.c.l.b16 %v4658
        %v4954 = vunpack.c.l.b16 %v4659
        %v4955 = vunpack.c.l.b16 %v4660
        %v4956 = vunpack.c.l.b16 %v4661
        %v4957 = vunpack.c.l.b16 %v4662
        %v4958 = vunpack.c.l.b16 %v4663
        %v4959 = vunpack.c.l.b16 %v4664
        %v4960 = vunpack.c.l.b16 %v4665
        %v4961 = vunpack.c.l.b16 %v4666
        %v4962 = vunpack.c.l.b16 %v4667
        %v4963 = vunpack.c.l.b16 %v4668
        %v4964 = vunpack.c.l.b16 %v4669
        %v4965 = vunpack.c.l.b16 %v4670
        %v4966 = vunpack.c.l.b16 %v4671
        %v4967 = vunpack.c.l.b16 %v4672
        %v4968 = vunpack.c.l.b16 %v4673
        %v4969 = vunpack.c.l.b16 %v4674
        %v4970 = vunpack.c.l.b16 %v4675
        %v4971 = vunpack.c.l.b16 %v4676
        %v4972 = vunpack.c.l.b16 %v4677
        %v4973 = vunpack.c.l.b16 %v4678
        %v4974 = vunpack.c.l.b16 %v4679
        %v4975 = vunpack.c.l.b16 %v4680
        %v4976 = vunpack.c.l.b16 %v4681
        %v4977 = vunpack.c.l.b16 %v4682
        %v4978 = vunpack.c.l.b16 %v4683
        %v4979 = vunpack.c.l.b16 %v4684
        %v4980 = vunpack.c.l.b16 %v4685
        %v4981 = vunpack.c.l.b16 %v4686
        %v4982 = vunpack.c.l.b16 %v4687
        %v4983 = vunpack.c.l.b16 %v4688
        %v4984 = vunpack.c.l.b16 %v4689
        %v4985 = vunpack.c.l.b16 %v4690
        %v4986 = vunpack.c.l.b16 %v4691
        %v4987 = vunpack.c.l.b16 %v4692
        %v4988 = vunpack.c.l.b16 %v4693
        %v4989 = vunpack.c.l.b16 %v4694
        %v4990 = vunpack.c.l.b16 %v4695
        %v4991 = vunpack.c.l.b16 %v4696
        %v4992 = vunpack.c.l.b16 %v4697
        %v4993 = vunpack.c.l.b16 %v4698
        %v4994 = vunpack.c.l.b16 %v4699
        %v4995 = vunpack.c.l.b16 %v4700
        %v4996 = vunpack.c.l.b16 %v4701
        %v4997 = vunpack.c.l.b16 %v4702
        %v4998 = vpack.c.b16 %v4855, %v4854
        %v4999 = vpack.c.b16 %v4857, %v4856
        %v5000 = vpack.c.b16 %v4859, %v4858
        %v5001 = vpack.c.b16 %v4861, %v4860
        %v5002 = vpack.c.b16 %v4863, %v4862
        %v5003 = vpack.c.b16 %v4865, %v4864
        %v5004 = vpack.c.b16 %v4867, %v4866
        %v5005 = vpack.c.b16 %v4869, %v4868
        %v5006 = vpack.c.b16 %v4871, %v4870
        %v5007 = vpack.c.b16 %v4873, %v4872
        %v5008 = vpack.c.b16 %v4875, %v4874
        %v5009 = vpack.c.b16 %v4877, %v4876
        %v5010 = vpack.c.b16 %v4879, %v4878
        %v5011 = vpack.c.b16 %v4881, %v4880
        %v5012 = vpack.c.b16 %v4883, %v4882
        %v5013 = vpack.c.b16 %v4885, %v4884
        %v5014 = vpack.c.b16 %v4887, %v4886
        %v5015 = vpack.c.b16 %v4889, %v4888
        %v5016 = vpack.c.b16 %v4891, %v4890
        %v5017 = vpack.c.b16 %v4893, %v4892
        %v5018 = vpack.c.b16 %v4895, %v4894
        %v5019 = vpack.c.b16 %v4897, %v4896
        %v5020 = vpack.c.b16 %v4899, %v4898
        %v5021 = vpack.c.b16 %v4901, %v4900
        %v5022 = vpack.c.b16 %v4903, %v4902
        %v5023 = vpack.c.b16 %v4905, %v4904
        %v5024 = vpack.c.b16 %v4907, %v4906
        %v5025 = vpack.c.b16 %v4909, %v4908
        %v5026 = vpack.c.b16 %v4911, %v4910
        %v5027 = vpack.c.b16 %v4913, %v4912
        %v5028 = vpack.c.b16 %v4915, %v4914
        %v5029 = vpack.c.b16 %v4917, %v4916
        %v5030 = vpack.c.b16 %v4919, %v4918
        %v5031 = vpack.c.b16 %v4921, %v4920
        %v5032 = vpack.c.b16 %v4923, %v4922
        %v5033 = vpack.c.b16 %v4925, %v4924
        %v5034 = vpack.c.b16 %v4927, %v4926
        %v5035 = vpack.c.b16 %v4929, %v4928
        %v5036 = vpack.c.b16 %v4931, %v4930
        %v5037 = vpack.c.b16 %v4933, %v4932
        %v5038 = vpack.c.b16 %v4935, %v4934
        %v5039 = vpack.c.b16 %v4937, %v4936
        %v5040 = vpack.c.b16 %v4939, %v4938
        %v5041 = vpack.c.b16 %v4941, %v4940
        %v5042 = vpack.c.b16 %v4943, %v4942
        %v5043 = vpack.c.b16 %v4945, %v4944
        %v5044 = vpack.c.b16 %v4947, %v4946
        %v5045 = vpack.c.b16 %v4949, %v4948
        %v5046 = vpack.c.b16 %v4951, %v4950
        %v5047 = vpack.c.b16 %v4953, %v4952
        %v5048 = vpack.c.b16 %v4955, %v4954
        %v5049 = vpack.c.b16 %v4957, %v4956
        %v5050 = vpack.c.b16 %v4959, %v4958
        %v5051 = vpack.c.b16 %v4961, %v4960
        %v5052 = vpack.c.b16 %v4963, %v4962
        %v5053 = vpack.c.b16 %v4965, %v4964
        %v5054 = vpack.c.b16 %v4967, %v4966
        %v5055 = vpack.c.b16 %v4969, %v4968
        %v5056 = vpack.c.b16 %v4971, %v4970
        %v5057 = vpack.c.b16 %v4973, %v4972
        %v5058 = vpack.c.b16 %v4975, %v4974
        %v5059 = vpack.c.b16 %v4977, %v4976
        %v5060 = vpack.c.b16 %v4979, %v4978
        %v5061 = vpack.c.b16 %v4981, %v4980
        %v5062 = vpack.c.b16 %v4983, %v4982
        %v5063 = vpack.c.b16 %v4985, %v4984
        %v5064 = vpack.c.b16 %v4987, %v4986
        %v5065 = vpack.c.b16 %v4989, %v4988
        %v5066 = vpack.c.b16 %v4991, %v4990
        %v5067 = vpack.c.b16 %v4993, %v4992
        %v5068 = vpack.c.b16 %v4995, %v4994
        %v5069 = vpack.c.b16 %v4997, %v4996
        %5142 = vmatprep.subr.bf16.mxu0 0
        %5143 = vmatpush1.bf16.msra.mxu0 %v4998
        %5144 = vmatprep.subr.bf16.mxu0 0
        %5145 = vmatpush1.bf16.msra.mxu0 %v4999
        %5146 = vmatprep.subr.bf16.mxu0 0
        %5147 = vmatpush1.bf16.msra.mxu0 %v5000
        %5148 = vmatprep.subr.bf16.mxu0 0
        %5149 = vmatpush1.bf16.msra.mxu0 %v5001
        %5150 = vmatprep.subr.bf16.mxu0 0
        %5151 = vmatpush1.bf16.msra.mxu0 %v5002
        %5152 = vmatprep.subr.bf16.mxu0 0
        %5153 = vmatpush1.bf16.msra.mxu0 %v5003
        %5154 = vmatprep.subr.bf16.mxu0 0
        %5155 = vmatpush1.bf16.msra.mxu0 %v5004
        %5156 = vmatprep.subr.bf16.mxu0 0
        %5157 = vmatpush1.bf16.msra.mxu0 %v5005
        %5158 = vmatprep.subr.bf16.mxu0 0
        %5159 = vmatpush1.bf16.msra.mxu0 %v5006
        %5160 = vmatprep.subr.bf16.mxu0 0
        %5161 = vmatpush1.bf16.msra.mxu0 %v5007
        %5162 = vmatprep.subr.bf16.mxu0 0
        %5163 = vmatpush1.bf16.msra.mxu0 %v5008
        %5164 = vmatprep.subr.bf16.mxu0 0
        %5165 = vmatpush1.bf16.msra.mxu0 %v5009
        %5166 = vmatprep.subr.bf16.mxu0 0
        %5167 = vmatpush1.bf16.msra.mxu0 %v5010
        %5168 = vmatprep.subr.bf16.mxu0 0
        %5169 = vmatpush1.bf16.msra.mxu0 %v5011
        %5170 = vmatprep.subr.bf16.mxu0 0
        %5171 = vmatpush1.bf16.msra.mxu0 %v5012
        %5172 = vmatprep.subr.bf16.mxu0 0
        %5173 = vmatpush1.bf16.msra.mxu0 %v5013
        %5174 = vmatprep.mubr.bf16.mxu0 %v4318
        %5175 = vmatmul.mubr.bf16.gmra.mrb[0].mxu0 %v4299
        %v5176 = vpop.f32.mrb[0].mxu0
        %v5177 = vadd.f32 %v4708, %v5176
        %v5178 = vpop.f32.mrb[0].mxu0
        %v5179 = vpop.f32.mrb[0].mxu0
        %v5180 = vadd.f32 %v4708, %v5179
        %v5181 = vpop.f32.mrb[0].mxu0
        %5182 = vmatprep.mubr.bf16.mxu0 %v4326
        %5183 = vmatmul.mubr.bf16.gmra.mrb[0].mxu0 %v4300
        %v5184 = vpop.f32.mrb[0].mxu0
        %v5185 = vadd.f32 %v4708, %v5184
        %v5186 = vpop.f32.mrb[0].mxu0
        %v5187 = vpop.f32.mrb[0].mxu0
        %v5188 = vadd.f32 %v4708, %v5187
        %v5189 = vpop.f32.mrb[0].mxu0
        %5190 = vmatprep.mubr.bf16.mxu0 %v4334
        %5191 = vmatmul.mubr.bf16.gmra.mrb[0].mxu0 %v4301
        %v5192 = vpop.f32.mrb[0].mxu0
        %v5193 = vadd.f32 %v4708, %v5192
        %v5194 = vpop.f32.mrb[0].mxu0
        %v5195 = vpop.f32.mrb[0].mxu0
        %v5196 = vadd.f32 %v4708, %v5195
        %v5197 = vpop.f32.mrb[0].mxu0
        %5198 = vmatprep.mubr.bf16.mxu0 %v4337
        %5199 = vmatmul.mubr.bf16.gmra.mrb[0].mxu0 %v4302
        %v5200 = vpop.f32.mrb[0].mxu0
        %v5201 = vadd.f32 %v4708, %v5200
        %v5202 = vpop.f32.mrb[0].mxu0
        %v5203 = vpop.f32.mrb[0].mxu0
        %v5204 = vadd.f32 %v4708, %v5203
        %v5205 = vpop.f32.mrb[0].mxu0
        %5206 = vdwg.mxu0
        %5207 = vmatprep.subr.bf16.mxu0 0
        %5208 = vmatpush1.bf16.msra.mxu0 %v5014
        %5209 = vmatprep.subr.bf16.mxu0 0
        %5210 = vmatpush1.bf16.msra.mxu0 %v5015
        %5211 = vmatprep.subr.bf16.mxu0 0
        %5212 = vmatpush1.bf16.msra.mxu0 %v5016
        %5213 = vmatprep.subr.bf16.mxu0 0
        %5214 = vmatpush1.bf16.msra.mxu0 %v5017
        %5215 = vmatprep.subr.bf16.mxu0 0
        %5216 = vmatpush1.bf16.msra.mxu0 %v5018
        %5217 = vmatprep.subr.bf16.mxu0 0
        %5218 = vmatpush1.bf16.msra.mxu0 %v5019
        %5219 = vmatprep.subr.bf16.mxu0 0
        %5220 = vmatpush1.bf16.msra.mxu0 %v5020
        %5221 = vmatprep.subr.bf16.mxu0 0
        %5222 = vmatpush1.bf16.msra.mxu0 %v5021
        %5223 = vmatprep.subr.bf16.mxu0 0
        %5224 = vmatpush1.bf16.msra.mxu0 %v5022
        %5225 = vmatprep.subr.bf16.mxu0 0
        %5226 = vmatpush1.bf16.msra.mxu0 %v5023
        %5227 = vmatprep.subr.bf16.mxu0 0
        %5228 = vmatpush1.bf16.msra.mxu0 %v5024
        %5229 = vmatprep.subr.bf16.mxu0 0
        %5230 = vmatpush1.bf16.msra.mxu0 %v5025
        %5231 = vmatprep.subr.bf16.mxu0 0
        %5232 = vmatpush1.bf16.msra.mxu0 %v5026
        %5233 = vmatprep.subr.bf16.mxu0 0
        %5234 = vmatpush1.bf16.msra.mxu0 %v5027
        %5235 = vmatprep.subr.bf16.mxu0 0
        %5236 = vmatpush1.bf16.msra.mxu0 %v5028
        %5237 = vmatprep.subr.bf16.mxu0 0
        %5238 = vmatpush1.bf16.msra.mxu0 %v5029
        %5239 = vmatprep.mubr.bf16.mxu0 %v4378
        %5240 = vmatmul.mubr.bf16.gmra.mrb[0].mxu0 %v4350
        %v5241 = vpop.f32.mrb[0].mxu0
        %v5242 = vadd.f32 %v5177, %v5241
        %v5243 = vpop.f32.mrb[0].mxu0
        %v5244 = vpop.f32.mrb[0].mxu0
        %v5245 = vadd.f32 %v5180, %v5244
        %v5246 = vpop.f32.mrb[0].mxu0
        %5247 = vmatprep.mubr.bf16.mxu0 %v4386
        %5248 = vmatmul.mubr.bf16.gmra.mrb[0].mxu0 %v4352
        %v5249 = vpop.f32.mrb[0].mxu0
        %v5250 = vadd.f32 %v5185, %v5249
        %v5251 = vpop.f32.mrb[0].mxu0
        %v5252 = vpop.f32.mrb[0].mxu0
        %v5253 = vadd.f32 %v5188, %v5252
        %v5254 = vpop.f32.mrb[0].mxu0
        %5255 = vmatprep.mubr.bf16.mxu0 %v4394
        %5256 = vmatmul.mubr.bf16.gmra.mrb[0].mxu0 %v4354
        %v5257 = vpop.f32.mrb[0].mxu0
        %v5258 = vadd.f32 %v5193, %v5257
        %v5259 = vpop.f32.mrb[0].mxu0
        %v5260 = vpop.f32.mrb[0].mxu0
        %v5261 = vadd.f32 %v5196, %v5260
        %v5262 = vpop.f32.mrb[0].mxu0
        %5263 = vmatprep.mubr.bf16.mxu0 %v4397
        %5264 = vmatmul.mubr.bf16.gmra.mrb[0].mxu0 %v4356
        %v5265 = vpop.f32.mrb[0].mxu0
        %v5266 = vadd.f32 %v5201, %v5265
        %v5267 = vpop.f32.mrb[0].mxu0
        %v5268 = vpop.f32.mrb[0].mxu0
        %v5269 = vadd.f32 %v5204, %v5268
        %v5270 = vpop.f32.mrb[0].mxu0
        %5271 = vdwg.mxu0
        %5272 = vmatprep.subr.bf16.mxu0 0
        %5273 = vmatpush1.bf16.msra.mxu0 %v5030
        %5274 = vmatprep.subr.bf16.mxu0 0
        %5275 = vmatpush1.bf16.msra.mxu0 %v5031
        %5276 = vmatprep.subr.bf16.mxu0 0
        %5277 = vmatpush1.bf16.msra.mxu0 %v5032
        %5278 = vmatprep.subr.bf16.mxu0 0
        %5279 = vmatpush1.bf16.msra.mxu0 %v5033
        %5280 = vmatprep.subr.bf16.mxu0 0
        %5281 = vmatpush1.bf16.msra.mxu0 %v5034
        %5282 = vmatprep.subr.bf16.mxu0 0
        %5283 = vmatpush1.bf16.msra.mxu0 %v5035
        %5284 = vmatprep.subr.bf16.mxu0 0
        %5285 = vmatpush1.bf16.msra.mxu0 %v5036
        %5286 = vmatprep.subr.bf16.mxu0 0
        %5287 = vmatpush1.bf16.msra.mxu0 %v5037
        %5288 = vmatprep.subr.bf16.mxu0 0
        %5289 = vmatpush1.bf16.msra.mxu0 %v5038
        %5290 = vmatprep.subr.bf16.mxu0 0
        %5291 = vmatpush1.bf16.msra.mxu0 %v5039
        %5292 = vmatprep.subr.bf16.mxu0 0
        %5293 = vmatpush1.bf16.msra.mxu0 %v5040
        %5294 = vmatprep.subr.bf16.mxu0 0
        %5295 = vmatpush1.bf16.msra.mxu0 %v5041
        %5296 = vmatprep.subr.bf16.mxu0 0
        %5297 = vmatpush1.bf16.msra.mxu0 %v5042
        %5298 = vmatprep.subr.bf16.mxu0 0
        %5299 = vmatpush1.bf16.msra.mxu0 %v5043
        %5300 = vmatprep.subr.bf16.mxu0 0
        %5301 = vmatpush1.bf16.msra.mxu0 %v5044
        %5302 = vmatprep.subr.bf16.mxu0 0
        %5303 = vmatpush1.bf16.msra.mxu0 %v5045
        %5304 = vmatprep.mubr.bf16.mxu0 %v4433
        %5305 = vmatmul.mubr.bf16.gmra.mrb[0].mxu0 %v4410
        %v5306 = vpop.f32.mrb[0].mxu0
        %v5307 = vadd.f32 %v5242, %v5306
        %v5308 = vpop.f32.mrb[0].mxu0
        %v5309 = vpop.f32.mrb[0].mxu0
        %v5310 = vadd.f32 %v5245, %v5309
        %v5311 = vpop.f32.mrb[0].mxu0
        %5312 = vmatprep.mubr.bf16.mxu0 %v4437
        %5313 = vmatmul.mubr.bf16.gmra.mrb[0].mxu0 %v4412
        %v5314 = vpop.f32.mrb[0].mxu0
        %v5315 = vadd.f32 %v5250, %v5314
        %v5316 = vpop.f32.mrb[0].mxu0
        %v5317 = vpop.f32.mrb[0].mxu0
        %v5318 = vadd.f32 %v5253, %v5317
        %v5319 = vpop.f32.mrb[0].mxu0
        %5320 = vmatprep.mubr.bf16.mxu0 %v4441
        %5321 = vmatmul.mubr.bf16.gmra.mrb[0].mxu0 %v4414
        %v5322 = vpop.f32.mrb[0].mxu0
        %v5323 = vadd.f32 %v5258, %v5322
        %v5324 = vpop.f32.mrb[0].mxu0
        %v5325 = vpop.f32.mrb[0].mxu0
        %v5326 = vadd.f32 %v5261, %v5325
        %v5327 = vpop.f32.mrb[0].mxu0
        %5328 = vmatprep.mubr.bf16.mxu0 %v4450
        %5329 = vmatmul.mubr.bf16.gmra.mrb[0].mxu0 %v4416
        %v5330 = vpop.f32.mrb[0].mxu0
        %v5331 = vadd.f32 %v5266, %v5330
        %v5332 = vpop.f32.mrb[0].mxu0
        %v5333 = vpop.f32.mrb[0].mxu0
        %v5334 = vadd.f32 %v5269, %v5333
        %v5335 = vpop.f32.mrb[0].mxu0
        %5336 = vdwg.mxu0
        %5337 = vmatprep.subr.bf16.mxu0 0
        %5338 = vmatpush1.bf16.msra.mxu0 %v5046
        %5339 = vmatprep.subr.bf16.mxu0 0
        %5340 = vmatpush1.bf16.msra.mxu0 %v5047
        %5341 = vmatprep.subr.bf16.mxu0 0
        %5342 = vmatpush1.bf16.msra.mxu0 %v5048
        %5343 = vmatprep.subr.bf16.mxu0 0
        %5344 = vmatpush1.bf16.msra.mxu0 %v5049
        %5345 = vmatprep.subr.bf16.mxu0 0
        %5346 = vmatpush1.bf16.msra.mxu0 %v5050
        %5347 = vmatprep.subr.bf16.mxu0 0
        %5348 = vmatpush1.bf16.msra.mxu0 %v5051
        %5349 = vmatprep.subr.bf16.mxu0 0
        %5350 = vmatpush1.bf16.msra.mxu0 %v5052
        %5351 = vmatprep.subr.bf16.mxu0 0
        %5352 = vmatpush1.bf16.msra.mxu0 %v5053
        %5353 = vmatprep.subr.bf16.mxu0 0
        %5354 = vmatpush1.bf16.msra.mxu0 %v5054
        %5355 = vmatprep.subr.bf16.mxu0 0
        %5356 = vmatpush1.bf16.msra.mxu0 %v5055
        %5357 = vmatprep.subr.bf16.mxu0 0
        %5358 = vmatpush1.bf16.msra.mxu0 %v5056
        %5359 = vmatprep.subr.bf16.mxu0 0
        %5360 = vmatpush1.bf16.msra.mxu0 %v5057
        %5361 = vmatprep.subr.bf16.mxu0 0
        %5362 = vmatpush1.bf16.msra.mxu0 %v5058
        %5363 = vmatprep.subr.bf16.mxu0 0
        %5364 = vmatpush1.bf16.msra.mxu0 %v5059
        %5365 = vmatprep.subr.bf16.mxu0 0
        %5366 = vmatpush1.bf16.msra.mxu0 %v5060
        %5367 = vmatprep.subr.bf16.mxu0 0
        %5368 = vmatpush1.bf16.msra.mxu0 %v5061
        %5369 = vmatprep.mubr.bf16.mxu0 %v4507
        %5370 = vmatmul.mubr.bf16.gmra.mrb[0].mxu0 %v4480
        %v5371 = vpop.f32.mrb[0].mxu0
        %v5372 = vadd.f32 %v5307, %v5371
        %v5373 = vpop.f32.mrb[0].mxu0
        %v5374 = vpop.f32.mrb[0].mxu0
        %v5375 = vadd.f32 %v5310, %v5374
        %v5376 = vpop.f32.mrb[0].mxu0
        %5377 = vmatprep.mubr.bf16.mxu0 %v4516
        %5378 = vmatmul.mubr.bf16.gmra.mrb[0].mxu0 %v4482
        %v5379 = vpop.f32.mrb[0].mxu0
        %v5380 = vadd.f32 %v5315, %v5379
        %v5381 = vpop.f32.mrb[0].mxu0
        %v5382 = vpop.f32.mrb[0].mxu0
        %v5383 = vadd.f32 %v5318, %v5382
        %v5384 = vpop.f32.mrb[0].mxu0
        %5385 = vmatprep.mubr.bf16.mxu0 %v4525
        %5386 = vmatmul.mubr.bf16.gmra.mrb[0].mxu0 %v4484
        %v5387 = vpop.f32.mrb[0].mxu0
        %v5388 = vadd.f32 %v5323, %v5387
        %v5389 = vpop.f32.mrb[0].mxu0
        %v5390 = vpop.f32.mrb[0].mxu0
        %v5391 = vadd.f32 %v5326, %v5390
        %v5392 = vpop.f32.mrb[0].mxu0
        %5393 = vmatprep.mubr.bf16.mxu0 %v4534
        %5394 = vmatmul.mubr.bf16.gmra.mrb[0].mxu0 %v4486
        %v5395 = vpop.f32.mrb[0].mxu0
        %v5396 = vadd.f32 %v5331, %v5395
        %v5397 = vpop.f32.mrb[0].mxu0
        %v5398 = vpop.f32.mrb[0].mxu0
        %v5399 = vadd.f32 %v5334, %v5398
        %v5400 = vpop.f32.mrb[0].mxu0
        %5401 = vdwg.mxu0
        %5402 = vmatprep.subr.bf16.mxu0 0
        %5403 = vmatpush1.bf16.msra.mxu0 %v5062
        %5404 = vmatprep.subr.bf16.mxu0 0
        %5405 = vmatpush1.bf16.msra.mxu0 %v5063
        %5406 = vmatprep.subr.bf16.mxu0 0
        %5407 = vmatpush1.bf16.msra.mxu0 %v5064
        %5408 = vmatprep.subr.bf16.mxu0 0
        %5409 = vmatpush1.bf16.msra.mxu0 %v5065
        %5410 = vmatprep.subr.bf16.mxu0 0
        %5411 = vmatpush1.bf16.msra.mxu0 %v5066
        %5412 = vmatprep.subr.bf16.mxu0 0
        %5413 = vmatpush1.bf16.msra.mxu0 %v5067
        %5414 = vmatprep.subr.bf16.mxu0 0
        %5415 = vmatpush1.bf16.msra.mxu0 %v5068
        %5416 = vmatprep.subr.bf16.mxu0 0
        %5417 = vmatpush1.bf16.msra.mxu0 %v5069
        %5418 = vmatprep.subr.bf16.mxu0 0
        %5419 = vmatpush1.bf16.msra.mxu0 0
        %5420 = vmatprep.subr.bf16.mxu0 0
        %5421 = vmatpush1.bf16.msra.mxu0 0
        %5422 = vmatprep.subr.bf16.mxu0 0
        %5423 = vmatpush1.bf16.msra.mxu0 0
        %5424 = vmatprep.subr.bf16.mxu0 0
        %5425 = vmatpush1.bf16.msra.mxu0 0
        %5426 = vmatprep.subr.bf16.mxu0 0
        %5427 = vmatpush1.bf16.msra.mxu0 0
        %5428 = vmatprep.subr.bf16.mxu0 0
        %5429 = vmatpush1.bf16.msra.mxu0 0
        %5430 = vmatprep.subr.bf16.mxu0 0
        %5431 = vmatpush1.bf16.msra.mxu0 0
        %5432 = vmatprep.subr.bf16.mxu0 0
        %5433 = vmatpush1.bf16.msra.mxu0 0
        %5434 = vmatprep.mubr.bf16.mxu0 0
        %5435 = vmatmul.mubr.bf16.gmra.mrb[0].mxu0 %v4548
        %v5436 = vpop.f32.mrb[0].mxu0
        %v5437 = vadd.f32 %v5372, %v5436
        %v5438 = vpop.f32.mrb[0].mxu0
        %v5439 = vpop.f32.mrb[0].mxu0
        %v5440 = vadd.f32 %v5375, %v5439
        %v5441 = vpop.f32.mrb[0].mxu0
        %5442 = vmatprep.mubr.bf16.mxu0 0
        %5443 = vmatmul.mubr.bf16.gmra.mrb[0].mxu0 %v4550
        %v5444 = vpop.f32.mrb[0].mxu0
        %v5445 = vadd.f32 %v5380, %v5444
        %v5446 = vpop.f32.mrb[0].mxu0
        %v5447 = vpop.f32.mrb[0].mxu0
        %v5448 = vadd.f32 %v5383, %v5447
        %v5449 = vpop.f32.mrb[0].mxu0
        %5450 = vmatprep.mubr.bf16.mxu0 0
        %5451 = vmatmul.mubr.bf16.gmra.mrb[0].mxu0 %v4552
        %v5452 = vpop.f32.mrb[0].mxu0
        %v5453 = vadd.f32 %v5388, %v5452
        %v5454 = vpop.f32.mrb[0].mxu0
        %v5455 = vpop.f32.mrb[0].mxu0
        %v5456 = vadd.f32 %v5391, %v5455
        %v5457 = vpop.f32.mrb[0].mxu0
        %5458 = vmatprep.mubr.bf16.mxu0 0
        %5459 = vmatmul.mubr.bf16.gmra.mrb[0].mxu0 %v4554
        %v5460 = vpop.f32.mrb[0].mxu0
        %v5461 = vadd.f32 %v5396, %v5460
        %v5462 = vpop.f32.mrb[0].mxu0
        %v5463 = vpop.f32.mrb[0].mxu0
        %v5464 = vadd.f32 %v5399, %v5463
        %v5465 = vpop.f32.mrb[0].mxu0
        %5466 = vdwg.mxu0
        %5467 = vst [vmem:[#allocation6] sm:$0xff] %v5437
        %5468 = vst [vmem:[#allocation6 + $0x8] sm:$0xff] %v5440
        %5469 = vst [vmem:[#allocation6 + $0x10] sm:$0xff] %v5445
        %5470 = vst [vmem:[#allocation6 + $0x18] sm:$0xff] %v5448
        %5471 = vst [vmem:[#allocation6 + $0x20] sm:$0xff] %v5453
        %5472 = vst [vmem:[#allocation6 + $0x28] sm:$0xff] %v5456
        %5473 = vst [vmem:[#allocation6 + $0x30] sm:$0xff] %v5461
        %5474 = vst [vmem:[#allocation6 + $0x38] sm:$0x7f] %v5464
        %v5475 = vld [vmem:[#allocation6] sm:$0x7f]
        %v5476 = vpack.c.bf16 %v5475, %v5475
        %v5478 = vshrl.u32 %v5476, 16
        %v5480 = vrot.slane %v5478, 7
        %v5481 = vshll.u32 %v5476, 16
        %v5483 = vor.u32 %v5480, %v5481
        %v5486 = vrot.slane %v5476, 7
        %v5487 = vsel %vm1557, %v5476, %v5483
        %v5490 = vsel %vm981, %v5487, %v5486
        %v5492 = vunpack.c.l.b16 %v5490
        %v5493 = vunpack.c.h.b16 %v5490
        %v5494 = vpack.c.b16 %v5492, %v5492
        %v5495 = vpack.c.b16 %v5493, %v5493
        %v5497 = vshrl.u32 %v5494, 16
        %v5499 = vrot.slane %v5497, 7
        %v5500 = vshll.u32 %v5494, 16
        %v5502 = vor.u32 %v5499, %v5500
        %v5503 = vrot.slane %v5499, 4
        %v5505 = vshll.u32 %v5495, 16
        %v5507 = vsel %vm3908, %v5503, %v5505
        %v5510 = vld [vmem:[#allocation7 + $0x4] sm:$0xf]
        %v5511 = vsel %vm3925, %v5502, %v5510
        %5512 = vst [vmem:[#allocation7 + $0x4] sm:$0xf] %v5511
        %5513 = vst [vmem:[#allocation7 + $0x8] sm:$0x1] %v5507
        %5516 = vst [vmem:[#allocation7] sm:$0xf] %v5494
        %v5517 = vld [vmem:[#allocation7 + $0x4] sm:$0x1]
        %v5518 = vsel %vm1557, %v5495, %v5517
        %5519 = vst [vmem:[#allocation7 + $0x4] sm:$0x1] %v5518
        %v5520 = vld [vmem:[#allocation6 + $0x9] sm:$0x7f]
        %v5521 = vpack.c.bf16 %v5520, %v5520
        %v5523 = vshrl.u32 %v5521, 16
        %v5525 = vrot.slane %v5523, 7
        %v5526 = vshll.u32 %v5521, 16
        %v5528 = vor.u32 %v5525, %v5526
        %v5531 = vrot.slane %v5521, 7
        %v5532 = vsel %vm1557, %v5521, %v5528
        %v5535 = vsel %vm981, %v5532, %v5531
        %v5537 = vunpack.c.l.b16 %v5535
        %v5538 = vunpack.c.h.b16 %v5535
        %v5539 = vpack.c.b16 %v5537, %v5537
        %v5540 = vpack.c.b16 %v5538, %v5538
        %v5541 = vrot.slane %v5539, 7
        %v5542 = vrot.slane %v5541, 4
        %v5543 = vrot.slane %v5540, 7
        %v5544 = vsel %vm3970, %v5542, %v5543
        %5547 = vst [vmem:[#allocation7 + $0x8] sm:$0xe] %v5541
        %v5548 = vld [vmem:[#allocation7 + $0xc] sm:$0x3]
        %v5549 = vsel %vm3980, %v5544, %v5548
        %5550 = vst [vmem:[#allocation7 + $0xc] sm:$0x3] %v5549
        %v5551 = vld [vmem:[#allocation6 + $0x12] sm:$0x7f]
        %v5552 = vpack.c.bf16 %v5551, %v5551
        %v5554 = vshrl.u32 %v5552, 16
        %v5556 = vrot.slane %v5554, 7
        %v5557 = vshll.u32 %v5552, 16
        %v5559 = vor.u32 %v5556, %v5557
        %v5562 = vrot.slane %v5552, 7
        %v5563 = vsel %vm1557, %v5552, %v5559
        %v5566 = vsel %vm981, %v5563, %v5562
        %v5568 = vunpack.c.l.b16 %v5566
        %v5569 = vunpack.c.h.b16 %v5566
        %v5570 = vpack.c.b16 %v5568, %v5568
        %v5571 = vpack.c.b16 %v5569, %v5569
        %v5573 = vshrl.u32 %v5570, 16
        %v5575 = vrot.slane %v5573, 6
        %v5576 = vshll.u32 %v5570, 16
        %v5578 = vrot.slane %v5576, 7
        %v5579 = vor.u32 %v5575, %v5578
        %v5580 = vrot.slane %v5579, 4
        %v5582 = vshll.u32 %v5571, 16
        %v5584 = vrot.slane %v5582, 7
        %v5585 = vsel %vm4018, %v5580, %v5584
        %v5588 = vld [vmem:[#allocation7 + $0xc] sm:$0xe]
        %v5589 = vsel %vm4037, %v5579, %v5588
        %5590 = vst [vmem:[#allocation7 + $0xc] sm:$0xe] %v5589
        %5591 = vst [vmem:[#allocation7 + $0x10] sm:$0x3] %v5585
        %v5592 = vld [vmem:[#allocation6 + $0x1b] sm:$0x7f]
        %v5593 = vpack.c.bf16 %v5592, %v5592
        %v5595 = vshrl.u32 %v5593, 16
        %v5597 = vrot.slane %v5595, 7
        %v5598 = vshll.u32 %v5593, 16
        %v5600 = vor.u32 %v5597, %v5598
        %v5603 = vrot.slane %v5593, 7
        %v5604 = vsel %vm1557, %v5593, %v5600
        %v5607 = vsel %vm981, %v5604, %v5603
        %v5609 = vunpack.c.l.b16 %v5607
        %v5610 = vunpack.c.h.b16 %v5607
        %v5611 = vpack.c.b16 %v5609, %v5609
        %v5612 = vpack.c.b16 %v5610, %v5610
        %v5613 = vrot.slane %v5611, 6
        %v5614 = vrot.slane %v5613, 4
        %v5615 = vrot.slane %v5612, 6
        %v5616 = vsel %vm4076, %v5614, %v5615
        %5619 = vst [vmem:[#allocation7 + $0x10] sm:$0xc] %v5613
        %v5620 = vld [vmem:[#allocation7 + $0x14] sm:$0x7]
        %v5621 = vsel %vm4086, %v5616, %v5620
        %5622 = vst [vmem:[#allocation7 + $0x14] sm:$0x7] %v5621
        %v5623 = vld [vmem:[#allocation6 + $0x24] sm:$0x7f]
        %v5624 = vpack.c.bf16 %v5623, %v5623
        %v5626 = vshrl.u32 %v5624, 16
        %v5628 = vrot.slane %v5626, 7
        %v5629 = vshll.u32 %v5624, 16
        %v5631 = vor.u32 %v5628, %v5629
        %v5634 = vrot.slane %v5624, 7
        %v5635 = vsel %vm1557, %v5624, %v5631
        %v5638 = vsel %vm981, %v5635, %v5634
        %v5640 = vunpack.c.l.b16 %v5638
        %v5641 = vunpack.c.h.b16 %v5638
        %v5642 = vpack.c.b16 %v5640, %v5640
        %v5643 = vpack.c.b16 %v5641, %v5641
        %v5645 = vshrl.u32 %v5642, 16
        %v5647 = vrot.slane %v5645, 5
        %v5648 = vshll.u32 %v5642, 16
        %v5650 = vrot.slane %v5648, 6
        %v5651 = vor.u32 %v5647, %v5650
        %v5652 = vrot.slane %v5651, 4
        %v5654 = vshll.u32 %v5643, 16
        %v5656 = vrot.slane %v5654, 6
        %v5657 = vsel %vm4124, %v5652, %v5656
        %v5660 = vld [vmem:[#allocation7 + $0x14] sm:$0xc]
        %v5661 = vsel %vm4143, %v5651, %v5660
        %5662 = vst [vmem:[#allocation7 + $0x14] sm:$0xc] %v5661
        %5663 = vst [vmem:[#allocation7 + $0x18] sm:$0x7] %v5657
        %v5664 = vld [vmem:[#allocation6 + $0x2d] sm:$0x7f]
        %v5665 = vpack.c.bf16 %v5664, %v5664
        %v5667 = vshrl.u32 %v5665, 16
        %v5669 = vrot.slane %v5667, 7
        %v5670 = vshll.u32 %v5665, 16
        %v5672 = vor.u32 %v5669, %v5670
        %v5675 = vrot.slane %v5665, 7
        %v5676 = vsel %vm1557, %v5665, %v5672
        %v5679 = vsel %vm981, %v5676, %v5675
        %v5681 = vunpack.c.l.b16 %v5679
        %v5682 = vunpack.c.h.b16 %v5679
        %v5683 = vpack.c.b16 %v5681, %v5681
        %v5684 = vpack.c.b16 %v5682, %v5682
        %v5685 = vrot.slane %v5683, 5
        %v5686 = vrot.slane %v5685, 4
        %v5687 = vrot.slane %v5684, 5
        %v5688 = vsel %vm4182, %v5686, %v5687
        %5691 = vst [vmem:[#allocation7 + $0x18] sm:$0x8] %v5685
        %v5692 = vld [vmem:[#allocation7 + $0x1c] sm:$0xf]
        %v5693 = vsel %vm4191, %v5688, %v5692
        %5694 = vst [vmem:[#allocation7 + $0x1c] sm:$0xf] %v5693
        %v5695 = vld [vmem:[#allocation6 + $0x36] sm:$0x7f]
        %v5696 = vpack.c.bf16 %v5695, %v5695
        %v5698 = vshrl.u32 %v5696, 16
        %v5700 = vrot.slane %v5698, 7
        %v5701 = vshll.u32 %v5696, 16
        %v5703 = vor.u32 %v5700, %v5701
        %v5706 = vrot.slane %v5696, 7
        %v5707 = vsel %vm1557, %v5696, %v5703
        %v5710 = vsel %vm981, %v5707, %v5706
        %v5712 = vunpack.c.l.b16 %v5710
        %v5713 = vunpack.c.h.b16 %v5710
        %v5714 = vpack.c.b16 %v5712, %v5712
        %v5715 = vpack.c.b16 %v5713, %v5713
        %v5717 = vshll.u32 %v5714, 16
        %v5719 = vrot.slane %v5717, 5
        %v5720 = vshrl.u32 %v5714, 16
        %v5722 = vrot.slane %v5720, 4
        %v5723 = vor.u32 %v5722, %v5719
        %v5724 = vrot.slane %v5723, 4
        %v5726 = vshll.u32 %v5715, 16
        %v5728 = vrot.slane %v5726, 5
        %v5729 = vsel %vm4229, %v5724, %v5728
        %v5732 = vld [vmem:[#allocation7 + $0x1c] sm:$0x8]
        %v5733 = vsel %vm4248, %v5719, %v5732
        %5734 = vst [vmem:[#allocation7 + $0x1c] sm:$0x8] %v5733
        %5735 = vst [vmem:[#allocation7 + $0x20] sm:$0xf] %v5729
        %5738 = vst [vmem:[#allocation7 + $0x24] sm:$0xf] %v5714
        %v5739 = vld [vmem:[#allocation7 + $0x28] sm:$0x1]
        %v5740 = vsel %vm1557, %v5715, %v5739
        %5741 = vst [vmem:[#allocation7 + $0x28] sm:$0x1] %v5740
        %v5742 = vld [vmem:[#allocation7] sm:$0xf]
        %v5743 = vld [vmem:[#allocation7 + $0x4] sm:$0xf]
        %v5744 = vld [vmem:[#allocation7 + $0x8] sm:$0xf]
        %v5745 = vld [vmem:[#allocation7 + $0xc] sm:$0xf]
        %v5746 = vld [vmem:[#allocation7 + $0x10] sm:$0xf]
        %v5747 = vld [vmem:[#allocation7 + $0x14] sm:$0xf]
        %v5748 = vld [vmem:[#allocation7 + $0x18] sm:$0xf]
        %v5749 = vld [vmem:[#allocation7 + $0x1c] sm:$0xf]
        %v5750 = vld [vmem:[#allocation7] sm:$0xe]
        %v5751 = vld [vmem:[#allocation7 + $0x20] sm:$0x1]
        %v5752 = vld [vmem:[#allocation7 + $0x20] sm:$0xf]
        %v5753 = vld [vmem:[#allocation7 + $0x4] sm:$0xe]
        %v5754 = vld [vmem:[#allocation7 + $0x24] sm:$0x1]
        %v5755 = vld [vmem:[#allocation7 + $0x8] sm:$0xe]
        %v5756 = vld [vmem:[#allocation7 + $0xc] sm:$0xf]
        %v5757 = vld [vmem:[#allocation7 + $0x10] sm:$0xf]
        %v5758 = vld [vmem:[#allocation7 + $0x14] sm:$0xf]
        %v5759 = vld [vmem:[#allocation7 + $0x18] sm:$0xf]
        %v5760 = vld [vmem:[#allocation7 + $0x1c] sm:$0xf]
        %v5761 = vld [vmem:[#allocation7 + $0x20] sm:$0xf]
        %v5762 = vld [vmem:[#allocation7 + $0x24] sm:$0xf]
        %v5763 = vld [vmem:[#allocation7 + $0x28] sm:$0x1]
        %v5764 = vld [vmem:[#allocation7 + $0x8] sm:$0xc]
        %v5765 = vld [vmem:[#allocation7 + $0x28] sm:$0x3]
        %v5774 = vunpack.c.l.b16 %v5742
        %v5775 = vunpack.c.l.b16 %v5743
        %v5776 = vunpack.c.l.b16 %v5744
        %v5777 = vunpack.c.l.b16 %v5745
        %v5778 = vunpack.c.l.b16 %v5746
        %v5779 = vunpack.c.l.b16 %v5747
        %v5780 = vunpack.c.l.b16 %v5748
        %v5781 = vunpack.c.l.b16 %v5749
        %v5782 = vpack.c.b16 %v5775, %v5774
        %v5783 = vpack.c.b16 %v5777, %v5776
        %v5784 = vpack.c.b16 %v5779, %v5778
        %v5785 = vpack.c.b16 %v5781, %v5780
        %v5791 = vshrl.u32 %v5782, 16
        %v5793 = vshll.u32 %v5782, 16
        %v5795 = vrot.slane %v5793, 1
        %v5796 = vor.u32 %v5791, %v5795
        %v5798 = vshll.u32 %v5783, 16
        %v5800 = vrot.slane %v5798, 1
        %v5801 = vsel %vm1560, %v5796, %v5800
        %v5802 = vshrl.u32 %v5783, 16
        %v5804 = vor.u32 %v5802, %v5800
        %v5806 = vshll.u32 %v5784, 16
        %v5808 = vrot.slane %v5806, 1
        %v5809 = vsel %vm1560, %v5804, %v5808
        %v5810 = vshrl.u32 %v5784, 16
        %v5812 = vor.u32 %v5810, %v5808
        %v5814 = vshll.u32 %v5785, 16
        %v5816 = vrot.slane %v5814, 1
        %v5817 = vsel %vm1560, %v5812, %v5816
        %v5818 = vshrl.u32 %v5785, 16
        %v5820 = vor.u32 %v5818, %v5816
        %v5827 = vunpack.c.l.b16 %v5750
        %v5828 = vunpack.c.l.b16 %v5751
        %v5829 = vpack.c.b16 %v5775, %v5827
        %v5830 = vpack.c.b16 %v5828, %v5828
        %v5831 = vrot.slane %v5829, 1
        %v5832 = vrot.slane %v5783, 1
        %v5833 = vsel %vm2280, %v5831, %v5832
        %v5834 = vrot.slane %v5784, 1
        %v5835 = vsel %vm2280, %v5832, %v5834
        %v5836 = vrot.slane %v5785, 1
        %v5837 = vsel %vm2280, %v5834, %v5836
        %v5838 = vrot.slane %v5830, 1
        %v5839 = vsel %vm2280, %v5836, %v5838
        %v5845 = vunpack.c.l.b16 %v5752
        %v5846 = vpack.c.b16 %v5776, %v5775
        %v5847 = vpack.c.b16 %v5778, %v5777
        %v5848 = vpack.c.b16 %v5780, %v5779
        %v5849 = vpack.c.b16 %v5845, %v5781
        %v5851 = vshrl.u32 %v5846, 16
        %v5853 = vshll.u32 %v5846, 16
        %v5855 = vrot.slane %v5853, 1
        %v5856 = vor.u32 %v5851, %v5855
        %v5858 = vshll.u32 %v5847, 16
        %v5860 = vrot.slane %v5858, 1
        %v5861 = vsel %vm1560, %v5856, %v5860
        %v5862 = vshrl.u32 %v5847, 16
        %v5864 = vor.u32 %v5862, %v5860
        %v5866 = vshll.u32 %v5848, 16
        %v5868 = vrot.slane %v5866, 1
        %v5869 = vsel %vm1560, %v5864, %v5868
        %v5870 = vshrl.u32 %v5848, 16
        %v5872 = vor.u32 %v5870, %v5868
        %v5874 = vshll.u32 %v5849, 16
        %v5876 = vrot.slane %v5874, 1
        %v5877 = vsel %vm1560, %v5872, %v5876
        %v5878 = vshrl.u32 %v5849, 16
        %v5880 = vor.u32 %v5878, %v5876
        %v5887 = vunpack.c.l.b16 %v5753
        %v5888 = vunpack.c.l.b16 %v5754
        %v5889 = vpack.c.b16 %v5776, %v5887
        %v5890 = vpack.c.b16 %v5888, %v5888
        %v5891 = vrot.slane %v5889, 1
        %v5892 = vrot.slane %v5847, 1
        %v5893 = vsel %vm2280, %v5891, %v5892
        %v5894 = vrot.slane %v5848, 1
        %v5895 = vsel %vm2280, %v5892, %v5894
        %v5896 = vrot.slane %v5849, 1
        %v5897 = vsel %vm2280, %v5894, %v5896
        %v5898 = vrot.slane %v5890, 1
        %v5899 = vsel %vm2280, %v5896, %v5898
        %v5905 = vshrl.u32 %v5889, 16
        %v5907 = vrot.slane %v5905, 1
        %v5908 = vshll.u32 %v5889, 16
        %v5910 = vrot.slane %v5908, 2
        %v5911 = vor.u32 %v5907, %v5910
        %v5912 = vrot.slane %v5862, 1
        %v5913 = vrot.slane %v5858, 2
        %v5914 = vor.u32 %v5912, %v5913
        %v5915 = vsel %vm4421, %v5911, %v5914
        %v5916 = vrot.slane %v5870, 1
        %v5917 = vrot.slane %v5866, 2
        %v5918 = vor.u32 %v5916, %v5917
        %v5919 = vsel %vm4421, %v5914, %v5918
        %v5920 = vrot.slane %v5878, 1
        %v5921 = vrot.slane %v5874, 2
        %v5922 = vor.u32 %v5920, %v5921
        %v5923 = vsel %vm4421, %v5918, %v5922
        %v5925 = vshrl.u32 %v5890, 16
        %v5927 = vrot.slane %v5925, 1
        %v5928 = vshll.u32 %v5890, 16
        %v5930 = vrot.slane %v5928, 2
        %v5931 = vor.u32 %v5927, %v5930
        %v5932 = vsel %vm4421, %v5922, %v5931
        %v5946 = vunpack.c.l.b16 %v5755
        %v5947 = vunpack.c.l.b16 %v5756
        %v5948 = vunpack.c.l.b16 %v5757
        %v5949 = vunpack.c.l.b16 %v5758
        %v5950 = vunpack.c.l.b16 %v5759
        %v5951 = vunpack.c.l.b16 %v5760
        %v5952 = vunpack.c.l.b16 %v5761
        %v5953 = vunpack.c.l.b16 %v5762
        %v5954 = vunpack.c.l.b16 %v5763
        %v5955 = vpack.c.b16 %v5947, %v5946
        %v5956 = vpack.c.b16 %v5949, %v5948
        %v5957 = vpack.c.b16 %v5951, %v5950
        %v5958 = vpack.c.b16 %v5953, %v5952
        %v5959 = vpack.c.b16 %v5954, %v5954
        %v5960 = vrot.slane %v5955, 1
        %v5961 = vrot.slane %v5956, 1
        %v5962 = vsel %vm2280, %v5960, %v5961
        %v5963 = vrot.slane %v5957, 1
        %v5964 = vsel %vm2280, %v5961, %v5963
        %v5965 = vrot.slane %v5958, 1
        %v5966 = vsel %vm2280, %v5963, %v5965
        %v5967 = vrot.slane %v5959, 1
        %v5968 = vsel %vm2280, %v5965, %v5967
        %v5974 = vshrl.u32 %v5955, 16
        %v5976 = vrot.slane %v5974, 1
        %v5977 = vshll.u32 %v5955, 16
        %v5979 = vrot.slane %v5977, 2
        %v5980 = vor.u32 %v5976, %v5979
        %v5982 = vshrl.u32 %v5956, 16
        %v5984 = vrot.slane %v5982, 1
        %v5985 = vshll.u32 %v5956, 16
        %v5987 = vrot.slane %v5985, 2
        %v5988 = vor.u32 %v5984, %v5987
        %v5989 = vsel %vm4421, %v5980, %v5988
        %v5991 = vshrl.u32 %v5957, 16
        %v5993 = vrot.slane %v5991, 1
        %v5994 = vshll.u32 %v5957, 16
        %v5996 = vrot.slane %v5994, 2
        %v5997 = vor.u32 %v5993, %v5996
        %v5998 = vsel %vm4421, %v5988, %v5997
        %v6000 = vshrl.u32 %v5958, 16
        %v6002 = vrot.slane %v6000, 1
        %v6003 = vshll.u32 %v5958, 16
        %v6005 = vrot.slane %v6003, 2
        %v6006 = vor.u32 %v6002, %v6005
        %v6007 = vsel %vm4421, %v5997, %v6006
        %v6009 = vshrl.u32 %v5959, 16
        %v6011 = vrot.slane %v6009, 1
        %v6012 = vshll.u32 %v5959, 16
        %v6014 = vrot.slane %v6012, 2
        %v6015 = vor.u32 %v6011, %v6014
        %v6016 = vsel %vm4421, %v6006, %v6015
        %v6023 = vunpack.c.l.b16 %v5764
        %v6024 = vunpack.c.l.b16 %v5765
        %v6025 = vpack.c.b16 %v5947, %v6023
        %v6026 = vpack.c.b16 %v6024, %v6024
        %v6027 = vrot.slane %v6025, 2
        %v6028 = vrot.slane %v5956, 2
        %v6029 = vsel %vm4545, %v6027, %v6028
        %v6030 = vrot.slane %v5957, 2
        %v6031 = vsel %vm4545, %v6028, %v6030
        %v6032 = vrot.slane %v5958, 2
        %v6033 = vsel %vm4545, %v6030, %v6032
        %v6034 = vrot.slane %v6026, 2
        %v6035 = vsel %vm4545, %v6032, %v6034
        %v6040 = vld [vmem:[#allocation14] sm:$0xf]
        %v6041 = vld [vmem:[#allocation14 + $0x4] sm:$0xf]
        %v6042 = vld [vmem:[#allocation14 + $0x8] sm:$0xf]
        %v6043 = vld [vmem:[#allocation14 + $0xc] sm:$0xf]
        %v6044 = vld [vmem:[#allocation14 + $0x10] sm:$0xf]
        %v6045 = vld [vmem:[#allocation14 + $0x14] sm:$0xf]
        %v6046 = vld [vmem:[#allocation14 + $0x18] sm:$0xf]
        %v6047 = vld [vmem:[#allocation14 + $0x1c] sm:$0xf]
        %v6048 = vld [vmem:[#allocation14 + $0x20] sm:$0xf]
        %v6049 = vld [vmem:[#allocation14 + $0x24] sm:$0xf]
        %v6050 = vld [vmem:[#allocation14 + $0x28] sm:$0xf]
        %v6051 = vld [vmem:[#allocation14 + $0x2c] sm:$0xf]
        %v6052 = vld [vmem:[#allocation14 + $0x30] sm:$0xf]
        %v6053 = vld [vmem:[#allocation14 + $0x34] sm:$0xf]
        %v6054 = vld [vmem:[#allocation14 + $0x38] sm:$0xf]
        %v6055 = vld [vmem:[#allocation14 + $0x3c] sm:$0xf]
        %v6056 = vld [vmem:[#allocation14 + $0x40] sm:$0xf]
        %v6057 = vld [vmem:[#allocation14 + $0x44] sm:$0xf]
        %v6058 = vld [vmem:[#allocation14 + $0x48] sm:$0xf]
        %v6059 = vld [vmem:[#allocation14 + $0x4c] sm:$0xf]
        %v6060 = vld [vmem:[#allocation14 + $0x50] sm:$0xf]
        %v6061 = vld [vmem:[#allocation14 + $0x54] sm:$0xf]
        %v6062 = vld [vmem:[#allocation14 + $0x58] sm:$0xf]
        %v6063 = vld [vmem:[#allocation14 + $0x5c] sm:$0xf]
        %v6064 = vld [vmem:[#allocation14 + $0x60] sm:$0xf]
        %v6065 = vld [vmem:[#allocation14 + $0x64] sm:$0xf]
        %v6066 = vld [vmem:[#allocation14 + $0x68] sm:$0xf]
        %v6067 = vld [vmem:[#allocation14 + $0x6c] sm:$0xf]
        %v6068 = vld [vmem:[#allocation14 + $0x70] sm:$0xf]
        %v6069 = vld [vmem:[#allocation14 + $0x74] sm:$0xf]
        %v6070 = vld [vmem:[#allocation14 + $0x78] sm:$0xf]
        %v6071 = vld [vmem:[#allocation14 + $0x7c] sm:$0xf]
        %v6072 = vld [vmem:[#allocation14 + $0x80] sm:$0xf]
        %v6073 = vld [vmem:[#allocation14 + $0x84] sm:$0xf]
        %v6074 = vld [vmem:[#allocation14 + $0x88] sm:$0xf]
        %v6075 = vld [vmem:[#allocation14 + $0x8c] sm:$0xf]
        %v6076 = vld [vmem:[#allocation14 + $0x90] sm:$0xf]
        %v6077 = vld [vmem:[#allocation14 + $0x94] sm:$0xf]
        %v6078 = vld [vmem:[#allocation14 + $0x98] sm:$0xf]
        %v6079 = vld [vmem:[#allocation14 + $0x9c] sm:$0xf]
        %v6080 = vld [vmem:[#allocation14 + $0xa0] sm:$0xf]
        %v6081 = vld [vmem:[#allocation14 + $0xa4] sm:$0xf]
        %v6082 = vld [vmem:[#allocation14 + $0xa8] sm:$0xf]
        %v6083 = vld [vmem:[#allocation14 + $0xac] sm:$0xf]
        %v6084 = vld [vmem:[#allocation14 + $0xb0] sm:$0xf]
        %v6085 = vld [vmem:[#allocation14 + $0xb4] sm:$0xf]
        %v6086 = vld [vmem:[#allocation14 + $0xb8] sm:$0xf]
        %v6087 = vld [vmem:[#allocation14 + $0xbc] sm:$0xf]
        %v6088 = vld [vmem:[#allocation14 + $0xc0] sm:$0xf]
        %v6089 = vld [vmem:[#allocation14 + $0xc4] sm:$0xf]
        %v6090 = vld [vmem:[#allocation14 + $0xc8] sm:$0xf]
        %v6091 = vld [vmem:[#allocation14 + $0xcc] sm:$0xf]
        %v6092 = vld [vmem:[#allocation14 + $0xd0] sm:$0xf]
        %v6093 = vld [vmem:[#allocation14 + $0xd4] sm:$0xf]
        %v6094 = vld [vmem:[#allocation14 + $0xd8] sm:$0xf]
        %v6095 = vld [vmem:[#allocation14 + $0xdc] sm:$0xf]
        %v6096 = vld [vmem:[#allocation14 + $0xe0] sm:$0xf]
        %v6097 = vld [vmem:[#allocation14 + $0xe4] sm:$0xf]
        %v6098 = vld [vmem:[#allocation14 + $0xe8] sm:$0xf]
        %v6099 = vld [vmem:[#allocation14 + $0xec] sm:$0xf]
        %v6100 = vld [vmem:[#allocation14 + $0xf0] sm:$0xf]
        %v6101 = vld [vmem:[#allocation14 + $0xf4] sm:$0xf]
        %v6102 = vld [vmem:[#allocation14 + $0xf8] sm:$0xf]
        %v6103 = vld [vmem:[#allocation14 + $0xfc] sm:$0xf]
        %v6104 = vld [vmem:[#allocation14 + $0x100] sm:$0xf]
        %v6105 = vld [vmem:[#allocation14 + $0x104] sm:$0xf]
        %v6106 = vld [vmem:[#allocation14 + $0x108] sm:$0xf]
        %v6107 = vld [vmem:[#allocation14 + $0x10c] sm:$0xf]
        %v6108 = vld [vmem:[#allocation14 + $0x110] sm:$0xf]
        %v6109 = vld [vmem:[#allocation14 + $0x114] sm:$0xf]
        %v6110 = vld [vmem:[#allocation14 + $0x118] sm:$0xf]
        %v6111 = vld [vmem:[#allocation14 + $0x11c] sm:$0xf]
        %v6112 = vld [vmem:[#allocation14 + $0x120] sm:$0xf]
        %v6113 = vld [vmem:[#allocation14 + $0x124] sm:$0xf]
        %v6114 = vld [vmem:[#allocation14 + $0x128] sm:$0xf]
        %v6115 = vld [vmem:[#allocation14 + $0x12c] sm:$0xf]
        %v6116 = vld [vmem:[#allocation14 + $0x130] sm:$0xf]
        %v6117 = vld [vmem:[#allocation14 + $0x134] sm:$0xf]
        %v6118 = vld [vmem:[#allocation14 + $0x138] sm:$0xf]
        %v6119 = vld [vmem:[#allocation14 + $0x13c] sm:$0xf]
        %v6120 = vld [vmem:[#allocation14 + $0x140] sm:$0xf]
        %v6121 = vld [vmem:[#allocation14 + $0x144] sm:$0xf]
        %v6122 = vld [vmem:[#allocation14 + $0x148] sm:$0xf]
        %v6123 = vld [vmem:[#allocation14 + $0x14c] sm:$0xf]
        %v6124 = vld [vmem:[#allocation14 + $0x150] sm:$0xf]
        %v6125 = vld [vmem:[#allocation14 + $0x154] sm:$0xf]
        %v6126 = vld [vmem:[#allocation14 + $0x158] sm:$0xf]
        %v6127 = vld [vmem:[#allocation14 + $0x15c] sm:$0xf]
        %v6128 = vld [vmem:[#allocation14 + $0x160] sm:$0xf]
        %v6129 = vld [vmem:[#allocation14 + $0x164] sm:$0xf]
        %v6130 = vld [vmem:[#allocation14 + $0x168] sm:$0xf]
        %v6131 = vld [vmem:[#allocation14 + $0x16c] sm:$0xf]
        %v6132 = vld [vmem:[#allocation14 + $0x170] sm:$0xf]
        %v6133 = vld [vmem:[#allocation14 + $0x174] sm:$0xf]
        %v6134 = vld [vmem:[#allocation14 + $0x178] sm:$0xf]
        %v6135 = vld [vmem:[#allocation14 + $0x17c] sm:$0xf]
        %v6136 = vld [vmem:[#allocation14 + $0x180] sm:$0xf]
        %v6137 = vld [vmem:[#allocation14 + $0x184] sm:$0xf]
        %v6138 = vld [vmem:[#allocation14 + $0x188] sm:$0xf]
        %v6139 = vld [vmem:[#allocation14 + $0x18c] sm:$0xf]
        %v6140 = vld [vmem:[#allocation14 + $0x190] sm:$0xf]
        %v6141 = vld [vmem:[#allocation14 + $0x194] sm:$0xf]
        %v6142 = vld [vmem:[#allocation14 + $0x198] sm:$0xf]
        %v6143 = vld [vmem:[#allocation14 + $0x19c] sm:$0xf]
        %v6144 = vld [vmem:[#allocation14 + $0x1a0] sm:$0xf]
        %v6145 = vld [vmem:[#allocation14 + $0x1a4] sm:$0xf]
        %v6146 = vld [vmem:[#allocation14 + $0x1a8] sm:$0xf]
        %v6147 = vld [vmem:[#allocation14 + $0x1ac] sm:$0xf]
        %v6148 = vld [vmem:[#allocation14 + $0x1b0] sm:$0xf]
        %v6149 = vld [vmem:[#allocation14 + $0x1b4] sm:$0xf]
        %v6150 = vld [vmem:[#allocation14 + $0x1b8] sm:$0xf]
        %v6151 = vld [vmem:[#allocation14 + $0x1bc] sm:$0xf]
        %v6152 = vld [vmem:[#allocation14 + $0x1c0] sm:$0xf]
        %v6153 = vld [vmem:[#allocation14 + $0x1c4] sm:$0xf]
        %v6154 = vld [vmem:[#allocation14 + $0x1c8] sm:$0xf]
        %v6155 = vld [vmem:[#allocation14 + $0x1cc] sm:$0xf]
        %v6156 = vld [vmem:[#allocation14 + $0x1d0] sm:$0xf]
        %v6157 = vld [vmem:[#allocation14 + $0x1d4] sm:$0xf]
        %v6158 = vld [vmem:[#allocation14 + $0x1d8] sm:$0xf]
        %v6159 = vld [vmem:[#allocation14 + $0x1dc] sm:$0xf]
        %v6160 = vld [vmem:[#allocation14 + $0x1e0] sm:$0xf]
        %v6161 = vld [vmem:[#allocation14 + $0x1e4] sm:$0xf]
        %v6162 = vld [vmem:[#allocation14 + $0x1e8] sm:$0xf]
        %v6163 = vld [vmem:[#allocation14 + $0x1ec] sm:$0xf]
        %v6164 = vld [vmem:[#allocation14 + $0x1f0] sm:$0xf]
        %v6165 = vld [vmem:[#allocation14 + $0x1f4] sm:$0xf]
        %v6166 = vld [vmem:[#allocation14 + $0x1f8] sm:$0xf]
        %v6167 = vld [vmem:[#allocation14 + $0x1fc] sm:$0xf]
        %v6168 = vld [vmem:[#allocation14 + $0x200] sm:$0xf]
        %v6169 = vld [vmem:[#allocation14 + $0x204] sm:$0xf]
        %v6170 = vld [vmem:[#allocation14 + $0x208] sm:$0xf]
        %v6171 = vld [vmem:[#allocation14 + $0x20c] sm:$0xf]
        %v6172 = vld [vmem:[#allocation14 + $0x210] sm:$0xf]
        %v6173 = vld [vmem:[#allocation14 + $0x214] sm:$0xf]
        %v6174 = vld [vmem:[#allocation14 + $0x218] sm:$0xf]
        %v6175 = vld [vmem:[#allocation14 + $0x21c] sm:$0xf]
        %v6176 = vld [vmem:[#allocation14 + $0x220] sm:$0xf]
        %v6177 = vld [vmem:[#allocation14 + $0x224] sm:$0xf]
        %v6178 = vld [vmem:[#allocation14 + $0x228] sm:$0xf]
        %v6179 = vld [vmem:[#allocation14 + $0x22c] sm:$0xf]
        %v6180 = vld [vmem:[#allocation14 + $0x230] sm:$0xf]
        %v6181 = vld [vmem:[#allocation14 + $0x234] sm:$0xf]
        %v6182 = vld [vmem:[#allocation14 + $0x238] sm:$0xf]
        %v6183 = vld [vmem:[#allocation14 + $0x23c] sm:$0xf]
        %v6328 = vunpack.c.l.b16 %v6040
        %v6329 = vunpack.c.l.b16 %v6041
        %v6330 = vunpack.c.l.b16 %v6042
        %v6331 = vunpack.c.l.b16 %v6043
        %v6332 = vunpack.c.l.b16 %v6044
        %v6333 = vunpack.c.l.b16 %v6045
        %v6334 = vunpack.c.l.b16 %v6046
        %v6335 = vunpack.c.l.b16 %v6047
        %v6336 = vunpack.c.l.b16 %v6048
        %v6337 = vunpack.c.l.b16 %v6049
        %v6338 = vunpack.c.l.b16 %v6050
        %v6339 = vunpack.c.l.b16 %v6051
        %v6340 = vunpack.c.l.b16 %v6052
        %v6341 = vunpack.c.l.b16 %v6053
        %v6342 = vunpack.c.l.b16 %v6054
        %v6343 = vunpack.c.l.b16 %v6055
        %v6344 = vunpack.c.l.b16 %v6056
        %v6345 = vunpack.c.l.b16 %v6057
        %v6346 = vunpack.c.l.b16 %v6058
        %v6347 = vunpack.c.l.b16 %v6059
        %v6348 = vunpack.c.l.b16 %v6060
        %v6349 = vunpack.c.l.b16 %v6061
        %v6350 = vunpack.c.l.b16 %v6062
        %v6351 = vunpack.c.l.b16 %v6063
        %v6352 = vunpack.c.l.b16 %v6064
        %v6353 = vunpack.c.l.b16 %v6065
        %v6354 = vunpack.c.l.b16 %v6066
        %v6355 = vunpack.c.l.b16 %v6067
        %v6356 = vunpack.c.l.b16 %v6068
        %v6357 = vunpack.c.l.b16 %v6069
        %v6358 = vunpack.c.l.b16 %v6070
        %v6359 = vunpack.c.l.b16 %v6071
        %v6360 = vunpack.c.l.b16 %v6072
        %v6361 = vunpack.c.l.b16 %v6073
        %v6362 = vunpack.c.l.b16 %v6074
        %v6363 = vunpack.c.l.b16 %v6075
        %v6364 = vunpack.c.l.b16 %v6076
        %v6365 = vunpack.c.l.b16 %v6077
        %v6366 = vunpack.c.l.b16 %v6078
        %v6367 = vunpack.c.l.b16 %v6079
        %v6368 = vunpack.c.l.b16 %v6080
        %v6369 = vunpack.c.l.b16 %v6081
        %v6370 = vunpack.c.l.b16 %v6082
        %v6371 = vunpack.c.l.b16 %v6083
        %v6372 = vunpack.c.l.b16 %v6084
        %v6373 = vunpack.c.l.b16 %v6085
        %v6374 = vunpack.c.l.b16 %v6086
        %v6375 = vunpack.c.l.b16 %v6087
        %v6376 = vunpack.c.l.b16 %v6088
        %v6377 = vunpack.c.l.b16 %v6089
        %v6378 = vunpack.c.l.b16 %v6090
        %v6379 = vunpack.c.l.b16 %v6091
        %v6380 = vunpack.c.l.b16 %v6092
        %v6381 = vunpack.c.l.b16 %v6093
        %v6382 = vunpack.c.l.b16 %v6094
        %v6383 = vunpack.c.l.b16 %v6095
        %v6384 = vunpack.c.l.b16 %v6096
        %v6385 = vunpack.c.l.b16 %v6097
        %v6386 = vunpack.c.l.b16 %v6098
        %v6387 = vunpack.c.l.b16 %v6099
        %v6388 = vunpack.c.l.b16 %v6100
        %v6389 = vunpack.c.l.b16 %v6101
        %v6390 = vunpack.c.l.b16 %v6102
        %v6391 = vunpack.c.l.b16 %v6103
        %v6392 = vunpack.c.l.b16 %v6104
        %v6393 = vunpack.c.l.b16 %v6105
        %v6394 = vunpack.c.l.b16 %v6106
        %v6395 = vunpack.c.l.b16 %v6107
        %v6396 = vunpack.c.l.b16 %v6108
        %v6397 = vunpack.c.l.b16 %v6109
        %v6398 = vunpack.c.l.b16 %v6110
        %v6399 = vunpack.c.l.b16 %v6111
        %v6400 = vunpack.c.l.b16 %v6112
        %v6401 = vunpack.c.l.b16 %v6113
        %v6402 = vunpack.c.l.b16 %v6114
        %v6403 = vunpack.c.l.b16 %v6115
        %v6404 = vunpack.c.l.b16 %v6116
        %v6405 = vunpack.c.l.b16 %v6117
        %v6406 = vunpack.c.l.b16 %v6118
        %v6407 = vunpack.c.l.b16 %v6119
        %v6408 = vunpack.c.l.b16 %v6120
        %v6409 = vunpack.c.l.b16 %v6121
        %v6410 = vunpack.c.l.b16 %v6122
        %v6411 = vunpack.c.l.b16 %v6123
        %v6412 = vunpack.c.l.b16 %v6124
        %v6413 = vunpack.c.l.b16 %v6125
        %v6414 = vunpack.c.l.b16 %v6126
        %v6415 = vunpack.c.l.b16 %v6127
        %v6416 = vunpack.c.l.b16 %v6128
        %v6417 = vunpack.c.l.b16 %v6129
        %v6418 = vunpack.c.l.b16 %v6130
        %v6419 = vunpack.c.l.b16 %v6131
        %v6420 = vunpack.c.l.b16 %v6132
        %v6421 = vunpack.c.l.b16 %v6133
        %v6422 = vunpack.c.l.b16 %v6134
        %v6423 = vunpack.c.l.b16 %v6135
        %v6424 = vunpack.c.l.b16 %v6136
        %v6425 = vunpack.c.l.b16 %v6137
        %v6426 = vunpack.c.l.b16 %v6138
        %v6427 = vunpack.c.l.b16 %v6139
        %v6428 = vunpack.c.l.b16 %v6140
        %v6429 = vunpack.c.l.b16 %v6141
        %v6430 = vunpack.c.l.b16 %v6142
        %v6431 = vunpack.c.l.b16 %v6143
        %v6432 = vunpack.c.l.b16 %v6144
        %v6433 = vunpack.c.l.b16 %v6145
        %v6434 = vunpack.c.l.b16 %v6146
        %v6435 = vunpack.c.l.b16 %v6147
        %v6436 = vunpack.c.l.b16 %v6148
        %v6437 = vunpack.c.l.b16 %v6149
        %v6438 = vunpack.c.l.b16 %v6150
        %v6439 = vunpack.c.l.b16 %v6151
        %v6440 = vunpack.c.l.b16 %v6152
        %v6441 = vunpack.c.l.b16 %v6153
        %v6442 = vunpack.c.l.b16 %v6154
        %v6443 = vunpack.c.l.b16 %v6155
        %v6444 = vunpack.c.l.b16 %v6156
        %v6445 = vunpack.c.l.b16 %v6157
        %v6446 = vunpack.c.l.b16 %v6158
        %v6447 = vunpack.c.l.b16 %v6159
        %v6448 = vunpack.c.l.b16 %v6160
        %v6449 = vunpack.c.l.b16 %v6161
        %v6450 = vunpack.c.l.b16 %v6162
        %v6451 = vunpack.c.l.b16 %v6163
        %v6452 = vunpack.c.l.b16 %v6164
        %v6453 = vunpack.c.l.b16 %v6165
        %v6454 = vunpack.c.l.b16 %v6166
        %v6455 = vunpack.c.l.b16 %v6167
        %v6456 = vunpack.c.l.b16 %v6168
        %v6457 = vunpack.c.l.b16 %v6169
        %v6458 = vunpack.c.l.b16 %v6170
        %v6459 = vunpack.c.l.b16 %v6171
        %v6460 = vunpack.c.l.b16 %v6172
        %v6461 = vunpack.c.l.b16 %v6173
        %v6462 = vunpack.c.l.b16 %v6174
        %v6463 = vunpack.c.l.b16 %v6175
        %v6464 = vunpack.c.l.b16 %v6176
        %v6465 = vunpack.c.l.b16 %v6177
        %v6466 = vunpack.c.l.b16 %v6178
        %v6467 = vunpack.c.l.b16 %v6179
        %v6468 = vunpack.c.l.b16 %v6180
        %v6469 = vunpack.c.l.b16 %v6181
        %v6470 = vunpack.c.l.b16 %v6182
        %v6471 = vunpack.c.l.b16 %v6183
        %v6472 = vpack.c.b16 %v6329, %v6328
        %v6473 = vpack.c.b16 %v6331, %v6330
        %v6474 = vpack.c.b16 %v6333, %v6332
        %v6475 = vpack.c.b16 %v6335, %v6334
        %v6476 = vpack.c.b16 %v6337, %v6336
        %v6477 = vpack.c.b16 %v6339, %v6338
        %v6478 = vpack.c.b16 %v6341, %v6340
        %v6479 = vpack.c.b16 %v6343, %v6342
        %v6480 = vpack.c.b16 %v6345, %v6344
        %v6481 = vpack.c.b16 %v6347, %v6346
        %v6482 = vpack.c.b16 %v6349, %v6348
        %v6483 = vpack.c.b16 %v6351, %v6350
        %v6484 = vpack.c.b16 %v6353, %v6352
        %v6485 = vpack.c.b16 %v6355, %v6354
        %v6486 = vpack.c.b16 %v6357, %v6356
        %v6487 = vpack.c.b16 %v6359, %v6358
        %v6488 = vpack.c.b16 %v6361, %v6360
        %v6489 = vpack.c.b16 %v6363, %v6362
        %v6490 = vpack.c.b16 %v6365, %v6364
        %v6491 = vpack.c.b16 %v6367, %v6366
        %v6492 = vpack.c.b16 %v6369, %v6368
        %v6493 = vpack.c.b16 %v6371, %v6370
        %v6494 = vpack.c.b16 %v6373, %v6372
        %v6495 = vpack.c.b16 %v6375, %v6374
        %v6496 = vpack.c.b16 %v6377, %v6376
        %v6497 = vpack.c.b16 %v6379, %v6378
        %v6498 = vpack.c.b16 %v6381, %v6380
        %v6499 = vpack.c.b16 %v6383, %v6382
        %v6500 = vpack.c.b16 %v6385, %v6384
        %v6501 = vpack.c.b16 %v6387, %v6386
        %v6502 = vpack.c.b16 %v6389, %v6388
        %v6503 = vpack.c.b16 %v6391, %v6390
        %v6504 = vpack.c.b16 %v6393, %v6392
        %v6505 = vpack.c.b16 %v6395, %v6394
        %v6506 = vpack.c.b16 %v6397, %v6396
        %v6507 = vpack.c.b16 %v6399, %v6398
        %v6508 = vpack.c.b16 %v6401, %v6400
        %v6509 = vpack.c.b16 %v6403, %v6402
        %v6510 = vpack.c.b16 %v6405, %v6404
        %v6511 = vpack.c.b16 %v6407, %v6406
        %v6512 = vpack.c.b16 %v6409, %v6408
        %v6513 = vpack.c.b16 %v6411, %v6410
        %v6514 = vpack.c.b16 %v6413, %v6412
        %v6515 = vpack.c.b16 %v6415, %v6414
        %v6516 = vpack.c.b16 %v6417, %v6416
        %v6517 = vpack.c.b16 %v6419, %v6418
        %v6518 = vpack.c.b16 %v6421, %v6420
        %v6519 = vpack.c.b16 %v6423, %v6422
        %v6520 = vpack.c.b16 %v6425, %v6424
        %v6521 = vpack.c.b16 %v6427, %v6426
        %v6522 = vpack.c.b16 %v6429, %v6428
        %v6523 = vpack.c.b16 %v6431, %v6430
        %v6524 = vpack.c.b16 %v6433, %v6432
        %v6525 = vpack.c.b16 %v6435, %v6434
        %v6526 = vpack.c.b16 %v6437, %v6436
        %v6527 = vpack.c.b16 %v6439, %v6438
        %v6528 = vpack.c.b16 %v6441, %v6440
        %v6529 = vpack.c.b16 %v6443, %v6442
        %v6530 = vpack.c.b16 %v6445, %v6444
        %v6531 = vpack.c.b16 %v6447, %v6446
        %v6532 = vpack.c.b16 %v6449, %v6448
        %v6533 = vpack.c.b16 %v6451, %v6450
        %v6534 = vpack.c.b16 %v6453, %v6452
        %v6535 = vpack.c.b16 %v6455, %v6454
        %v6536 = vpack.c.b16 %v6457, %v6456
        %v6537 = vpack.c.b16 %v6459, %v6458
        %v6538 = vpack.c.b16 %v6461, %v6460
        %v6539 = vpack.c.b16 %v6463, %v6462
        %v6540 = vpack.c.b16 %v6465, %v6464
        %v6541 = vpack.c.b16 %v6467, %v6466
        %v6542 = vpack.c.b16 %v6469, %v6468
        %v6543 = vpack.c.b16 %v6471, %v6470
        %6616 = vmatprep.subr.bf16.mxu0 0
        %6617 = vmatpush1.bf16.msra.mxu0 %v6472
        %6618 = vmatprep.subr.bf16.mxu0 0
        %6619 = vmatpush1.bf16.msra.mxu0 %v6473
        %6620 = vmatprep.subr.bf16.mxu0 0
        %6621 = vmatpush1.bf16.msra.mxu0 %v6474
        %6622 = vmatprep.subr.bf16.mxu0 0
        %6623 = vmatpush1.bf16.msra.mxu0 %v6475
        %6624 = vmatprep.subr.bf16.mxu0 0
        %6625 = vmatpush1.bf16.msra.mxu0 %v6476
        %6626 = vmatprep.subr.bf16.mxu0 0
        %6627 = vmatpush1.bf16.msra.mxu0 %v6477
        %6628 = vmatprep.subr.bf16.mxu0 0
        %6629 = vmatpush1.bf16.msra.mxu0 %v6478
        %6630 = vmatprep.subr.bf16.mxu0 0
        %6631 = vmatpush1.bf16.msra.mxu0 %v6479
        %6632 = vmatprep.subr.bf16.mxu0 0
        %6633 = vmatpush1.bf16.msra.mxu0 %v6480
        %6634 = vmatprep.subr.bf16.mxu0 0
        %6635 = vmatpush1.bf16.msra.mxu0 %v6481
        %6636 = vmatprep.subr.bf16.mxu0 0
        %6637 = vmatpush1.bf16.msra.mxu0 %v6482
        %6638 = vmatprep.subr.bf16.mxu0 0
        %6639 = vmatpush1.bf16.msra.mxu0 %v6483
        %6640 = vmatprep.subr.bf16.mxu0 0
        %6641 = vmatpush1.bf16.msra.mxu0 %v6484
        %6642 = vmatprep.subr.bf16.mxu0 0
        %6643 = vmatpush1.bf16.msra.mxu0 %v6485
        %6644 = vmatprep.subr.bf16.mxu0 0
        %6645 = vmatpush1.bf16.msra.mxu0 %v6486
        %6646 = vmatprep.subr.bf16.mxu0 0
        %6647 = vmatpush1.bf16.msra.mxu0 %v6487
        %6648 = vmatprep.mubr.bf16.mxu0 %v5801
        %6649 = vmatmul.mubr.bf16.gmra.mrb[0].mxu0 %v5782
        %v6650 = vpop.f32.mrb[0].mxu0
        %v6651 = vadd.f32 0.0, %v6650
        %v6652 = vpop.f32.mrb[0].mxu0
        %v6653 = vpop.f32.mrb[0].mxu0
        %v6654 = vadd.f32 0.0, %v6653
        %v6655 = vpop.f32.mrb[0].mxu0
        %6656 = vmatprep.mubr.bf16.mxu0 %v5809
        %6657 = vmatmul.mubr.bf16.gmra.mrb[0].mxu0 %v5783
        %v6658 = vpop.f32.mrb[0].mxu0
        %v6659 = vadd.f32 0.0, %v6658
        %v6660 = vpop.f32.mrb[0].mxu0
        %v6661 = vpop.f32.mrb[0].mxu0
        %v6662 = vadd.f32 0.0, %v6661
        %v6663 = vpop.f32.mrb[0].mxu0
        %6664 = vmatprep.mubr.bf16.mxu0 %v5817
        %6665 = vmatmul.mubr.bf16.gmra.mrb[0].mxu0 %v5784
        %v6666 = vpop.f32.mrb[0].mxu0
        %v6667 = vadd.f32 0.0, %v6666
        %v6668 = vpop.f32.mrb[0].mxu0
        %v6669 = vpop.f32.mrb[0].mxu0
        %v6670 = vadd.f32 0.0, %v6669
        %v6671 = vpop.f32.mrb[0].mxu0
        %6672 = vmatprep.mubr.bf16.mxu0 %v5820
        %6673 = vmatmul.mubr.bf16.gmra.mrb[0].mxu0 %v5785
        %v6674 = vpop.f32.mrb[0].mxu0
        %v6675 = vadd.f32 0.0, %v6674
        %v6676 = vpop.f32.mrb[0].mxu0
        %v6677 = vpop.f32.mrb[0].mxu0
        %v6678 = vadd.f32 0.0, %v6677
        %v6679 = vpop.f32.mrb[0].mxu0
        %6680 = vdwg.mxu0
        %6681 = vmatprep.subr.bf16.mxu0 0
        %6682 = vmatpush1.bf16.msra.mxu0 %v6488
        %6683 = vmatprep.subr.bf16.mxu0 0
        %6684 = vmatpush1.bf16.msra.mxu0 %v6489
        %6685 = vmatprep.subr.bf16.mxu0 0
        %6686 = vmatpush1.bf16.msra.mxu0 %v6490
        %6687 = vmatprep.subr.bf16.mxu0 0
        %6688 = vmatpush1.bf16.msra.mxu0 %v6491
        %6689 = vmatprep.subr.bf16.mxu0 0
        %6690 = vmatpush1.bf16.msra.mxu0 %v6492
        %6691 = vmatprep.subr.bf16.mxu0 0
        %6692 = vmatpush1.bf16.msra.mxu0 %v6493
        %6693 = vmatprep.subr.bf16.mxu0 0
        %6694 = vmatpush1.bf16.msra.mxu0 %v6494
        %6695 = vmatprep.subr.bf16.mxu0 0
        %6696 = vmatpush1.bf16.msra.mxu0 %v6495
        %6697 = vmatprep.subr.bf16.mxu0 0
        %6698 = vmatpush1.bf16.msra.mxu0 %v6496
        %6699 = vmatprep.subr.bf16.mxu0 0
        %6700 = vmatpush1.bf16.msra.mxu0 %v6497
        %6701 = vmatprep.subr.bf16.mxu0 0
        %6702 = vmatpush1.bf16.msra.mxu0 %v6498
        %6703 = vmatprep.subr.bf16.mxu0 0
        %6704 = vmatpush1.bf16.msra.mxu0 %v6499
        %6705 = vmatprep.subr.bf16.mxu0 0
        %6706 = vmatpush1.bf16.msra.mxu0 %v6500
        %6707 = vmatprep.subr.bf16.mxu0 0
        %6708 = vmatpush1.bf16.msra.mxu0 %v6501
        %6709 = vmatprep.subr.bf16.mxu0 0
        %6710 = vmatpush1.bf16.msra.mxu0 %v6502
        %6711 = vmatprep.subr.bf16.mxu0 0
        %6712 = vmatpush1.bf16.msra.mxu0 %v6503
        %6713 = vmatprep.mubr.bf16.mxu0 %v5861
        %6714 = vmatmul.mubr.bf16.gmra.mrb[0].mxu0 %v5833
        %v6715 = vpop.f32.mrb[0].mxu0
        %v6716 = vadd.f32 %v6651, %v6715
        %v6717 = vpop.f32.mrb[0].mxu0
        %v6718 = vpop.f32.mrb[0].mxu0
        %v6719 = vadd.f32 %v6654, %v6718
        %v6720 = vpop.f32.mrb[0].mxu0
        %6721 = vmatprep.mubr.bf16.mxu0 %v5869
        %6722 = vmatmul.mubr.bf16.gmra.mrb[0].mxu0 %v5835
        %v6723 = vpop.f32.mrb[0].mxu0
        %v6724 = vadd.f32 %v6659, %v6723
        %v6725 = vpop.f32.mrb[0].mxu0
        %v6726 = vpop.f32.mrb[0].mxu0
        %v6727 = vadd.f32 %v6662, %v6726
        %v6728 = vpop.f32.mrb[0].mxu0
        %6729 = vmatprep.mubr.bf16.mxu0 %v5877
        %6730 = vmatmul.mubr.bf16.gmra.mrb[0].mxu0 %v5837
        %v6731 = vpop.f32.mrb[0].mxu0
        %v6732 = vadd.f32 %v6667, %v6731
        %v6733 = vpop.f32.mrb[0].mxu0
        %v6734 = vpop.f32.mrb[0].mxu0
        %v6735 = vadd.f32 %v6670, %v6734
        %v6736 = vpop.f32.mrb[0].mxu0
        %6737 = vmatprep.mubr.bf16.mxu0 %v5880
        %6738 = vmatmul.mubr.bf16.gmra.mrb[0].mxu0 %v5839
        %v6739 = vpop.f32.mrb[0].mxu0
        %v6740 = vadd.f32 %v6675, %v6739
        %v6741 = vpop.f32.mrb[0].mxu0
        %v6742 = vpop.f32.mrb[0].mxu0
        %v6743 = vadd.f32 %v6678, %v6742
        %v6744 = vpop.f32.mrb[0].mxu0
        %6745 = vdwg.mxu0
        %6746 = vmatprep.subr.bf16.mxu0 0
        %6747 = vmatpush1.bf16.msra.mxu0 %v6504
        %6748 = vmatprep.subr.bf16.mxu0 0
        %6749 = vmatpush1.bf16.msra.mxu0 %v6505
        %6750 = vmatprep.subr.bf16.mxu0 0
        %6751 = vmatpush1.bf16.msra.mxu0 %v6506
        %6752 = vmatprep.subr.bf16.mxu0 0
        %6753 = vmatpush1.bf16.msra.mxu0 %v6507
        %6754 = vmatprep.subr.bf16.mxu0 0
        %6755 = vmatpush1.bf16.msra.mxu0 %v6508
        %6756 = vmatprep.subr.bf16.mxu0 0
        %6757 = vmatpush1.bf16.msra.mxu0 %v6509
        %6758 = vmatprep.subr.bf16.mxu0 0
        %6759 = vmatpush1.bf16.msra.mxu0 %v6510
        %6760 = vmatprep.subr.bf16.mxu0 0
        %6761 = vmatpush1.bf16.msra.mxu0 %v6511
        %6762 = vmatprep.subr.bf16.mxu0 0
        %6763 = vmatpush1.bf16.msra.mxu0 %v6512
        %6764 = vmatprep.subr.bf16.mxu0 0
        %6765 = vmatpush1.bf16.msra.mxu0 %v6513
        %6766 = vmatprep.subr.bf16.mxu0 0
        %6767 = vmatpush1.bf16.msra.mxu0 %v6514
        %6768 = vmatprep.subr.bf16.mxu0 0
        %6769 = vmatpush1.bf16.msra.mxu0 %v6515
        %6770 = vmatprep.subr.bf16.mxu0 0
        %6771 = vmatpush1.bf16.msra.mxu0 %v6516
        %6772 = vmatprep.subr.bf16.mxu0 0
        %6773 = vmatpush1.bf16.msra.mxu0 %v6517
        %6774 = vmatprep.subr.bf16.mxu0 0
        %6775 = vmatpush1.bf16.msra.mxu0 %v6518
        %6776 = vmatprep.subr.bf16.mxu0 0
        %6777 = vmatpush1.bf16.msra.mxu0 %v6519
        %6778 = vmatprep.mubr.bf16.mxu0 %v5915
        %6779 = vmatmul.mubr.bf16.gmra.mrb[0].mxu0 %v5893
        %v6780 = vpop.f32.mrb[0].mxu0
        %v6781 = vadd.f32 %v6716, %v6780
        %v6782 = vpop.f32.mrb[0].mxu0
        %v6783 = vpop.f32.mrb[0].mxu0
        %v6784 = vadd.f32 %v6719, %v6783
        %v6785 = vpop.f32.mrb[0].mxu0
        %6786 = vmatprep.mubr.bf16.mxu0 %v5919
        %6787 = vmatmul.mubr.bf16.gmra.mrb[0].mxu0 %v5895
        %v6788 = vpop.f32.mrb[0].mxu0
        %v6789 = vadd.f32 %v6724, %v6788
        %v6790 = vpop.f32.mrb[0].mxu0
        %v6791 = vpop.f32.mrb[0].mxu0
        %v6792 = vadd.f32 %v6727, %v6791
        %v6793 = vpop.f32.mrb[0].mxu0
        %6794 = vmatprep.mubr.bf16.mxu0 %v5923
        %6795 = vmatmul.mubr.bf16.gmra.mrb[0].mxu0 %v5897
        %v6796 = vpop.f32.mrb[0].mxu0
        %v6797 = vadd.f32 %v6732, %v6796
        %v6798 = vpop.f32.mrb[0].mxu0
        %v6799 = vpop.f32.mrb[0].mxu0
        %v6800 = vadd.f32 %v6735, %v6799
        %v6801 = vpop.f32.mrb[0].mxu0
        %6802 = vmatprep.mubr.bf16.mxu0 %v5932
        %6803 = vmatmul.mubr.bf16.gmra.mrb[0].mxu0 %v5899
        %v6804 = vpop.f32.mrb[0].mxu0
        %v6805 = vadd.f32 %v6740, %v6804
        %v6806 = vpop.f32.mrb[0].mxu0
        %v6807 = vpop.f32.mrb[0].mxu0
        %v6808 = vadd.f32 %v6743, %v6807
        %v6809 = vpop.f32.mrb[0].mxu0
        %6810 = vdwg.mxu0
        %6811 = vmatprep.subr.bf16.mxu0 0
        %6812 = vmatpush1.bf16.msra.mxu0 %v6520
        %6813 = vmatprep.subr.bf16.mxu0 0
        %6814 = vmatpush1.bf16.msra.mxu0 %v6521
        %6815 = vmatprep.subr.bf16.mxu0 0
        %6816 = vmatpush1.bf16.msra.mxu0 %v6522
        %6817 = vmatprep.subr.bf16.mxu0 0
        %6818 = vmatpush1.bf16.msra.mxu0 %v6523
        %6819 = vmatprep.subr.bf16.mxu0 0
        %6820 = vmatpush1.bf16.msra.mxu0 %v6524
        %6821 = vmatprep.subr.bf16.mxu0 0
        %6822 = vmatpush1.bf16.msra.mxu0 %v6525
        %6823 = vmatprep.subr.bf16.mxu0 0
        %6824 = vmatpush1.bf16.msra.mxu0 %v6526
        %6825 = vmatprep.subr.bf16.mxu0 0
        %6826 = vmatpush1.bf16.msra.mxu0 %v6527
        %6827 = vmatprep.subr.bf16.mxu0 0
        %6828 = vmatpush1.bf16.msra.mxu0 %v6528
        %6829 = vmatprep.subr.bf16.mxu0 0
        %6830 = vmatpush1.bf16.msra.mxu0 %v6529
        %6831 = vmatprep.subr.bf16.mxu0 0
        %6832 = vmatpush1.bf16.msra.mxu0 %v6530
        %6833 = vmatprep.subr.bf16.mxu0 0
        %6834 = vmatpush1.bf16.msra.mxu0 %v6531
        %6835 = vmatprep.subr.bf16.mxu0 0
        %6836 = vmatpush1.bf16.msra.mxu0 %v6532
        %6837 = vmatprep.subr.bf16.mxu0 0
        %6838 = vmatpush1.bf16.msra.mxu0 %v6533
        %6839 = vmatprep.subr.bf16.mxu0 0
        %6840 = vmatpush1.bf16.msra.mxu0 %v6534
        %6841 = vmatprep.subr.bf16.mxu0 0
        %6842 = vmatpush1.bf16.msra.mxu0 %v6535
        %6843 = vmatprep.mubr.bf16.mxu0 %v5989
        %6844 = vmatmul.mubr.bf16.gmra.mrb[0].mxu0 %v5962
        %v6845 = vpop.f32.mrb[0].mxu0
        %v6846 = vadd.f32 %v6781, %v6845
        %v6847 = vpop.f32.mrb[0].mxu0
        %v6848 = vpop.f32.mrb[0].mxu0
        %v6849 = vadd.f32 %v6784, %v6848
        %v6850 = vpop.f32.mrb[0].mxu0
        %6851 = vmatprep.mubr.bf16.mxu0 %v5998
        %6852 = vmatmul.mubr.bf16.gmra.mrb[0].mxu0 %v5964
        %v6853 = vpop.f32.mrb[0].mxu0
        %v6854 = vadd.f32 %v6789, %v6853
        %v6855 = vpop.f32.mrb[0].mxu0
        %v6856 = vpop.f32.mrb[0].mxu0
        %v6857 = vadd.f32 %v6792, %v6856
        %v6858 = vpop.f32.mrb[0].mxu0
        %6859 = vmatprep.mubr.bf16.mxu0 %v6007
        %6860 = vmatmul.mubr.bf16.gmra.mrb[0].mxu0 %v5966
        %v6861 = vpop.f32.mrb[0].mxu0
        %v6862 = vadd.f32 %v6797, %v6861
        %v6863 = vpop.f32.mrb[0].mxu0
        %v6864 = vpop.f32.mrb[0].mxu0
        %v6865 = vadd.f32 %v6800, %v6864
        %v6866 = vpop.f32.mrb[0].mxu0
        %6867 = vmatprep.mubr.bf16.mxu0 %v6016
        %6868 = vmatmul.mubr.bf16.gmra.mrb[0].mxu0 %v5968
        %v6869 = vpop.f32.mrb[0].mxu0
        %v6870 = vadd.f32 %v6805, %v6869
        %v6871 = vpop.f32.mrb[0].mxu0
        %v6872 = vpop.f32.mrb[0].mxu0
        %v6873 = vadd.f32 %v6808, %v6872
        %v6874 = vpop.f32.mrb[0].mxu0
        %6875 = vdwg.mxu0
        %6876 = vmatprep.subr.bf16.mxu0 0
        %6877 = vmatpush1.bf16.msra.mxu0 %v6536
        %6878 = vmatprep.subr.bf16.mxu0 0
        %6879 = vmatpush1.bf16.msra.mxu0 %v6537
        %6880 = vmatprep.subr.bf16.mxu0 0
        %6881 = vmatpush1.bf16.msra.mxu0 %v6538
        %6882 = vmatprep.subr.bf16.mxu0 0
        %6883 = vmatpush1.bf16.msra.mxu0 %v6539
        %6884 = vmatprep.subr.bf16.mxu0 0
        %6885 = vmatpush1.bf16.msra.mxu0 %v6540
        %6886 = vmatprep.subr.bf16.mxu0 0
        %6887 = vmatpush1.bf16.msra.mxu0 %v6541
        %6888 = vmatprep.subr.bf16.mxu0 0
        %6889 = vmatpush1.bf16.msra.mxu0 %v6542
        %6890 = vmatprep.subr.bf16.mxu0 0
        %6891 = vmatpush1.bf16.msra.mxu0 %v6543
        %6892 = vmatprep.subr.bf16.mxu0 0
        %6893 = vmatpush1.bf16.msra.mxu0 0
        %6894 = vmatprep.subr.bf16.mxu0 0
        %6895 = vmatpush1.bf16.msra.mxu0 0
        %6896 = vmatprep.subr.bf16.mxu0 0
        %6897 = vmatpush1.bf16.msra.mxu0 0
        %6898 = vmatprep.subr.bf16.mxu0 0
        %6899 = vmatpush1.bf16.msra.mxu0 0
        %6900 = vmatprep.subr.bf16.mxu0 0
        %6901 = vmatpush1.bf16.msra.mxu0 0
        %6902 = vmatprep.subr.bf16.mxu0 0
        %6903 = vmatpush1.bf16.msra.mxu0 0
        %6904 = vmatprep.subr.bf16.mxu0 0
        %6905 = vmatpush1.bf16.msra.mxu0 0
        %6906 = vmatprep.subr.bf16.mxu0 0
        %6907 = vmatpush1.bf16.msra.mxu0 0
        %6908 = vmatprep.mubr.bf16.mxu0 0
        %6909 = vmatmul.mubr.bf16.gmra.mrb[0].mxu0 %v6029
        %v6910 = vpop.f32.mrb[0].mxu0
        %v6911 = vadd.f32 %v6846, %v6910
        %v6912 = vpop.f32.mrb[0].mxu0
        %v6913 = vpop.f32.mrb[0].mxu0
        %v6914 = vadd.f32 %v6849, %v6913
        %v6915 = vpop.f32.mrb[0].mxu0
        %6916 = vmatprep.mubr.bf16.mxu0 0
        %6917 = vmatmul.mubr.bf16.gmra.mrb[0].mxu0 %v6031
        %v6918 = vpop.f32.mrb[0].mxu0
        %v6919 = vadd.f32 %v6854, %v6918
        %v6920 = vpop.f32.mrb[0].mxu0
        %v6921 = vpop.f32.mrb[0].mxu0
        %v6922 = vadd.f32 %v6857, %v6921
        %v6923 = vpop.f32.mrb[0].mxu0
        %6924 = vmatprep.mubr.bf16.mxu0 0
        %6925 = vmatmul.mubr.bf16.gmra.mrb[0].mxu0 %v6033
        %v6926 = vpop.f32.mrb[0].mxu0
        %v6927 = vadd.f32 %v6862, %v6926
        %v6928 = vpop.f32.mrb[0].mxu0
        %v6929 = vpop.f32.mrb[0].mxu0
        %v6930 = vadd.f32 %v6865, %v6929
        %v6931 = vpop.f32.mrb[0].mxu0
        %6932 = vmatprep.mubr.bf16.mxu0 0
        %6933 = vmatmul.mubr.bf16.gmra.mrb[0].mxu0 %v6035
        %v6934 = vpop.f32.mrb[0].mxu0
        %v6935 = vadd.f32 %v6870, %v6934
        %v6936 = vpop.f32.mrb[0].mxu0
        %v6937 = vpop.f32.mrb[0].mxu0
        %v6938 = vadd.f32 %v6873, %v6937
        %v6939 = vpop.f32.mrb[0].mxu0
        %6940 = vdwg.mxu0
        %6941 = vst [vmem:[#allocation8] sm:$0xff] %v6911
        %6942 = vst [vmem:[#allocation8 + $0x8] sm:$0xff] %v6914
        %6943 = vst [vmem:[#allocation8 + $0x10] sm:$0xff] %v6919
        %6944 = vst [vmem:[#allocation8 + $0x18] sm:$0xff] %v6922
        %6945 = vst [vmem:[#allocation8 + $0x20] sm:$0xff] %v6927
        %6946 = vst [vmem:[#allocation8 + $0x28] sm:$0xff] %v6930
        %6947 = vst [vmem:[#allocation8 + $0x30] sm:$0xff] %v6935
        %6948 = vst [vmem:[#allocation8 + $0x38] sm:$0x7f] %v6938
        %v6949 = vld [vmem:[%s8] sm:$0x1]
        %v6951 = vlaneseq
        %v6952 = vshrl.u32 %v6951, 7
        %v6953 = vsub.s32 0, %v6952
        %v6954 = vrot.slane %v6949, %v6953
        %v6956 = vld [vmem:[#allocation8] ss:$2 sm:$0x7]
        %s6957 = scalar_lea.vmem [#allocation8], 1
        %v6958 = vld [vmem:[%s6957] ss:$2 sm:$0x7]
        %v6959 = vmax.f32 %v6956, %v6958
        %s6960 = scalar_lea.vmem [#allocation8], 9
        %v6961 = vld [vmem:[%s6960] ss:$2 sm:$0x7]
        %s6962 = scalar_lea.vmem [#allocation8], 10
        %v6963 = vld [vmem:[%s6962] ss:$2 sm:$0x7]
        %v6964 = vmax.f32 %v6961, %v6963
        %v6965 = vmax.f32 %v6959, %v6964
        %v6966 = vadd.f32 %v6965, %v6954
        %v6967 = vmax.f32 %v6966, 0.0
        %s6968 = scalar_lea.vmem [#allocation8], 18
        %v6969 = vld [vmem:[%s6968] ss:$2 sm:$0x7]
        %s6970 = scalar_lea.vmem [#allocation8], 19
        %v6971 = vld [vmem:[%s6970] ss:$2 sm:$0x7]
        %v6972 = vmax.f32 %v6969, %v6971
        %s6973 = scalar_lea.vmem [#allocation8], 27
        %v6974 = vld [vmem:[%s6973] ss:$2 sm:$0x7]
        %s6975 = scalar_lea.vmem [#allocation8], 28
        %v6976 = vld [vmem:[%s6975] ss:$2 sm:$0x7]
        %v6977 = vmax.f32 %v6974, %v6976
        %v6978 = vmax.f32 %v6972, %v6977
        %v6979 = vadd.f32 %v6978, %v6954
        %v6980 = vmax.f32 %v6979, 0.0
        %s6981 = scalar_lea.vmem [#allocation8], 36
        %v6982 = vld [vmem:[%s6981] ss:$2 sm:$0x7]
        %s6983 = scalar_lea.vmem [#allocation8], 37
        %v6984 = vld [vmem:[%s6983] ss:$2 sm:$0x7]
        %v6985 = vmax.f32 %v6982, %v6984
        %s6986 = scalar_lea.vmem [#allocation8], 45
        %v6987 = vld [vmem:[%s6986] ss:$2 sm:$0x7]
        %s6988 = scalar_lea.vmem [#allocation8], 46
        %v6989 = vld [vmem:[%s6988] ss:$2 sm:$0x7]
        %v6990 = vmax.f32 %v6987, %v6989
        %v6991 = vmax.f32 %v6985, %v6990
        %v6992 = vadd.f32 %v6991, %v6954
        %v6993 = vmax.f32 %v6992, 0.0
        %v6994 = vpack.c.bf16 %v6967, %v6967
        %v6995 = vpack.c.bf16 %v6980, %v6980
        %v6996 = vpack.c.bf16 %v6993, %v6993
        %v6998 = vshrl.u32 %v6994, 16
        %v7002 = vrot.slane %v6994, 1
        %v7005 = vshrl.u32 %v6995, 16
        %v7009 = vrot.slane %v6995, 1
        %v7012 = vshrl.u32 %v6996, 16
        %v7016 = vrot.slane %v6996, 1
        %v7018 = vld [vmem:[%s9] sm:$0xff]
        %v7019 = vld [vmem:[%s9 + $0x8] sm:$0xff]
        %v7020 = vld [vmem:[%s9 + $0x10] sm:$0xff]
        %v7021 = vld [vmem:[%s9 + $0x18] sm:$0xff]
        %v7022 = vld [vmem:[%s9 + $0x20] sm:$0xff]
        %v7023 = vld [vmem:[%s9 + $0x28] sm:$0xff]
        %v7024 = vld [vmem:[%s9 + $0x30] sm:$0xff]
        %v7025 = vld [vmem:[%s9 + $0x38] sm:$0xff]
        %v7026 = vld [vmem:[%s9 + $0x40] sm:$0xff]
        %v7027 = vld [vmem:[%s9 + $0x48] sm:$0xff]
        %v7028 = vld [vmem:[%s9 + $0x50] sm:$0xff]
        %v7029 = vld [vmem:[%s9 + $0x58] sm:$0xff]
        %v7030 = vld [vmem:[%s9 + $0x60] sm:$0xff]
        %v7031 = vld [vmem:[%s9 + $0x68] sm:$0xff]
        %v7032 = vld [vmem:[%s9 + $0x70] sm:$0xff]
        %v7033 = vld [vmem:[%s9 + $0x78] sm:$0xff]
        %v7034 = vld [vmem:[%s9 + $0x80] sm:$0xff]
        %v7035 = vld [vmem:[%s9 + $0x88] sm:$0xff]
        %v7036 = vld [vmem:[%s9 + $0x90] sm:$0xff]
        %v7037 = vld [vmem:[%s9 + $0x98] sm:$0xff]
        %v7038 = vld [vmem:[%s9 + $0xa0] sm:$0xff]
        %v7039 = vld [vmem:[%s9 + $0xa8] sm:$0xff]
        %v7040 = vld [vmem:[%s9 + $0xb0] sm:$0xff]
        %v7041 = vld [vmem:[%s9 + $0xb8] sm:$0xff]
        %v7042 = vld [vmem:[%s9 + $0xc0] sm:$0xff]
        %v7043 = vld [vmem:[%s9 + $0xc8] sm:$0xff]
        %v7044 = vld [vmem:[%s9 + $0xd0] sm:$0xff]
        %v7045 = vld [vmem:[%s9 + $0xd8] sm:$0xff]
        %v7046 = vld [vmem:[%s9 + $0xe0] sm:$0xff]
        %v7047 = vld [vmem:[%s9 + $0xe8] sm:$0xff]
        %v7048 = vld [vmem:[%s9 + $0xf0] sm:$0xff]
        %v7049 = vld [vmem:[%s9 + $0xf8] sm:$0xff]
        %v7050 = vld [vmem:[%s9 + $0x100] sm:$0xff]
        %v7051 = vld [vmem:[%s9 + $0x108] sm:$0xff]
        %v7052 = vld [vmem:[%s9 + $0x110] sm:$0xff]
        %v7053 = vld [vmem:[%s9 + $0x118] sm:$0xff]
        %v7054 = vld [vmem:[%s9 + $0x120] sm:$0xff]
        %v7055 = vld [vmem:[%s9 + $0x128] sm:$0xff]
        %v7056 = vld [vmem:[%s9 + $0x130] sm:$0xff]
        %v7057 = vld [vmem:[%s9 + $0x138] sm:$0xff]
        %v7058 = vld [vmem:[%s9 + $0x140] sm:$0xff]
        %v7059 = vld [vmem:[%s9 + $0x148] sm:$0xff]
        %v7060 = vld [vmem:[%s9 + $0x150] sm:$0xff]
        %v7061 = vld [vmem:[%s9 + $0x158] sm:$0xff]
        %v7062 = vld [vmem:[%s9 + $0x160] sm:$0xff]
        %v7063 = vld [vmem:[%s9 + $0x168] sm:$0xff]
        %v7064 = vld [vmem:[%s9 + $0x170] sm:$0xff]
        %v7065 = vld [vmem:[%s9 + $0x178] sm:$0xff]
        %v7066 = vld [vmem:[%s9 + $0x180] sm:$0xff]
        %v7067 = vld [vmem:[%s9 + $0x188] sm:$0xff]
        %v7068 = vld [vmem:[%s9 + $0x190] sm:$0xff]
        %v7069 = vld [vmem:[%s9 + $0x198] sm:$0xff]
        %v7070 = vld [vmem:[%s9 + $0x1a0] sm:$0xff]
        %v7071 = vld [vmem:[%s9 + $0x1a8] sm:$0xff]
        %v7072 = vld [vmem:[%s9 + $0x1b0] sm:$0xff]
        %v7073 = vld [vmem:[%s9 + $0x1b8] sm:$0xff]
        %v7074 = vld [vmem:[%s9 + $0x1c0] sm:$0xff]
        %v7075 = vld [vmem:[%s9 + $0x1c8] sm:$0xff]
        %v7076 = vld [vmem:[%s9 + $0x1d0] sm:$0xff]
        %v7077 = vld [vmem:[%s9 + $0x1d8] sm:$0xff]
        %v7078 = vld [vmem:[%s9 + $0x1e0] sm:$0xff]
        %v7079 = vld [vmem:[%s9 + $0x1e8] sm:$0xff]
        %v7080 = vld [vmem:[%s9 + $0x1f0] sm:$0xff]
        %v7081 = vld [vmem:[%s9 + $0x1f8] sm:$0xff]
        %v7082 = vld [vmem:[%s9 + $0x200] sm:$0xff]
        %v7083 = vld [vmem:[%s9 + $0x208] sm:$0xff]
        %v7084 = vld [vmem:[%s9 + $0x210] sm:$0xff]
        %v7085 = vld [vmem:[%s9 + $0x218] sm:$0xff]
        %v7086 = vld [vmem:[%s9 + $0x220] sm:$0xff]
        %v7087 = vld [vmem:[%s9 + $0x228] sm:$0xff]
        %v7088 = vld [vmem:[%s9 + $0x230] sm:$0xff]
        %v7089 = vld [vmem:[%s9 + $0x238] sm:$0xff]
        %v7090 = vld [vmem:[%s9 + $0x240] sm:$0xff]
        %v7091 = vld [vmem:[%s9 + $0x248] sm:$0xff]
        %v7092 = vld [vmem:[%s9 + $0x250] sm:$0xff]
        %v7093 = vld [vmem:[%s9 + $0x258] sm:$0xff]
        %v7094 = vld [vmem:[%s9 + $0x260] sm:$0xff]
        %v7095 = vld [vmem:[%s9 + $0x268] sm:$0xff]
        %v7096 = vld [vmem:[%s9 + $0x270] sm:$0xff]
        %v7097 = vld [vmem:[%s9 + $0x278] sm:$0xff]
        %v7098 = vld [vmem:[%s9 + $0x280] sm:$0xff]
        %v7099 = vld [vmem:[%s9 + $0x288] sm:$0xff]
        %v7100 = vld [vmem:[%s9 + $0x290] sm:$0xff]
        %v7101 = vld [vmem:[%s9 + $0x298] sm:$0xff]
        %v7102 = vld [vmem:[%s9 + $0x2a0] sm:$0xff]
        %v7103 = vld [vmem:[%s9 + $0x2a8] sm:$0xff]
        %v7104 = vld [vmem:[%s9 + $0x2b0] sm:$0xff]
        %v7105 = vld [vmem:[%s9 + $0x2b8] sm:$0xff]
        %v7106 = vld [vmem:[%s9 + $0x2c0] sm:$0xff]
        %v7107 = vld [vmem:[%s9 + $0x2c8] sm:$0xff]
        %v7108 = vld [vmem:[%s9 + $0x2d0] sm:$0xff]
        %v7109 = vld [vmem:[%s9 + $0x2d8] sm:$0xff]
        %v7110 = vld [vmem:[%s9 + $0x2e0] sm:$0xff]
        %v7111 = vld [vmem:[%s9 + $0x2e8] sm:$0xff]
        %v7112 = vld [vmem:[%s9 + $0x2f0] sm:$0xff]
        %v7113 = vld [vmem:[%s9 + $0x2f8] sm:$0xff]
        %v7114 = vld [vmem:[%s9 + $0x300] sm:$0xff]
        %v7115 = vld [vmem:[%s9 + $0x308] sm:$0xff]
        %v7116 = vld [vmem:[%s9 + $0x310] sm:$0xff]
        %v7117 = vld [vmem:[%s9 + $0x318] sm:$0xff]
        %v7118 = vld [vmem:[%s9 + $0x320] sm:$0xff]
        %v7119 = vld [vmem:[%s9 + $0x328] sm:$0xff]
        %v7120 = vld [vmem:[%s9 + $0x330] sm:$0xff]
        %v7121 = vld [vmem:[%s9 + $0x338] sm:$0xff]
        %v7122 = vld [vmem:[%s9 + $0x340] sm:$0xff]
        %v7123 = vld [vmem:[%s9 + $0x348] sm:$0xff]
        %v7124 = vld [vmem:[%s9 + $0x350] sm:$0xff]
        %v7125 = vld [vmem:[%s9 + $0x358] sm:$0xff]
        %v7126 = vld [vmem:[%s9 + $0x360] sm:$0xff]
        %v7127 = vld [vmem:[%s9 + $0x368] sm:$0xff]
        %v7128 = vld [vmem:[%s9 + $0x370] sm:$0xff]
        %v7129 = vld [vmem:[%s9 + $0x378] sm:$0xff]
        %v7130 = vld [vmem:[%s9 + $0x380] sm:$0xff]
        %v7131 = vld [vmem:[%s9 + $0x388] sm:$0xff]
        %v7132 = vld [vmem:[%s9 + $0x390] sm:$0xff]
        %v7133 = vld [vmem:[%s9 + $0x398] sm:$0xff]
        %v7134 = vld [vmem:[%s9 + $0x3a0] sm:$0xff]
        %v7135 = vld [vmem:[%s9 + $0x3a8] sm:$0xff]
        %v7136 = vld [vmem:[%s9 + $0x3b0] sm:$0xff]
        %v7137 = vld [vmem:[%s9 + $0x3b8] sm:$0xff]
        %v7138 = vld [vmem:[%s9 + $0x3c0] sm:$0xff]
        %v7139 = vld [vmem:[%s9 + $0x3c8] sm:$0xff]
        %v7140 = vld [vmem:[%s9 + $0x3d0] sm:$0xff]
        %v7141 = vld [vmem:[%s9 + $0x3d8] sm:$0xff]
        %v7142 = vld [vmem:[%s9 + $0x3e0] sm:$0xff]
        %v7143 = vld [vmem:[%s9 + $0x3e8] sm:$0xff]
        %v7144 = vld [vmem:[%s9 + $0x3f0] sm:$0xff]
        %v7145 = vld [vmem:[%s9 + $0x3f8] sm:$0xff]
        %v7146 = vld [vmem:[%s9 + $0x400] sm:$0xff]
        %v7147 = vld [vmem:[%s9 + $0x408] sm:$0xff]
        %v7148 = vld [vmem:[%s9 + $0x410] sm:$0xff]
        %v7149 = vld [vmem:[%s9 + $0x418] sm:$0xff]
        %v7150 = vld [vmem:[%s9 + $0x420] sm:$0xff]
        %v7151 = vld [vmem:[%s9 + $0x428] sm:$0xff]
        %v7152 = vld [vmem:[%s9 + $0x430] sm:$0xff]
        %v7153 = vld [vmem:[%s9 + $0x438] sm:$0xff]
        %v7154 = vld [vmem:[%s9 + $0x440] sm:$0xff]
        %v7155 = vld [vmem:[%s9 + $0x448] sm:$0xff]
        %v7156 = vld [vmem:[%s9 + $0x450] sm:$0xff]
        %v7157 = vld [vmem:[%s9 + $0x458] sm:$0xff]
        %v7158 = vld [vmem:[%s9 + $0x460] sm:$0xff]
        %v7159 = vld [vmem:[%s9 + $0x468] sm:$0xff]
        %v7160 = vld [vmem:[%s9 + $0x470] sm:$0xff]
        %v7161 = vld [vmem:[%s9 + $0x478] sm:$0xff]
        %v7162 = vld [vmem:[%s9 + $0x480] sm:$0xff]
        %v7163 = vld [vmem:[%s9 + $0x488] sm:$0xff]
        %v7164 = vld [vmem:[%s9 + $0x490] sm:$0xff]
        %v7165 = vld [vmem:[%s9 + $0x498] sm:$0xff]
        %v7166 = vld [vmem:[%s9 + $0x4a0] sm:$0xff]
        %v7167 = vld [vmem:[%s9 + $0x4a8] sm:$0xff]
        %v7168 = vld [vmem:[%s9 + $0x4b0] sm:$0xff]
        %v7169 = vld [vmem:[%s9 + $0x4b8] sm:$0xff]
        %v7170 = vld [vmem:[%s9 + $0x4c0] sm:$0xff]
        %v7171 = vld [vmem:[%s9 + $0x4c8] sm:$0xff]
        %v7172 = vld [vmem:[%s9 + $0x4d0] sm:$0xff]
        %v7173 = vld [vmem:[%s9 + $0x4d8] sm:$0xff]
        %v7174 = vld [vmem:[%s9 + $0x4e0] sm:$0xff]
        %v7175 = vld [vmem:[%s9 + $0x4e8] sm:$0xff]
        %v7176 = vld [vmem:[%s9 + $0x4f0] sm:$0xff]
        %v7177 = vld [vmem:[%s9 + $0x4f8] sm:$0xff]
        %v7178 = vld [vmem:[%s9 + $0x500] sm:$0xff]
        %v7179 = vld [vmem:[%s9 + $0x508] sm:$0xff]
        %v7180 = vld [vmem:[%s9 + $0x510] sm:$0xff]
        %v7181 = vld [vmem:[%s9 + $0x518] sm:$0xff]
        %v7182 = vld [vmem:[%s9 + $0x520] sm:$0xff]
        %v7183 = vld [vmem:[%s9 + $0x528] sm:$0xff]
        %v7184 = vld [vmem:[%s9 + $0x530] sm:$0xff]
        %v7185 = vld [vmem:[%s9 + $0x538] sm:$0xff]
        %v7186 = vld [vmem:[%s9 + $0x540] sm:$0xff]
        %v7187 = vld [vmem:[%s9 + $0x548] sm:$0xff]
        %v7188 = vld [vmem:[%s9 + $0x550] sm:$0xff]
        %v7189 = vld [vmem:[%s9 + $0x558] sm:$0xff]
        %v7190 = vld [vmem:[%s9 + $0x560] sm:$0xff]
        %v7191 = vld [vmem:[%s9 + $0x568] sm:$0xff]
        %v7192 = vld [vmem:[%s9 + $0x570] sm:$0xff]
        %v7193 = vld [vmem:[%s9 + $0x578] sm:$0xff]
        %v7194 = vld [vmem:[%s9 + $0x580] sm:$0xff]
        %v7195 = vld [vmem:[%s9 + $0x588] sm:$0xff]
        %v7196 = vld [vmem:[%s9 + $0x590] sm:$0xff]
        %v7197 = vld [vmem:[%s9 + $0x598] sm:$0xff]
        %v7198 = vld [vmem:[%s9 + $0x5a0] sm:$0xff]
        %v7199 = vld [vmem:[%s9 + $0x5a8] sm:$0xff]
        %v7200 = vld [vmem:[%s9 + $0x5b0] sm:$0xff]
        %v7201 = vld [vmem:[%s9 + $0x5b8] sm:$0xff]
        %v7202 = vld [vmem:[%s9 + $0x5c0] sm:$0xff]
        %v7203 = vld [vmem:[%s9 + $0x5c8] sm:$0xff]
        %v7204 = vld [vmem:[%s9 + $0x5d0] sm:$0xff]
        %v7205 = vld [vmem:[%s9 + $0x5d8] sm:$0xff]
        %v7206 = vld [vmem:[%s9 + $0x5e0] sm:$0xff]
        %v7207 = vld [vmem:[%s9 + $0x5e8] sm:$0xff]
        %v7208 = vld [vmem:[%s9 + $0x5f0] sm:$0xff]
        %v7209 = vld [vmem:[%s9 + $0x5f8] sm:$0xff]
        %v7210 = vld [vmem:[%s9 + $0x600] sm:$0xff]
        %v7211 = vld [vmem:[%s9 + $0x608] sm:$0xff]
        %v7212 = vld [vmem:[%s9 + $0x610] sm:$0xff]
        %v7213 = vld [vmem:[%s9 + $0x618] sm:$0xff]
        %v7214 = vld [vmem:[%s9 + $0x620] sm:$0xff]
        %v7215 = vld [vmem:[%s9 + $0x628] sm:$0xff]
        %v7216 = vld [vmem:[%s9 + $0x630] sm:$0xff]
        %v7217 = vld [vmem:[%s9 + $0x638] sm:$0xff]
        %v7218 = vld [vmem:[%s9 + $0x640] sm:$0xff]
        %v7219 = vld [vmem:[%s9 + $0x648] sm:$0xff]
        %v7220 = vld [vmem:[%s9 + $0x650] sm:$0xff]
        %v7221 = vld [vmem:[%s9 + $0x658] sm:$0xff]
        %v7222 = vld [vmem:[%s9 + $0x660] sm:$0xff]
        %v7223 = vld [vmem:[%s9 + $0x668] sm:$0xff]
        %v7224 = vld [vmem:[%s9 + $0x670] sm:$0xff]
        %v7225 = vld [vmem:[%s9 + $0x678] sm:$0xff]
        %v7226 = vld [vmem:[%s9 + $0x680] sm:$0xff]
        %v7227 = vld [vmem:[%s9 + $0x688] sm:$0xff]
        %v7228 = vld [vmem:[%s9 + $0x690] sm:$0xff]
        %v7229 = vld [vmem:[%s9 + $0x698] sm:$0xff]
        %v7230 = vld [vmem:[%s9 + $0x6a0] sm:$0xff]
        %v7231 = vld [vmem:[%s9 + $0x6a8] sm:$0xff]
        %v7232 = vld [vmem:[%s9 + $0x6b0] sm:$0xff]
        %v7233 = vld [vmem:[%s9 + $0x6b8] sm:$0xff]
        %v7234 = vld [vmem:[%s9 + $0x6c0] sm:$0xff]
        %v7235 = vld [vmem:[%s9 + $0x6c8] sm:$0xff]
        %v7236 = vld [vmem:[%s9 + $0x6d0] sm:$0xff]
        %v7237 = vld [vmem:[%s9 + $0x6d8] sm:$0xff]
        %v7238 = vld [vmem:[%s9 + $0x6e0] sm:$0xff]
        %v7239 = vld [vmem:[%s9 + $0x6e8] sm:$0xff]
        %v7240 = vld [vmem:[%s9 + $0x6f0] sm:$0xff]
        %v7241 = vld [vmem:[%s9 + $0x6f8] sm:$0xff]
        %v7242 = vld [vmem:[%s9 + $0x700] sm:$0xff]
        %v7243 = vld [vmem:[%s9 + $0x708] sm:$0xff]
        %v7244 = vld [vmem:[%s9 + $0x710] sm:$0xff]
        %v7245 = vld [vmem:[%s9 + $0x718] sm:$0xff]
        %v7246 = vld [vmem:[%s9 + $0x720] sm:$0xff]
        %v7247 = vld [vmem:[%s9 + $0x728] sm:$0xff]
        %v7248 = vld [vmem:[%s9 + $0x730] sm:$0xff]
        %v7249 = vld [vmem:[%s9 + $0x738] sm:$0xff]
        %v7250 = vld [vmem:[%s9 + $0x740] sm:$0xff]
        %v7251 = vld [vmem:[%s9 + $0x748] sm:$0xff]
        %v7252 = vld [vmem:[%s9 + $0x750] sm:$0xff]
        %v7253 = vld [vmem:[%s9 + $0x758] sm:$0xff]
        %v7254 = vld [vmem:[%s9 + $0x760] sm:$0xff]
        %v7255 = vld [vmem:[%s9 + $0x768] sm:$0xff]
        %v7256 = vld [vmem:[%s9 + $0x770] sm:$0xff]
        %v7257 = vld [vmem:[%s9 + $0x778] sm:$0xff]
        %v7258 = vld [vmem:[%s9 + $0x780] sm:$0xff]
        %v7259 = vld [vmem:[%s9 + $0x788] sm:$0xff]
        %v7260 = vld [vmem:[%s9 + $0x790] sm:$0xff]
        %v7261 = vld [vmem:[%s9 + $0x798] sm:$0xff]
        %v7262 = vld [vmem:[%s9 + $0x7a0] sm:$0xff]
        %v7263 = vld [vmem:[%s9 + $0x7a8] sm:$0xff]
        %v7264 = vld [vmem:[%s9 + $0x7b0] sm:$0xff]
        %v7265 = vld [vmem:[%s9 + $0x7b8] sm:$0xff]
        %v7266 = vld [vmem:[%s9 + $0x7c0] sm:$0xff]
        %v7267 = vld [vmem:[%s9 + $0x7c8] sm:$0xff]
        %v7268 = vld [vmem:[%s9 + $0x7d0] sm:$0xff]
        %v7269 = vld [vmem:[%s9 + $0x7d8] sm:$0xff]
        %v7270 = vld [vmem:[%s9 + $0x7e0] sm:$0xff]
        %v7271 = vld [vmem:[%s9 + $0x7e8] sm:$0xff]
        %v7272 = vld [vmem:[%s9 + $0x7f0] sm:$0xff]
        %v7273 = vld [vmem:[%s9 + $0x7f8] sm:$0xff]
        %v7274 = vld [vmem:[%s9 + $0x800] sm:$0xff]
        %v7275 = vld [vmem:[%s9 + $0x808] sm:$0xff]
        %v7276 = vld [vmem:[%s9 + $0x810] sm:$0xff]
        %v7277 = vld [vmem:[%s9 + $0x818] sm:$0xff]
        %v7278 = vld [vmem:[%s9 + $0x820] sm:$0xff]
        %v7279 = vld [vmem:[%s9 + $0x828] sm:$0xff]
        %v7280 = vld [vmem:[%s9 + $0x830] sm:$0xff]
        %v7281 = vld [vmem:[%s9 + $0x838] sm:$0xff]
        %v7282 = vld [vmem:[%s9 + $0x840] sm:$0xff]
        %v7283 = vld [vmem:[%s9 + $0x848] sm:$0xff]
        %v7284 = vld [vmem:[%s9 + $0x850] sm:$0xff]
        %v7285 = vld [vmem:[%s9 + $0x858] sm:$0xff]
        %v7286 = vld [vmem:[%s9 + $0x860] sm:$0xff]
        %v7287 = vld [vmem:[%s9 + $0x868] sm:$0xff]
        %v7288 = vld [vmem:[%s9 + $0x870] sm:$0xff]
        %v7289 = vld [vmem:[%s9 + $0x878] sm:$0xff]
        %v7290 = vld [vmem:[%s9 + $0x880] sm:$0xff]
        %v7291 = vld [vmem:[%s9 + $0x888] sm:$0xff]
        %v7292 = vld [vmem:[%s9 + $0x890] sm:$0xff]
        %v7293 = vld [vmem:[%s9 + $0x898] sm:$0xff]
        %v7294 = vld [vmem:[%s9 + $0x8a0] sm:$0xff]
        %v7295 = vld [vmem:[%s9 + $0x8a8] sm:$0xff]
        %v7296 = vld [vmem:[%s9 + $0x8b0] sm:$0xff]
        %v7297 = vld [vmem:[%s9 + $0x8b8] sm:$0xff]
        %v7298 = vld [vmem:[%s9 + $0x8c0] sm:$0xff]
        %v7299 = vld [vmem:[%s9 + $0x8c8] sm:$0xff]
        %v7300 = vld [vmem:[%s9 + $0x8d0] sm:$0xff]
        %v7301 = vld [vmem:[%s9 + $0x8d8] sm:$0xff]
        %v7302 = vld [vmem:[%s9 + $0x8e0] sm:$0xff]
        %v7303 = vld [vmem:[%s9 + $0x8e8] sm:$0xff]
        %v7304 = vld [vmem:[%s9 + $0x8f0] sm:$0xff]
        %v7305 = vld [vmem:[%s9 + $0x8f8] sm:$0xff]
        %v7306 = vld [vmem:[%s10] sm:$0xf]
        %v7595 = vunpack.c.l.b16 %v7018
        %v7596 = vunpack.c.h.b16 %v7018
        %v7597 = vunpack.c.l.b16 %v7019
        %v7598 = vunpack.c.h.b16 %v7019
        %v7599 = vunpack.c.l.b16 %v7020
        %v7600 = vunpack.c.h.b16 %v7020
        %v7601 = vunpack.c.l.b16 %v7021
        %v7602 = vunpack.c.h.b16 %v7021
        %v7603 = vunpack.c.l.b16 %v7022
        %v7604 = vunpack.c.h.b16 %v7022
        %v7605 = vunpack.c.l.b16 %v7023
        %v7606 = vunpack.c.h.b16 %v7023
        %v7607 = vunpack.c.l.b16 %v7024
        %v7608 = vunpack.c.h.b16 %v7024
        %v7609 = vunpack.c.l.b16 %v7025
        %v7610 = vunpack.c.h.b16 %v7025
        %v7611 = vunpack.c.l.b16 %v7026
        %v7612 = vunpack.c.h.b16 %v7026
        %v7613 = vunpack.c.l.b16 %v7027
        %v7614 = vunpack.c.h.b16 %v7027
        %v7615 = vunpack.c.l.b16 %v7028
        %v7616 = vunpack.c.h.b16 %v7028
        %v7617 = vunpack.c.l.b16 %v7029
        %v7618 = vunpack.c.h.b16 %v7029
        %v7619 = vunpack.c.l.b16 %v7030
        %v7620 = vunpack.c.h.b16 %v7030
        %v7621 = vunpack.c.l.b16 %v7031
        %v7622 = vunpack.c.h.b16 %v7031
        %v7623 = vunpack.c.l.b16 %v7032
        %v7624 = vunpack.c.h.b16 %v7032
        %v7625 = vunpack.c.l.b16 %v7033
        %v7626 = vunpack.c.h.b16 %v7033
        %v7627 = vunpack.c.l.b16 %v7034
        %v7628 = vunpack.c.h.b16 %v7034
        %v7629 = vunpack.c.l.b16 %v7035
        %v7630 = vunpack.c.h.b16 %v7035
        %v7631 = vunpack.c.l.b16 %v7036
        %v7632 = vunpack.c.h.b16 %v7036
        %v7633 = vunpack.c.l.b16 %v7037
        %v7634 = vunpack.c.h.b16 %v7037
        %v7635 = vunpack.c.l.b16 %v7038
        %v7636 = vunpack.c.h.b16 %v7038
        %v7637 = vunpack.c.l.b16 %v7039
        %v7638 = vunpack.c.h.b16 %v7039
        %v7639 = vunpack.c.l.b16 %v7040
        %v7640 = vunpack.c.h.b16 %v7040
        %v7641 = vunpack.c.l.b16 %v7041
        %v7642 = vunpack.c.h.b16 %v7041
        %v7643 = vunpack.c.l.b16 %v7042
        %v7644 = vunpack.c.h.b16 %v7042
        %v7645 = vunpack.c.l.b16 %v7043
        %v7646 = vunpack.c.h.b16 %v7043
        %v7647 = vunpack.c.l.b16 %v7044
        %v7648 = vunpack.c.h.b16 %v7044
        %v7649 = vunpack.c.l.b16 %v7045
        %v7650 = vunpack.c.h.b16 %v7045
        %v7651 = vunpack.c.l.b16 %v7046
        %v7652 = vunpack.c.h.b16 %v7046
        %v7653 = vunpack.c.l.b16 %v7047
        %v7654 = vunpack.c.h.b16 %v7047
        %v7655 = vunpack.c.l.b16 %v7048
        %v7656 = vunpack.c.h.b16 %v7048
        %v7657 = vunpack.c.l.b16 %v7049
        %v7658 = vunpack.c.h.b16 %v7049
        %v7659 = vunpack.c.l.b16 %v7050
        %v7660 = vunpack.c.h.b16 %v7050
        %v7661 = vunpack.c.l.b16 %v7051
        %v7662 = vunpack.c.h.b16 %v7051
        %v7663 = vunpack.c.l.b16 %v7052
        %v7664 = vunpack.c.h.b16 %v7052
        %v7665 = vunpack.c.l.b16 %v7053
        %v7666 = vunpack.c.h.b16 %v7053
        %v7667 = vunpack.c.l.b16 %v7054
        %v7668 = vunpack.c.h.b16 %v7054
        %v7669 = vunpack.c.l.b16 %v7055
        %v7670 = vunpack.c.h.b16 %v7055
        %v7671 = vunpack.c.l.b16 %v7056
        %v7672 = vunpack.c.h.b16 %v7056
        %v7673 = vunpack.c.l.b16 %v7057
        %v7674 = vunpack.c.h.b16 %v7057
        %v7675 = vunpack.c.l.b16 %v7058
        %v7676 = vunpack.c.h.b16 %v7058
        %v7677 = vunpack.c.l.b16 %v7059
        %v7678 = vunpack.c.h.b16 %v7059
        %v7679 = vunpack.c.l.b16 %v7060
        %v7680 = vunpack.c.h.b16 %v7060
        %v7681 = vunpack.c.l.b16 %v7061
        %v7682 = vunpack.c.h.b16 %v7061
        %v7683 = vunpack.c.l.b16 %v7062
        %v7684 = vunpack.c.h.b16 %v7062
        %v7685 = vunpack.c.l.b16 %v7063
        %v7686 = vunpack.c.h.b16 %v7063
        %v7687 = vunpack.c.l.b16 %v7064
        %v7688 = vunpack.c.h.b16 %v7064
        %v7689 = vunpack.c.l.b16 %v7065
        %v7690 = vunpack.c.h.b16 %v7065
        %v7691 = vunpack.c.l.b16 %v7066
        %v7692 = vunpack.c.h.b16 %v7066
        %v7693 = vunpack.c.l.b16 %v7067
        %v7694 = vunpack.c.h.b16 %v7067
        %v7695 = vunpack.c.l.b16 %v7068
        %v7696 = vunpack.c.h.b16 %v7068
        %v7697 = vunpack.c.l.b16 %v7069
        %v7698 = vunpack.c.h.b16 %v7069
        %v7699 = vunpack.c.l.b16 %v7070
        %v7700 = vunpack.c.h.b16 %v7070
        %v7701 = vunpack.c.l.b16 %v7071
        %v7702 = vunpack.c.h.b16 %v7071
        %v7703 = vunpack.c.l.b16 %v7072
        %v7704 = vunpack.c.h.b16 %v7072
        %v7705 = vunpack.c.l.b16 %v7073
        %v7706 = vunpack.c.h.b16 %v7073
        %v7707 = vunpack.c.l.b16 %v7074
        %v7708 = vunpack.c.h.b16 %v7074
        %v7709 = vunpack.c.l.b16 %v7075
        %v7710 = vunpack.c.h.b16 %v7075
        %v7711 = vunpack.c.l.b16 %v7076
        %v7712 = vunpack.c.h.b16 %v7076
        %v7713 = vunpack.c.l.b16 %v7077
        %v7714 = vunpack.c.h.b16 %v7077
        %v7715 = vunpack.c.l.b16 %v7078
        %v7716 = vunpack.c.h.b16 %v7078
        %v7717 = vunpack.c.l.b16 %v7079
        %v7718 = vunpack.c.h.b16 %v7079
        %v7719 = vunpack.c.l.b16 %v7080
        %v7720 = vunpack.c.h.b16 %v7080
        %v7721 = vunpack.c.l.b16 %v7081
        %v7722 = vunpack.c.h.b16 %v7081
        %v7723 = vunpack.c.l.b16 %v7082
        %v7724 = vunpack.c.h.b16 %v7082
        %v7725 = vunpack.c.l.b16 %v7083
        %v7726 = vunpack.c.h.b16 %v7083
        %v7727 = vunpack.c.l.b16 %v7084
        %v7728 = vunpack.c.h.b16 %v7084
        %v7729 = vunpack.c.l.b16 %v7085
        %v7730 = vunpack.c.h.b16 %v7085
        %v7731 = vunpack.c.l.b16 %v7086
        %v7732 = vunpack.c.h.b16 %v7086
        %v7733 = vunpack.c.l.b16 %v7087
        %v7734 = vunpack.c.h.b16 %v7087
        %v7735 = vunpack.c.l.b16 %v7088
        %v7736 = vunpack.c.h.b16 %v7088
        %v7737 = vunpack.c.l.b16 %v7089
        %v7738 = vunpack.c.h.b16 %v7089
        %v7739 = vunpack.c.l.b16 %v7090
        %v7740 = vunpack.c.h.b16 %v7090
        %v7741 = vunpack.c.l.b16 %v7091
        %v7742 = vunpack.c.h.b16 %v7091
        %v7743 = vunpack.c.l.b16 %v7092
        %v7744 = vunpack.c.h.b16 %v7092
        %v7745 = vunpack.c.l.b16 %v7093
        %v7746 = vunpack.c.h.b16 %v7093
        %v7747 = vunpack.c.l.b16 %v7094
        %v7748 = vunpack.c.h.b16 %v7094
        %v7749 = vunpack.c.l.b16 %v7095
        %v7750 = vunpack.c.h.b16 %v7095
        %v7751 = vunpack.c.l.b16 %v7096
        %v7752 = vunpack.c.h.b16 %v7096
        %v7753 = vunpack.c.l.b16 %v7097
        %v7754 = vunpack.c.h.b16 %v7097
        %v7755 = vunpack.c.l.b16 %v7098
        %v7756 = vunpack.c.h.b16 %v7098
        %v7757 = vunpack.c.l.b16 %v7099
        %v7758 = vunpack.c.h.b16 %v7099
        %v7759 = vunpack.c.l.b16 %v7100
        %v7760 = vunpack.c.h.b16 %v7100
        %v7761 = vunpack.c.l.b16 %v7101
        %v7762 = vunpack.c.h.b16 %v7101
        %v7763 = vunpack.c.l.b16 %v7102
        %v7764 = vunpack.c.h.b16 %v7102
        %v7765 = vunpack.c.l.b16 %v7103
        %v7766 = vunpack.c.h.b16 %v7103
        %v7767 = vunpack.c.l.b16 %v7104
        %v7768 = vunpack.c.h.b16 %v7104
        %v7769 = vunpack.c.l.b16 %v7105
        %v7770 = vunpack.c.h.b16 %v7105
        %v7771 = vunpack.c.l.b16 %v7106
        %v7772 = vunpack.c.h.b16 %v7106
        %v7773 = vunpack.c.l.b16 %v7107
        %v7774 = vunpack.c.h.b16 %v7107
        %v7775 = vunpack.c.l.b16 %v7108
        %v7776 = vunpack.c.h.b16 %v7108
        %v7777 = vunpack.c.l.b16 %v7109
        %v7778 = vunpack.c.h.b16 %v7109
        %v7779 = vunpack.c.l.b16 %v7110
        %v7780 = vunpack.c.h.b16 %v7110
        %v7781 = vunpack.c.l.b16 %v7111
        %v7782 = vunpack.c.h.b16 %v7111
        %v7783 = vunpack.c.l.b16 %v7112
        %v7784 = vunpack.c.h.b16 %v7112
        %v7785 = vunpack.c.l.b16 %v7113
        %v7786 = vunpack.c.h.b16 %v7113
        %v7787 = vunpack.c.l.b16 %v7114
        %v7788 = vunpack.c.h.b16 %v7114
        %v7789 = vunpack.c.l.b16 %v7115
        %v7790 = vunpack.c.h.b16 %v7115
        %v7791 = vunpack.c.l.b16 %v7116
        %v7792 = vunpack.c.h.b16 %v7116
        %v7793 = vunpack.c.l.b16 %v7117
        %v7794 = vunpack.c.h.b16 %v7117
        %v7795 = vunpack.c.l.b16 %v7118
        %v7796 = vunpack.c.h.b16 %v7118
        %v7797 = vunpack.c.l.b16 %v7119
        %v7798 = vunpack.c.h.b16 %v7119
        %v7799 = vunpack.c.l.b16 %v7120
        %v7800 = vunpack.c.h.b16 %v7120
        %v7801 = vunpack.c.l.b16 %v7121
        %v7802 = vunpack.c.h.b16 %v7121
        %v7803 = vunpack.c.l.b16 %v7122
        %v7804 = vunpack.c.h.b16 %v7122
        %v7805 = vunpack.c.l.b16 %v7123
        %v7806 = vunpack.c.h.b16 %v7123
        %v7807 = vunpack.c.l.b16 %v7124
        %v7808 = vunpack.c.h.b16 %v7124
        %v7809 = vunpack.c.l.b16 %v7125
        %v7810 = vunpack.c.h.b16 %v7125
        %v7811 = vunpack.c.l.b16 %v7126
        %v7812 = vunpack.c.h.b16 %v7126
        %v7813 = vunpack.c.l.b16 %v7127
        %v7814 = vunpack.c.h.b16 %v7127
        %v7815 = vunpack.c.l.b16 %v7128
        %v7816 = vunpack.c.h.b16 %v7128
        %v7817 = vunpack.c.l.b16 %v7129
        %v7818 = vunpack.c.h.b16 %v7129
        %v7819 = vunpack.c.l.b16 %v7130
        %v7820 = vunpack.c.h.b16 %v7130
        %v7821 = vunpack.c.l.b16 %v7131
        %v7822 = vunpack.c.h.b16 %v7131
        %v7823 = vunpack.c.l.b16 %v7132
        %v7824 = vunpack.c.h.b16 %v7132
        %v7825 = vunpack.c.l.b16 %v7133
        %v7826 = vunpack.c.h.b16 %v7133
        %v7827 = vunpack.c.l.b16 %v7134
        %v7828 = vunpack.c.h.b16 %v7134
        %v7829 = vunpack.c.l.b16 %v7135
        %v7830 = vunpack.c.h.b16 %v7135
        %v7831 = vunpack.c.l.b16 %v7136
        %v7832 = vunpack.c.h.b16 %v7136
        %v7833 = vunpack.c.l.b16 %v7137
        %v7834 = vunpack.c.h.b16 %v7137
        %v7835 = vunpack.c.l.b16 %v7138
        %v7836 = vunpack.c.h.b16 %v7138
        %v7837 = vunpack.c.l.b16 %v7139
        %v7838 = vunpack.c.h.b16 %v7139
        %v7839 = vunpack.c.l.b16 %v7140
        %v7840 = vunpack.c.h.b16 %v7140
        %v7841 = vunpack.c.l.b16 %v7141
        %v7842 = vunpack.c.h.b16 %v7141
        %v7843 = vunpack.c.l.b16 %v7142
        %v7844 = vunpack.c.h.b16 %v7142
        %v7845 = vunpack.c.l.b16 %v7143
        %v7846 = vunpack.c.h.b16 %v7143
        %v7847 = vunpack.c.l.b16 %v7144
        %v7848 = vunpack.c.h.b16 %v7144
        %v7849 = vunpack.c.l.b16 %v7145
        %v7850 = vunpack.c.h.b16 %v7145
        %v7851 = vunpack.c.l.b16 %v7146
        %v7852 = vunpack.c.h.b16 %v7146
        %v7853 = vunpack.c.l.b16 %v7147
        %v7854 = vunpack.c.h.b16 %v7147
        %v7855 = vunpack.c.l.b16 %v7148
        %v7856 = vunpack.c.h.b16 %v7148
        %v7857 = vunpack.c.l.b16 %v7149
        %v7858 = vunpack.c.h.b16 %v7149
        %v7859 = vunpack.c.l.b16 %v7150
        %v7860 = vunpack.c.h.b16 %v7150
        %v7861 = vunpack.c.l.b16 %v7151
        %v7862 = vunpack.c.h.b16 %v7151
        %v7863 = vunpack.c.l.b16 %v7152
        %v7864 = vunpack.c.h.b16 %v7152
        %v7865 = vunpack.c.l.b16 %v7153
        %v7866 = vunpack.c.h.b16 %v7153
        %v7867 = vunpack.c.l.b16 %v7154
        %v7868 = vunpack.c.h.b16 %v7154
        %v7869 = vunpack.c.l.b16 %v7155
        %v7870 = vunpack.c.h.b16 %v7155
        %v7871 = vunpack.c.l.b16 %v7156
        %v7872 = vunpack.c.h.b16 %v7156
        %v7873 = vunpack.c.l.b16 %v7157
        %v7874 = vunpack.c.h.b16 %v7157
        %v7875 = vunpack.c.l.b16 %v7158
        %v7876 = vunpack.c.h.b16 %v7158
        %v7877 = vunpack.c.l.b16 %v7159
        %v7878 = vunpack.c.h.b16 %v7159
        %v7879 = vunpack.c.l.b16 %v7160
        %v7880 = vunpack.c.h.b16 %v7160
        %v7881 = vunpack.c.l.b16 %v7161
        %v7882 = vunpack.c.h.b16 %v7161
        %v7883 = vunpack.c.l.b16 %v7162
        %v7884 = vunpack.c.h.b16 %v7162
        %v7885 = vunpack.c.l.b16 %v7163
        %v7886 = vunpack.c.h.b16 %v7163
        %v7887 = vunpack.c.l.b16 %v7164
        %v7888 = vunpack.c.h.b16 %v7164
        %v7889 = vunpack.c.l.b16 %v7165
        %v7890 = vunpack.c.h.b16 %v7165
        %v7891 = vunpack.c.l.b16 %v7166
        %v7892 = vunpack.c.h.b16 %v7166
        %v7893 = vunpack.c.l.b16 %v7167
        %v7894 = vunpack.c.h.b16 %v7167
        %v7895 = vunpack.c.l.b16 %v7168
        %v7896 = vunpack.c.h.b16 %v7168
        %v7897 = vunpack.c.l.b16 %v7169
        %v7898 = vunpack.c.h.b16 %v7169
        %v7899 = vunpack.c.l.b16 %v7170
        %v7900 = vunpack.c.h.b16 %v7170
        %v7901 = vunpack.c.l.b16 %v7171
        %v7902 = vunpack.c.h.b16 %v7171
        %v7903 = vunpack.c.l.b16 %v7172
        %v7904 = vunpack.c.h.b16 %v7172
        %v7905 = vunpack.c.l.b16 %v7173
        %v7906 = vunpack.c.h.b16 %v7173
        %v7907 = vunpack.c.l.b16 %v7174
        %v7908 = vunpack.c.h.b16 %v7174
        %v7909 = vunpack.c.l.b16 %v7175
        %v7910 = vunpack.c.h.b16 %v7175
        %v7911 = vunpack.c.l.b16 %v7176
        %v7912 = vunpack.c.h.b16 %v7176
        %v7913 = vunpack.c.l.b16 %v7177
        %v7914 = vunpack.c.h.b16 %v7177
        %v7915 = vunpack.c.l.b16 %v7178
        %v7916 = vunpack.c.h.b16 %v7178
        %v7917 = vunpack.c.l.b16 %v7179
        %v7918 = vunpack.c.h.b16 %v7179
        %v7919 = vunpack.c.l.b16 %v7180
        %v7920 = vunpack.c.h.b16 %v7180
        %v7921 = vunpack.c.l.b16 %v7181
        %v7922 = vunpack.c.h.b16 %v7181
        %v7923 = vunpack.c.l.b16 %v7182
        %v7924 = vunpack.c.h.b16 %v7182
        %v7925 = vunpack.c.l.b16 %v7183
        %v7926 = vunpack.c.h.b16 %v7183
        %v7927 = vunpack.c.l.b16 %v7184
        %v7928 = vunpack.c.h.b16 %v7184
        %v7929 = vunpack.c.l.b16 %v7185
        %v7930 = vunpack.c.h.b16 %v7185
        %v7931 = vunpack.c.l.b16 %v7186
        %v7932 = vunpack.c.h.b16 %v7186
        %v7933 = vunpack.c.l.b16 %v7187
        %v7934 = vunpack.c.h.b16 %v7187
        %v7935 = vunpack.c.l.b16 %v7188
        %v7936 = vunpack.c.h.b16 %v7188
        %v7937 = vunpack.c.l.b16 %v7189
        %v7938 = vunpack.c.h.b16 %v7189
        %v7939 = vunpack.c.l.b16 %v7190
        %v7940 = vunpack.c.h.b16 %v7190
        %v7941 = vunpack.c.l.b16 %v7191
        %v7942 = vunpack.c.h.b16 %v7191
        %v7943 = vunpack.c.l.b16 %v7192
        %v7944 = vunpack.c.h.b16 %v7192
        %v7945 = vunpack.c.l.b16 %v7193
        %v7946 = vunpack.c.h.b16 %v7193
        %v7947 = vunpack.c.l.b16 %v7194
        %v7948 = vunpack.c.h.b16 %v7194
        %v7949 = vunpack.c.l.b16 %v7195
        %v7950 = vunpack.c.h.b16 %v7195
        %v7951 = vunpack.c.l.b16 %v7196
        %v7952 = vunpack.c.h.b16 %v7196
        %v7953 = vunpack.c.l.b16 %v7197
        %v7954 = vunpack.c.h.b16 %v7197
        %v7955 = vunpack.c.l.b16 %v7198
        %v7956 = vunpack.c.h.b16 %v7198
        %v7957 = vunpack.c.l.b16 %v7199
        %v7958 = vunpack.c.h.b16 %v7199
        %v7959 = vunpack.c.l.b16 %v7200
        %v7960 = vunpack.c.h.b16 %v7200
        %v7961 = vunpack.c.l.b16 %v7201
        %v7962 = vunpack.c.h.b16 %v7201
        %v7963 = vunpack.c.l.b16 %v7202
        %v7964 = vunpack.c.h.b16 %v7202
        %v7965 = vunpack.c.l.b16 %v7203
        %v7966 = vunpack.c.h.b16 %v7203
        %v7967 = vunpack.c.l.b16 %v7204
        %v7968 = vunpack.c.h.b16 %v7204
        %v7969 = vunpack.c.l.b16 %v7205
        %v7970 = vunpack.c.h.b16 %v7205
        %v7971 = vunpack.c.l.b16 %v7206
        %v7972 = vunpack.c.h.b16 %v7206
        %v7973 = vunpack.c.l.b16 %v7207
        %v7974 = vunpack.c.h.b16 %v7207
        %v7975 = vunpack.c.l.b16 %v7208
        %v7976 = vunpack.c.h.b16 %v7208
        %v7977 = vunpack.c.l.b16 %v7209
        %v7978 = vunpack.c.h.b16 %v7209
        %v7979 = vunpack.c.l.b16 %v7210
        %v7980 = vunpack.c.h.b16 %v7210
        %v7981 = vunpack.c.l.b16 %v7211
        %v7982 = vunpack.c.h.b16 %v7211
        %v7983 = vunpack.c.l.b16 %v7212
        %v7984 = vunpack.c.h.b16 %v7212
        %v7985 = vunpack.c.l.b16 %v7213
        %v7986 = vunpack.c.h.b16 %v7213
        %v7987 = vunpack.c.l.b16 %v7214
        %v7988 = vunpack.c.h.b16 %v7214
        %v7989 = vunpack.c.l.b16 %v7215
        %v7990 = vunpack.c.h.b16 %v7215
        %v7991 = vunpack.c.l.b16 %v7216
        %v7992 = vunpack.c.h.b16 %v7216
        %v7993 = vunpack.c.l.b16 %v7217
        %v7994 = vunpack.c.h.b16 %v7217
        %v7995 = vunpack.c.l.b16 %v7218
        %v7996 = vunpack.c.h.b16 %v7218
        %v7997 = vunpack.c.l.b16 %v7219
        %v7998 = vunpack.c.h.b16 %v7219
        %v7999 = vunpack.c.l.b16 %v7220
        %v8000 = vunpack.c.h.b16 %v7220
        %v8001 = vunpack.c.l.b16 %v7221
        %v8002 = vunpack.c.h.b16 %v7221
        %v8003 = vunpack.c.l.b16 %v7222
        %v8004 = vunpack.c.h.b16 %v7222
        %v8005 = vunpack.c.l.b16 %v7223
        %v8006 = vunpack.c.h.b16 %v7223
        %v8007 = vunpack.c.l.b16 %v7224
        %v8008 = vunpack.c.h.b16 %v7224
        %v8009 = vunpack.c.l.b16 %v7225
        %v8010 = vunpack.c.h.b16 %v7225
        %v8011 = vunpack.c.l.b16 %v7226
        %v8012 = vunpack.c.h.b16 %v7226
        %v8013 = vunpack.c.l.b16 %v7227
        %v8014 = vunpack.c.h.b16 %v7227
        %v8015 = vunpack.c.l.b16 %v7228
        %v8016 = vunpack.c.h.b16 %v7228
        %v8017 = vunpack.c.l.b16 %v7229
        %v8018 = vunpack.c.h.b16 %v7229
        %v8019 = vunpack.c.l.b16 %v7230
        %v8020 = vunpack.c.h.b16 %v7230
        %v8021 = vunpack.c.l.b16 %v7231
        %v8022 = vunpack.c.h.b16 %v7231
        %v8023 = vunpack.c.l.b16 %v7232
        %v8024 = vunpack.c.h.b16 %v7232
        %v8025 = vunpack.c.l.b16 %v7233
        %v8026 = vunpack.c.h.b16 %v7233
        %v8027 = vunpack.c.l.b16 %v7234
        %v8028 = vunpack.c.h.b16 %v7234
        %v8029 = vunpack.c.l.b16 %v7235
        %v8030 = vunpack.c.h.b16 %v7235
        %v8031 = vunpack.c.l.b16 %v7236
        %v8032 = vunpack.c.h.b16 %v7236
        %v8033 = vunpack.c.l.b16 %v7237
        %v8034 = vunpack.c.h.b16 %v7237
        %v8035 = vunpack.c.l.b16 %v7238
        %v8036 = vunpack.c.h.b16 %v7238
        %v8037 = vunpack.c.l.b16 %v7239
        %v8038 = vunpack.c.h.b16 %v7239
        %v8039 = vunpack.c.l.b16 %v7240
        %v8040 = vunpack.c.h.b16 %v7240
        %v8041 = vunpack.c.l.b16 %v7241
        %v8042 = vunpack.c.h.b16 %v7241
        %v8043 = vunpack.c.l.b16 %v7242
        %v8044 = vunpack.c.h.b16 %v7242
        %v8045 = vunpack.c.l.b16 %v7243
        %v8046 = vunpack.c.h.b16 %v7243
        %v8047 = vunpack.c.l.b16 %v7244
        %v8048 = vunpack.c.h.b16 %v7244
        %v8049 = vunpack.c.l.b16 %v7245
        %v8050 = vunpack.c.h.b16 %v7245
        %v8051 = vunpack.c.l.b16 %v7246
        %v8052 = vunpack.c.h.b16 %v7246
        %v8053 = vunpack.c.l.b16 %v7247
        %v8054 = vunpack.c.h.b16 %v7247
        %v8055 = vunpack.c.l.b16 %v7248
        %v8056 = vunpack.c.h.b16 %v7248
        %v8057 = vunpack.c.l.b16 %v7249
        %v8058 = vunpack.c.h.b16 %v7249
        %v8059 = vunpack.c.l.b16 %v7250
        %v8060 = vunpack.c.h.b16 %v7250
        %v8061 = vunpack.c.l.b16 %v7251
        %v8062 = vunpack.c.h.b16 %v7251
        %v8063 = vunpack.c.l.b16 %v7252
        %v8064 = vunpack.c.h.b16 %v7252
        %v8065 = vunpack.c.l.b16 %v7253
        %v8066 = vunpack.c.h.b16 %v7253
        %v8067 = vunpack.c.l.b16 %v7254
        %v8068 = vunpack.c.h.b16 %v7254
        %v8069 = vunpack.c.l.b16 %v7255
        %v8070 = vunpack.c.h.b16 %v7255
        %v8071 = vunpack.c.l.b16 %v7256
        %v8072 = vunpack.c.h.b16 %v7256
        %v8073 = vunpack.c.l.b16 %v7257
        %v8074 = vunpack.c.h.b16 %v7257
        %v8075 = vunpack.c.l.b16 %v7258
        %v8076 = vunpack.c.h.b16 %v7258
        %v8077 = vunpack.c.l.b16 %v7259
        %v8078 = vunpack.c.h.b16 %v7259
        %v8079 = vunpack.c.l.b16 %v7260
        %v8080 = vunpack.c.h.b16 %v7260
        %v8081 = vunpack.c.l.b16 %v7261
        %v8082 = vunpack.c.h.b16 %v7261
        %v8083 = vunpack.c.l.b16 %v7262
        %v8084 = vunpack.c.h.b16 %v7262
        %v8085 = vunpack.c.l.b16 %v7263
        %v8086 = vunpack.c.h.b16 %v7263
        %v8087 = vunpack.c.l.b16 %v7264
        %v8088 = vunpack.c.h.b16 %v7264
        %v8089 = vunpack.c.l.b16 %v7265
        %v8090 = vunpack.c.h.b16 %v7265
        %v8091 = vunpack.c.l.b16 %v7266
        %v8092 = vunpack.c.h.b16 %v7266
        %v8093 = vunpack.c.l.b16 %v7267
        %v8094 = vunpack.c.h.b16 %v7267
        %v8095 = vunpack.c.l.b16 %v7268
        %v8096 = vunpack.c.h.b16 %v7268
        %v8097 = vunpack.c.l.b16 %v7269
        %v8098 = vunpack.c.h.b16 %v7269
        %v8099 = vunpack.c.l.b16 %v7270
        %v8100 = vunpack.c.h.b16 %v7270
        %v8101 = vunpack.c.l.b16 %v7271
        %v8102 = vunpack.c.h.b16 %v7271
        %v8103 = vunpack.c.l.b16 %v7272
        %v8104 = vunpack.c.h.b16 %v7272
        %v8105 = vunpack.c.l.b16 %v7273
        %v8106 = vunpack.c.h.b16 %v7273
        %v8107 = vunpack.c.l.b16 %v7274
        %v8108 = vunpack.c.h.b16 %v7274
        %v8109 = vunpack.c.l.b16 %v7275
        %v8110 = vunpack.c.h.b16 %v7275
        %v8111 = vunpack.c.l.b16 %v7276
        %v8112 = vunpack.c.h.b16 %v7276
        %v8113 = vunpack.c.l.b16 %v7277
        %v8114 = vunpack.c.h.b16 %v7277
        %v8115 = vunpack.c.l.b16 %v7278
        %v8116 = vunpack.c.h.b16 %v7278
        %v8117 = vunpack.c.l.b16 %v7279
        %v8118 = vunpack.c.h.b16 %v7279
        %v8119 = vunpack.c.l.b16 %v7280
        %v8120 = vunpack.c.h.b16 %v7280
        %v8121 = vunpack.c.l.b16 %v7281
        %v8122 = vunpack.c.h.b16 %v7281
        %v8123 = vunpack.c.l.b16 %v7282
        %v8124 = vunpack.c.h.b16 %v7282
        %v8125 = vunpack.c.l.b16 %v7283
        %v8126 = vunpack.c.h.b16 %v7283
        %v8127 = vunpack.c.l.b16 %v7284
        %v8128 = vunpack.c.h.b16 %v7284
        %v8129 = vunpack.c.l.b16 %v7285
        %v8130 = vunpack.c.h.b16 %v7285
        %v8131 = vunpack.c.l.b16 %v7286
        %v8132 = vunpack.c.h.b16 %v7286
        %v8133 = vunpack.c.l.b16 %v7287
        %v8134 = vunpack.c.h.b16 %v7287
        %v8135 = vunpack.c.l.b16 %v7288
        %v8136 = vunpack.c.h.b16 %v7288
        %v8137 = vunpack.c.l.b16 %v7289
        %v8138 = vunpack.c.h.b16 %v7289
        %v8139 = vunpack.c.l.b16 %v7290
        %v8140 = vunpack.c.h.b16 %v7290
        %v8141 = vunpack.c.l.b16 %v7291
        %v8142 = vunpack.c.h.b16 %v7291
        %v8143 = vunpack.c.l.b16 %v7292
        %v8144 = vunpack.c.h.b16 %v7292
        %v8145 = vunpack.c.l.b16 %v7293
        %v8146 = vunpack.c.h.b16 %v7293
        %v8147 = vunpack.c.l.b16 %v7294
        %v8148 = vunpack.c.h.b16 %v7294
        %v8149 = vunpack.c.l.b16 %v7295
        %v8150 = vunpack.c.h.b16 %v7295
        %v8151 = vunpack.c.l.b16 %v7296
        %v8152 = vunpack.c.h.b16 %v7296
        %v8153 = vunpack.c.l.b16 %v7297
        %v8154 = vunpack.c.h.b16 %v7297
        %v8155 = vunpack.c.l.b16 %v7298
        %v8156 = vunpack.c.h.b16 %v7298
        %v8157 = vunpack.c.l.b16 %v7299
        %v8158 = vunpack.c.h.b16 %v7299
        %v8159 = vunpack.c.l.b16 %v7300
        %v8160 = vunpack.c.h.b16 %v7300
        %v8161 = vunpack.c.l.b16 %v7301
        %v8162 = vunpack.c.h.b16 %v7301
        %v8163 = vunpack.c.l.b16 %v7302
        %v8164 = vunpack.c.h.b16 %v7302
        %v8165 = vunpack.c.l.b16 %v7303
        %v8166 = vunpack.c.h.b16 %v7303
        %v8167 = vunpack.c.l.b16 %v7304
        %v8168 = vunpack.c.h.b16 %v7304
        %v8169 = vunpack.c.l.b16 %v7305
        %v8170 = vunpack.c.h.b16 %v7305
        %v8171 = vpack.c.b16 %v7599, %v7595
        %v8172 = vpack.c.b16 %v7600, %v7596
        %v8173 = vpack.c.b16 %v7601, %v7597
        %v8174 = vpack.c.b16 %v7602, %v7598
        %v8175 = vpack.c.b16 %v7607, %v7603
        %v8176 = vpack.c.b16 %v7608, %v7604
        %v8177 = vpack.c.b16 %v7609, %v7605
        %v8178 = vpack.c.b16 %v7610, %v7606
        %v8179 = vpack.c.b16 %v7615, %v7611
        %v8180 = vpack.c.b16 %v7616, %v7612
        %v8181 = vpack.c.b16 %v7617, %v7613
        %v8182 = vpack.c.b16 %v7618, %v7614
        %v8183 = vpack.c.b16 %v7623, %v7619
        %v8184 = vpack.c.b16 %v7624, %v7620
        %v8185 = vpack.c.b16 %v7625, %v7621
        %v8186 = vpack.c.b16 %v7626, %v7622
        %v8187 = vpack.c.b16 %v7631, %v7627
        %v8188 = vpack.c.b16 %v7632, %v7628
        %v8189 = vpack.c.b16 %v7633, %v7629
        %v8190 = vpack.c.b16 %v7634, %v7630
        %v8191 = vpack.c.b16 %v7639, %v7635
        %v8192 = vpack.c.b16 %v7640, %v7636
        %v8193 = vpack.c.b16 %v7641, %v7637
        %v8194 = vpack.c.b16 %v7642, %v7638
        %v8195 = vpack.c.b16 %v7647, %v7643
        %v8196 = vpack.c.b16 %v7648, %v7644
        %v8197 = vpack.c.b16 %v7649, %v7645
        %v8198 = vpack.c.b16 %v7650, %v7646
        %v8199 = vpack.c.b16 %v7655, %v7651
        %v8200 = vpack.c.b16 %v7656, %v7652
        %v8201 = vpack.c.b16 %v7657, %v7653
        %v8202 = vpack.c.b16 %v7658, %v7654
        %v8203 = vpack.c.b16 %v7663, %v7659
        %v8204 = vpack.c.b16 %v7664, %v7660
        %v8205 = vpack.c.b16 %v7665, %v7661
        %v8206 = vpack.c.b16 %v7666, %v7662
        %v8207 = vpack.c.b16 %v7671, %v7667
        %v8208 = vpack.c.b16 %v7672, %v7668
        %v8209 = vpack.c.b16 %v7673, %v7669
        %v8210 = vpack.c.b16 %v7674, %v7670
        %v8211 = vpack.c.b16 %v7679, %v7675
        %v8212 = vpack.c.b16 %v7680, %v7676
        %v8213 = vpack.c.b16 %v7681, %v7677
        %v8214 = vpack.c.b16 %v7682, %v7678
        %v8215 = vpack.c.b16 %v7687, %v7683
        %v8216 = vpack.c.b16 %v7688, %v7684
        %v8217 = vpack.c.b16 %v7689, %v7685
        %v8218 = vpack.c.b16 %v7690, %v7686
        %v8219 = vpack.c.b16 %v7695, %v7691
        %v8220 = vpack.c.b16 %v7696, %v7692
        %v8221 = vpack.c.b16 %v7697, %v7693
        %v8222 = vpack.c.b16 %v7698, %v7694
        %v8223 = vpack.c.b16 %v7703, %v7699
        %v8224 = vpack.c.b16 %v7704, %v7700
        %v8225 = vpack.c.b16 %v7705, %v7701
        %v8226 = vpack.c.b16 %v7706, %v7702
        %v8227 = vpack.c.b16 %v7711, %v7707
        %v8228 = vpack.c.b16 %v7712, %v7708
        %v8229 = vpack.c.b16 %v7713, %v7709
        %v8230 = vpack.c.b16 %v7714, %v7710
        %v8231 = vpack.c.b16 %v7719, %v7715
        %v8232 = vpack.c.b16 %v7720, %v7716
        %v8233 = vpack.c.b16 %v7721, %v7717
        %v8234 = vpack.c.b16 %v7722, %v7718
        %v8235 = vpack.c.b16 %v7727, %v7723
        %v8236 = vpack.c.b16 %v7728, %v7724
        %v8237 = vpack.c.b16 %v7729, %v7725
        %v8238 = vpack.c.b16 %v7730, %v7726
        %v8239 = vpack.c.b16 %v7735, %v7731
        %v8240 = vpack.c.b16 %v7736, %v7732
        %v8241 = vpack.c.b16 %v7737, %v7733
        %v8242 = vpack.c.b16 %v7738, %v7734
        %v8243 = vpack.c.b16 %v7743, %v7739
        %v8244 = vpack.c.b16 %v7744, %v7740
        %v8245 = vpack.c.b16 %v7745, %v7741
        %v8246 = vpack.c.b16 %v7746, %v7742
        %v8247 = vpack.c.b16 %v7751, %v7747
        %v8248 = vpack.c.b16 %v7752, %v7748
        %v8249 = vpack.c.b16 %v7753, %v7749
        %v8250 = vpack.c.b16 %v7754, %v7750
        %v8251 = vpack.c.b16 %v7759, %v7755
        %v8252 = vpack.c.b16 %v7760, %v7756
        %v8253 = vpack.c.b16 %v7761, %v7757
        %v8254 = vpack.c.b16 %v7762, %v7758
        %v8255 = vpack.c.b16 %v7767, %v7763
        %v8256 = vpack.c.b16 %v7768, %v7764
        %v8257 = vpack.c.b16 %v7769, %v7765
        %v8258 = vpack.c.b16 %v7770, %v7766
        %v8259 = vpack.c.b16 %v7775, %v7771
        %v8260 = vpack.c.b16 %v7776, %v7772
        %v8261 = vpack.c.b16 %v7777, %v7773
        %v8262 = vpack.c.b16 %v7778, %v7774
        %v8263 = vpack.c.b16 %v7783, %v7779
        %v8264 = vpack.c.b16 %v7784, %v7780
        %v8265 = vpack.c.b16 %v7785, %v7781
        %v8266 = vpack.c.b16 %v7786, %v7782
        %v8267 = vpack.c.b16 %v7791, %v7787
        %v8268 = vpack.c.b16 %v7792, %v7788
        %v8269 = vpack.c.b16 %v7793, %v7789
        %v8270 = vpack.c.b16 %v7794, %v7790
        %v8271 = vpack.c.b16 %v7799, %v7795
        %v8272 = vpack.c.b16 %v7800, %v7796
        %v8273 = vpack.c.b16 %v7801, %v7797
        %v8274 = vpack.c.b16 %v7802, %v7798
        %v8275 = vpack.c.b16 %v7807, %v7803
        %v8276 = vpack.c.b16 %v7808, %v7804
        %v8277 = vpack.c.b16 %v7809, %v7805
        %v8278 = vpack.c.b16 %v7810, %v7806
        %v8279 = vpack.c.b16 %v7815, %v7811
        %v8280 = vpack.c.b16 %v7816, %v7812
        %v8281 = vpack.c.b16 %v7817, %v7813
        %v8282 = vpack.c.b16 %v7818, %v7814
        %v8283 = vpack.c.b16 %v7823, %v7819
        %v8284 = vpack.c.b16 %v7824, %v7820
        %v8285 = vpack.c.b16 %v7825, %v7821
        %v8286 = vpack.c.b16 %v7826, %v7822
        %v8287 = vpack.c.b16 %v7831, %v7827
        %v8288 = vpack.c.b16 %v7832, %v7828
        %v8289 = vpack.c.b16 %v7833, %v7829
        %v8290 = vpack.c.b16 %v7834, %v7830
        %v8291 = vpack.c.b16 %v7839, %v7835
        %v8292 = vpack.c.b16 %v7840, %v7836
        %v8293 = vpack.c.b16 %v7841, %v7837
        %v8294 = vpack.c.b16 %v7842, %v7838
        %v8295 = vpack.c.b16 %v7847, %v7843
        %v8296 = vpack.c.b16 %v7848, %v7844
        %v8297 = vpack.c.b16 %v7849, %v7845
        %v8298 = vpack.c.b16 %v7850, %v7846
        %v8299 = vpack.c.b16 %v7855, %v7851
        %v8300 = vpack.c.b16 %v7856, %v7852
        %v8301 = vpack.c.b16 %v7857, %v7853
        %v8302 = vpack.c.b16 %v7858, %v7854
        %v8303 = vpack.c.b16 %v7863, %v7859
        %v8304 = vpack.c.b16 %v7864, %v7860
        %v8305 = vpack.c.b16 %v7865, %v7861
        %v8306 = vpack.c.b16 %v7866, %v7862
        %v8307 = vpack.c.b16 %v7871, %v7867
        %v8308 = vpack.c.b16 %v7872, %v7868
        %v8309 = vpack.c.b16 %v7873, %v7869
        %v8310 = vpack.c.b16 %v7874, %v7870
        %v8311 = vpack.c.b16 %v7879, %v7875
        %v8312 = vpack.c.b16 %v7880, %v7876
        %v8313 = vpack.c.b16 %v7881, %v7877
        %v8314 = vpack.c.b16 %v7882, %v7878
        %v8315 = vpack.c.b16 %v7887, %v7883
        %v8316 = vpack.c.b16 %v7888, %v7884
        %v8317 = vpack.c.b16 %v7889, %v7885
        %v8318 = vpack.c.b16 %v7890, %v7886
        %v8319 = vpack.c.b16 %v7895, %v7891
        %v8320 = vpack.c.b16 %v7896, %v7892
        %v8321 = vpack.c.b16 %v7897, %v7893
        %v8322 = vpack.c.b16 %v7898, %v7894
        %v8323 = vpack.c.b16 %v7903, %v7899
        %v8324 = vpack.c.b16 %v7904, %v7900
        %v8325 = vpack.c.b16 %v7905, %v7901
        %v8326 = vpack.c.b16 %v7906, %v7902
        %v8327 = vpack.c.b16 %v7911, %v7907
        %v8328 = vpack.c.b16 %v7912, %v7908
        %v8329 = vpack.c.b16 %v7913, %v7909
        %v8330 = vpack.c.b16 %v7914, %v7910
        %v8331 = vpack.c.b16 %v7919, %v7915
        %v8332 = vpack.c.b16 %v7920, %v7916
        %v8333 = vpack.c.b16 %v7921, %v7917
        %v8334 = vpack.c.b16 %v7922, %v7918
        %v8335 = vpack.c.b16 %v7927, %v7923
        %v8336 = vpack.c.b16 %v7928, %v7924
        %v8337 = vpack.c.b16 %v7929, %v7925
        %v8338 = vpack.c.b16 %v7930, %v7926
        %v8339 = vpack.c.b16 %v7935, %v7931
        %v8340 = vpack.c.b16 %v7936, %v7932
        %v8341 = vpack.c.b16 %v7937, %v7933
        %v8342 = vpack.c.b16 %v7938, %v7934
        %v8343 = vpack.c.b16 %v7943, %v7939
        %v8344 = vpack.c.b16 %v7944, %v7940
        %v8345 = vpack.c.b16 %v7945, %v7941
        %v8346 = vpack.c.b16 %v7946, %v7942
        %v8347 = vpack.c.b16 %v7951, %v7947
        %v8348 = vpack.c.b16 %v7952, %v7948
        %v8349 = vpack.c.b16 %v7953, %v7949
        %v8350 = vpack.c.b16 %v7954, %v7950
        %v8351 = vpack.c.b16 %v7959, %v7955
        %v8352 = vpack.c.b16 %v7960, %v7956
        %v8353 = vpack.c.b16 %v7961, %v7957
        %v8354 = vpack.c.b16 %v7962, %v7958
        %v8355 = vpack.c.b16 %v7967, %v7963
        %v8356 = vpack.c.b16 %v7968, %v7964
        %v8357 = vpack.c.b16 %v7969, %v7965
        %v8358 = vpack.c.b16 %v7970, %v7966
        %v8359 = vpack.c.b16 %v7975, %v7971
        %v8360 = vpack.c.b16 %v7976, %v7972
        %v8361 = vpack.c.b16 %v7977, %v7973
        %v8362 = vpack.c.b16 %v7978, %v7974
        %v8363 = vpack.c.b16 %v7983, %v7979
        %v8364 = vpack.c.b16 %v7984, %v7980
        %v8365 = vpack.c.b16 %v7985, %v7981
        %v8366 = vpack.c.b16 %v7986, %v7982
        %v8367 = vpack.c.b16 %v7991, %v7987
        %v8368 = vpack.c.b16 %v7992, %v7988
        %v8369 = vpack.c.b16 %v7993, %v7989
        %v8370 = vpack.c.b16 %v7994, %v7990
        %v8371 = vpack.c.b16 %v7999, %v7995
        %v8372 = vpack.c.b16 %v8000, %v7996
        %v8373 = vpack.c.b16 %v8001, %v7997
        %v8374 = vpack.c.b16 %v8002, %v7998
        %v8375 = vpack.c.b16 %v8007, %v8003
        %v8376 = vpack.c.b16 %v8008, %v8004
        %v8377 = vpack.c.b16 %v8009, %v8005
        %v8378 = vpack.c.b16 %v8010, %v8006
        %v8379 = vpack.c.b16 %v8015, %v8011
        %v8380 = vpack.c.b16 %v8016, %v8012
        %v8381 = vpack.c.b16 %v8017, %v8013
        %v8382 = vpack.c.b16 %v8018, %v8014
        %v8383 = vpack.c.b16 %v8023, %v8019
        %v8384 = vpack.c.b16 %v8024, %v8020
        %v8385 = vpack.c.b16 %v8025, %v8021
        %v8386 = vpack.c.b16 %v8026, %v8022
        %v8387 = vpack.c.b16 %v8031, %v8027
        %v8388 = vpack.c.b16 %v8032, %v8028
        %v8389 = vpack.c.b16 %v8033, %v8029
        %v8390 = vpack.c.b16 %v8034, %v8030
        %v8391 = vpack.c.b16 %v8039, %v8035
        %v8392 = vpack.c.b16 %v8040, %v8036
        %v8393 = vpack.c.b16 %v8041, %v8037
        %v8394 = vpack.c.b16 %v8042, %v8038
        %v8395 = vpack.c.b16 %v8047, %v8043
        %v8396 = vpack.c.b16 %v8048, %v8044
        %v8397 = vpack.c.b16 %v8049, %v8045
        %v8398 = vpack.c.b16 %v8050, %v8046
        %v8399 = vpack.c.b16 %v8055, %v8051
        %v8400 = vpack.c.b16 %v8056, %v8052
        %v8401 = vpack.c.b16 %v8057, %v8053
        %v8402 = vpack.c.b16 %v8058, %v8054
        %v8403 = vpack.c.b16 %v8063, %v8059
        %v8404 = vpack.c.b16 %v8064, %v8060
        %v8405 = vpack.c.b16 %v8065, %v8061
        %v8406 = vpack.c.b16 %v8066, %v8062
        %v8407 = vpack.c.b16 %v8071, %v8067
        %v8408 = vpack.c.b16 %v8072, %v8068
        %v8409 = vpack.c.b16 %v8073, %v8069
        %v8410 = vpack.c.b16 %v8074, %v8070
        %v8411 = vpack.c.b16 %v8079, %v8075
        %v8412 = vpack.c.b16 %v8080, %v8076
        %v8413 = vpack.c.b16 %v8081, %v8077
        %v8414 = vpack.c.b16 %v8082, %v8078
        %v8415 = vpack.c.b16 %v8087, %v8083
        %v8416 = vpack.c.b16 %v8088, %v8084
        %v8417 = vpack.c.b16 %v8089, %v8085
        %v8418 = vpack.c.b16 %v8090, %v8086
        %v8419 = vpack.c.b16 %v8095, %v8091
        %v8420 = vpack.c.b16 %v8096, %v8092
        %v8421 = vpack.c.b16 %v8097, %v8093
        %v8422 = vpack.c.b16 %v8098, %v8094
        %v8423 = vpack.c.b16 %v8103, %v8099
        %v8424 = vpack.c.b16 %v8104, %v8100
        %v8425 = vpack.c.b16 %v8105, %v8101
        %v8426 = vpack.c.b16 %v8106, %v8102
        %v8427 = vpack.c.b16 %v8111, %v8107
        %v8428 = vpack.c.b16 %v8112, %v8108
        %v8429 = vpack.c.b16 %v8113, %v8109
        %v8430 = vpack.c.b16 %v8114, %v8110
        %v8431 = vpack.c.b16 %v8119, %v8115
        %v8432 = vpack.c.b16 %v8120, %v8116
        %v8433 = vpack.c.b16 %v8121, %v8117
        %v8434 = vpack.c.b16 %v8122, %v8118
        %v8435 = vpack.c.b16 %v8127, %v8123
        %v8436 = vpack.c.b16 %v8128, %v8124
        %v8437 = vpack.c.b16 %v8129, %v8125
        %v8438 = vpack.c.b16 %v8130, %v8126
        %v8439 = vpack.c.b16 %v8135, %v8131
        %v8440 = vpack.c.b16 %v8136, %v8132
        %v8441 = vpack.c.b16 %v8137, %v8133
        %v8442 = vpack.c.b16 %v8138, %v8134
        %v8443 = vpack.c.b16 %v8143, %v8139
        %v8444 = vpack.c.b16 %v8144, %v8140
        %v8445 = vpack.c.b16 %v8145, %v8141
        %v8446 = vpack.c.b16 %v8146, %v8142
        %v8447 = vpack.c.b16 %v8151, %v8147
        %v8448 = vpack.c.b16 %v8152, %v8148
        %v8449 = vpack.c.b16 %v8153, %v8149
        %v8450 = vpack.c.b16 %v8154, %v8150
        %v8451 = vpack.c.b16 %v8159, %v8155
        %v8452 = vpack.c.b16 %v8160, %v8156
        %v8453 = vpack.c.b16 %v8161, %v8157
        %v8454 = vpack.c.b16 %v8162, %v8158
        %v8455 = vpack.c.b16 %v8167, %v8163
        %v8456 = vpack.c.b16 %v8168, %v8164
        %v8457 = vpack.c.b16 %v8169, %v8165
        %v8458 = vpack.c.b16 %v8170, %v8166
        %v8748 = vlaneseq
        %v8749 = vshrl.u32 %v8748, 7
        %v8750 = vsub.s32 0, %v8749
        %v8751 = vrot.slane %v7306, %v8750
        %v8752 = vlaneseq
        %v8753 = vshrl.u32 %v8752, 7
        %v8754 = vsub.s32 1, %v8753
        %v8755 = vrot.slane %v7306, %v8754
        %v8756 = vlaneseq
        %v8757 = vshrl.u32 %v8756, 7
        %v8758 = vsub.s32 2, %v8757
        %v8759 = vrot.slane %v7306, %v8758
        %v8760 = vlaneseq
        %v8761 = vshrl.u32 %v8760, 7
        %v8762 = vsub.s32 3, %v8761
        %v8763 = vrot.slane %v7306, %v8762
        %8768 = vmatprep.subr.bf16.mxu0 %v8172
        %8769 = vmatpush1.bf16.msra.mxu0 %v8171
        %8770 = vmatprep.subr.bf16.mxu0 %v8176
        %8771 = vmatpush1.bf16.msra.mxu0 %v8175
        %8772 = vmatprep.subr.bf16.mxu0 %v8180
        %8773 = vmatpush1.bf16.msra.mxu0 %v8179
        %8774 = vmatprep.subr.bf16.mxu0 %v8184
        %8775 = vmatpush1.bf16.msra.mxu0 %v8183
        %8776 = vmatprep.subr.bf16.mxu0 %v8188
        %8777 = vmatpush1.bf16.msra.mxu0 %v8187
        %8778 = vmatprep.subr.bf16.mxu0 %v8192
        %8779 = vmatpush1.bf16.msra.mxu0 %v8191
        %8780 = vmatprep.subr.bf16.mxu0 %v8196
        %8781 = vmatpush1.bf16.msra.mxu0 %v8195
        %8782 = vmatprep.subr.bf16.mxu0 %v8200
        %8783 = vmatpush1.bf16.msra.mxu0 %v8199
        %8784 = vmatprep.subr.bf16.mxu0 %v8204
        %8785 = vmatpush1.bf16.msra.mxu0 %v8203
        %8786 = vmatprep.subr.bf16.mxu0 %v8208
        %8787 = vmatpush1.bf16.msra.mxu0 %v8207
        %8788 = vmatprep.subr.bf16.mxu0 %v8212
        %8789 = vmatpush1.bf16.msra.mxu0 %v8211
        %8790 = vmatprep.subr.bf16.mxu0 %v8216
        %8791 = vmatpush1.bf16.msra.mxu0 %v8215
        %8792 = vmatprep.subr.bf16.mxu0 %v8220
        %8793 = vmatpush1.bf16.msra.mxu0 %v8219
        %8794 = vmatprep.subr.bf16.mxu0 %v8224
        %8795 = vmatpush1.bf16.msra.mxu0 %v8223
        %8796 = vmatprep.subr.bf16.mxu0 %v8228
        %8797 = vmatpush1.bf16.msra.mxu0 %v8227
        %8798 = vmatprep.subr.bf16.mxu0 %v8232
        %8799 = vmatpush1.bf16.msra.mxu0 %v8231
        %8800 = vmatprep.mubr.bf16.mxu0 %v6998
        %8801 = vmatmul.mubr.bf16.gmra.mrb[0].mxu0 %v6994
        %v8802 = vpop.f32.mrb[0].mxu0
        %v8803 = vadd.f32 %v8751, %v8802
        %v8804 = vpop.f32.mrb[0].mxu0
        %v8805 = vadd.f32 %v8755, %v8804
        %v8806 = vpop.f32.mrb[0].mxu0
        %v8807 = vpop.f32.mrb[0].mxu0
        %8808 = vdwg.mxu0
        %8809 = vmatprep.subr.bf16.mxu0 %v8236
        %8810 = vmatpush1.bf16.msra.mxu0 %v8235
        %8811 = vmatprep.subr.bf16.mxu0 %v8240
        %8812 = vmatpush1.bf16.msra.mxu0 %v8239
        %8813 = vmatprep.subr.bf16.mxu0 %v8244
        %8814 = vmatpush1.bf16.msra.mxu0 %v8243
        %8815 = vmatprep.subr.bf16.mxu0 %v8248
        %8816 = vmatpush1.bf16.msra.mxu0 %v8247
        %8817 = vmatprep.subr.bf16.mxu0 %v8252
        %8818 = vmatpush1.bf16.msra.mxu0 %v8251
        %8819 = vmatprep.subr.bf16.mxu0 %v8256
        %8820 = vmatpush1.bf16.msra.mxu0 %v8255
        %8821 = vmatprep.subr.bf16.mxu0 %v8260
        %8822 = vmatpush1.bf16.msra.mxu0 %v8259
        %8823 = vmatprep.subr.bf16.mxu0 %v8264
        %8824 = vmatpush1.bf16.msra.mxu0 %v8263
        %8825 = vmatprep.subr.bf16.mxu0 %v8268
        %8826 = vmatpush1.bf16.msra.mxu0 %v8267
        %8827 = vmatprep.subr.bf16.mxu0 %v8272
        %8828 = vmatpush1.bf16.msra.mxu0 %v8271
        %8829 = vmatprep.subr.bf16.mxu0 %v8276
        %8830 = vmatpush1.bf16.msra.mxu0 %v8275
        %8831 = vmatprep.subr.bf16.mxu0 %v8280
        %8832 = vmatpush1.bf16.msra.mxu0 %v8279
        %8833 = vmatprep.subr.bf16.mxu0 %v8284
        %8834 = vmatpush1.bf16.msra.mxu0 %v8283
        %8835 = vmatprep.subr.bf16.mxu0 %v8288
        %8836 = vmatpush1.bf16.msra.mxu0 %v8287
        %8837 = vmatprep.subr.bf16.mxu0 %v8292
        %8838 = vmatpush1.bf16.msra.mxu0 %v8291
        %8839 = vmatprep.subr.bf16.mxu0 %v8296
        %8840 = vmatpush1.bf16.msra.mxu0 %v8295
        %8841 = vmatprep.mubr.bf16.mxu0 %v6995
        %8842 = vmatmul.mubr.bf16.gmra.mrb[0].mxu0 %v7002
        %v8843 = vpop.f32.mrb[0].mxu0
        %v8844 = vadd.f32 %v8803, %v8843
        %v8845 = vpop.f32.mrb[0].mxu0
        %v8846 = vadd.f32 %v8805, %v8845
        %v8847 = vpop.f32.mrb[0].mxu0
        %v8848 = vpop.f32.mrb[0].mxu0
        %8849 = vdwg.mxu0
        %8850 = vmatprep.subr.bf16.mxu0 %v8300
        %8851 = vmatpush1.bf16.msra.mxu0 %v8299
        %8852 = vmatprep.subr.bf16.mxu0 %v8304
        %8853 = vmatpush1.bf16.msra.mxu0 %v8303
        %8854 = vmatprep.subr.bf16.mxu0 %v8308
        %8855 = vmatpush1.bf16.msra.mxu0 %v8307
        %8856 = vmatprep.subr.bf16.mxu0 %v8312
        %8857 = vmatpush1.bf16.msra.mxu0 %v8311
        %8858 = vmatprep.subr.bf16.mxu0 %v8316
        %8859 = vmatpush1.bf16.msra.mxu0 %v8315
        %8860 = vmatprep.subr.bf16.mxu0 %v8320
        %8861 = vmatpush1.bf16.msra.mxu0 %v8319
        %8862 = vmatprep.subr.bf16.mxu0 %v8324
        %8863 = vmatpush1.bf16.msra.mxu0 %v8323
        %8864 = vmatprep.subr.bf16.mxu0 %v8328
        %8865 = vmatpush1.bf16.msra.mxu0 %v8327
        %8866 = vmatprep.subr.bf16.mxu0 %v8332
        %8867 = vmatpush1.bf16.msra.mxu0 %v8331
        %8868 = vmatprep.subr.bf16.mxu0 %v8336
        %8869 = vmatpush1.bf16.msra.mxu0 %v8335
        %8870 = vmatprep.subr.bf16.mxu0 %v8340
        %8871 = vmatpush1.bf16.msra.mxu0 %v8339
        %8872 = vmatprep.subr.bf16.mxu0 %v8344
        %8873 = vmatpush1.bf16.msra.mxu0 %v8343
        %8874 = vmatprep.subr.bf16.mxu0 %v8348
        %8875 = vmatpush1.bf16.msra.mxu0 %v8347
        %8876 = vmatprep.subr.bf16.mxu0 %v8352
        %8877 = vmatpush1.bf16.msra.mxu0 %v8351
        %8878 = vmatprep.subr.bf16.mxu0 %v8356
        %8879 = vmatpush1.bf16.msra.mxu0 %v8355
        %8880 = vmatprep.subr.bf16.mxu0 %v8360
        %8881 = vmatpush1.bf16.msra.mxu0 %v8359
        %8882 = vmatprep.mubr.bf16.mxu0 %v7009
        %8883 = vmatmul.mubr.bf16.gmra.mrb[0].mxu0 %v7005
        %v8884 = vpop.f32.mrb[0].mxu0
        %v8885 = vadd.f32 %v8844, %v8884
        %v8886 = vpop.f32.mrb[0].mxu0
        %v8887 = vadd.f32 %v8846, %v8886
        %v8888 = vpop.f32.mrb[0].mxu0
        %v8889 = vpop.f32.mrb[0].mxu0
        %8890 = vdwg.mxu0
        %8891 = vmatprep.subr.bf16.mxu0 %v8364
        %8892 = vmatpush1.bf16.msra.mxu0 %v8363
        %8893 = vmatprep.subr.bf16.mxu0 %v8368
        %8894 = vmatpush1.bf16.msra.mxu0 %v8367
        %8895 = vmatprep.subr.bf16.mxu0 %v8372
        %8896 = vmatpush1.bf16.msra.mxu0 %v8371
        %8897 = vmatprep.subr.bf16.mxu0 %v8376
        %8898 = vmatpush1.bf16.msra.mxu0 %v8375
        %8899 = vmatprep.subr.bf16.mxu0 %v8380
        %8900 = vmatpush1.bf16.msra.mxu0 %v8379
        %8901 = vmatprep.subr.bf16.mxu0 %v8384
        %8902 = vmatpush1.bf16.msra.mxu0 %v8383
        %8903 = vmatprep.subr.bf16.mxu0 %v8388
        %8904 = vmatpush1.bf16.msra.mxu0 %v8387
        %8905 = vmatprep.subr.bf16.mxu0 %v8392
        %8906 = vmatpush1.bf16.msra.mxu0 %v8391
        %8907 = vmatprep.subr.bf16.mxu0 %v8396
        %8908 = vmatpush1.bf16.msra.mxu0 %v8395
        %8909 = vmatprep.subr.bf16.mxu0 %v8400
        %8910 = vmatpush1.bf16.msra.mxu0 %v8399
        %8911 = vmatprep.subr.bf16.mxu0 %v8404
        %8912 = vmatpush1.bf16.msra.mxu0 %v8403
        %8913 = vmatprep.subr.bf16.mxu0 %v8408
        %8914 = vmatpush1.bf16.msra.mxu0 %v8407
        %8915 = vmatprep.subr.bf16.mxu0 %v8412
        %8916 = vmatpush1.bf16.msra.mxu0 %v8411
        %8917 = vmatprep.subr.bf16.mxu0 %v8416
        %8918 = vmatpush1.bf16.msra.mxu0 %v8415
        %8919 = vmatprep.subr.bf16.mxu0 %v8420
        %8920 = vmatpush1.bf16.msra.mxu0 %v8419
        %8921 = vmatprep.subr.bf16.mxu0 %v8424
        %8922 = vmatpush1.bf16.msra.mxu0 %v8423
        %8923 = vmatprep.mubr.bf16.mxu0 %v7012
        %8924 = vmatmul.mubr.bf16.gmra.mrb[0].mxu0 %v6996
        %v8925 = vpop.f32.mrb[0].mxu0
        %v8926 = vadd.f32 %v8885, %v8925
        %v8927 = vpop.f32.mrb[0].mxu0
        %v8928 = vadd.f32 %v8887, %v8927
        %v8929 = vpop.f32.mrb[0].mxu0
        %v8930 = vpop.f32.mrb[0].mxu0
        %8931 = vdwg.mxu0
        %8932 = vmatprep.subr.bf16.mxu0 %v8428
        %8933 = vmatpush1.bf16.msra.mxu0 %v8427
        %8934 = vmatprep.subr.bf16.mxu0 %v8432
        %8935 = vmatpush1.bf16.msra.mxu0 %v8431
        %8936 = vmatprep.subr.bf16.mxu0 %v8436
        %8937 = vmatpush1.bf16.msra.mxu0 %v8435
        %8938 = vmatprep.subr.bf16.mxu0 %v8440
        %8939 = vmatpush1.bf16.msra.mxu0 %v8439
        %8940 = vmatprep.subr.bf16.mxu0 %v8444
        %8941 = vmatpush1.bf16.msra.mxu0 %v8443
        %8942 = vmatprep.subr.bf16.mxu0 %v8448
        %8943 = vmatpush1.bf16.msra.mxu0 %v8447
        %8944 = vmatprep.subr.bf16.mxu0 %v8452
        %8945 = vmatpush1.bf16.msra.mxu0 %v8451
        %8946 = vmatprep.subr.bf16.mxu0 %v8456
        %8947 = vmatpush1.bf16.msra.mxu0 %v8455
        %8948 = vmatprep.subr.bf16.mxu0 0
        %8949 = vmatpush1.bf16.msra.mxu0 0
        %8950 = vmatprep.subr.bf16.mxu0 0
        %8951 = vmatpush1.bf16.msra.mxu0 0
        %8952 = vmatprep.subr.bf16.mxu0 0
        %8953 = vmatpush1.bf16.msra.mxu0 0
        %8954 = vmatprep.subr.bf16.mxu0 0
        %8955 = vmatpush1.bf16.msra.mxu0 0
        %8956 = vmatprep.subr.bf16.mxu0 0
        %8957 = vmatpush1.bf16.msra.mxu0 0
        %8958 = vmatprep.subr.bf16.mxu0 0
        %8959 = vmatpush1.bf16.msra.mxu0 0
        %8960 = vmatprep.subr.bf16.mxu0 0
        %8961 = vmatpush1.bf16.msra.mxu0 0
        %8962 = vmatprep.subr.bf16.mxu0 0
        %8963 = vmatpush1.bf16.msra.mxu0 0
        %8964 = vmatprep.mubr.bf16.mxu0 0
        %8965 = vmatmul.mubr.bf16.gmra.mrb[0].mxu0 %v7016
        %v8966 = vpop.f32.mrb[0].mxu0
        %v8967 = vadd.f32 %v8926, %v8966
        %v8968 = vpop.f32.mrb[0].mxu0
        %v8969 = vadd.f32 %v8928, %v8968
        %v8970 = vpop.f32.mrb[0].mxu0
        %v8971 = vpop.f32.mrb[0].mxu0
        %8972 = vdwg.mxu0
        %8973 = vmatprep.subr.bf16.mxu0 %v8174
        %8974 = vmatpush1.bf16.msra.mxu0 %v8173
        %8975 = vmatprep.subr.bf16.mxu0 %v8178
        %8976 = vmatpush1.bf16.msra.mxu0 %v8177
        %8977 = vmatprep.subr.bf16.mxu0 %v8182
        %8978 = vmatpush1.bf16.msra.mxu0 %v8181
        %8979 = vmatprep.subr.bf16.mxu0 %v8186
        %8980 = vmatpush1.bf16.msra.mxu0 %v8185
        %8981 = vmatprep.subr.bf16.mxu0 %v8190
        %8982 = vmatpush1.bf16.msra.mxu0 %v8189
        %8983 = vmatprep.subr.bf16.mxu0 %v8194
        %8984 = vmatpush1.bf16.msra.mxu0 %v8193
        %8985 = vmatprep.subr.bf16.mxu0 %v8198
        %8986 = vmatpush1.bf16.msra.mxu0 %v8197
        %8987 = vmatprep.subr.bf16.mxu0 %v8202
        %8988 = vmatpush1.bf16.msra.mxu0 %v8201
        %8989 = vmatprep.subr.bf16.mxu0 %v8206
        %8990 = vmatpush1.bf16.msra.mxu0 %v8205
        %8991 = vmatprep.subr.bf16.mxu0 %v8210
        %8992 = vmatpush1.bf16.msra.mxu0 %v8209
        %8993 = vmatprep.subr.bf16.mxu0 %v8214
        %8994 = vmatpush1.bf16.msra.mxu0 %v8213
        %8995 = vmatprep.subr.bf16.mxu0 %v8218
        %8996 = vmatpush1.bf16.msra.mxu0 %v8217
        %8997 = vmatprep.subr.bf16.mxu0 %v8222
        %8998 = vmatpush1.bf16.msra.mxu0 %v8221
        %8999 = vmatprep.subr.bf16.mxu0 %v8226
        %9000 = vmatpush1.bf16.msra.mxu0 %v8225
        %9001 = vmatprep.subr.bf16.mxu0 %v8230
        %9002 = vmatpush1.bf16.msra.mxu0 %v8229
        %9003 = vmatprep.subr.bf16.mxu0 %v8234
        %9004 = vmatpush1.bf16.msra.mxu0 %v8233
        %9005 = vmatprep.mubr.bf16.mxu0 %v6998
        %9006 = vmatmul.mubr.bf16.gmra.mrb[0].mxu0 %v6994
        %v9007 = vpop.f32.mrb[0].mxu0
        %v9008 = vadd.f32 %v8759, %v9007
        %v9009 = vpop.f32.mrb[0].mxu0
        %v9010 = vadd.f32 %v8763, %v9009
        %v9011 = vpop.f32.mrb[0].mxu0
        %v9012 = vpop.f32.mrb[0].mxu0
        %9013 = vdwg.mxu0
        %9014 = vmatprep.subr.bf16.mxu0 %v8238
        %9015 = vmatpush1.bf16.msra.mxu0 %v8237
        %9016 = vmatprep.subr.bf16.mxu0 %v8242
        %9017 = vmatpush1.bf16.msra.mxu0 %v8241
        %9018 = vmatprep.subr.bf16.mxu0 %v8246
        %9019 = vmatpush1.bf16.msra.mxu0 %v8245
        %9020 = vmatprep.subr.bf16.mxu0 %v8250
        %9021 = vmatpush1.bf16.msra.mxu0 %v8249
        %9022 = vmatprep.subr.bf16.mxu0 %v8254
        %9023 = vmatpush1.bf16.msra.mxu0 %v8253
        %9024 = vmatprep.subr.bf16.mxu0 %v8258
        %9025 = vmatpush1.bf16.msra.mxu0 %v8257
        %9026 = vmatprep.subr.bf16.mxu0 %v8262
        %9027 = vmatpush1.bf16.msra.mxu0 %v8261
        %9028 = vmatprep.subr.bf16.mxu0 %v8266
        %9029 = vmatpush1.bf16.msra.mxu0 %v8265
        %9030 = vmatprep.subr.bf16.mxu0 %v8270
        %9031 = vmatpush1.bf16.msra.mxu0 %v8269
        %9032 = vmatprep.subr.bf16.mxu0 %v8274
        %9033 = vmatpush1.bf16.msra.mxu0 %v8273
        %9034 = vmatprep.subr.bf16.mxu0 %v8278
        %9035 = vmatpush1.bf16.msra.mxu0 %v8277
        %9036 = vmatprep.subr.bf16.mxu0 %v8282
        %9037 = vmatpush1.bf16.msra.mxu0 %v8281
        %9038 = vmatprep.subr.bf16.mxu0 %v8286
        %9039 = vmatpush1.bf16.msra.mxu0 %v8285
        %9040 = vmatprep.subr.bf16.mxu0 %v8290
        %9041 = vmatpush1.bf16.msra.mxu0 %v8289
        %9042 = vmatprep.subr.bf16.mxu0 %v8294
        %9043 = vmatpush1.bf16.msra.mxu0 %v8293
        %9044 = vmatprep.subr.bf16.mxu0 %v8298
        %9045 = vmatpush1.bf16.msra.mxu0 %v8297
        %9046 = vmatprep.mubr.bf16.mxu0 %v6995
        %9047 = vmatmul.mubr.bf16.gmra.mrb[0].mxu0 %v7002
        %v9048 = vpop.f32.mrb[0].mxu0
        %v9049 = vadd.f32 %v9008, %v9048
        %v9050 = vpop.f32.mrb[0].mxu0
        %v9051 = vadd.f32 %v9010, %v9050
        %v9052 = vpop.f32.mrb[0].mxu0
        %v9053 = vpop.f32.mrb[0].mxu0
        %9054 = vdwg.mxu0
        %9055 = vmatprep.subr.bf16.mxu0 %v8302
        %9056 = vmatpush1.bf16.msra.mxu0 %v8301
        %9057 = vmatprep.subr.bf16.mxu0 %v8306
        %9058 = vmatpush1.bf16.msra.mxu0 %v8305
        %9059 = vmatprep.subr.bf16.mxu0 %v8310
        %9060 = vmatpush1.bf16.msra.mxu0 %v8309
        %9061 = vmatprep.subr.bf16.mxu0 %v8314
        %9062 = vmatpush1.bf16.msra.mxu0 %v8313
        %9063 = vmatprep.subr.bf16.mxu0 %v8318
        %9064 = vmatpush1.bf16.msra.mxu0 %v8317
        %9065 = vmatprep.subr.bf16.mxu0 %v8322
        %9066 = vmatpush1.bf16.msra.mxu0 %v8321
        %9067 = vmatprep.subr.bf16.mxu0 %v8326
        %9068 = vmatpush1.bf16.msra.mxu0 %v8325
        %9069 = vmatprep.subr.bf16.mxu0 %v8330
        %9070 = vmatpush1.bf16.msra.mxu0 %v8329
        %9071 = vmatprep.subr.bf16.mxu0 %v8334
        %9072 = vmatpush1.bf16.msra.mxu0 %v8333
        %9073 = vmatprep.subr.bf16.mxu0 %v8338
        %9074 = vmatpush1.bf16.msra.mxu0 %v8337
        %9075 = vmatprep.subr.bf16.mxu0 %v8342
        %9076 = vmatpush1.bf16.msra.mxu0 %v8341
        %9077 = vmatprep.subr.bf16.mxu0 %v8346
        %9078 = vmatpush1.bf16.msra.mxu0 %v8345
        %9079 = vmatprep.subr.bf16.mxu0 %v8350
        %9080 = vmatpush1.bf16.msra.mxu0 %v8349
        %9081 = vmatprep.subr.bf16.mxu0 %v8354
        %9082 = vmatpush1.bf16.msra.mxu0 %v8353
        %9083 = vmatprep.subr.bf16.mxu0 %v8358
        %9084 = vmatpush1.bf16.msra.mxu0 %v8357
        %9085 = vmatprep.subr.bf16.mxu0 %v8362
        %9086 = vmatpush1.bf16.msra.mxu0 %v8361
        %9087 = vmatprep.mubr.bf16.mxu0 %v7009
        %9088 = vmatmul.mubr.bf16.gmra.mrb[0].mxu0 %v7005
        %v9089 = vpop.f32.mrb[0].mxu0
        %v9090 = vadd.f32 %v9049, %v9089
        %v9091 = vpop.f32.mrb[0].mxu0
        %v9092 = vadd.f32 %v9051, %v9091
        %v9093 = vpop.f32.mrb[0].mxu0
        %v9094 = vpop.f32.mrb[0].mxu0
        %9095 = vdwg.mxu0
        %9096 = vmatprep.subr.bf16.mxu0 %v8366
        %9097 = vmatpush1.bf16.msra.mxu0 %v8365
        %9098 = vmatprep.subr.bf16.mxu0 %v8370
        %9099 = vmatpush1.bf16.msra.mxu0 %v8369
        %9100 = vmatprep.subr.bf16.mxu0 %v8374
        %9101 = vmatpush1.bf16.msra.mxu0 %v8373
        %9102 = vmatprep.subr.bf16.mxu0 %v8378
        %9103 = vmatpush1.bf16.msra.mxu0 %v8377
        %9104 = vmatprep.subr.bf16.mxu0 %v8382
        %9105 = vmatpush1.bf16.msra.mxu0 %v8381
        %9106 = vmatprep.subr.bf16.mxu0 %v8386
        %9107 = vmatpush1.bf16.msra.mxu0 %v8385
        %9108 = vmatprep.subr.bf16.mxu0 %v8390
        %9109 = vmatpush1.bf16.msra.mxu0 %v8389
        %9110 = vmatprep.subr.bf16.mxu0 %v8394
        %9111 = vmatpush1.bf16.msra.mxu0 %v8393
        %9112 = vmatprep.subr.bf16.mxu0 %v8398
        %9113 = vmatpush1.bf16.msra.mxu0 %v8397
        %9114 = vmatprep.subr.bf16.mxu0 %v8402
        %9115 = vmatpush1.bf16.msra.mxu0 %v8401
        %9116 = vmatprep.subr.bf16.mxu0 %v8406
        %9117 = vmatpush1.bf16.msra.mxu0 %v8405
        %9118 = vmatprep.subr.bf16.mxu0 %v8410
        %9119 = vmatpush1.bf16.msra.mxu0 %v8409
        %9120 = vmatprep.subr.bf16.mxu0 %v8414
        %9121 = vmatpush1.bf16.msra.mxu0 %v8413
        %9122 = vmatprep.subr.bf16.mxu0 %v8418
        %9123 = vmatpush1.bf16.msra.mxu0 %v8417
        %9124 = vmatprep.subr.bf16.mxu0 %v8422
        %9125 = vmatpush1.bf16.msra.mxu0 %v8421
        %9126 = vmatprep.subr.bf16.mxu0 %v8426
        %9127 = vmatpush1.bf16.msra.mxu0 %v8425
        %9128 = vmatprep.mubr.bf16.mxu0 %v7012
        %9129 = vmatmul.mubr.bf16.gmra.mrb[0].mxu0 %v6996
        %v9130 = vpop.f32.mrb[0].mxu0
        %v9131 = vadd.f32 %v9090, %v9130
        %v9132 = vpop.f32.mrb[0].mxu0
        %v9133 = vadd.f32 %v9092, %v9132
        %v9134 = vpop.f32.mrb[0].mxu0
        %v9135 = vpop.f32.mrb[0].mxu0
        %9136 = vdwg.mxu0
        %9137 = vmatprep.subr.bf16.mxu0 %v8430
        %9138 = vmatpush1.bf16.msra.mxu0 %v8429
        %9139 = vmatprep.subr.bf16.mxu0 %v8434
        %9140 = vmatpush1.bf16.msra.mxu0 %v8433
        %9141 = vmatprep.subr.bf16.mxu0 %v8438
        %9142 = vmatpush1.bf16.msra.mxu0 %v8437
        %9143 = vmatprep.subr.bf16.mxu0 %v8442
        %9144 = vmatpush1.bf16.msra.mxu0 %v8441
        %9145 = vmatprep.subr.bf16.mxu0 %v8446
        %9146 = vmatpush1.bf16.msra.mxu0 %v8445
        %9147 = vmatprep.subr.bf16.mxu0 %v8450
        %9148 = vmatpush1.bf16.msra.mxu0 %v8449
        %9149 = vmatprep.subr.bf16.mxu0 %v8454
        %9150 = vmatpush1.bf16.msra.mxu0 %v8453
        %9151 = vmatprep.subr.bf16.mxu0 %v8458
        %9152 = vmatpush1.bf16.msra.mxu0 %v8457
        %9153 = vmatprep.subr.bf16.mxu0 0
        %9154 = vmatpush1.bf16.msra.mxu0 0
        %9155 = vmatprep.subr.bf16.mxu0 0
        %9156 = vmatpush1.bf16.msra.mxu0 0
        %9157 = vmatprep.subr.bf16.mxu0 0
        %9158 = vmatpush1.bf16.msra.mxu0 0
        %9159 = vmatprep.subr.bf16.mxu0 0
        %9160 = vmatpush1.bf16.msra.mxu0 0
        %9161 = vmatprep.subr.bf16.mxu0 0
        %9162 = vmatpush1.bf16.msra.mxu0 0
        %9163 = vmatprep.subr.bf16.mxu0 0
        %9164 = vmatpush1.bf16.msra.mxu0 0
        %9165 = vmatprep.subr.bf16.mxu0 0
        %9166 = vmatpush1.bf16.msra.mxu0 0
        %9167 = vmatprep.subr.bf16.mxu0 0
        %9168 = vmatpush1.bf16.msra.mxu0 0
        %9169 = vmatprep.mubr.bf16.mxu0 0
        %9170 = vmatmul.mubr.bf16.gmra.mrb[0].mxu0 %v7016
        %v9171 = vpop.f32.mrb[0].mxu0
        %v9172 = vadd.f32 %v9131, %v9171
        %v9173 = vpop.f32.mrb[0].mxu0
        %v9174 = vadd.f32 %v9133, %v9173
        %v9175 = vpop.f32.mrb[0].mxu0
        %v9176 = vpop.f32.mrb[0].mxu0
        %9177 = vdwg.mxu0
        %v9178 = vmax.f32 %v8967, 0.0
        %v9179 = vmax.f32 %v8969, 0.0
        %v9180 = vmax.f32 %v9172, 0.0
        %v9181 = vmax.f32 %v9174, 0.0
        %v9182 = vpack.c.bf16 %v9178, %v9178
        %v9183 = vpack.c.bf16 %v9179, %v9179
        %v9184 = vpack.c.bf16 %v9180, %v9180
        %v9185 = vpack.c.bf16 %v9181, %v9181
        %v9186 = vld [vmem:[%s11] sm:$0xf]
        %v9187 = vld [vmem:[%s11 + $0x4] sm:$0xf]
        %v9188 = vld [vmem:[%s11 + $0x8] sm:$0xf]
        %v9189 = vld [vmem:[%s11 + $0xc] sm:$0xf]
        %v9190 = vld [vmem:[%s11 + $0x10] sm:$0xf]
        %v9191 = vld [vmem:[%s11 + $0x14] sm:$0xf]
        %v9192 = vld [vmem:[%s11 + $0x18] sm:$0xf]
        %v9193 = vld [vmem:[%s11 + $0x1c] sm:$0xf]
        %v9194 = vld [vmem:[%s11 + $0x20] sm:$0xf]
        %v9195 = vld [vmem:[%s11 + $0x24] sm:$0xf]
        %v9196 = vld [vmem:[%s11 + $0x28] sm:$0xf]
        %v9197 = vld [vmem:[%s11 + $0x2c] sm:$0xf]
        %v9198 = vld [vmem:[%s11 + $0x30] sm:$0xf]
        %v9199 = vld [vmem:[%s11 + $0x34] sm:$0xf]
        %v9200 = vld [vmem:[%s11 + $0x38] sm:$0xf]
        %v9201 = vld [vmem:[%s11 + $0x3c] sm:$0xf]
        %v9202 = vld [vmem:[%s11 + $0x40] sm:$0xf]
        %v9203 = vld [vmem:[%s11 + $0x44] sm:$0xf]
        %v9204 = vld [vmem:[%s11 + $0x48] sm:$0xf]
        %v9205 = vld [vmem:[%s11 + $0x4c] sm:$0xf]
        %v9206 = vld [vmem:[%s11 + $0x50] sm:$0xf]
        %v9207 = vld [vmem:[%s11 + $0x54] sm:$0xf]
        %v9208 = vld [vmem:[%s11 + $0x58] sm:$0xf]
        %v9209 = vld [vmem:[%s11 + $0x5c] sm:$0xf]
        %v9210 = vld [vmem:[%s11 + $0x60] sm:$0xf]
        %v9211 = vld [vmem:[%s11 + $0x64] sm:$0xf]
        %v9212 = vld [vmem:[%s11 + $0x68] sm:$0xf]
        %v9213 = vld [vmem:[%s11 + $0x6c] sm:$0xf]
        %v9214 = vld [vmem:[%s11 + $0x70] sm:$0xf]
        %v9215 = vld [vmem:[%s11 + $0x74] sm:$0xf]
        %v9216 = vld [vmem:[%s11 + $0x78] sm:$0xf]
        %v9217 = vld [vmem:[%s11 + $0x7c] sm:$0xf]
        %v9218 = vld [vmem:[%s11 + $0x80] sm:$0xf]
        %v9219 = vld [vmem:[%s11 + $0x84] sm:$0xf]
        %v9220 = vld [vmem:[%s11 + $0x88] sm:$0xf]
        %v9221 = vld [vmem:[%s11 + $0x8c] sm:$0xf]
        %v9222 = vld [vmem:[%s11 + $0x90] sm:$0xf]
        %v9223 = vld [vmem:[%s11 + $0x94] sm:$0xf]
        %v9224 = vld [vmem:[%s11 + $0x98] sm:$0xf]
        %v9225 = vld [vmem:[%s11 + $0x9c] sm:$0xf]
        %v9226 = vld [vmem:[%s11 + $0xa0] sm:$0xf]
        %v9227 = vld [vmem:[%s11 + $0xa4] sm:$0xf]
        %v9228 = vld [vmem:[%s11 + $0xa8] sm:$0xf]
        %v9229 = vld [vmem:[%s11 + $0xac] sm:$0xf]
        %v9230 = vld [vmem:[%s11 + $0xb0] sm:$0xf]
        %v9231 = vld [vmem:[%s11 + $0xb4] sm:$0xf]
        %v9232 = vld [vmem:[%s11 + $0xb8] sm:$0xf]
        %v9233 = vld [vmem:[%s11 + $0xbc] sm:$0xf]
        %v9234 = vld [vmem:[%s11 + $0xc0] sm:$0xf]
        %v9235 = vld [vmem:[%s11 + $0xc4] sm:$0xf]
        %v9236 = vld [vmem:[%s11 + $0xc8] sm:$0xf]
        %v9237 = vld [vmem:[%s11 + $0xcc] sm:$0xf]
        %v9238 = vld [vmem:[%s11 + $0xd0] sm:$0xf]
        %v9239 = vld [vmem:[%s11 + $0xd4] sm:$0xf]
        %v9240 = vld [vmem:[%s11 + $0xd8] sm:$0xf]
        %v9241 = vld [vmem:[%s11 + $0xdc] sm:$0xf]
        %v9242 = vld [vmem:[%s11 + $0xe0] sm:$0xf]
        %v9243 = vld [vmem:[%s11 + $0xe4] sm:$0xf]
        %v9244 = vld [vmem:[%s11 + $0xe8] sm:$0xf]
        %v9245 = vld [vmem:[%s11 + $0xec] sm:$0xf]
        %v9246 = vld [vmem:[%s11 + $0xf0] sm:$0xf]
        %v9247 = vld [vmem:[%s11 + $0xf4] sm:$0xf]
        %v9248 = vld [vmem:[%s11 + $0xf8] sm:$0xf]
        %v9249 = vld [vmem:[%s11 + $0xfc] sm:$0xf]
        %v9250 = vld [vmem:[%s12] sm:$0x1]
        %v9315 = vunpack.c.l.b16 %v9186
        %v9316 = vunpack.c.l.b16 %v9187
        %v9317 = vunpack.c.l.b16 %v9188
        %v9318 = vunpack.c.l.b16 %v9189
        %v9319 = vunpack.c.l.b16 %v9190
        %v9320 = vunpack.c.l.b16 %v9191
        %v9321 = vunpack.c.l.b16 %v9192
        %v9322 = vunpack.c.l.b16 %v9193
        %v9323 = vunpack.c.l.b16 %v9194
        %v9324 = vunpack.c.l.b16 %v9195
        %v9325 = vunpack.c.l.b16 %v9196
        %v9326 = vunpack.c.l.b16 %v9197
        %v9327 = vunpack.c.l.b16 %v9198
        %v9328 = vunpack.c.l.b16 %v9199
        %v9329 = vunpack.c.l.b16 %v9200
        %v9330 = vunpack.c.l.b16 %v9201
        %v9331 = vunpack.c.l.b16 %v9202
        %v9332 = vunpack.c.l.b16 %v9203
        %v9333 = vunpack.c.l.b16 %v9204
        %v9334 = vunpack.c.l.b16 %v9205
        %v9335 = vunpack.c.l.b16 %v9206
        %v9336 = vunpack.c.l.b16 %v9207
        %v9337 = vunpack.c.l.b16 %v9208
        %v9338 = vunpack.c.l.b16 %v9209
        %v9339 = vunpack.c.l.b16 %v9210
        %v9340 = vunpack.c.l.b16 %v9211
        %v9341 = vunpack.c.l.b16 %v9212
        %v9342 = vunpack.c.l.b16 %v9213
        %v9343 = vunpack.c.l.b16 %v9214
        %v9344 = vunpack.c.l.b16 %v9215
        %v9345 = vunpack.c.l.b16 %v9216
        %v9346 = vunpack.c.l.b16 %v9217
        %v9347 = vunpack.c.l.b16 %v9218
        %v9348 = vunpack.c.l.b16 %v9219
        %v9349 = vunpack.c.l.b16 %v9220
        %v9350 = vunpack.c.l.b16 %v9221
        %v9351 = vunpack.c.l.b16 %v9222
        %v9352 = vunpack.c.l.b16 %v9223
        %v9353 = vunpack.c.l.b16 %v9224
        %v9354 = vunpack.c.l.b16 %v9225
        %v9355 = vunpack.c.l.b16 %v9226
        %v9356 = vunpack.c.l.b16 %v9227
        %v9357 = vunpack.c.l.b16 %v9228
        %v9358 = vunpack.c.l.b16 %v9229
        %v9359 = vunpack.c.l.b16 %v9230
        %v9360 = vunpack.c.l.b16 %v9231
        %v9361 = vunpack.c.l.b16 %v9232
        %v9362 = vunpack.c.l.b16 %v9233
        %v9363 = vunpack.c.l.b16 %v9234
        %v9364 = vunpack.c.l.b16 %v9235
        %v9365 = vunpack.c.l.b16 %v9236
        %v9366 = vunpack.c.l.b16 %v9237
        %v9367 = vunpack.c.l.b16 %v9238
        %v9368 = vunpack.c.l.b16 %v9239
        %v9369 = vunpack.c.l.b16 %v9240
        %v9370 = vunpack.c.l.b16 %v9241
        %v9371 = vunpack.c.l.b16 %v9242
        %v9372 = vunpack.c.l.b16 %v9243
        %v9373 = vunpack.c.l.b16 %v9244
        %v9374 = vunpack.c.l.b16 %v9245
        %v9375 = vunpack.c.l.b16 %v9246
        %v9376 = vunpack.c.l.b16 %v9247
        %v9377 = vunpack.c.l.b16 %v9248
        %v9378 = vunpack.c.l.b16 %v9249
        %v9379 = vpack.c.b16 %v9316, %v9315
        %v9380 = vpack.c.b16 %v9318, %v9317
        %v9381 = vpack.c.b16 %v9320, %v9319
        %v9382 = vpack.c.b16 %v9322, %v9321
        %v9383 = vpack.c.b16 %v9324, %v9323
        %v9384 = vpack.c.b16 %v9326, %v9325
        %v9385 = vpack.c.b16 %v9328, %v9327
        %v9386 = vpack.c.b16 %v9330, %v9329
        %v9387 = vpack.c.b16 %v9332, %v9331
        %v9388 = vpack.c.b16 %v9334, %v9333
        %v9389 = vpack.c.b16 %v9336, %v9335
        %v9390 = vpack.c.b16 %v9338, %v9337
        %v9391 = vpack.c.b16 %v9340, %v9339
        %v9392 = vpack.c.b16 %v9342, %v9341
        %v9393 = vpack.c.b16 %v9344, %v9343
        %v9394 = vpack.c.b16 %v9346, %v9345
        %v9395 = vpack.c.b16 %v9348, %v9347
        %v9396 = vpack.c.b16 %v9350, %v9349
        %v9397 = vpack.c.b16 %v9352, %v9351
        %v9398 = vpack.c.b16 %v9354, %v9353
        %v9399 = vpack.c.b16 %v9356, %v9355
        %v9400 = vpack.c.b16 %v9358, %v9357
        %v9401 = vpack.c.b16 %v9360, %v9359
        %v9402 = vpack.c.b16 %v9362, %v9361
        %v9403 = vpack.c.b16 %v9364, %v9363
        %v9404 = vpack.c.b16 %v9366, %v9365
        %v9405 = vpack.c.b16 %v9368, %v9367
        %v9406 = vpack.c.b16 %v9370, %v9369
        %v9407 = vpack.c.b16 %v9372, %v9371
        %v9408 = vpack.c.b16 %v9374, %v9373
        %v9409 = vpack.c.b16 %v9376, %v9375
        %v9410 = vpack.c.b16 %v9378, %v9377
        %9443 = vmatprep.subr.bf16.mxu0 0
        %9444 = vmatpush1.bf16.msra.mxu0 %v9379
        %9445 = vmatprep.subr.bf16.mxu0 0
        %9446 = vmatpush1.bf16.msra.mxu0 %v9380
        %9447 = vmatprep.subr.bf16.mxu0 0
        %9448 = vmatpush1.bf16.msra.mxu0 %v9381
        %9449 = vmatprep.subr.bf16.mxu0 0
        %9450 = vmatpush1.bf16.msra.mxu0 %v9382
        %9451 = vmatprep.subr.bf16.mxu0 0
        %9452 = vmatpush1.bf16.msra.mxu0 %v9383
        %9453 = vmatprep.subr.bf16.mxu0 0
        %9454 = vmatpush1.bf16.msra.mxu0 %v9384
        %9455 = vmatprep.subr.bf16.mxu0 0
        %9456 = vmatpush1.bf16.msra.mxu0 %v9385
        %9457 = vmatprep.subr.bf16.mxu0 0
        %9458 = vmatpush1.bf16.msra.mxu0 %v9386
        %9459 = vmatprep.subr.bf16.mxu0 0
        %9460 = vmatpush1.bf16.msra.mxu0 %v9387
        %9461 = vmatprep.subr.bf16.mxu0 0
        %9462 = vmatpush1.bf16.msra.mxu0 %v9388
        %9463 = vmatprep.subr.bf16.mxu0 0
        %9464 = vmatpush1.bf16.msra.mxu0 %v9389
        %9465 = vmatprep.subr.bf16.mxu0 0
        %9466 = vmatpush1.bf16.msra.mxu0 %v9390
        %9467 = vmatprep.subr.bf16.mxu0 0
        %9468 = vmatpush1.bf16.msra.mxu0 %v9391
        %9469 = vmatprep.subr.bf16.mxu0 0
        %9470 = vmatpush1.bf16.msra.mxu0 %v9392
        %9471 = vmatprep.subr.bf16.mxu0 0
        %9472 = vmatpush1.bf16.msra.mxu0 %v9393
        %9473 = vmatprep.subr.bf16.mxu0 0
        %9474 = vmatpush1.bf16.msra.mxu0 %v9394
        %9475 = vmatprep.mubr.bf16.mxu0 %v9183
        %9476 = vmatmul.mubr.bf16.gmra.mrb[0].mxu0 %v9182
        %v9477 = vpop.f32.mrb[0].mxu0
        %v9478 = vadd.f32 %v9250, %v9477
        %v9479 = vpop.f32.mrb[0].mxu0
        %v9480 = vpop.f32.mrb[0].mxu0
        %v9481 = vpop.f32.mrb[0].mxu0
        %9482 = vdwg.mxu0
        %9483 = vmatprep.subr.bf16.mxu0 0
        %9484 = vmatpush1.bf16.msra.mxu0 %v9395
        %9485 = vmatprep.subr.bf16.mxu0 0
        %9486 = vmatpush1.bf16.msra.mxu0 %v9396
        %9487 = vmatprep.subr.bf16.mxu0 0
        %9488 = vmatpush1.bf16.msra.mxu0 %v9397
        %9489 = vmatprep.subr.bf16.mxu0 0
        %9490 = vmatpush1.bf16.msra.mxu0 %v9398
        %9491 = vmatprep.subr.bf16.mxu0 0
        %9492 = vmatpush1.bf16.msra.mxu0 %v9399
        %9493 = vmatprep.subr.bf16.mxu0 0
        %9494 = vmatpush1.bf16.msra.mxu0 %v9400
        %9495 = vmatprep.subr.bf16.mxu0 0
        %9496 = vmatpush1.bf16.msra.mxu0 %v9401
        %9497 = vmatprep.subr.bf16.mxu0 0
        %9498 = vmatpush1.bf16.msra.mxu0 %v9402
        %9499 = vmatprep.subr.bf16.mxu0 0
        %9500 = vmatpush1.bf16.msra.mxu0 %v9403
        %9501 = vmatprep.subr.bf16.mxu0 0
        %9502 = vmatpush1.bf16.msra.mxu0 %v9404
        %9503 = vmatprep.subr.bf16.mxu0 0
        %9504 = vmatpush1.bf16.msra.mxu0 %v9405
        %9505 = vmatprep.subr.bf16.mxu0 0
        %9506 = vmatpush1.bf16.msra.mxu0 %v9406
        %9507 = vmatprep.subr.bf16.mxu0 0
        %9508 = vmatpush1.bf16.msra.mxu0 %v9407
        %9509 = vmatprep.subr.bf16.mxu0 0
        %9510 = vmatpush1.bf16.msra.mxu0 %v9408
        %9511 = vmatprep.subr.bf16.mxu0 0
        %9512 = vmatpush1.bf16.msra.mxu0 %v9409
        %9513 = vmatprep.subr.bf16.mxu0 0
        %9514 = vmatpush1.bf16.msra.mxu0 %v9410
        %9515 = vmatprep.mubr.bf16.mxu0 %v9185
        %9516 = vmatmul.mubr.bf16.gmra.mrb[0].mxu0 %v9184
        %v9517 = vpop.f32.mrb[0].mxu0
        %v9518 = vadd.f32 %v9478, %v9517
        %v9519 = vpop.f32.mrb[0].mxu0
        %v9520 = vpop.f32.mrb[0].mxu0
        %v9521 = vpop.f32.mrb[0].mxu0
        %9522 = vdwg.mxu0
        %9523 = vst [vmem:[%s476] sm:$0x1] %v9518
        %s9524 = sand.u32 %s315, 1
        %s9525 = scalar_lea.sflag [#allocation11], %s9524
        %s9526 = sand.u32 %s315, 1
        %s9527 = scalar_lea.vmem [#allocation15], %s9526
        // Predicated region
        $region85: #{forward.1} parent=71 // pred_check
          %p9528 = pneg %p325
        $region86: #{forward.1} parent=71 // pred_check_branch
          %9530 = sbr.rel (%p9528) target = $region88
        $region87: #{forward.1} parent=71 // pred_region
          %s9532 = ssub.s32 16, 16
          %9533 = vsyncadd %s9525, %s9532
          %s9534 = smul.addr %s29, 16
          %s9535 = scalar_lea.hbm %s13, %s9534
          %s9537 = sshll.u32 %s9527, 4
          %s9538 = int_to_ptr.vmem [resolvable:$true] %s9537
          %9540 = dma.vmem_to_hbm [thread:$0]  %s9538, 16, %s9535, %s9525
        $region88: #{forward.1} parent=71 // pred_fallthru
          _
      $region72: #{forward.1} parent=5 // pred_fallthru
        _
      %p9541 = scmp.le.s32.totalorder 2, %s24
      // Predicated region
      $region89: #{forward.1} parent=5 // pred_check
        %p9542 = pneg %p9541
      $region90: #{forward.1} parent=5 // pred_check_branch
        %9544 = sbr.rel (%p9542) target = $region92
      $region91: #{forward.1} parent=5 // pred_region
        %s9545 = ssub.s32 %s24, 2
        // Predicated region
        $region93: #{forward.1} parent=91 // pred_check
          %p9546 = pneg %p331
        $region94: #{forward.1} parent=91 // pred_check_branch
          %9548 = sbr.rel (%p9546) target = $region96
        $region95: #{forward.1} parent=91 // pred_region
          %s9549 = sand.u32 %s316, 1
          %s9550 = scalar_lea.sflag [#allocation11], %s9549
          %s9551 = sand.u32 %s316, 1
          %s9552 = scalar_lea.vmem [#allocation15], %s9551
          %9553 = dma.done %s9550, 16
        $region96: #{forward.1} parent=91 // pred_fallthru
          _
      $region92: #{forward.1} parent=5 // pred_fallthru
        _
    $region6: #{forward.1} parent=1 // loop_footer
      %s28 = sadd.s32 1, %s24
    $region7: #{forward.1} parent=1 // loop_footer_branch
      %23 = sbr.rel target = $region3
    $region8: #{forward.1} parent=1 // loop_exit
      _
    %9554 = vsyncpa [#allocation10], 1
    %s9555 = scalar_lea.sflag [#allocation10], 1
    %9556 = vsyncpa %s9555, 1
    %9557 = vsyncpa [#allocation13], 1
    %9558 = vsyncpa [#allocation11], 1
    %s9559 = scalar_lea.sflag [#allocation11], 1
    %9560 = vsyncpa %s9559, 1

</llo_original>
